<compile_context>
chip_gen: v7x
topology: tpu7x:2x2x1
jax: 0.10.0
libtpu: 0.0.40
codegen_flags: <defaults>
</compile_context>

<pallas_src>
import jax
import jax.numpy as jnp
from jax.experimental import pallas as pl
from jax.experimental.pallas import tpu as pltpu

HIDDEN = 960  # ESM-C 300M hidden size -> regression_head = nn.Linear(960, 1)


def _esmba_pool_head_kernel(mask_ref, hidden_ref, w_ref, b_ref, out_ref,
                            acc_ref, cnt_ref):
    si = pl.program_id(1)

    @pl.when(si == 0)
    def _init():
        acc_ref[...] = jnp.zeros_like(acc_ref)
        cnt_ref[...] = jnp.zeros_like(cnt_ref)

    m = mask_ref[...]          # (tb, ts)    bf16 (0/1 values, exact)
    h = hidden_ref[...]        # (tb, ts, H) bf16

    # masked sum over this sequence tile as an MXU contraction:
    #   (tb, 1, ts) x (tb, ts, H) -> (tb, 1, H), accumulated in f32.
    part = jnp.einsum('bqs,bsh->bqh', m[:, None, :], h,
                      preferred_element_type=jnp.float32)
    acc_ref[...] += part[:, 0, :]                                          # (tb, H)
    cnt_ref[...] += jnp.sum(m.astype(jnp.float32), axis=1, keepdims=True)  # (tb, 1)

    @pl.when(si == pl.num_programs(1) - 1)
    def _finalize():
        # pooled_output = sum_embeddings / (sum_mask + 1e-8)
        inv = pl.reciprocal(cnt_ref[...] + 1e-8, approx=True)              # EUP
        pooled = acc_ref[...] * inv                                        # (tb, H) f32
        # Dropout(0.3) is identity at inference time (no-op here).
        # regression_head: lane-dense (1, H) weight, VPU multiply + lane reduce.
        head = jnp.sum(pooled * w_ref[...], axis=-1, keepdims=True)        # (tb, 1)
        out_ref[...] = head + b_ref[0]


def _choose_tiles(B, S, batch_tile, seq_tile, *, vmem_budget_bytes=24 << 20):
    # Batch tile: multiple of 8 (sublane) or the full (un-blocked) batch dim.
    tb = batch_tile if batch_tile is not None else (8 if B % 8 == 0 else B)
    if seq_tile is not None:
        return tb, seq_tile
    # Seq tile: largest multiple of 128 dividing S whose double-buffered bf16
    # hidden tile stays within the VMEM budget; fall back to the full seq dim.
    per_unit = 2 * tb * HIDDEN * 2          # 2 pipeline buffers, bf16
    max_ts = max(128, vmem_budget_bytes // per_unit)
    t = (min(max_ts, S) // 128) * 128
    while t >= 128:
        if S % t == 0:
            return tb, t
        t -= 128
    return tb, S                            # full (un-blocked) sequence axis


def esmba_forward(hidden_states, attention_mask, weight, bias, *,
                  batch_tile=None, seq_tile=None):
    """hidden_states: (B, S, 960) [any float dtype, kept/cast to bf16],
       attention_mask: (B, S), weight: (1, 960), bias: (1,).
       Returns (B,) float32, matching ESMBA.forward's squeezed output."""
    B, S, H = hidden_states.shape
    assert H == HIDDEN

    tb, ts = _choose_tiles(B, S, batch_tile, seq_tile)
    assert B % tb == 0 and S % ts == 0, (B, tb, S, ts)

    hidden_bf16 = hidden_states.astype(jnp.bfloat16)
    mask_bf16 = attention_mask.astype(jnp.bfloat16)   # 0/1 values, exact in bf16
    w = weight.reshape(1, H).astype(jnp.float32)      # lane-dense weight
    b = bias.reshape(1).astype(jnp.float32)

    grid = (B // tb, S // ts)

    # VMEM: double-buffered hidden + mask tiles, f32 accumulators, weight.
    needed = (2 * (tb * ts * H * 2 + tb * ts * 2)
              + tb * H * 4 + tb * 4 + 2 * H * 4 + (4 << 20))
    vmem_limit = int(min(max(32 << 20, needed), 100 << 20))

    cost = pl.CostEstimate(
        flops=2 * B * S * H + 2 * B * H,
        transcendentals=B,
        bytes_accessed=B * S * H * 2 + B * S * 2 + B * 4 + H * 4,
    )

    out = pl.pallas_call(
        _esmba_pool_head_kernel,
        out_shape=jax.ShapeDtypeStruct((B, 1), jnp.float32),
        grid_spec=pltpu.PrefetchScalarGridSpec(
            num_scalar_prefetch=0,
            grid=grid,
            in_specs=[
                pl.BlockSpec((tb, ts), lambda bi, si: (bi, si)),        # mask
                pl.BlockSpec((tb, ts, H), lambda bi, si: (bi, si, 0)),  # hidden
                pl.BlockSpec((1, H), lambda bi, si: (0, 0)),            # weight
                pl.BlockSpec(memory_space=pltpu.MemorySpace.SMEM),      # bias
            ],
            out_specs=pl.BlockSpec((tb, 1), lambda bi, si: (bi, 0)),
            scratch_shapes=[
                pltpu.VMEM((tb, H), jnp.float32),   # sum_embeddings accumulator
                pltpu.VMEM((tb, 1), jnp.float32),   # sum_mask accumulator
            ],
        ),
        compiler_params=pltpu.CompilerParams(
            dimension_semantics=("parallel", "arbitrary"),
            vmem_limit_bytes=vmem_limit,
        ),
        cost_estimate=cost,
    )(mask_bf16, hidden_bf16, w, b)
    return out[:, 0]  # .squeeze(-1)


def init_regression_head(key):
    """Matches the PyTorch module: xavier_uniform_(weight, gain=0.01) on shape
       (1, 960); bias ~ U[0, 1). Weight kept lane-dense as (1, 960)."""
    kw, kb = jax.random.split(key)
    fan_in, fan_out = HIDDEN, 1
    gain = 0.01
    bound = gain * jnp.sqrt(6.0 / (fan_in + fan_out))
    weight = jax.random.uniform(kw, (1, HIDDEN), jnp.float32, -bound, bound)
    bias = jax.random.uniform(kb, (1,), jnp.float32, 0.0, 1.0)
    return weight, bias


if __name__ == "__main__":
    key = jax.random.PRNGKey(0)
    k_emb, k_ids, k_len, k_head = jax.random.split(key, 4)

    B, S, VOCAB = 16, 256, 33

    # TODO(synk): the ESM-C ("esmc_300m") transformer base_model is not
    # re-implemented; a deterministic embedding stub stands in for its
    # outputs.hidden_states[-1] (kept in bf16, like the real model's output).
    embedding_table = jax.random.normal(k_emb, (VOCAB, HIDDEN), jnp.float32)
    embedding_table = embedding_table.astype(jnp.bfloat16)
    input_ids = jax.random.randint(k_ids, (B, S), 0, VOCAB)
    hidden_states = embedding_table[input_ids]            # (B, S, H) bf16

    # attention mask with ragged lengths
    lengths = jax.random.randint(k_len, (B,), 1, S + 1)
    attention_mask = (jnp.arange(S)[None, :] < lengths[:, None]).astype(jnp.float32)

    weight, bias = init_regression_head(k_head)            # (1, 960), (1,)

    # Pure-JAX reference (f32 math on the same bf16-valued hidden states).
    hid_f32 = hidden_states.astype(jnp.float32)
    msk_f32 = attention_mask.astype(jnp.float32)
    pooled_ref = (hid_f32 * msk_f32[:, :, None]).sum(axis=1) / (
        msk_f32.sum(axis=1, keepdims=True) + 1e-8)
    ref = (pooled_ref @ weight.T)[:, 0] + bias[0]

    # 1) adaptive tiles (single seq step for these shapes)
    out_auto = esmba_forward(hidden_states, attention_mask, weight, bias)
    out_auto = jax.block_until_ready(out_auto)
    # 2) explicit small tiles -> (2, 2) grid, exercises the seq-axis accumulation
    out_tiled = esmba_forward(hidden_states, attention_mask, weight, bias,
                              batch_tile=8, seq_tile=128)
    out_tiled = jax.block_until_ready(out_tiled)

    assert out_auto.shape == (B,), out_auto.shape
    assert out_tiled.shape == (B,), out_tiled.shape
    # Tolerance accounts for the approximate EUP reciprocal and f32 accumulation
    # order differences; values are O(1) (uniform bias + tiny regression term).
    assert jnp.allclose(out_auto, ref, atol=1e-3, rtol=1e-3), (out_auto, ref)
    assert jnp.allclose(out_tiled, ref, atol=1e-3, rtol=1e-3), (out_tiled, ref)

    print("KERNEL_OK")
</pallas_src>

<mosaic_0001>
module attributes {stable_mosaic.version = 11 : i64} {
  func.func @_esmba_pool_head_kernel(%arg0: i32, %arg1: i32, %arg2: memref<8x256xbf16, #tpu.memory_space<vmem>>, %arg3: memref<8x256x960xbf16, #tpu.memory_space<vmem>>, %arg4: memref<1x960xf32, #tpu.memory_space<vmem>>, %arg5: memref<1xf32, #tpu.memory_space<smem>>, %arg6: memref<8x1xf32, #tpu.memory_space<vmem>>, %arg7: memref<8x960xf32, #tpu.memory_space<vmem>>, %arg8: memref<8x1xf32, #tpu.memory_space<vmem>>) attributes {dimension_semantics = [#tpu.dimension_semantics<parallel>, #tpu.dimension_semantics<arbitrary>], iteration_bounds = array<i64: 2, 1>, scalar_prefetch = 0 : i64, scratch_operands = 2 : i64, tpu.core_type = #tpu.core_type<tc>, window_params = [{transform_indices = @transform_0, window_bounds = array<i64: 8, 256>}, {transform_indices = @transform_1, window_bounds = array<i64: 8, 256, 960>}, {pipeline_mode = #tpu.pipeline_mode<synchronous>, transform_indices = @transform_2, window_bounds = array<i64: 1, 960>}, {transform_indices = @transform_3, window_bounds = array<i64: 1>}, {transform_indices = @transform_4, window_bounds = array<i64: 8, 1>}]} {
    %c0_i32 = arith.constant 0 : i32
    %0 = arith.cmpi eq, %arg1, %c0_i32 : i32
    %1 = arith.extui %0 : i1 to i32
    %c0_i32_0 = arith.constant 0 : i32
    %2 = arith.cmpi ne, %1, %c0_i32_0 : i32
    scf.if %2 {
      %cst_16 = arith.constant 0.000000e+00 : f32
      %20 = vector.broadcast %cst_16 : f32 to vector<8x960xf32>
      %c0_17 = arith.constant 0 : index
      %c0_18 = arith.constant 0 : index
      %21 = vector.load %arg7[%c0_17, %c0_18] : memref<8x960xf32, #tpu.memory_space<vmem>>, vector<8x960xf32>
      tpu.vector_store %arg7[%c0_17, %c0_18], %20 {strides = array<i32>} : memref<8x960xf32, #tpu.memory_space<vmem>>, vector<8x960xf32>,
      %cst_19 = arith.constant 0.000000e+00 : f32
      %22 = vector.broadcast %cst_19 : f32 to vector<8x1xf32>
      %c0_20 = arith.constant 0 : index
      %c0_21 = arith.constant 0 : index
      %23 = vector.load %arg8[%c0_20, %c0_21] : memref<8x1xf32, #tpu.memory_space<vmem>>, vector<8x1xf32>
      tpu.vector_store %arg8[%c0_20, %c0_21], %22 {strides = array<i32>} : memref<8x1xf32, #tpu.memory_space<vmem>>, vector<8x1xf32>,
    } else {
    }
    %c0 = arith.constant 0 : index
    %c0_1 = arith.constant 0 : index
    %3 = vector.load %arg2[%c0, %c0_1] : memref<8x256xbf16, #tpu.memory_space<vmem>>, vector<8x256xbf16>
    %c0_2 = arith.constant 0 : index
    %c0_3 = arith.constant 0 : index
    %c0_4 = arith.constant 0 : index
    %4 = vector.load %arg3[%c0_2, %c0_3, %c0_4] : memref<8x256x960xbf16, #tpu.memory_space<vmem>>, vector<8x256x960xbf16>
    %5 = vector.shape_cast %3 : vector<8x256xbf16> to vector<8x1x256xbf16>
    "tpu.trace_start"() <{level = 10 : i32, message = "bqs,bsh->bqh"}> : () -> ()
    %cst = arith.constant dense<0.000000e+00> : vector<8x1x960xf32>
    %6 = tpu.matmul %5, %4, %cst {dimension_numbers = #tpu.dot_dimension_numbers<[2], [1], [1], [2], [0, 0, 0, 1, 1, 2], [0], [0]>} : vector<8x1x256xbf16>, vector<8x256x960xbf16>, vector<8x1x960xf32> -> vector<8x1x960xf32>
    "tpu.trace_stop"() : () -> ()
    %c0_5 = arith.constant 0 : index
    %c0_6 = arith.constant 0 : index
    %7 = vector.load %arg7[%c0_5, %c0_6] : memref<8x960xf32, #tpu.memory_space<vmem>>, vector<8x960xf32>
    %8 = vector.shape_cast %6 : vector<8x1x960xf32> to vector<8x960xf32>
    %9 = arith.addf %7, %8 : vector<8x960xf32>
    %c0_7 = arith.constant 0 : index
    %c0_8 = arith.constant 0 : index
    %10 = vector.load %arg7[%c0_7, %c0_8] : memref<8x960xf32, #tpu.memory_space<vmem>>, vector<8x960xf32>
    tpu.vector_store %arg7[%c0_7, %c0_8], %9 {strides = array<i32>} : memref<8x960xf32, #tpu.memory_space<vmem>>, vector<8x960xf32>,
    %c0_9 = arith.constant 0 : index
    %c0_10 = arith.constant 0 : index
    %11 = vector.load %arg8[%c0_9, %c0_10] : memref<8x1xf32, #tpu.memory_space<vmem>>, vector<8x1xf32>
    %12 = arith.extf %3 : vector<8x256xbf16> to vector<8x256xf32>
    %cst_11 = arith.constant dense<0.000000e+00> : vector<8xf32>
    %13 = vector.multi_reduction <add>, %12, %cst_11 [1] : vector<8x256xf32> to vector<8xf32>
    %14 = vector.shape_cast %13 : vector<8xf32> to vector<8x1xf32>
    %15 = arith.addf %11, %14 : vector<8x1xf32>
    %c0_12 = arith.constant 0 : index
    %c0_13 = arith.constant 0 : index
    %16 = vector.load %arg8[%c0_12, %c0_13] : memref<8x1xf32, #tpu.memory_space<vmem>>, vector<8x1xf32>
    tpu.vector_store %arg8[%c0_12, %c0_13], %15 {strides = array<i32>} : memref<8x1xf32, #tpu.memory_space<vmem>>, vector<8x1xf32>,
    %c0_i32_14 = arith.constant 0 : i32
    %17 = arith.cmpi eq, %arg1, %c0_i32_14 : i32
    %18 = arith.extui %17 : i1 to i32
    %c0_i32_15 = arith.constant 0 : i32
    %19 = arith.cmpi ne, %18, %c0_i32_15 : i32
    scf.if %19 {
      %c0_16 = arith.constant 0 : index
      %c0_17 = arith.constant 0 : index
      %20 = vector.load %arg8[%c0_16, %c0_17] : memref<8x1xf32, #tpu.memory_space<vmem>>, vector<8x1xf32>
      %cst_18 = arith.constant 9.99999993E-9 : f32
      %21 = vector.broadcast %cst_18 : f32 to vector<8x1xf32>
      %22 = arith.addf %20, %21 : vector<8x1xf32>
      %23 = tpu.reciprocal %22 {approx = true} : vector<8x1xf32> -> vector<8x1xf32>
      %c0_19 = arith.constant 0 : index
      %c0_20 = arith.constant 0 : index
      %24 = vector.load %arg7[%c0_19, %c0_20] : memref<8x960xf32, #tpu.memory_space<vmem>>, vector<8x960xf32>
      %25 = vector.broadcast %23 : vector<8x1xf32> to vector<8x960xf32>
      %26 = arith.mulf %24, %25 : vector<8x960xf32>
      %c0_21 = arith.constant 0 : index
      %c0_22 = arith.constant 0 : index
      %27 = vector.load %arg4[%c0_21, %c0_22] : memref<1x960xf32, #tpu.memory_space<vmem>>, vector<1x960xf32>
      %28 = vector.broadcast %27 : vector<1x960xf32> to vector<8x960xf32>
      %29 = arith.mulf %26, %28 : vector<8x960xf32>
      %cst_23 = arith.constant dense<0.000000e+00> : vector<8xf32>
      %30 = vector.multi_reduction <add>, %29, %cst_23 [1] : vector<8x960xf32> to vector<8xf32>
      %31 = vector.shape_cast %30 : vector<8xf32> to vector<8x1xf32>
      %c0_24 = arith.constant 0 : index
      %32 = memref.load %arg5[%c0_24] : memref<1xf32, #tpu.memory_space<smem>>
      %33 = vector.broadcast %32 : f32 to vector<8x1xf32>
      %34 = arith.addf %31, %33 : vector<8x1xf32>
      %c0_25 = arith.constant 0 : index
      %c0_26 = arith.constant 0 : index
      %35 = vector.load %arg6[%c0_25, %c0_26] : memref<8x1xf32, #tpu.memory_space<vmem>>, vector<8x1xf32>
      tpu.vector_store %arg6[%c0_25, %c0_26], %34 {strides = array<i32>} : memref<8x1xf32, #tpu.memory_space<vmem>>, vector<8x1xf32>,
    } else {
    }
    return
  }
  func.func @transform_0(%arg0: i32, %arg1: i32) -> (i32, i32) {
    %c0_i32 = arith.constant 0 : i32
    return %arg0, %arg1 : i32, i32
  }
  func.func @transform_1(%arg0: i32, %arg1: i32) -> (i32, i32, i32) {
    %c0_i32 = arith.constant 0 : i32
    %c0_i32_0 = arith.constant 0 : i32
    return %arg0, %arg1, %c0_i32 : i32, i32, i32
  }
  func.func @transform_2(%arg0: i32, %arg1: i32) -> (i32, i32) {
    %c0_i32 = arith.constant 0 : i32
    %c0_i32_0 = arith.constant 0 : i32
    %c0_i32_1 = arith.constant 0 : i32
    return %c0_i32, %c0_i32_0 : i32, i32
  }
  func.func @transform_3(%arg0: i32, %arg1: i32) -> i32 {
    %c0_i32 = arith.constant 0 : i32
    %c0_i32_0 = arith.constant 0 : i32
    return %c0_i32 : i32
  }
  func.func @transform_4(%arg0: i32, %arg1: i32) -> (i32, i32) {
    %c0_i32 = arith.constant 0 : i32
    %c0_i32_0 = arith.constant 0 : i32
    return %arg0, %c0_i32 : i32, i32
  }
}

</mosaic_0001>

<llo_original>
// kernel: tpu_custom_call.1
$region0: #{tpu_custom_call.1}
  #allocation0 [shape = 'u32[]', space=smem, size = 0x4, offset = 0x4, fixed_abs, tag = 'smem constant byte address 0x4 - core index']
  #allocation1 [shape = 'u32[144,128]{1,0:T(1,128)}', space=vmem, size = 0x12000, scoped, tag = 'internal scratch']
  #allocation2 [shape = 'f32[8,960]{1,0:T(8,128)}', space=vmem, size = 0x8000, scoped, tag = 'scratch operand']
  #allocation3 [shape = 'f32[8,1]{1,0:T(8,128)}', space=vmem, size = 0x1000, scoped, tag = 'scratch operand']
  #allocation4 [shape = 'f32[1]{0:T(128)S(6)}', space=smem, size = 0x200, scoped, tag = 'scoped memory for tpu_custom_call.1']
  %s0 = inlined_call_operand.vmem [shape: bf16[16,256], index: 0, kind: input, shape index: {}]
  %s1 = inlined_call_operand.vmem [shape: bf16[16,256,960], index: 1, kind: input, shape index: {}]
  %s2 = inlined_call_operand.vmem [shape: f32[1,960], index: 2, kind: input, shape index: {}]
  %s3 = inlined_call_operand.<no memory space> [shape: f32[1], index: 3, kind: input, shape index: {}]
  %s4 = inlined_call_operand.vmem [shape: f32[16,1], index: 4, kind: output, shape index: {}]
  %s5 = sld [smem:[#allocation0]]
  $region57: #{tpu_custom_call.1} parent=0
    _
  %s7 = ssub.s32 1, %s5
  %s8 = scalar_select 0, %s7, %s5
  %9 = sst [smem:[#allocation4]] %s3
  loop: start=0, step=1, limit=4
  $region2: #{tpu_custom_call.1} parent=0 // loop_pre_header
    _
  $region3: #{tpu_custom_call.1} parent=0 // loop_header
    %s11 = sphi 0, %s15
    %p12 = scmp.ge.s32.totalorder %s11, 4
    %s18 = sphi 0, %s30
    %s19 = sphi 0, %s26
    %s20 = sphi 0, %s18
    %s21 = sphi 0, %s19
    %s22 = sphi 0, %s20
    %s23 = sphi 0, %s21
    %s35 = sphi 0, %s37
    %s38 = sphi 0, %s35
    %s39 = sphi 0, %s38
    %s55 = sphi 0, %s39
    %s63 = sphi 0, %s65
    %s66 = sphi 0, %s63
    %s67 = sphi 0, %s66
    %s83 = sphi 0, %s67
    %s87 = sphi 0, %s87
    %s89 = sphi 0, %s87
    %s90 = sphi 0, %s89
    %s104 = sphi 0, %s90
    %s108 = sphi 0, %s108
    %s110 = sphi 0, %s108
    %s111 = sphi 0, %s110
    %s125 = sphi 0, %s111
    %s131 = sphi 0, %s133
    %s134 = sphi 0, %s131
    %s135 = sphi 0, %s134
    %s151 = sphi 0, %s135
  $region4: #{tpu_custom_call.1} parent=0 // loop_header_branch
    %14 = sbr.rel (%p12) target = $region8
  $region5: #{tpu_custom_call.1} parent=0 // loop_body
    %s16 = ssub.s32 %s11, 1
    %s17 = ssub.s32 %s11, 2
    %s24 = sadd.s32 1, %s19
    %p25 = scmp.ge.s32.totalorder %s24, 1
    %s26 = scalar_select %p25, 0, %s24
    %s27 = sadd.s32 1, %s18
    %s28 = scalar_select %p25, %s27, %s18
    %p29 = scmp.ge.s32.totalorder %s28, 2
    %s30 = scalar_select %p29, 0, %s28
    %s31 = ssub.s32 %s18, %s30
    %s32 = ssub.s32 %s19, %s26
    %s33 = sor.u32 %s31, %s32
    %p34 = scmp.eq.s32.totalorder %s33, 0
    %s36 = sadd.s32 %s35, 1
    %s37 = scalar_select %p34, %s35, %s36
    %p40 = pneg %p34
    %p41 = scmp.eq.s32.totalorder %s11, 1
    %p42 = por %p40, %p41
    %p43 = scmp.ne.s32.totalorder %s35, %s38
    %p44 = scmp.eq.s32.totalorder %s11, 0
    %p45 = por %p43, %p44
    %p46 = scmp.ne.s32.totalorder %s35, %s38
    %p47 = scmp.eq.s32.totalorder %s16, 1
    %p48 = por %p46, %p47
    %p49 = scmp.ne.s32.totalorder %s38, %s39
    %p50 = scmp.eq.s32.totalorder %s16, 0
    %p51 = por %p49, %p50
    %p52 = scmp.ne.s32.totalorder %s38, %s39
    %p53 = scmp.eq.s32.totalorder %s17, 1
    %p54 = por %p52, %p53
    %p56 = scmp.ne.s32.totalorder %s39, %s55
    %p57 = scmp.eq.s32.totalorder %s17, 0
    %p58 = por %p56, %p57
    %s59 = ssub.s32 %s18, %s30
    %s60 = ssub.s32 %s19, %s26
    %s61 = sor.u32 %s59, %s60
    %p62 = scmp.eq.s32.totalorder %s61, 0
    %s64 = sadd.s32 %s63, 1
    %s65 = scalar_select %p62, %s63, %s64
    %p68 = pneg %p62
    %p69 = scmp.eq.s32.totalorder %s11, 1
    %p70 = por %p68, %p69
    %p71 = scmp.ne.s32.totalorder %s63, %s66
    %p72 = scmp.eq.s32.totalorder %s11, 0
    %p73 = por %p71, %p72
    %p74 = scmp.ne.s32.totalorder %s63, %s66
    %p75 = scmp.eq.s32.totalorder %s16, 1
    %p76 = por %p74, %p75
    %p77 = scmp.ne.s32.totalorder %s66, %s67
    %p78 = scmp.eq.s32.totalorder %s16, 0
    %p79 = por %p77, %p78
    %p80 = scmp.ne.s32.totalorder %s66, %s67
    %p81 = scmp.eq.s32.totalorder %s17, 1
    %p82 = por %p80, %p81
    %p84 = scmp.ne.s32.totalorder %s67, %s83
    %p85 = scmp.eq.s32.totalorder %s17, 0
    %p86 = por %p84, %p85
    %s88 = sadd.s32 %s87, 1
    %p91 = scmp.eq.s32.totalorder %s11, 1
    %p92 = scmp.ne.s32.totalorder %s87, %s89
    %p93 = scmp.eq.s32.totalorder %s11, 0
    %p94 = por %p92, %p93
    %p95 = scmp.ne.s32.totalorder %s87, %s89
    %p96 = scmp.eq.s32.totalorder %s16, 1
    %p97 = por %p95, %p96
    %p98 = scmp.ne.s32.totalorder %s89, %s90
    %p99 = scmp.eq.s32.totalorder %s16, 0
    %p100 = por %p98, %p99
    %p101 = scmp.ne.s32.totalorder %s89, %s90
    %p102 = scmp.eq.s32.totalorder %s17, 1
    %p103 = por %p101, %p102
    %p105 = scmp.ne.s32.totalorder %s90, %s104
    %p106 = scmp.eq.s32.totalorder %s17, 0
    %p107 = por %p105, %p106
    %s109 = sadd.s32 %s108, 1
    %p112 = scmp.eq.s32.totalorder %s11, 1
    %p113 = scmp.ne.s32.totalorder %s108, %s110
    %p114 = scmp.eq.s32.totalorder %s11, 0
    %p115 = por %p113, %p114
    %p116 = scmp.ne.s32.totalorder %s108, %s110
    %p117 = scmp.eq.s32.totalorder %s16, 1
    %p118 = por %p116, %p117
    %p119 = scmp.ne.s32.totalorder %s110, %s111
    %p120 = scmp.eq.s32.totalorder %s16, 0
    %p121 = por %p119, %p120
    %p122 = scmp.ne.s32.totalorder %s110, %s111
    %p123 = scmp.eq.s32.totalorder %s17, 1
    %p124 = por %p122, %p123
    %p126 = scmp.ne.s32.totalorder %s111, %s125
    %p127 = scmp.eq.s32.totalorder %s17, 0
    %p128 = por %p126, %p127
    %s129 = ssub.s32 %s18, %s30
    %p130 = scmp.eq.s32.totalorder %s129, 0
    %s132 = sadd.s32 %s131, 1
    %s133 = scalar_select %p130, %s131, %s132
    %p136 = pneg %p130
    %p137 = scmp.eq.s32.totalorder %s11, 1
    %p138 = por %p136, %p137
    %p139 = scmp.ne.s32.totalorder %s131, %s134
    %p140 = scmp.eq.s32.totalorder %s11, 0
    %p141 = por %p139, %p140
    %p142 = scmp.ne.s32.totalorder %s131, %s134
    %p143 = scmp.eq.s32.totalorder %s16, 1
    %p144 = por %p142, %p143
    %p145 = scmp.ne.s32.totalorder %s134, %s135
    %p146 = scmp.eq.s32.totalorder %s16, 0
    %p147 = por %p145, %p146
    %p148 = scmp.ne.s32.totalorder %s134, %s135
    %p149 = scmp.eq.s32.totalorder %s17, 1
    %p150 = por %p148, %p149
    %p152 = scmp.ne.s32.totalorder %s135, %s151
    %p153 = scmp.eq.s32.totalorder %s17, 0
    %p154 = por %p152, %p153
    %p155 = scmp.le.s32.totalorder 1, %s11
    %p156 = scmp.lt.s32.totalorder %s11, 3
    %p157 = pnand %p155, %p156
    %p158 = pneg %p157
    // Predicated region
    $region9: #{tpu_custom_call.1} parent=5 // pred_check
      _
    $region10: #{tpu_custom_call.1} parent=5 // pred_check_branch
      %160 = sbr.rel (%p157) target = $region12
    $region11: #{tpu_custom_call.1} parent=5 // pred_region
      %s161 = ssub.s32 %s11, 1
      // Predicated region
      $region13: #{tpu_custom_call.1} parent=11 // pred_check
        %p162 = pneg %p100
      $region14: #{tpu_custom_call.1} parent=11 // pred_check_branch
        %164 = sbr.rel (%p162) target = $region16
      $region15: #{tpu_custom_call.1} parent=11 // pred_region
        _
      $region16: #{tpu_custom_call.1} parent=11 // pred_fallthru
        _
      // Predicated region
      $region17: #{tpu_custom_call.1} parent=11 // pred_check
        %p165 = pneg %p121
      $region18: #{tpu_custom_call.1} parent=11 // pred_check_branch
        %167 = sbr.rel (%p165) target = $region20
      $region19: #{tpu_custom_call.1} parent=11 // pred_region
        _
      $region20: #{tpu_custom_call.1} parent=11 // pred_fallthru
        _
    $region12: #{tpu_custom_call.1} parent=5 // pred_fallthru
      _
    %p168 = scmp.lt.s32.totalorder %s11, 2
    // Predicated region
    $region21: #{tpu_custom_call.1} parent=5 // pred_check
      %p169 = pneg %p168
    $region22: #{tpu_custom_call.1} parent=5 // pred_check_branch
      %171 = sbr.rel (%p169) target = $region24
    $region23: #{tpu_custom_call.1} parent=5 // pred_region
      // Predicated region
      $region25: #{tpu_custom_call.1} parent=23 // pred_check
        %p172 = pneg %p45
      $region26: #{tpu_custom_call.1} parent=23 // pred_check_branch
        %174 = sbr.rel (%p172) target = $region28
      $region27: #{tpu_custom_call.1} parent=23 // pred_region
        %s175 = smul.u32 2, %s19
        %p176 = scmp.lt.s32.totalorder %s18, 1
        %s177 = scalar_select %p176, %s18, 1
        %p178 = scmp.lt.s32.totalorder %s175, 1
        %s179 = scalar_select %p178, %s175, 1
        %s180 = smul.addr %s177, 2
        %s181 = sadd.s32 %s179, %s180
        %s182 = smul.addr %s181, 4
        %s183 = scalar_lea.vmem %s0, %s182
        %s184 = smul.u32 2, %s19
      $region28: #{tpu_custom_call.1} parent=23 // pred_fallthru
        _
      // Predicated region
      $region29: #{tpu_custom_call.1} parent=23 // pred_check
        %p185 = pneg %p73
      $region30: #{tpu_custom_call.1} parent=23 // pred_check_branch
        %187 = sbr.rel (%p185) target = $region32
      $region31: #{tpu_custom_call.1} parent=23 // pred_region
        %s188 = smul.u32 8, %s18
        %s189 = smul.u32 32, %s19
        %p190 = scmp.lt.s32.totalorder %s188, 15
        %s191 = scalar_select %p190, %s188, 15
        %p192 = scmp.lt.s32.totalorder %s189, 31
        %s193 = scalar_select %p192, %s189, 31
        %s194 = smul.addr %s193, 8
        %s195 = smul.addr %s191, 256
        %s196 = sadd.s32 %s194, %s195
        %s197 = smul.addr %s196, 4
        %s198 = scalar_lea.vmem %s1, %s197
        %s199 = smul.u32 8, %s18
        %s200 = smul.u32 32, %s19
      $region32: #{tpu_custom_call.1} parent=23 // pred_fallthru
        _
    $region24: #{tpu_custom_call.1} parent=5 // pred_fallthru
      _
    %p201 = scmp.le.s32.totalorder 1, %s11
    %p202 = scmp.lt.s32.totalorder %s11, 3
    %p203 = pnand %p201, %p202
    %p204 = pneg %p203
    // Predicated region
    $region33: #{tpu_custom_call.1} parent=5 // pred_check
      _
    $region34: #{tpu_custom_call.1} parent=5 // pred_check_branch
      %206 = sbr.rel (%p203) target = $region36
    $region35: #{tpu_custom_call.1} parent=5 // pred_region
      %s207 = ssub.s32 %s11, 1
      %s208 = smul.u32 2, %s21
      %p209 = scmp.lt.s32.totalorder %s20, 1
      %s210 = scalar_select %p209, %s20, 1
      %p211 = scmp.lt.s32.totalorder %s208, 1
      %s212 = scalar_select %p211, %s208, 1
      %s213 = smul.addr %s210, 2
      %s214 = sadd.s32 %s212, %s213
      %s215 = smul.addr %s214, 4
      %s216 = scalar_lea.vmem %s0, %s215
      %p217 = pneg %p51
      %p218 = pneg %p48
      %s219 = smul.u32 8, %s20
      %s220 = smul.u32 32, %s21
      %p221 = scmp.lt.s32.totalorder %s219, 15
      %s222 = scalar_select %p221, %s219, 15
      %p223 = scmp.lt.s32.totalorder %s220, 31
      %s224 = scalar_select %p223, %s220, 31
      %s225 = smul.addr %s224, 8
      %s226 = smul.addr %s222, 256
      %s227 = sadd.s32 %s225, %s226
      %s228 = smul.addr %s227, 4
      %s229 = scalar_lea.vmem %s1, %s228
      %p230 = pneg %p79
      %p231 = pneg %p76
      %p232 = pneg %p100
      %p233 = pneg %p97
      %p234 = pneg %p121
      %p235 = pneg %p118
      %p236 = pneg %p147
      %p237 = pneg %p144
      %p238 = scmp.lt.s32.totalorder %s20, 1
      %s239 = scalar_select %p238, %s20, 1
      %s240 = smul.addr %s239, 8
      %s241 = scalar_lea.vmem %s4, %s240
      %s242 = smul.u32 2, %s21
      %p243 = scmp.lt.s32.totalorder %s20, 1
      %s244 = scalar_select %p243, %s20, 1
      %p245 = scmp.lt.s32.totalorder %s242, 1
      %s246 = scalar_select %p245, %s242, 1
      %s247 = smul.addr %s244, 2
      %s248 = sadd.s32 %s246, %s247
      %s249 = smul.addr %s248, 4
      %s250 = scalar_lea.vmem %s0, %s249
      %s251 = smul.u32 2, %s21
      %s252 = smul.u32 8, %s20
      %s253 = smul.u32 32, %s21
      %p254 = scmp.lt.s32.totalorder %s252, 15
      %s255 = scalar_select %p254, %s252, 15
      %p256 = scmp.lt.s32.totalorder %s253, 31
      %s257 = scalar_select %p256, %s253, 31
      %s258 = smul.addr %s257, 8
      %s259 = smul.addr %s255, 256
      %s260 = sadd.s32 %s258, %s259
      %s261 = smul.addr %s260, 4
      %s262 = scalar_lea.vmem %s1, %s261
      %s263 = smul.u32 8, %s20
      %s264 = smul.u32 32, %s21
      %p265 = scmp.lt.s32.totalorder %s20, 1
      %s266 = scalar_select %p265, %s20, 1
      %s267 = smul.addr %s266, 8
      %s268 = scalar_lea.vmem %s4, %s267
      %p269 = scmp.eq.s32.totalorder %s21, 0
      // Predicated region
      $region37: #{tpu_custom_call.1} parent=35 // pred_check
        %p270 = pneg %p269
      $region38: #{tpu_custom_call.1} parent=35 // pred_check_branch
        %272 = sbr.rel (%p270) target = $region40
      $region39: #{tpu_custom_call.1} parent=35 // pred_region
        %273 = vst [vmem:[#allocation2] sm:$0xff] 0.0
        %274 = vst [vmem:[#allocation2 + $0x8] sm:$0xff] 0.0
        %275 = vst [vmem:[#allocation2 + $0x10] sm:$0xff] 0.0
        %276 = vst [vmem:[#allocation2 + $0x18] sm:$0xff] 0.0
        %277 = vst [vmem:[#allocation2 + $0x20] sm:$0xff] 0.0
        %278 = vst [vmem:[#allocation2 + $0x28] sm:$0xff] 0.0
        %279 = vst [vmem:[#allocation2 + $0x30] sm:$0xff] 0.0
        %vm280 = vcmask 523264
        %281 = vst.msk [vmem:[#allocation2 + $0x38] sm:$0xff] %vm280, 0.0
        %vm282 = vcmask 7168
        %283 = vst.msk [vmem:[#allocation3] sm:$0xff] %vm282, 0.0
      $region40: #{tpu_custom_call.1} parent=35 // pred_fallthru
        _
      %v284 = vld [vmem:[%s250] sm:$0xff]
      %v285 = vld [vmem:[%s262] sm:$0xff]
      %v286 = vld [vmem:[%s262 + $0x8] sm:$0xff]
      %v287 = vld [vmem:[%s262 + $0x10] sm:$0xff]
      %v288 = vld [vmem:[%s262 + $0x18] sm:$0xff]
      %v289 = vld [vmem:[%s262 + $0x20] sm:$0xff]
      %v290 = vld [vmem:[%s262 + $0x28] sm:$0xff]
      %v291 = vld [vmem:[%s262 + $0x30] sm:$0xff]
      %v292 = vld [vmem:[%s262 + $0x38] sm:$0xff]
      %v293 = vld [vmem:[%s262 + $0x40] sm:$0xff]
      %v294 = vld [vmem:[%s262 + $0x48] sm:$0xff]
      %v295 = vld [vmem:[%s262 + $0x50] sm:$0xff]
      %v296 = vld [vmem:[%s262 + $0x58] sm:$0xff]
      %v297 = vld [vmem:[%s262 + $0x60] sm:$0xff]
      %v298 = vld [vmem:[%s262 + $0x68] sm:$0xff]
      %v299 = vld [vmem:[%s262 + $0x70] sm:$0xff]
      %v300 = vld [vmem:[%s262 + $0x78] sm:$0xff]
      %v301 = vld [vmem:[%s262 + $0x80] sm:$0xff]
      %v302 = vld [vmem:[%s262 + $0x88] sm:$0xff]
      %v303 = vld [vmem:[%s262 + $0x90] sm:$0xff]
      %v304 = vld [vmem:[%s262 + $0x98] sm:$0xff]
      %v305 = vld [vmem:[%s262 + $0xa0] sm:$0xff]
      %v306 = vld [vmem:[%s262 + $0xa8] sm:$0xff]
      %v307 = vld [vmem:[%s262 + $0xb0] sm:$0xff]
      %v308 = vld [vmem:[%s262 + $0xb8] sm:$0xff]
      %v309 = vld [vmem:[%s262 + $0xc0] sm:$0xff]
      %v310 = vld [vmem:[%s262 + $0xc8] sm:$0xff]
      %v311 = vld [vmem:[%s262 + $0xd0] sm:$0xff]
      %v312 = vld [vmem:[%s262 + $0xd8] sm:$0xff]
      %v313 = vld [vmem:[%s262 + $0xe0] sm:$0xff]
      %v314 = vld [vmem:[%s262 + $0xe8] sm:$0xff]
      %v315 = vld [vmem:[%s262 + $0xf0] sm:$0xff]
      %v316 = vld [vmem:[%s262 + $0xf8] sm:$0xff]
      %v317 = vld [vmem:[%s262 + $0x100] sm:$0xff]
      %v318 = vld [vmem:[%s262 + $0x108] sm:$0xff]
      %v319 = vld [vmem:[%s262 + $0x110] sm:$0xff]
      %v320 = vld [vmem:[%s262 + $0x118] sm:$0xff]
      %v321 = vld [vmem:[%s262 + $0x120] sm:$0xff]
      %v322 = vld [vmem:[%s262 + $0x128] sm:$0xff]
      %v323 = vld [vmem:[%s262 + $0x130] sm:$0xff]
      %v324 = vld [vmem:[%s262 + $0x138] sm:$0xff]
      %v325 = vld [vmem:[%s262 + $0x140] sm:$0xff]
      %v326 = vld [vmem:[%s262 + $0x148] sm:$0xff]
      %v327 = vld [vmem:[%s262 + $0x150] sm:$0xff]
      %v328 = vld [vmem:[%s262 + $0x158] sm:$0xff]
      %v329 = vld [vmem:[%s262 + $0x160] sm:$0xff]
      %v330 = vld [vmem:[%s262 + $0x168] sm:$0xff]
      %v331 = vld [vmem:[%s262 + $0x170] sm:$0xff]
      %v332 = vld [vmem:[%s262 + $0x178] sm:$0xff]
      %v333 = vld [vmem:[%s262 + $0x180] sm:$0xff]
      %v334 = vld [vmem:[%s262 + $0x188] sm:$0xff]
      %v335 = vld [vmem:[%s262 + $0x190] sm:$0xff]
      %v336 = vld [vmem:[%s262 + $0x198] sm:$0xff]
      %v337 = vld [vmem:[%s262 + $0x1a0] sm:$0xff]
      %v338 = vld [vmem:[%s262 + $0x1a8] sm:$0xff]
      %v339 = vld [vmem:[%s262 + $0x1b0] sm:$0xff]
      %v340 = vld [vmem:[%s262 + $0x1b8] sm:$0xff]
      %v341 = vld [vmem:[%s262 + $0x1c0] sm:$0xff]
      %v342 = vld [vmem:[%s262 + $0x1c8] sm:$0xff]
      %v343 = vld [vmem:[%s262 + $0x1d0] sm:$0xff]
      %v344 = vld [vmem:[%s262 + $0x1d8] sm:$0xff]
      %v345 = vld [vmem:[%s262 + $0x1e0] sm:$0xff]
      %v346 = vld [vmem:[%s262 + $0x1e8] sm:$0xff]
      %v347 = vld [vmem:[%s262 + $0x1f0] sm:$0xff]
      %v348 = vld [vmem:[%s262 + $0x1f8] sm:$0xff]
      %v349 = vld [vmem:[%s262 + $0x200] sm:$0xff]
      %v350 = vld [vmem:[%s262 + $0x208] sm:$0xff]
      %v351 = vld [vmem:[%s262 + $0x210] sm:$0xff]
      %v352 = vld [vmem:[%s262 + $0x218] sm:$0xff]
      %v353 = vld [vmem:[%s262 + $0x220] sm:$0xff]
      %v354 = vld [vmem:[%s262 + $0x228] sm:$0xff]
      %v355 = vld [vmem:[%s262 + $0x230] sm:$0xff]
      %v356 = vld [vmem:[%s262 + $0x238] sm:$0xff]
      %v357 = vld [vmem:[%s262 + $0x240] sm:$0xff]
      %v358 = vld [vmem:[%s262 + $0x248] sm:$0xff]
      %v359 = vld [vmem:[%s262 + $0x250] sm:$0xff]
      %v360 = vld [vmem:[%s262 + $0x258] sm:$0xff]
      %v361 = vld [vmem:[%s262 + $0x260] sm:$0xff]
      %v362 = vld [vmem:[%s262 + $0x268] sm:$0xff]
      %v363 = vld [vmem:[%s262 + $0x270] sm:$0xff]
      %v364 = vld [vmem:[%s262 + $0x278] sm:$0xff]
      %v365 = vld [vmem:[%s262 + $0x280] sm:$0xff]
      %v366 = vld [vmem:[%s262 + $0x288] sm:$0xff]
      %v367 = vld [vmem:[%s262 + $0x290] sm:$0xff]
      %v368 = vld [vmem:[%s262 + $0x298] sm:$0xff]
      %v369 = vld [vmem:[%s262 + $0x2a0] sm:$0xff]
      %v370 = vld [vmem:[%s262 + $0x2a8] sm:$0xff]
      %v371 = vld [vmem:[%s262 + $0x2b0] sm:$0xff]
      %v372 = vld [vmem:[%s262 + $0x2b8] sm:$0xff]
      %v373 = vld [vmem:[%s262 + $0x2c0] sm:$0xff]
      %v374 = vld [vmem:[%s262 + $0x2c8] sm:$0xff]
      %v375 = vld [vmem:[%s262 + $0x2d0] sm:$0xff]
      %v376 = vld [vmem:[%s262 + $0x2d8] sm:$0xff]
      %v377 = vld [vmem:[%s262 + $0x2e0] sm:$0xff]
      %v378 = vld [vmem:[%s262 + $0x2e8] sm:$0xff]
      %v379 = vld [vmem:[%s262 + $0x2f0] sm:$0xff]
      %v380 = vld [vmem:[%s262 + $0x2f8] sm:$0xff]
      %v381 = vld [vmem:[%s262 + $0x300] sm:$0xff]
      %v382 = vld [vmem:[%s262 + $0x308] sm:$0xff]
      %v383 = vld [vmem:[%s262 + $0x310] sm:$0xff]
      %v384 = vld [vmem:[%s262 + $0x318] sm:$0xff]
      %v385 = vld [vmem:[%s262 + $0x320] sm:$0xff]
      %v386 = vld [vmem:[%s262 + $0x328] sm:$0xff]
      %v387 = vld [vmem:[%s262 + $0x330] sm:$0xff]
      %v388 = vld [vmem:[%s262 + $0x338] sm:$0xff]
      %v389 = vld [vmem:[%s262 + $0x340] sm:$0xff]
      %v390 = vld [vmem:[%s262 + $0x348] sm:$0xff]
      %v391 = vld [vmem:[%s262 + $0x350] sm:$0xff]
      %v392 = vld [vmem:[%s262 + $0x358] sm:$0xff]
      %v393 = vld [vmem:[%s262 + $0x360] sm:$0xff]
      %v394 = vld [vmem:[%s262 + $0x368] sm:$0xff]
      %v395 = vld [vmem:[%s262 + $0x370] sm:$0xff]
      %v396 = vld [vmem:[%s262 + $0x378] sm:$0xff]
      %v397 = vld [vmem:[%s262 + $0x380] sm:$0xff]
      %v398 = vld [vmem:[%s262 + $0x388] sm:$0xff]
      %v399 = vld [vmem:[%s262 + $0x390] sm:$0xff]
      %v400 = vld [vmem:[%s262 + $0x398] sm:$0xff]
      %v401 = vld [vmem:[%s262 + $0x3a0] sm:$0xff]
      %v402 = vld [vmem:[%s262 + $0x3a8] sm:$0xff]
      %v403 = vld [vmem:[%s262 + $0x3b0] sm:$0xff]
      %v404 = vld [vmem:[%s262 + $0x3b8] sm:$0xff]
      %v405 = vld [vmem:[%s262 + $0x3c0] sm:$0xff]
      %v406 = vld [vmem:[%s262 + $0x3c8] sm:$0xff]
      %v407 = vld [vmem:[%s262 + $0x3d0] sm:$0xff]
      %v408 = vld [vmem:[%s262 + $0x3d8] sm:$0xff]
      %v409 = vld [vmem:[%s262 + $0x3e0] sm:$0xff]
      %v410 = vld [vmem:[%s262 + $0x3e8] sm:$0xff]
      %v411 = vld [vmem:[%s262 + $0x3f0] sm:$0xff]
      %v412 = vld [vmem:[%s262 + $0x3f8] sm:$0xff]
      %v413 = vld [vmem:[%s262 + $0x400] sm:$0xff]
      %v414 = vld [vmem:[%s262 + $0x408] sm:$0xff]
      %v415 = vld [vmem:[%s262 + $0x410] sm:$0xff]
      %v416 = vld [vmem:[%s262 + $0x418] sm:$0xff]
      %v417 = vld [vmem:[%s262 + $0x420] sm:$0xff]
      %v418 = vld [vmem:[%s262 + $0x428] sm:$0xff]
      %v419 = vld [vmem:[%s262 + $0x430] sm:$0xff]
      %v420 = vld [vmem:[%s262 + $0x438] sm:$0xff]
      %v421 = vld [vmem:[%s262 + $0x440] sm:$0xff]
      %v422 = vld [vmem:[%s262 + $0x448] sm:$0xff]
      %v423 = vld [vmem:[%s262 + $0x450] sm:$0xff]
      %v424 = vld [vmem:[%s262 + $0x458] sm:$0xff]
      %v425 = vld [vmem:[%s262 + $0x460] sm:$0xff]
      %v426 = vld [vmem:[%s262 + $0x468] sm:$0xff]
      %v427 = vld [vmem:[%s262 + $0x470] sm:$0xff]
      %v428 = vld [vmem:[%s262 + $0x478] sm:$0xff]
      %v429 = vld [vmem:[%s262 + $0x480] sm:$0xff]
      %v430 = vld [vmem:[%s262 + $0x488] sm:$0xff]
      %v431 = vld [vmem:[%s262 + $0x490] sm:$0xff]
      %v432 = vld [vmem:[%s262 + $0x498] sm:$0xff]
      %v433 = vld [vmem:[%s262 + $0x4a0] sm:$0xff]
      %v434 = vld [vmem:[%s262 + $0x4a8] sm:$0xff]
      %v435 = vld [vmem:[%s262 + $0x4b0] sm:$0xff]
      %v436 = vld [vmem:[%s262 + $0x4b8] sm:$0xff]
      %v437 = vld [vmem:[%s262 + $0x4c0] sm:$0xff]
      %v438 = vld [vmem:[%s262 + $0x4c8] sm:$0xff]
      %v439 = vld [vmem:[%s262 + $0x4d0] sm:$0xff]
      %v440 = vld [vmem:[%s262 + $0x4d8] sm:$0xff]
      %v441 = vld [vmem:[%s262 + $0x4e0] sm:$0xff]
      %v442 = vld [vmem:[%s262 + $0x4e8] sm:$0xff]
      %v443 = vld [vmem:[%s262 + $0x4f0] sm:$0xff]
      %v444 = vld [vmem:[%s262 + $0x4f8] sm:$0xff]
      %v445 = vld [vmem:[%s262 + $0x500] sm:$0xff]
      %v446 = vld [vmem:[%s262 + $0x508] sm:$0xff]
      %v447 = vld [vmem:[%s262 + $0x510] sm:$0xff]
      %v448 = vld [vmem:[%s262 + $0x518] sm:$0xff]
      %v449 = vld [vmem:[%s262 + $0x520] sm:$0xff]
      %v450 = vld [vmem:[%s262 + $0x528] sm:$0xff]
      %v451 = vld [vmem:[%s262 + $0x530] sm:$0xff]
      %v452 = vld [vmem:[%s262 + $0x538] sm:$0xff]
      %v453 = vld [vmem:[%s262 + $0x540] sm:$0xff]
      %v454 = vld [vmem:[%s262 + $0x548] sm:$0xff]
      %v455 = vld [vmem:[%s262 + $0x550] sm:$0xff]
      %v456 = vld [vmem:[%s262 + $0x558] sm:$0xff]
      %v457 = vld [vmem:[%s262 + $0x560] sm:$0xff]
      %v458 = vld [vmem:[%s262 + $0x568] sm:$0xff]
      %v459 = vld [vmem:[%s262 + $0x570] sm:$0xff]
      %v460 = vld [vmem:[%s262 + $0x578] sm:$0xff]
      %v461 = vld [vmem:[%s262 + $0x580] sm:$0xff]
      %v462 = vld [vmem:[%s262 + $0x588] sm:$0xff]
      %v463 = vld [vmem:[%s262 + $0x590] sm:$0xff]
      %v464 = vld [vmem:[%s262 + $0x598] sm:$0xff]
      %v465 = vld [vmem:[%s262 + $0x5a0] sm:$0xff]
      %v466 = vld [vmem:[%s262 + $0x5a8] sm:$0xff]
      %v467 = vld [vmem:[%s262 + $0x5b0] sm:$0xff]
      %v468 = vld [vmem:[%s262 + $0x5b8] sm:$0xff]
      %v469 = vld [vmem:[%s262 + $0x5c0] sm:$0xff]
      %v470 = vld [vmem:[%s262 + $0x5c8] sm:$0xff]
      %v471 = vld [vmem:[%s262 + $0x5d0] sm:$0xff]
      %v472 = vld [vmem:[%s262 + $0x5d8] sm:$0xff]
      %v473 = vld [vmem:[%s262 + $0x5e0] sm:$0xff]
      %v474 = vld [vmem:[%s262 + $0x5e8] sm:$0xff]
      %v475 = vld [vmem:[%s262 + $0x5f0] sm:$0xff]
      %v476 = vld [vmem:[%s262 + $0x5f8] sm:$0xff]
      %v477 = vld [vmem:[%s262 + $0x600] sm:$0xff]
      %v478 = vld [vmem:[%s262 + $0x608] sm:$0xff]
      %v479 = vld [vmem:[%s262 + $0x610] sm:$0xff]
      %v480 = vld [vmem:[%s262 + $0x618] sm:$0xff]
      %v481 = vld [vmem:[%s262 + $0x620] sm:$0xff]
      %v482 = vld [vmem:[%s262 + $0x628] sm:$0xff]
      %v483 = vld [vmem:[%s262 + $0x630] sm:$0xff]
      %v484 = vld [vmem:[%s262 + $0x638] sm:$0xff]
      %v485 = vld [vmem:[%s262 + $0x640] sm:$0xff]
      %v486 = vld [vmem:[%s262 + $0x648] sm:$0xff]
      %v487 = vld [vmem:[%s262 + $0x650] sm:$0xff]
      %v488 = vld [vmem:[%s262 + $0x658] sm:$0xff]
      %v489 = vld [vmem:[%s262 + $0x660] sm:$0xff]
      %v490 = vld [vmem:[%s262 + $0x668] sm:$0xff]
      %v491 = vld [vmem:[%s262 + $0x670] sm:$0xff]
      %v492 = vld [vmem:[%s262 + $0x678] sm:$0xff]
      %v493 = vld [vmem:[%s262 + $0x680] sm:$0xff]
      %v494 = vld [vmem:[%s262 + $0x688] sm:$0xff]
      %v495 = vld [vmem:[%s262 + $0x690] sm:$0xff]
      %v496 = vld [vmem:[%s262 + $0x698] sm:$0xff]
      %v497 = vld [vmem:[%s262 + $0x6a0] sm:$0xff]
      %v498 = vld [vmem:[%s262 + $0x6a8] sm:$0xff]
      %v499 = vld [vmem:[%s262 + $0x6b0] sm:$0xff]
      %v500 = vld [vmem:[%s262 + $0x6b8] sm:$0xff]
      %v501 = vld [vmem:[%s262 + $0x6c0] sm:$0xff]
      %v502 = vld [vmem:[%s262 + $0x6c8] sm:$0xff]
      %v503 = vld [vmem:[%s262 + $0x6d0] sm:$0xff]
      %v504 = vld [vmem:[%s262 + $0x6d8] sm:$0xff]
      %v505 = vld [vmem:[%s262 + $0x6e0] sm:$0xff]
      %v506 = vld [vmem:[%s262 + $0x6e8] sm:$0xff]
      %v507 = vld [vmem:[%s262 + $0x6f0] sm:$0xff]
      %v508 = vld [vmem:[%s262 + $0x6f8] sm:$0xff]
      %v509 = vld [vmem:[%s262 + $0x700] sm:$0xff]
      %v510 = vld [vmem:[%s262 + $0x708] sm:$0xff]
      %v511 = vld [vmem:[%s262 + $0x710] sm:$0xff]
      %v512 = vld [vmem:[%s262 + $0x718] sm:$0xff]
      %v513 = vld [vmem:[%s262 + $0x720] sm:$0xff]
      %v514 = vld [vmem:[%s262 + $0x728] sm:$0xff]
      %v515 = vld [vmem:[%s262 + $0x730] sm:$0xff]
      %v516 = vld [vmem:[%s262 + $0x738] sm:$0xff]
      %v517 = vld [vmem:[%s262 + $0x740] sm:$0xff]
      %v518 = vld [vmem:[%s262 + $0x748] sm:$0xff]
      %v519 = vld [vmem:[%s262 + $0x750] sm:$0xff]
      %v520 = vld [vmem:[%s262 + $0x758] sm:$0xff]
      %v521 = vld [vmem:[%s262 + $0x760] sm:$0xff]
      %v522 = vld [vmem:[%s262 + $0x768] sm:$0xff]
      %v523 = vld [vmem:[%s262 + $0x770] sm:$0xff]
      %v524 = vld [vmem:[%s262 + $0x778] sm:$0xff]
      %v525 = vld [vmem:[%s262 + $0x780] sm:$0xff]
      %v526 = vld [vmem:[%s262 + $0x788] sm:$0xff]
      %v527 = vld [vmem:[%s262 + $0x790] sm:$0xff]
      %v528 = vld [vmem:[%s262 + $0x798] sm:$0xff]
      %v529 = vld [vmem:[%s262 + $0x7a0] sm:$0xff]
      %v530 = vld [vmem:[%s262 + $0x7a8] sm:$0xff]
      %v531 = vld [vmem:[%s262 + $0x7b0] sm:$0xff]
      %v532 = vld [vmem:[%s262 + $0x7b8] sm:$0xff]
      %v533 = vld [vmem:[%s262 + $0x7c0] sm:$0xff]
      %v534 = vld [vmem:[%s262 + $0x7c8] sm:$0xff]
      %v535 = vld [vmem:[%s262 + $0x7d0] sm:$0xff]
      %v536 = vld [vmem:[%s262 + $0x7d8] sm:$0xff]
      %v537 = vld [vmem:[%s262 + $0x7e0] sm:$0xff]
      %v538 = vld [vmem:[%s262 + $0x7e8] sm:$0xff]
      %v539 = vld [vmem:[%s262 + $0x7f0] sm:$0xff]
      %v540 = vld [vmem:[%s262 + $0x7f8] sm:$0xff]
      %v541 = vld [vmem:[%s262 + $0x800] sm:$0xff]
      %v542 = vld [vmem:[%s262 + $0x808] sm:$0xff]
      %v543 = vld [vmem:[%s262 + $0x810] sm:$0xff]
      %v544 = vld [vmem:[%s262 + $0x818] sm:$0xff]
      %v545 = vld [vmem:[%s262 + $0x820] sm:$0xff]
      %v546 = vld [vmem:[%s262 + $0x828] sm:$0xff]
      %v547 = vld [vmem:[%s262 + $0x830] sm:$0xff]
      %v548 = vld [vmem:[%s262 + $0x838] sm:$0xff]
      %v549 = vld [vmem:[%s262 + $0x840] sm:$0xff]
      %v550 = vld [vmem:[%s262 + $0x848] sm:$0xff]
      %v551 = vld [vmem:[%s262 + $0x850] sm:$0xff]
      %v552 = vld [vmem:[%s262 + $0x858] sm:$0xff]
      %v553 = vld [vmem:[%s262 + $0x860] sm:$0xff]
      %v554 = vld [vmem:[%s262 + $0x868] sm:$0xff]
      %v555 = vld [vmem:[%s262 + $0x870] sm:$0xff]
      %v556 = vld [vmem:[%s262 + $0x878] sm:$0xff]
      %v557 = vld [vmem:[%s262 + $0x880] sm:$0xff]
      %v558 = vld [vmem:[%s262 + $0x888] sm:$0xff]
      %v559 = vld [vmem:[%s262 + $0x890] sm:$0xff]
      %v560 = vld [vmem:[%s262 + $0x898] sm:$0xff]
      %v561 = vld [vmem:[%s262 + $0x8a0] sm:$0xff]
      %v562 = vld [vmem:[%s262 + $0x8a8] sm:$0xff]
      %v563 = vld [vmem:[%s262 + $0x8b0] sm:$0xff]
      %v564 = vld [vmem:[%s262 + $0x8b8] sm:$0xff]
      %v565 = vld [vmem:[%s262 + $0x8c0] sm:$0xff]
      %v566 = vld [vmem:[%s262 + $0x8c8] sm:$0xff]
      %v567 = vld [vmem:[%s262 + $0x8d0] sm:$0xff]
      %v568 = vld [vmem:[%s262 + $0x8d8] sm:$0xff]
      %v569 = vld [vmem:[%s262 + $0x8e0] sm:$0xff]
      %v570 = vld [vmem:[%s262 + $0x8e8] sm:$0xff]
      %v571 = vld [vmem:[%s262 + $0x8f0] sm:$0xff]
      %v572 = vld [vmem:[%s262 + $0x8f8] sm:$0xff]
      %v573 = vld [vmem:[%s262 + $0x900] sm:$0xff]
      %v574 = vld [vmem:[%s262 + $0x908] sm:$0xff]
      %v575 = vld [vmem:[%s262 + $0x910] sm:$0xff]
      %v576 = vld [vmem:[%s262 + $0x918] sm:$0xff]
      %v577 = vld [vmem:[%s262 + $0x920] sm:$0xff]
      %v578 = vld [vmem:[%s262 + $0x928] sm:$0xff]
      %v579 = vld [vmem:[%s262 + $0x930] sm:$0xff]
      %v580 = vld [vmem:[%s262 + $0x938] sm:$0xff]
      %v581 = vld [vmem:[%s262 + $0x940] sm:$0xff]
      %v582 = vld [vmem:[%s262 + $0x948] sm:$0xff]
      %v583 = vld [vmem:[%s262 + $0x950] sm:$0xff]
      %v584 = vld [vmem:[%s262 + $0x958] sm:$0xff]
      %v585 = vld [vmem:[%s262 + $0x960] sm:$0xff]
      %v586 = vld [vmem:[%s262 + $0x968] sm:$0xff]
      %v587 = vld [vmem:[%s262 + $0x970] sm:$0xff]
      %v588 = vld [vmem:[%s262 + $0x978] sm:$0xff]
      %v589 = vld [vmem:[%s262 + $0x980] sm:$0xff]
      %v590 = vld [vmem:[%s262 + $0x988] sm:$0xff]
      %v591 = vld [vmem:[%s262 + $0x990] sm:$0xff]
      %v592 = vld [vmem:[%s262 + $0x998] sm:$0xff]
      %v593 = vld [vmem:[%s262 + $0x9a0] sm:$0xff]
      %v594 = vld [vmem:[%s262 + $0x9a8] sm:$0xff]
      %v595 = vld [vmem:[%s262 + $0x9b0] sm:$0xff]
      %v596 = vld [vmem:[%s262 + $0x9b8] sm:$0xff]
      %v597 = vld [vmem:[%s262 + $0x9c0] sm:$0xff]
      %v598 = vld [vmem:[%s262 + $0x9c8] sm:$0xff]
      %v599 = vld [vmem:[%s262 + $0x9d0] sm:$0xff]
      %v600 = vld [vmem:[%s262 + $0x9d8] sm:$0xff]
      %v601 = vld [vmem:[%s262 + $0x9e0] sm:$0xff]
      %v602 = vld [vmem:[%s262 + $0x9e8] sm:$0xff]
      %v603 = vld [vmem:[%s262 + $0x9f0] sm:$0xff]
      %v604 = vld [vmem:[%s262 + $0x9f8] sm:$0xff]
      %v605 = vld [vmem:[%s262 + $0xa00] sm:$0xff]
      %v606 = vld [vmem:[%s262 + $0xa08] sm:$0xff]
      %v607 = vld [vmem:[%s262 + $0xa10] sm:$0xff]
      %v608 = vld [vmem:[%s262 + $0xa18] sm:$0xff]
      %v609 = vld [vmem:[%s262 + $0xa20] sm:$0xff]
      %v610 = vld [vmem:[%s262 + $0xa28] sm:$0xff]
      %v611 = vld [vmem:[%s262 + $0xa30] sm:$0xff]
      %v612 = vld [vmem:[%s262 + $0xa38] sm:$0xff]
      %v613 = vld [vmem:[%s262 + $0xa40] sm:$0xff]
      %v614 = vld [vmem:[%s262 + $0xa48] sm:$0xff]
      %v615 = vld [vmem:[%s262 + $0xa50] sm:$0xff]
      %v616 = vld [vmem:[%s262 + $0xa58] sm:$0xff]
      %v617 = vld [vmem:[%s262 + $0xa60] sm:$0xff]
      %v618 = vld [vmem:[%s262 + $0xa68] sm:$0xff]
      %v619 = vld [vmem:[%s262 + $0xa70] sm:$0xff]
      %v620 = vld [vmem:[%s262 + $0xa78] sm:$0xff]
      %v621 = vld [vmem:[%s262 + $0xa80] sm:$0xff]
      %v622 = vld [vmem:[%s262 + $0xa88] sm:$0xff]
      %v623 = vld [vmem:[%s262 + $0xa90] sm:$0xff]
      %v624 = vld [vmem:[%s262 + $0xa98] sm:$0xff]
      %v625 = vld [vmem:[%s262 + $0xaa0] sm:$0xff]
      %v626 = vld [vmem:[%s262 + $0xaa8] sm:$0xff]
      %v627 = vld [vmem:[%s262 + $0xab0] sm:$0xff]
      %v628 = vld [vmem:[%s262 + $0xab8] sm:$0xff]
      %v629 = vld [vmem:[%s262 + $0xac0] sm:$0xff]
      %v630 = vld [vmem:[%s262 + $0xac8] sm:$0xff]
      %v631 = vld [vmem:[%s262 + $0xad0] sm:$0xff]
      %v632 = vld [vmem:[%s262 + $0xad8] sm:$0xff]
      %v633 = vld [vmem:[%s262 + $0xae0] sm:$0xff]
      %v634 = vld [vmem:[%s262 + $0xae8] sm:$0xff]
      %v635 = vld [vmem:[%s262 + $0xaf0] sm:$0xff]
      %v636 = vld [vmem:[%s262 + $0xaf8] sm:$0xff]
      %v637 = vld [vmem:[%s262 + $0xb00] sm:$0xff]
      %v638 = vld [vmem:[%s262 + $0xb08] sm:$0xff]
      %v639 = vld [vmem:[%s262 + $0xb10] sm:$0xff]
      %v640 = vld [vmem:[%s262 + $0xb18] sm:$0xff]
      %v641 = vld [vmem:[%s262 + $0xb20] sm:$0xff]
      %v642 = vld [vmem:[%s262 + $0xb28] sm:$0xff]
      %v643 = vld [vmem:[%s262 + $0xb30] sm:$0xff]
      %v644 = vld [vmem:[%s262 + $0xb38] sm:$0xff]
      %v645 = vld [vmem:[%s262 + $0xb40] sm:$0xff]
      %v646 = vld [vmem:[%s262 + $0xb48] sm:$0xff]
      %v647 = vld [vmem:[%s262 + $0xb50] sm:$0xff]
      %v648 = vld [vmem:[%s262 + $0xb58] sm:$0xff]
      %v649 = vld [vmem:[%s262 + $0xb60] sm:$0xff]
      %v650 = vld [vmem:[%s262 + $0xb68] sm:$0xff]
      %v651 = vld [vmem:[%s262 + $0xb70] sm:$0xff]
      %v652 = vld [vmem:[%s262 + $0xb78] sm:$0xff]
      %v653 = vld [vmem:[%s262 + $0xb80] sm:$0xff]
      %v654 = vld [vmem:[%s262 + $0xb88] sm:$0xff]
      %v655 = vld [vmem:[%s262 + $0xb90] sm:$0xff]
      %v656 = vld [vmem:[%s262 + $0xb98] sm:$0xff]
      %v657 = vld [vmem:[%s262 + $0xba0] sm:$0xff]
      %v658 = vld [vmem:[%s262 + $0xba8] sm:$0xff]
      %v659 = vld [vmem:[%s262 + $0xbb0] sm:$0xff]
      %v660 = vld [vmem:[%s262 + $0xbb8] sm:$0xff]
      %v661 = vld [vmem:[%s262 + $0xbc0] sm:$0xff]
      %v662 = vld [vmem:[%s262 + $0xbc8] sm:$0xff]
      %v663 = vld [vmem:[%s262 + $0xbd0] sm:$0xff]
      %v664 = vld [vmem:[%s262 + $0xbd8] sm:$0xff]
      %v665 = vld [vmem:[%s262 + $0xbe0] sm:$0xff]
      %v666 = vld [vmem:[%s262 + $0xbe8] sm:$0xff]
      %v667 = vld [vmem:[%s262 + $0xbf0] sm:$0xff]
      %v668 = vld [vmem:[%s262 + $0xbf8] sm:$0xff]
      %v669 = vld [vmem:[%s262 + $0xc00] sm:$0xff]
      %v670 = vld [vmem:[%s262 + $0xc08] sm:$0xff]
      %v671 = vld [vmem:[%s262 + $0xc10] sm:$0xff]
      %v672 = vld [vmem:[%s262 + $0xc18] sm:$0xff]
      %v673 = vld [vmem:[%s262 + $0xc20] sm:$0xff]
      %v674 = vld [vmem:[%s262 + $0xc28] sm:$0xff]
      %v675 = vld [vmem:[%s262 + $0xc30] sm:$0xff]
      %v676 = vld [vmem:[%s262 + $0xc38] sm:$0xff]
      %v677 = vld [vmem:[%s262 + $0xc40] sm:$0xff]
      %v678 = vld [vmem:[%s262 + $0xc48] sm:$0xff]
      %v679 = vld [vmem:[%s262 + $0xc50] sm:$0xff]
      %v680 = vld [vmem:[%s262 + $0xc58] sm:$0xff]
      %v681 = vld [vmem:[%s262 + $0xc60] sm:$0xff]
      %v682 = vld [vmem:[%s262 + $0xc68] sm:$0xff]
      %v683 = vld [vmem:[%s262 + $0xc70] sm:$0xff]
      %v684 = vld [vmem:[%s262 + $0xc78] sm:$0xff]
      %v685 = vld [vmem:[%s262 + $0xc80] sm:$0xff]
      %v686 = vld [vmem:[%s262 + $0xc88] sm:$0xff]
      %v687 = vld [vmem:[%s262 + $0xc90] sm:$0xff]
      %v688 = vld [vmem:[%s262 + $0xc98] sm:$0xff]
      %v689 = vld [vmem:[%s262 + $0xca0] sm:$0xff]
      %v690 = vld [vmem:[%s262 + $0xca8] sm:$0xff]
      %v691 = vld [vmem:[%s262 + $0xcb0] sm:$0xff]
      %v692 = vld [vmem:[%s262 + $0xcb8] sm:$0xff]
      %v693 = vld [vmem:[%s262 + $0xcc0] sm:$0xff]
      %v694 = vld [vmem:[%s262 + $0xcc8] sm:$0xff]
      %v695 = vld [vmem:[%s262 + $0xcd0] sm:$0xff]
      %v696 = vld [vmem:[%s262 + $0xcd8] sm:$0xff]
      %v697 = vld [vmem:[%s262 + $0xce0] sm:$0xff]
      %v698 = vld [vmem:[%s262 + $0xce8] sm:$0xff]
      %v699 = vld [vmem:[%s262 + $0xcf0] sm:$0xff]
      %v700 = vld [vmem:[%s262 + $0xcf8] sm:$0xff]
      %v701 = vld [vmem:[%s262 + $0xd00] sm:$0xff]
      %v702 = vld [vmem:[%s262 + $0xd08] sm:$0xff]
      %v703 = vld [vmem:[%s262 + $0xd10] sm:$0xff]
      %v704 = vld [vmem:[%s262 + $0xd18] sm:$0xff]
      %v705 = vld [vmem:[%s262 + $0xd20] sm:$0xff]
      %v706 = vld [vmem:[%s262 + $0xd28] sm:$0xff]
      %v707 = vld [vmem:[%s262 + $0xd30] sm:$0xff]
      %v708 = vld [vmem:[%s262 + $0xd38] sm:$0xff]
      %v709 = vld [vmem:[%s262 + $0xd40] sm:$0xff]
      %v710 = vld [vmem:[%s262 + $0xd48] sm:$0xff]
      %v711 = vld [vmem:[%s262 + $0xd50] sm:$0xff]
      %v712 = vld [vmem:[%s262 + $0xd58] sm:$0xff]
      %v713 = vld [vmem:[%s262 + $0xd60] sm:$0xff]
      %v714 = vld [vmem:[%s262 + $0xd68] sm:$0xff]
      %v715 = vld [vmem:[%s262 + $0xd70] sm:$0xff]
      %v716 = vld [vmem:[%s262 + $0xd78] sm:$0xff]
      %v717 = vld [vmem:[%s262 + $0xd80] sm:$0xff]
      %v718 = vld [vmem:[%s262 + $0xd88] sm:$0xff]
      %v719 = vld [vmem:[%s262 + $0xd90] sm:$0xff]
      %v720 = vld [vmem:[%s262 + $0xd98] sm:$0xff]
      %v721 = vld [vmem:[%s262 + $0xda0] sm:$0xff]
      %v722 = vld [vmem:[%s262 + $0xda8] sm:$0xff]
      %v723 = vld [vmem:[%s262 + $0xdb0] sm:$0xff]
      %v724 = vld [vmem:[%s262 + $0xdb8] sm:$0xff]
      %v725 = vld [vmem:[%s262 + $0xdc0] sm:$0xff]
      %v726 = vld [vmem:[%s262 + $0xdc8] sm:$0xff]
      %v727 = vld [vmem:[%s262 + $0xdd0] sm:$0xff]
      %v728 = vld [vmem:[%s262 + $0xdd8] sm:$0xff]
      %v729 = vld [vmem:[%s262 + $0xde0] sm:$0xff]
      %v730 = vld [vmem:[%s262 + $0xde8] sm:$0xff]
      %v731 = vld [vmem:[%s262 + $0xdf0] sm:$0xff]
      %v732 = vld [vmem:[%s262 + $0xdf8] sm:$0xff]
      %v733 = vld [vmem:[%s262 + $0xe00] sm:$0xff]
      %v734 = vld [vmem:[%s262 + $0xe08] sm:$0xff]
      %v735 = vld [vmem:[%s262 + $0xe10] sm:$0xff]
      %v736 = vld [vmem:[%s262 + $0xe18] sm:$0xff]
      %v737 = vld [vmem:[%s262 + $0xe20] sm:$0xff]
      %v738 = vld [vmem:[%s262 + $0xe28] sm:$0xff]
      %v739 = vld [vmem:[%s262 + $0xe30] sm:$0xff]
      %v740 = vld [vmem:[%s262 + $0xe38] sm:$0xff]
      %v741 = vld [vmem:[%s262 + $0xe40] sm:$0xff]
      %v742 = vld [vmem:[%s262 + $0xe48] sm:$0xff]
      %v743 = vld [vmem:[%s262 + $0xe50] sm:$0xff]
      %v744 = vld [vmem:[%s262 + $0xe58] sm:$0xff]
      %v745 = vld [vmem:[%s262 + $0xe60] sm:$0xff]
      %v746 = vld [vmem:[%s262 + $0xe68] sm:$0xff]
      %v747 = vld [vmem:[%s262 + $0xe70] sm:$0xff]
      %v748 = vld [vmem:[%s262 + $0xe78] sm:$0xff]
      %v749 = vld [vmem:[%s262 + $0xe80] sm:$0xff]
      %v750 = vld [vmem:[%s262 + $0xe88] sm:$0xff]
      %v751 = vld [vmem:[%s262 + $0xe90] sm:$0xff]
      %v752 = vld [vmem:[%s262 + $0xe98] sm:$0xff]
      %v753 = vld [vmem:[%s262 + $0xea0] sm:$0xff]
      %v754 = vld [vmem:[%s262 + $0xea8] sm:$0xff]
      %v755 = vld [vmem:[%s262 + $0xeb0] sm:$0xff]
      %v756 = vld [vmem:[%s262 + $0xeb8] sm:$0xff]
      %v757 = vld [vmem:[%s262 + $0xec0] sm:$0xff]
      %v758 = vld [vmem:[%s262 + $0xec8] sm:$0xff]
      %v759 = vld [vmem:[%s262 + $0xed0] sm:$0xff]
      %v760 = vld [vmem:[%s262 + $0xed8] sm:$0xff]
      %v761 = vld [vmem:[%s262 + $0xee0] sm:$0xff]
      %v762 = vld [vmem:[%s262 + $0xee8] sm:$0xff]
      %v763 = vld [vmem:[%s262 + $0xef0] sm:$0xff]
      %v764 = vld [vmem:[%s262 + $0xef8] sm:$0xff]
      %v765 = vld [vmem:[%s262 + $0xf00] sm:$0xff]
      %v766 = vld [vmem:[%s262 + $0xf08] sm:$0xff]
      %v767 = vld [vmem:[%s262 + $0xf10] sm:$0xff]
      %v768 = vld [vmem:[%s262 + $0xf18] sm:$0xff]
      %v769 = vld [vmem:[%s262 + $0xf20] sm:$0xff]
      %v770 = vld [vmem:[%s262 + $0xf28] sm:$0xff]
      %v771 = vld [vmem:[%s262 + $0xf30] sm:$0xff]
      %v772 = vld [vmem:[%s262 + $0xf38] sm:$0xff]
      %v773 = vld [vmem:[%s262 + $0xf40] sm:$0xff]
      %v774 = vld [vmem:[%s262 + $0xf48] sm:$0xff]
      %v775 = vld [vmem:[%s262 + $0xf50] sm:$0xff]
      %v776 = vld [vmem:[%s262 + $0xf58] sm:$0xff]
      %v777 = vld [vmem:[%s262 + $0xf60] sm:$0xff]
      %v778 = vld [vmem:[%s262 + $0xf68] sm:$0xff]
      %v779 = vld [vmem:[%s262 + $0xf70] sm:$0xff]
      %v780 = vld [vmem:[%s262 + $0xf78] sm:$0xff]
      %v781 = vld [vmem:[%s262 + $0xf80] sm:$0xff]
      %v782 = vld [vmem:[%s262 + $0xf88] sm:$0xff]
      %v783 = vld [vmem:[%s262 + $0xf90] sm:$0xff]
      %v784 = vld [vmem:[%s262 + $0xf98] sm:$0xff]
      %v785 = vld [vmem:[%s262 + $0xfa0] sm:$0xff]
      %v786 = vld [vmem:[%s262 + $0xfa8] sm:$0xff]
      %v787 = vld [vmem:[%s262 + $0xfb0] sm:$0xff]
      %v788 = vld [vmem:[%s262 + $0xfb8] sm:$0xff]
      %v789 = vld [vmem:[%s262 + $0xfc0] sm:$0xff]
      %v790 = vld [vmem:[%s262 + $0xfc8] sm:$0xff]
      %v791 = vld [vmem:[%s262 + $0xfd0] sm:$0xff]
      %v792 = vld [vmem:[%s262 + $0xfd8] sm:$0xff]
      %v793 = vld [vmem:[%s262 + $0xfe0] sm:$0xff]
      %v794 = vld [vmem:[%s262 + $0xfe8] sm:$0xff]
      %v795 = vld [vmem:[%s262 + $0xff0] sm:$0xff]
      %v796 = vld [vmem:[%s262 + $0xff8] sm:$0xff]
      %v797 = vld [vmem:[%s262 + $0x1000] sm:$0xff]
      %v798 = vld [vmem:[%s262 + $0x1008] sm:$0xff]
      %v799 = vld [vmem:[%s262 + $0x1010] sm:$0xff]
      %v800 = vld [vmem:[%s262 + $0x1018] sm:$0xff]
      %v801 = vld [vmem:[%s262 + $0x1020] sm:$0xff]
      %v802 = vld [vmem:[%s262 + $0x1028] sm:$0xff]
      %v803 = vld [vmem:[%s262 + $0x1030] sm:$0xff]
      %v804 = vld [vmem:[%s262 + $0x1038] sm:$0xff]
      %v805 = vld [vmem:[%s262 + $0x1040] sm:$0xff]
      %v806 = vld [vmem:[%s262 + $0x1048] sm:$0xff]
      %v807 = vld [vmem:[%s262 + $0x1050] sm:$0xff]
      %v808 = vld [vmem:[%s262 + $0x1058] sm:$0xff]
      %v809 = vld [vmem:[%s262 + $0x1060] sm:$0xff]
      %v810 = vld [vmem:[%s262 + $0x1068] sm:$0xff]
      %v811 = vld [vmem:[%s262 + $0x1070] sm:$0xff]
      %v812 = vld [vmem:[%s262 + $0x1078] sm:$0xff]
      %v813 = vld [vmem:[%s262 + $0x1080] sm:$0xff]
      %v814 = vld [vmem:[%s262 + $0x1088] sm:$0xff]
      %v815 = vld [vmem:[%s262 + $0x1090] sm:$0xff]
      %v816 = vld [vmem:[%s262 + $0x1098] sm:$0xff]
      %v817 = vld [vmem:[%s262 + $0x10a0] sm:$0xff]
      %v818 = vld [vmem:[%s262 + $0x10a8] sm:$0xff]
      %v819 = vld [vmem:[%s262 + $0x10b0] sm:$0xff]
      %v820 = vld [vmem:[%s262 + $0x10b8] sm:$0xff]
      %v821 = vld [vmem:[%s262 + $0x10c0] sm:$0xff]
      %v822 = vld [vmem:[%s262 + $0x10c8] sm:$0xff]
      %v823 = vld [vmem:[%s262 + $0x10d0] sm:$0xff]
      %v824 = vld [vmem:[%s262 + $0x10d8] sm:$0xff]
      %v825 = vld [vmem:[%s262 + $0x10e0] sm:$0xff]
      %v826 = vld [vmem:[%s262 + $0x10e8] sm:$0xff]
      %v827 = vld [vmem:[%s262 + $0x10f0] sm:$0xff]
      %v828 = vld [vmem:[%s262 + $0x10f8] sm:$0xff]
      %v829 = vld [vmem:[%s262 + $0x1100] sm:$0xff]
      %v830 = vld [vmem:[%s262 + $0x1108] sm:$0xff]
      %v831 = vld [vmem:[%s262 + $0x1110] sm:$0xff]
      %v832 = vld [vmem:[%s262 + $0x1118] sm:$0xff]
      %v833 = vld [vmem:[%s262 + $0x1120] sm:$0xff]
      %v834 = vld [vmem:[%s262 + $0x1128] sm:$0xff]
      %v835 = vld [vmem:[%s262 + $0x1130] sm:$0xff]
      %v836 = vld [vmem:[%s262 + $0x1138] sm:$0xff]
      %v837 = vld [vmem:[%s262 + $0x1140] sm:$0xff]
      %v838 = vld [vmem:[%s262 + $0x1148] sm:$0xff]
      %v839 = vld [vmem:[%s262 + $0x1150] sm:$0xff]
      %v840 = vld [vmem:[%s262 + $0x1158] sm:$0xff]
      %v841 = vld [vmem:[%s262 + $0x1160] sm:$0xff]
      %v842 = vld [vmem:[%s262 + $0x1168] sm:$0xff]
      %v843 = vld [vmem:[%s262 + $0x1170] sm:$0xff]
      %v844 = vld [vmem:[%s262 + $0x1178] sm:$0xff]
      %v845 = vld [vmem:[%s262 + $0x1180] sm:$0xff]
      %v846 = vld [vmem:[%s262 + $0x1188] sm:$0xff]
      %v847 = vld [vmem:[%s262 + $0x1190] sm:$0xff]
      %v848 = vld [vmem:[%s262 + $0x1198] sm:$0xff]
      %v849 = vld [vmem:[%s262 + $0x11a0] sm:$0xff]
      %v850 = vld [vmem:[%s262 + $0x11a8] sm:$0xff]
      %v851 = vld [vmem:[%s262 + $0x11b0] sm:$0xff]
      %v852 = vld [vmem:[%s262 + $0x11b8] sm:$0xff]
      %v853 = vld [vmem:[%s262 + $0x11c0] sm:$0xff]
      %v854 = vld [vmem:[%s262 + $0x11c8] sm:$0xff]
      %v855 = vld [vmem:[%s262 + $0x11d0] sm:$0xff]
      %v856 = vld [vmem:[%s262 + $0x11d8] sm:$0xff]
      %v857 = vld [vmem:[%s262 + $0x11e0] sm:$0xff]
      %v858 = vld [vmem:[%s262 + $0x11e8] sm:$0xff]
      %v859 = vld [vmem:[%s262 + $0x11f0] sm:$0xff]
      %v860 = vld [vmem:[%s262 + $0x11f8] sm:$0xff]
      %v861 = vld [vmem:[%s262 + $0x1200] sm:$0xff]
      %v862 = vld [vmem:[%s262 + $0x1208] sm:$0xff]
      %v863 = vld [vmem:[%s262 + $0x1210] sm:$0xff]
      %v864 = vld [vmem:[%s262 + $0x1218] sm:$0xff]
      %v865 = vld [vmem:[%s262 + $0x1220] sm:$0xff]
      %v866 = vld [vmem:[%s262 + $0x1228] sm:$0xff]
      %v867 = vld [vmem:[%s262 + $0x1230] sm:$0xff]
      %v868 = vld [vmem:[%s262 + $0x1238] sm:$0xff]
      %v869 = vld [vmem:[%s262 + $0x1240] sm:$0xff]
      %v870 = vld [vmem:[%s262 + $0x1248] sm:$0xff]
      %v871 = vld [vmem:[%s262 + $0x1250] sm:$0xff]
      %v872 = vld [vmem:[%s262 + $0x1258] sm:$0xff]
      %v873 = vld [vmem:[%s262 + $0x1260] sm:$0xff]
      %v874 = vld [vmem:[%s262 + $0x1268] sm:$0xff]
      %v875 = vld [vmem:[%s262 + $0x1270] sm:$0xff]
      %v876 = vld [vmem:[%s262 + $0x1278] sm:$0xff]
      %v877 = vld [vmem:[%s262 + $0x1280] sm:$0xff]
      %v878 = vld [vmem:[%s262 + $0x1288] sm:$0xff]
      %v879 = vld [vmem:[%s262 + $0x1290] sm:$0xff]
      %v880 = vld [vmem:[%s262 + $0x1298] sm:$0xff]
      %v881 = vld [vmem:[%s262 + $0x12a0] sm:$0xff]
      %v882 = vld [vmem:[%s262 + $0x12a8] sm:$0xff]
      %v883 = vld [vmem:[%s262 + $0x12b0] sm:$0xff]
      %v884 = vld [vmem:[%s262 + $0x12b8] sm:$0xff]
      %v885 = vld [vmem:[%s262 + $0x12c0] sm:$0xff]
      %v886 = vld [vmem:[%s262 + $0x12c8] sm:$0xff]
      %v887 = vld [vmem:[%s262 + $0x12d0] sm:$0xff]
      %v888 = vld [vmem:[%s262 + $0x12d8] sm:$0xff]
      %v889 = vld [vmem:[%s262 + $0x12e0] sm:$0xff]
      %v890 = vld [vmem:[%s262 + $0x12e8] sm:$0xff]
      %v891 = vld [vmem:[%s262 + $0x12f0] sm:$0xff]
      %v892 = vld [vmem:[%s262 + $0x12f8] sm:$0xff]
      %v893 = vld [vmem:[%s262 + $0x1300] sm:$0xff]
      %v894 = vld [vmem:[%s262 + $0x1308] sm:$0xff]
      %v895 = vld [vmem:[%s262 + $0x1310] sm:$0xff]
      %v896 = vld [vmem:[%s262 + $0x1318] sm:$0xff]
      %v897 = vld [vmem:[%s262 + $0x1320] sm:$0xff]
      %v898 = vld [vmem:[%s262 + $0x1328] sm:$0xff]
      %v899 = vld [vmem:[%s262 + $0x1330] sm:$0xff]
      %v900 = vld [vmem:[%s262 + $0x1338] sm:$0xff]
      %v901 = vld [vmem:[%s262 + $0x1340] sm:$0xff]
      %v902 = vld [vmem:[%s262 + $0x1348] sm:$0xff]
      %v903 = vld [vmem:[%s262 + $0x1350] sm:$0xff]
      %v904 = vld [vmem:[%s262 + $0x1358] sm:$0xff]
      %v905 = vld [vmem:[%s262 + $0x1360] sm:$0xff]
      %v906 = vld [vmem:[%s262 + $0x1368] sm:$0xff]
      %v907 = vld [vmem:[%s262 + $0x1370] sm:$0xff]
      %v908 = vld [vmem:[%s262 + $0x1378] sm:$0xff]
      %v909 = vld [vmem:[%s262 + $0x1380] sm:$0xff]
      %v910 = vld [vmem:[%s262 + $0x1388] sm:$0xff]
      %v911 = vld [vmem:[%s262 + $0x1390] sm:$0xff]
      %v912 = vld [vmem:[%s262 + $0x1398] sm:$0xff]
      %v913 = vld [vmem:[%s262 + $0x13a0] sm:$0xff]
      %v914 = vld [vmem:[%s262 + $0x13a8] sm:$0xff]
      %v915 = vld [vmem:[%s262 + $0x13b0] sm:$0xff]
      %v916 = vld [vmem:[%s262 + $0x13b8] sm:$0xff]
      %v917 = vld [vmem:[%s262 + $0x13c0] sm:$0xff]
      %v918 = vld [vmem:[%s262 + $0x13c8] sm:$0xff]
      %v919 = vld [vmem:[%s262 + $0x13d0] sm:$0xff]
      %v920 = vld [vmem:[%s262 + $0x13d8] sm:$0xff]
      %v921 = vld [vmem:[%s262 + $0x13e0] sm:$0xff]
      %v922 = vld [vmem:[%s262 + $0x13e8] sm:$0xff]
      %v923 = vld [vmem:[%s262 + $0x13f0] sm:$0xff]
      %v924 = vld [vmem:[%s262 + $0x13f8] sm:$0xff]
      %v925 = vld [vmem:[%s262 + $0x1400] sm:$0xff]
      %v926 = vld [vmem:[%s262 + $0x1408] sm:$0xff]
      %v927 = vld [vmem:[%s262 + $0x1410] sm:$0xff]
      %v928 = vld [vmem:[%s262 + $0x1418] sm:$0xff]
      %v929 = vld [vmem:[%s262 + $0x1420] sm:$0xff]
      %v930 = vld [vmem:[%s262 + $0x1428] sm:$0xff]
      %v931 = vld [vmem:[%s262 + $0x1430] sm:$0xff]
      %v932 = vld [vmem:[%s262 + $0x1438] sm:$0xff]
      %v933 = vld [vmem:[%s262 + $0x1440] sm:$0xff]
      %v934 = vld [vmem:[%s262 + $0x1448] sm:$0xff]
      %v935 = vld [vmem:[%s262 + $0x1450] sm:$0xff]
      %v936 = vld [vmem:[%s262 + $0x1458] sm:$0xff]
      %v937 = vld [vmem:[%s262 + $0x1460] sm:$0xff]
      %v938 = vld [vmem:[%s262 + $0x1468] sm:$0xff]
      %v939 = vld [vmem:[%s262 + $0x1470] sm:$0xff]
      %v940 = vld [vmem:[%s262 + $0x1478] sm:$0xff]
      %v941 = vld [vmem:[%s262 + $0x1480] sm:$0xff]
      %v942 = vld [vmem:[%s262 + $0x1488] sm:$0xff]
      %v943 = vld [vmem:[%s262 + $0x1490] sm:$0xff]
      %v944 = vld [vmem:[%s262 + $0x1498] sm:$0xff]
      %v945 = vld [vmem:[%s262 + $0x14a0] sm:$0xff]
      %v946 = vld [vmem:[%s262 + $0x14a8] sm:$0xff]
      %v947 = vld [vmem:[%s262 + $0x14b0] sm:$0xff]
      %v948 = vld [vmem:[%s262 + $0x14b8] sm:$0xff]
      %v949 = vld [vmem:[%s262 + $0x14c0] sm:$0xff]
      %v950 = vld [vmem:[%s262 + $0x14c8] sm:$0xff]
      %v951 = vld [vmem:[%s262 + $0x14d0] sm:$0xff]
      %v952 = vld [vmem:[%s262 + $0x14d8] sm:$0xff]
      %v953 = vld [vmem:[%s262 + $0x14e0] sm:$0xff]
      %v954 = vld [vmem:[%s262 + $0x14e8] sm:$0xff]
      %v955 = vld [vmem:[%s262 + $0x14f0] sm:$0xff]
      %v956 = vld [vmem:[%s262 + $0x14f8] sm:$0xff]
      %v957 = vld [vmem:[%s262 + $0x1500] sm:$0xff]
      %v958 = vld [vmem:[%s262 + $0x1508] sm:$0xff]
      %v959 = vld [vmem:[%s262 + $0x1510] sm:$0xff]
      %v960 = vld [vmem:[%s262 + $0x1518] sm:$0xff]
      %v961 = vld [vmem:[%s262 + $0x1520] sm:$0xff]
      %v962 = vld [vmem:[%s262 + $0x1528] sm:$0xff]
      %v963 = vld [vmem:[%s262 + $0x1530] sm:$0xff]
      %v964 = vld [vmem:[%s262 + $0x1538] sm:$0xff]
      %v965 = vld [vmem:[%s262 + $0x1540] sm:$0xff]
      %v966 = vld [vmem:[%s262 + $0x1548] sm:$0xff]
      %v967 = vld [vmem:[%s262 + $0x1550] sm:$0xff]
      %v968 = vld [vmem:[%s262 + $0x1558] sm:$0xff]
      %v969 = vld [vmem:[%s262 + $0x1560] sm:$0xff]
      %v970 = vld [vmem:[%s262 + $0x1568] sm:$0xff]
      %v971 = vld [vmem:[%s262 + $0x1570] sm:$0xff]
      %v972 = vld [vmem:[%s262 + $0x1578] sm:$0xff]
      %v973 = vld [vmem:[%s262 + $0x1580] sm:$0xff]
      %v974 = vld [vmem:[%s262 + $0x1588] sm:$0xff]
      %v975 = vld [vmem:[%s262 + $0x1590] sm:$0xff]
      %v976 = vld [vmem:[%s262 + $0x1598] sm:$0xff]
      %v977 = vld [vmem:[%s262 + $0x15a0] sm:$0xff]
      %v978 = vld [vmem:[%s262 + $0x15a8] sm:$0xff]
      %v979 = vld [vmem:[%s262 + $0x15b0] sm:$0xff]
      %v980 = vld [vmem:[%s262 + $0x15b8] sm:$0xff]
      %v981 = vld [vmem:[%s262 + $0x15c0] sm:$0xff]
      %v982 = vld [vmem:[%s262 + $0x15c8] sm:$0xff]
      %v983 = vld [vmem:[%s262 + $0x15d0] sm:$0xff]
      %v984 = vld [vmem:[%s262 + $0x15d8] sm:$0xff]
      %v985 = vld [vmem:[%s262 + $0x15e0] sm:$0xff]
      %v986 = vld [vmem:[%s262 + $0x15e8] sm:$0xff]
      %v987 = vld [vmem:[%s262 + $0x15f0] sm:$0xff]
      %v988 = vld [vmem:[%s262 + $0x15f8] sm:$0xff]
      %v989 = vld [vmem:[%s262 + $0x1600] sm:$0xff]
      %v990 = vld [vmem:[%s262 + $0x1608] sm:$0xff]
      %v991 = vld [vmem:[%s262 + $0x1610] sm:$0xff]
      %v992 = vld [vmem:[%s262 + $0x1618] sm:$0xff]
      %v993 = vld [vmem:[%s262 + $0x1620] sm:$0xff]
      %v994 = vld [vmem:[%s262 + $0x1628] sm:$0xff]
      %v995 = vld [vmem:[%s262 + $0x1630] sm:$0xff]
      %v996 = vld [vmem:[%s262 + $0x1638] sm:$0xff]
      %v997 = vld [vmem:[%s262 + $0x1640] sm:$0xff]
      %v998 = vld [vmem:[%s262 + $0x1648] sm:$0xff]
      %v999 = vld [vmem:[%s262 + $0x1650] sm:$0xff]
      %v1000 = vld [vmem:[%s262 + $0x1658] sm:$0xff]
      %v1001 = vld [vmem:[%s262 + $0x1660] sm:$0xff]
      %v1002 = vld [vmem:[%s262 + $0x1668] sm:$0xff]
      %v1003 = vld [vmem:[%s262 + $0x1670] sm:$0xff]
      %v1004 = vld [vmem:[%s262 + $0x1678] sm:$0xff]
      %v1005 = vld [vmem:[%s262 + $0x1680] sm:$0xff]
      %v1006 = vld [vmem:[%s262 + $0x1688] sm:$0xff]
      %v1007 = vld [vmem:[%s262 + $0x1690] sm:$0xff]
      %v1008 = vld [vmem:[%s262 + $0x1698] sm:$0xff]
      %v1009 = vld [vmem:[%s262 + $0x16a0] sm:$0xff]
      %v1010 = vld [vmem:[%s262 + $0x16a8] sm:$0xff]
      %v1011 = vld [vmem:[%s262 + $0x16b0] sm:$0xff]
      %v1012 = vld [vmem:[%s262 + $0x16b8] sm:$0xff]
      %v1013 = vld [vmem:[%s262 + $0x16c0] sm:$0xff]
      %v1014 = vld [vmem:[%s262 + $0x16c8] sm:$0xff]
      %v1015 = vld [vmem:[%s262 + $0x16d0] sm:$0xff]
      %v1016 = vld [vmem:[%s262 + $0x16d8] sm:$0xff]
      %v1017 = vld [vmem:[%s262 + $0x16e0] sm:$0xff]
      %v1018 = vld [vmem:[%s262 + $0x16e8] sm:$0xff]
      %v1019 = vld [vmem:[%s262 + $0x16f0] sm:$0xff]
      %v1020 = vld [vmem:[%s262 + $0x16f8] sm:$0xff]
      %v1021 = vld [vmem:[%s262 + $0x1700] sm:$0xff]
      %v1022 = vld [vmem:[%s262 + $0x1708] sm:$0xff]
      %v1023 = vld [vmem:[%s262 + $0x1710] sm:$0xff]
      %v1024 = vld [vmem:[%s262 + $0x1718] sm:$0xff]
      %v1025 = vld [vmem:[%s262 + $0x1720] sm:$0xff]
      %v1026 = vld [vmem:[%s262 + $0x1728] sm:$0xff]
      %v1027 = vld [vmem:[%s262 + $0x1730] sm:$0xff]
      %v1028 = vld [vmem:[%s262 + $0x1738] sm:$0xff]
      %v1029 = vld [vmem:[%s262 + $0x1740] sm:$0xff]
      %v1030 = vld [vmem:[%s262 + $0x1748] sm:$0xff]
      %v1031 = vld [vmem:[%s262 + $0x1750] sm:$0xff]
      %v1032 = vld [vmem:[%s262 + $0x1758] sm:$0xff]
      %v1033 = vld [vmem:[%s262 + $0x1760] sm:$0xff]
      %v1034 = vld [vmem:[%s262 + $0x1768] sm:$0xff]
      %v1035 = vld [vmem:[%s262 + $0x1770] sm:$0xff]
      %v1036 = vld [vmem:[%s262 + $0x1778] sm:$0xff]
      %v1037 = vld [vmem:[%s262 + $0x1780] sm:$0xff]
      %v1038 = vld [vmem:[%s262 + $0x1788] sm:$0xff]
      %v1039 = vld [vmem:[%s262 + $0x1790] sm:$0xff]
      %v1040 = vld [vmem:[%s262 + $0x1798] sm:$0xff]
      %v1041 = vld [vmem:[%s262 + $0x17a0] sm:$0xff]
      %v1042 = vld [vmem:[%s262 + $0x17a8] sm:$0xff]
      %v1043 = vld [vmem:[%s262 + $0x17b0] sm:$0xff]
      %v1044 = vld [vmem:[%s262 + $0x17b8] sm:$0xff]
      %v1045 = vld [vmem:[%s262 + $0x17c0] sm:$0xff]
      %v1046 = vld [vmem:[%s262 + $0x17c8] sm:$0xff]
      %v1047 = vld [vmem:[%s262 + $0x17d0] sm:$0xff]
      %v1048 = vld [vmem:[%s262 + $0x17d8] sm:$0xff]
      %v1049 = vld [vmem:[%s262 + $0x17e0] sm:$0xff]
      %v1050 = vld [vmem:[%s262 + $0x17e8] sm:$0xff]
      %v1051 = vld [vmem:[%s262 + $0x17f0] sm:$0xff]
      %v1052 = vld [vmem:[%s262 + $0x17f8] sm:$0xff]
      %v1053 = vld [vmem:[%s262 + $0x1800] sm:$0xff]
      %v1054 = vld [vmem:[%s262 + $0x1808] sm:$0xff]
      %v1055 = vld [vmem:[%s262 + $0x1810] sm:$0xff]
      %v1056 = vld [vmem:[%s262 + $0x1818] sm:$0xff]
      %v1057 = vld [vmem:[%s262 + $0x1820] sm:$0xff]
      %v1058 = vld [vmem:[%s262 + $0x1828] sm:$0xff]
      %v1059 = vld [vmem:[%s262 + $0x1830] sm:$0xff]
      %v1060 = vld [vmem:[%s262 + $0x1838] sm:$0xff]
      %v1061 = vld [vmem:[%s262 + $0x1840] sm:$0xff]
      %v1062 = vld [vmem:[%s262 + $0x1848] sm:$0xff]
      %v1063 = vld [vmem:[%s262 + $0x1850] sm:$0xff]
      %v1064 = vld [vmem:[%s262 + $0x1858] sm:$0xff]
      %v1065 = vld [vmem:[%s262 + $0x1860] sm:$0xff]
      %v1066 = vld [vmem:[%s262 + $0x1868] sm:$0xff]
      %v1067 = vld [vmem:[%s262 + $0x1870] sm:$0xff]
      %v1068 = vld [vmem:[%s262 + $0x1878] sm:$0xff]
      %v1069 = vld [vmem:[%s262 + $0x1880] sm:$0xff]
      %v1070 = vld [vmem:[%s262 + $0x1888] sm:$0xff]
      %v1071 = vld [vmem:[%s262 + $0x1890] sm:$0xff]
      %v1072 = vld [vmem:[%s262 + $0x1898] sm:$0xff]
      %v1073 = vld [vmem:[%s262 + $0x18a0] sm:$0xff]
      %v1074 = vld [vmem:[%s262 + $0x18a8] sm:$0xff]
      %v1075 = vld [vmem:[%s262 + $0x18b0] sm:$0xff]
      %v1076 = vld [vmem:[%s262 + $0x18b8] sm:$0xff]
      %v1077 = vld [vmem:[%s262 + $0x18c0] sm:$0xff]
      %v1078 = vld [vmem:[%s262 + $0x18c8] sm:$0xff]
      %v1079 = vld [vmem:[%s262 + $0x18d0] sm:$0xff]
      %v1080 = vld [vmem:[%s262 + $0x18d8] sm:$0xff]
      %v1081 = vld [vmem:[%s262 + $0x18e0] sm:$0xff]
      %v1082 = vld [vmem:[%s262 + $0x18e8] sm:$0xff]
      %v1083 = vld [vmem:[%s262 + $0x18f0] sm:$0xff]
      %v1084 = vld [vmem:[%s262 + $0x18f8] sm:$0xff]
      %v1085 = vld [vmem:[%s262 + $0x1900] sm:$0xff]
      %v1086 = vld [vmem:[%s262 + $0x1908] sm:$0xff]
      %v1087 = vld [vmem:[%s262 + $0x1910] sm:$0xff]
      %v1088 = vld [vmem:[%s262 + $0x1918] sm:$0xff]
      %v1089 = vld [vmem:[%s262 + $0x1920] sm:$0xff]
      %v1090 = vld [vmem:[%s262 + $0x1928] sm:$0xff]
      %v1091 = vld [vmem:[%s262 + $0x1930] sm:$0xff]
      %v1092 = vld [vmem:[%s262 + $0x1938] sm:$0xff]
      %v1093 = vld [vmem:[%s262 + $0x1940] sm:$0xff]
      %v1094 = vld [vmem:[%s262 + $0x1948] sm:$0xff]
      %v1095 = vld [vmem:[%s262 + $0x1950] sm:$0xff]
      %v1096 = vld [vmem:[%s262 + $0x1958] sm:$0xff]
      %v1097 = vld [vmem:[%s262 + $0x1960] sm:$0xff]
      %v1098 = vld [vmem:[%s262 + $0x1968] sm:$0xff]
      %v1099 = vld [vmem:[%s262 + $0x1970] sm:$0xff]
      %v1100 = vld [vmem:[%s262 + $0x1978] sm:$0xff]
      %v1101 = vld [vmem:[%s262 + $0x1980] sm:$0xff]
      %v1102 = vld [vmem:[%s262 + $0x1988] sm:$0xff]
      %v1103 = vld [vmem:[%s262 + $0x1990] sm:$0xff]
      %v1104 = vld [vmem:[%s262 + $0x1998] sm:$0xff]
      %v1105 = vld [vmem:[%s262 + $0x19a0] sm:$0xff]
      %v1106 = vld [vmem:[%s262 + $0x19a8] sm:$0xff]
      %v1107 = vld [vmem:[%s262 + $0x19b0] sm:$0xff]
      %v1108 = vld [vmem:[%s262 + $0x19b8] sm:$0xff]
      %v1109 = vld [vmem:[%s262 + $0x19c0] sm:$0xff]
      %v1110 = vld [vmem:[%s262 + $0x19c8] sm:$0xff]
      %v1111 = vld [vmem:[%s262 + $0x19d0] sm:$0xff]
      %v1112 = vld [vmem:[%s262 + $0x19d8] sm:$0xff]
      %v1113 = vld [vmem:[%s262 + $0x19e0] sm:$0xff]
      %v1114 = vld [vmem:[%s262 + $0x19e8] sm:$0xff]
      %v1115 = vld [vmem:[%s262 + $0x19f0] sm:$0xff]
      %v1116 = vld [vmem:[%s262 + $0x19f8] sm:$0xff]
      %v1117 = vld [vmem:[%s262 + $0x1a00] sm:$0xff]
      %v1118 = vld [vmem:[%s262 + $0x1a08] sm:$0xff]
      %v1119 = vld [vmem:[%s262 + $0x1a10] sm:$0xff]
      %v1120 = vld [vmem:[%s262 + $0x1a18] sm:$0xff]
      %v1121 = vld [vmem:[%s262 + $0x1a20] sm:$0xff]
      %v1122 = vld [vmem:[%s262 + $0x1a28] sm:$0xff]
      %v1123 = vld [vmem:[%s262 + $0x1a30] sm:$0xff]
      %v1124 = vld [vmem:[%s262 + $0x1a38] sm:$0xff]
      %v1125 = vld [vmem:[%s262 + $0x1a40] sm:$0xff]
      %v1126 = vld [vmem:[%s262 + $0x1a48] sm:$0xff]
      %v1127 = vld [vmem:[%s262 + $0x1a50] sm:$0xff]
      %v1128 = vld [vmem:[%s262 + $0x1a58] sm:$0xff]
      %v1129 = vld [vmem:[%s262 + $0x1a60] sm:$0xff]
      %v1130 = vld [vmem:[%s262 + $0x1a68] sm:$0xff]
      %v1131 = vld [vmem:[%s262 + $0x1a70] sm:$0xff]
      %v1132 = vld [vmem:[%s262 + $0x1a78] sm:$0xff]
      %v1133 = vld [vmem:[%s262 + $0x1a80] sm:$0xff]
      %v1134 = vld [vmem:[%s262 + $0x1a88] sm:$0xff]
      %v1135 = vld [vmem:[%s262 + $0x1a90] sm:$0xff]
      %v1136 = vld [vmem:[%s262 + $0x1a98] sm:$0xff]
      %v1137 = vld [vmem:[%s262 + $0x1aa0] sm:$0xff]
      %v1138 = vld [vmem:[%s262 + $0x1aa8] sm:$0xff]
      %v1139 = vld [vmem:[%s262 + $0x1ab0] sm:$0xff]
      %v1140 = vld [vmem:[%s262 + $0x1ab8] sm:$0xff]
      %v1141 = vld [vmem:[%s262 + $0x1ac0] sm:$0xff]
      %v1142 = vld [vmem:[%s262 + $0x1ac8] sm:$0xff]
      %v1143 = vld [vmem:[%s262 + $0x1ad0] sm:$0xff]
      %v1144 = vld [vmem:[%s262 + $0x1ad8] sm:$0xff]
      %v1145 = vld [vmem:[%s262 + $0x1ae0] sm:$0xff]
      %v1146 = vld [vmem:[%s262 + $0x1ae8] sm:$0xff]
      %v1147 = vld [vmem:[%s262 + $0x1af0] sm:$0xff]
      %v1148 = vld [vmem:[%s262 + $0x1af8] sm:$0xff]
      %v1149 = vld [vmem:[%s262 + $0x1b00] sm:$0xff]
      %v1150 = vld [vmem:[%s262 + $0x1b08] sm:$0xff]
      %v1151 = vld [vmem:[%s262 + $0x1b10] sm:$0xff]
      %v1152 = vld [vmem:[%s262 + $0x1b18] sm:$0xff]
      %v1153 = vld [vmem:[%s262 + $0x1b20] sm:$0xff]
      %v1154 = vld [vmem:[%s262 + $0x1b28] sm:$0xff]
      %v1155 = vld [vmem:[%s262 + $0x1b30] sm:$0xff]
      %v1156 = vld [vmem:[%s262 + $0x1b38] sm:$0xff]
      %v1157 = vld [vmem:[%s262 + $0x1b40] sm:$0xff]
      %v1158 = vld [vmem:[%s262 + $0x1b48] sm:$0xff]
      %v1159 = vld [vmem:[%s262 + $0x1b50] sm:$0xff]
      %v1160 = vld [vmem:[%s262 + $0x1b58] sm:$0xff]
      %v1161 = vld [vmem:[%s262 + $0x1b60] sm:$0xff]
      %v1162 = vld [vmem:[%s262 + $0x1b68] sm:$0xff]
      %v1163 = vld [vmem:[%s262 + $0x1b70] sm:$0xff]
      %v1164 = vld [vmem:[%s262 + $0x1b78] sm:$0xff]
      %v1165 = vld [vmem:[%s262 + $0x1b80] sm:$0xff]
      %v1166 = vld [vmem:[%s262 + $0x1b88] sm:$0xff]
      %v1167 = vld [vmem:[%s262 + $0x1b90] sm:$0xff]
      %v1168 = vld [vmem:[%s262 + $0x1b98] sm:$0xff]
      %v1169 = vld [vmem:[%s262 + $0x1ba0] sm:$0xff]
      %v1170 = vld [vmem:[%s262 + $0x1ba8] sm:$0xff]
      %v1171 = vld [vmem:[%s262 + $0x1bb0] sm:$0xff]
      %v1172 = vld [vmem:[%s262 + $0x1bb8] sm:$0xff]
      %v1173 = vld [vmem:[%s262 + $0x1bc0] sm:$0xff]
      %v1174 = vld [vmem:[%s262 + $0x1bc8] sm:$0xff]
      %v1175 = vld [vmem:[%s262 + $0x1bd0] sm:$0xff]
      %v1176 = vld [vmem:[%s262 + $0x1bd8] sm:$0xff]
      %v1177 = vld [vmem:[%s262 + $0x1be0] sm:$0xff]
      %v1178 = vld [vmem:[%s262 + $0x1be8] sm:$0xff]
      %v1179 = vld [vmem:[%s262 + $0x1bf0] sm:$0xff]
      %v1180 = vld [vmem:[%s262 + $0x1bf8] sm:$0xff]
      %v1181 = vld [vmem:[%s262 + $0x1c00] sm:$0xff]
      %v1182 = vld [vmem:[%s262 + $0x1c08] sm:$0xff]
      %v1183 = vld [vmem:[%s262 + $0x1c10] sm:$0xff]
      %v1184 = vld [vmem:[%s262 + $0x1c18] sm:$0xff]
      %v1185 = vld [vmem:[%s262 + $0x1c20] sm:$0xff]
      %v1186 = vld [vmem:[%s262 + $0x1c28] sm:$0xff]
      %v1187 = vld [vmem:[%s262 + $0x1c30] sm:$0xff]
      %v1188 = vld [vmem:[%s262 + $0x1c38] sm:$0xff]
      %v1189 = vld [vmem:[%s262 + $0x1c40] sm:$0xff]
      %v1190 = vld [vmem:[%s262 + $0x1c48] sm:$0xff]
      %v1191 = vld [vmem:[%s262 + $0x1c50] sm:$0xff]
      %v1192 = vld [vmem:[%s262 + $0x1c58] sm:$0xff]
      %v1193 = vld [vmem:[%s262 + $0x1c60] sm:$0xff]
      %v1194 = vld [vmem:[%s262 + $0x1c68] sm:$0xff]
      %v1195 = vld [vmem:[%s262 + $0x1c70] sm:$0xff]
      %v1196 = vld [vmem:[%s262 + $0x1c78] sm:$0xff]
      %v1197 = vld [vmem:[%s262 + $0x1c80] sm:$0xff]
      %v1198 = vld [vmem:[%s262 + $0x1c88] sm:$0xff]
      %v1199 = vld [vmem:[%s262 + $0x1c90] sm:$0xff]
      %v1200 = vld [vmem:[%s262 + $0x1c98] sm:$0xff]
      %v1201 = vld [vmem:[%s262 + $0x1ca0] sm:$0xff]
      %v1202 = vld [vmem:[%s262 + $0x1ca8] sm:$0xff]
      %v1203 = vld [vmem:[%s262 + $0x1cb0] sm:$0xff]
      %v1204 = vld [vmem:[%s262 + $0x1cb8] sm:$0xff]
      %v1205 = vld [vmem:[%s262 + $0x1cc0] sm:$0xff]
      %v1206 = vld [vmem:[%s262 + $0x1cc8] sm:$0xff]
      %v1207 = vld [vmem:[%s262 + $0x1cd0] sm:$0xff]
      %v1208 = vld [vmem:[%s262 + $0x1cd8] sm:$0xff]
      %v1209 = vld [vmem:[%s262 + $0x1ce0] sm:$0xff]
      %v1210 = vld [vmem:[%s262 + $0x1ce8] sm:$0xff]
      %v1211 = vld [vmem:[%s262 + $0x1cf0] sm:$0xff]
      %v1212 = vld [vmem:[%s262 + $0x1cf8] sm:$0xff]
      %v1213 = vld [vmem:[%s262 + $0x1d00] sm:$0xff]
      %v1214 = vld [vmem:[%s262 + $0x1d08] sm:$0xff]
      %v1215 = vld [vmem:[%s262 + $0x1d10] sm:$0xff]
      %v1216 = vld [vmem:[%s262 + $0x1d18] sm:$0xff]
      %v1217 = vld [vmem:[%s262 + $0x1d20] sm:$0xff]
      %v1218 = vld [vmem:[%s262 + $0x1d28] sm:$0xff]
      %v1219 = vld [vmem:[%s262 + $0x1d30] sm:$0xff]
      %v1220 = vld [vmem:[%s262 + $0x1d38] sm:$0xff]
      %v1221 = vld [vmem:[%s262 + $0x1d40] sm:$0xff]
      %v1222 = vld [vmem:[%s262 + $0x1d48] sm:$0xff]
      %v1223 = vld [vmem:[%s262 + $0x1d50] sm:$0xff]
      %v1224 = vld [vmem:[%s262 + $0x1d58] sm:$0xff]
      %v1225 = vld [vmem:[%s262 + $0x1d60] sm:$0xff]
      %v1226 = vld [vmem:[%s262 + $0x1d68] sm:$0xff]
      %v1227 = vld [vmem:[%s262 + $0x1d70] sm:$0xff]
      %v1228 = vld [vmem:[%s262 + $0x1d78] sm:$0xff]
      %v1229 = vld [vmem:[%s262 + $0x1d80] sm:$0xff]
      %v1230 = vld [vmem:[%s262 + $0x1d88] sm:$0xff]
      %v1231 = vld [vmem:[%s262 + $0x1d90] sm:$0xff]
      %v1232 = vld [vmem:[%s262 + $0x1d98] sm:$0xff]
      %v1233 = vld [vmem:[%s262 + $0x1da0] sm:$0xff]
      %v1234 = vld [vmem:[%s262 + $0x1da8] sm:$0xff]
      %v1235 = vld [vmem:[%s262 + $0x1db0] sm:$0xff]
      %v1236 = vld [vmem:[%s262 + $0x1db8] sm:$0xff]
      %v1237 = vld [vmem:[%s262 + $0x1dc0] sm:$0xff]
      %v1238 = vld [vmem:[%s262 + $0x1dc8] sm:$0xff]
      %v1239 = vld [vmem:[%s262 + $0x1dd0] sm:$0xff]
      %v1240 = vld [vmem:[%s262 + $0x1dd8] sm:$0xff]
      %v1241 = vld [vmem:[%s262 + $0x1de0] sm:$0xff]
      %v1242 = vld [vmem:[%s262 + $0x1de8] sm:$0xff]
      %v1243 = vld [vmem:[%s262 + $0x1df0] sm:$0xff]
      %v1244 = vld [vmem:[%s262 + $0x1df8] sm:$0xff]
      %v1245 = vld [vmem:[%s262 + $0x1e00] sm:$0xff]
      %v1246 = vld [vmem:[%s262 + $0x1e08] sm:$0xff]
      %v1247 = vld [vmem:[%s262 + $0x1e10] sm:$0xff]
      %v1248 = vld [vmem:[%s262 + $0x1e18] sm:$0xff]
      %v1249 = vld [vmem:[%s262 + $0x1e20] sm:$0xff]
      %v1250 = vld [vmem:[%s262 + $0x1e28] sm:$0xff]
      %v1251 = vld [vmem:[%s262 + $0x1e30] sm:$0xff]
      %v1252 = vld [vmem:[%s262 + $0x1e38] sm:$0xff]
      %v1253 = vld [vmem:[%s262 + $0x1e40] sm:$0xff]
      %v1254 = vld [vmem:[%s262 + $0x1e48] sm:$0xff]
      %v1255 = vld [vmem:[%s262 + $0x1e50] sm:$0xff]
      %v1256 = vld [vmem:[%s262 + $0x1e58] sm:$0xff]
      %v1257 = vld [vmem:[%s262 + $0x1e60] sm:$0xff]
      %v1258 = vld [vmem:[%s262 + $0x1e68] sm:$0xff]
      %v1259 = vld [vmem:[%s262 + $0x1e70] sm:$0xff]
      %v1260 = vld [vmem:[%s262 + $0x1e78] sm:$0xff]
      %v1261 = vld [vmem:[%s262 + $0x1e80] sm:$0xff]
      %v1262 = vld [vmem:[%s262 + $0x1e88] sm:$0xff]
      %v1263 = vld [vmem:[%s262 + $0x1e90] sm:$0xff]
      %v1264 = vld [vmem:[%s262 + $0x1e98] sm:$0xff]
      %v1265 = vld [vmem:[%s262 + $0x1ea0] sm:$0xff]
      %v1266 = vld [vmem:[%s262 + $0x1ea8] sm:$0xff]
      %v1267 = vld [vmem:[%s262 + $0x1eb0] sm:$0xff]
      %v1268 = vld [vmem:[%s262 + $0x1eb8] sm:$0xff]
      %v1269 = vld [vmem:[%s262 + $0x1ec0] sm:$0xff]
      %v1270 = vld [vmem:[%s262 + $0x1ec8] sm:$0xff]
      %v1271 = vld [vmem:[%s262 + $0x1ed0] sm:$0xff]
      %v1272 = vld [vmem:[%s262 + $0x1ed8] sm:$0xff]
      %v1273 = vld [vmem:[%s262 + $0x1ee0] sm:$0xff]
      %v1274 = vld [vmem:[%s262 + $0x1ee8] sm:$0xff]
      %v1275 = vld [vmem:[%s262 + $0x1ef0] sm:$0xff]
      %v1276 = vld [vmem:[%s262 + $0x1ef8] sm:$0xff]
      %v1277 = vld [vmem:[%s262 + $0x1f00] sm:$0xff]
      %v1278 = vld [vmem:[%s262 + $0x1f08] sm:$0xff]
      %v1279 = vld [vmem:[%s262 + $0x1f10] sm:$0xff]
      %v1280 = vld [vmem:[%s262 + $0x1f18] sm:$0xff]
      %v1281 = vld [vmem:[%s262 + $0x1f20] sm:$0xff]
      %v1282 = vld [vmem:[%s262 + $0x1f28] sm:$0xff]
      %v1283 = vld [vmem:[%s262 + $0x1f30] sm:$0xff]
      %v1284 = vld [vmem:[%s262 + $0x1f38] sm:$0xff]
      %v1285 = vld [vmem:[%s262 + $0x1f40] sm:$0xff]
      %v1286 = vld [vmem:[%s262 + $0x1f48] sm:$0xff]
      %v1287 = vld [vmem:[%s262 + $0x1f50] sm:$0xff]
      %v1288 = vld [vmem:[%s262 + $0x1f58] sm:$0xff]
      %v1289 = vld [vmem:[%s262 + $0x1f60] sm:$0xff]
      %v1290 = vld [vmem:[%s262 + $0x1f68] sm:$0xff]
      %v1291 = vld [vmem:[%s262 + $0x1f70] sm:$0xff]
      %v1292 = vld [vmem:[%s262 + $0x1f78] sm:$0xff]
      %v1293 = vld [vmem:[%s262 + $0x1f80] sm:$0xff]
      %v1294 = vld [vmem:[%s262 + $0x1f88] sm:$0xff]
      %v1295 = vld [vmem:[%s262 + $0x1f90] sm:$0xff]
      %v1296 = vld [vmem:[%s262 + $0x1f98] sm:$0xff]
      %v1297 = vld [vmem:[%s262 + $0x1fa0] sm:$0xff]
      %v1298 = vld [vmem:[%s262 + $0x1fa8] sm:$0xff]
      %v1299 = vld [vmem:[%s262 + $0x1fb0] sm:$0xff]
      %v1300 = vld [vmem:[%s262 + $0x1fb8] sm:$0xff]
      %v1301 = vld [vmem:[%s262 + $0x1fc0] sm:$0xff]
      %v1302 = vld [vmem:[%s262 + $0x1fc8] sm:$0xff]
      %v1303 = vld [vmem:[%s262 + $0x1fd0] sm:$0xff]
      %v1304 = vld [vmem:[%s262 + $0x1fd8] sm:$0xff]
      %v1305 = vld [vmem:[%s262 + $0x1fe0] sm:$0xff]
      %v1306 = vld [vmem:[%s262 + $0x1fe8] sm:$0xff]
      %v1307 = vld [vmem:[%s262 + $0x1ff0] sm:$0xff]
      %v1308 = vld [vmem:[%s262 + $0x1ff8] sm:$0xff]
      %v1311 = vunpack.c.l.s4 1966171168
      %v1312 = vunpack.c.0.s8 %v1311
      %v1313 = vlaneseq
      %v1314 = vshrl.u32 %v1313, 7
      %v1315 = vsub.s32 %v1312, %v1314
      %v1316 = vrot.slane %v284, %v1315
      %v1317 = vcombine.high %v1316, %v1316
      %v1319 = vunpack.c.l.s4 1966171168
      %v1320 = vunpack.c.0.s8 %v1319
      %v1321 = vlaneseq
      %v1322 = vshrl.u32 %v1321, 7
      %v1323 = vsub.s32 %v1320, %v1322
      %v1324 = vrot.slane %v1316, %v1323
      %v1326 = vunpack.c.l.s4 1966171168
      %v1327 = vunpack.c.0.s8 %v1326
      %v1328 = vlaneseq
      %v1329 = vshrl.u32 %v1328, 7
      %v1330 = vsub.s32 %v1327, %v1329
      %v1331 = vrot.slane %v1317, %v1330
      %v1332 = vcombine.high %v1324, %v1324
      %v1333 = vcombine.high %v1331, %v1331
      %v1334 = vunpack.i.l.s16 %v1324
      %v1335 = vunpack.i.h.s16 %v1324
      %v1336 = vunpack.i.l.s16 %v1331
      %v1337 = vunpack.i.h.s16 %v1331
      %v1338 = vunpack.i.l.s16 %v1332
      %v1339 = vunpack.i.h.s16 %v1332
      %v1340 = vunpack.i.l.s16 %v1333
      %v1341 = vunpack.i.h.s16 %v1333
      %v1342 = vpack.i.b16 %v1334, %v1334
      %v1343 = vlaneseq
      %v1344 = vshrl.u32 %v1343, 7
      %v1345 = vsub.s32 0, %v1344
      %v1346 = vrot.slane %v1342, %v1345
      %v1347 = vlaneseq
      %v1348 = vshrl.u32 %v1347, 7
      %v1349 = vsub.s32 1, %v1348
      %v1350 = vrot.slane %v1342, %v1349
      %v1481 = vunpack.c.l.b16 %v285
      %v1482 = vunpack.c.h.b16 %v285
      %v1483 = vunpack.c.l.b16 %v286
      %v1484 = vunpack.c.h.b16 %v286
      %v1485 = vunpack.c.l.b16 %v287
      %v1486 = vunpack.c.h.b16 %v287
      %v1487 = vunpack.c.l.b16 %v288
      %v1488 = vunpack.c.h.b16 %v288
      %v1489 = vunpack.c.l.b16 %v289
      %v1490 = vunpack.c.h.b16 %v289
      %v1491 = vunpack.c.l.b16 %v290
      %v1492 = vunpack.c.h.b16 %v290
      %v1493 = vunpack.c.l.b16 %v291
      %v1494 = vunpack.c.h.b16 %v291
      %v1495 = vunpack.c.l.b16 %v292
      %v1496 = vunpack.c.h.b16 %v292
      %v1497 = vunpack.c.l.b16 %v293
      %v1498 = vunpack.c.h.b16 %v293
      %v1499 = vunpack.c.l.b16 %v294
      %v1500 = vunpack.c.h.b16 %v294
      %v1501 = vunpack.c.l.b16 %v295
      %v1502 = vunpack.c.h.b16 %v295
      %v1503 = vunpack.c.l.b16 %v296
      %v1504 = vunpack.c.h.b16 %v296
      %v1505 = vunpack.c.l.b16 %v297
      %v1506 = vunpack.c.h.b16 %v297
      %v1507 = vunpack.c.l.b16 %v298
      %v1508 = vunpack.c.h.b16 %v298
      %v1509 = vunpack.c.l.b16 %v299
      %v1510 = vunpack.c.h.b16 %v299
      %v1511 = vunpack.c.l.b16 %v300
      %v1512 = vunpack.c.h.b16 %v300
      %v1513 = vunpack.c.l.b16 %v301
      %v1514 = vunpack.c.h.b16 %v301
      %v1515 = vunpack.c.l.b16 %v302
      %v1516 = vunpack.c.h.b16 %v302
      %v1517 = vunpack.c.l.b16 %v303
      %v1518 = vunpack.c.h.b16 %v303
      %v1519 = vunpack.c.l.b16 %v304
      %v1520 = vunpack.c.h.b16 %v304
      %v1521 = vunpack.c.l.b16 %v305
      %v1522 = vunpack.c.h.b16 %v305
      %v1523 = vunpack.c.l.b16 %v306
      %v1524 = vunpack.c.h.b16 %v306
      %v1525 = vunpack.c.l.b16 %v307
      %v1526 = vunpack.c.h.b16 %v307
      %v1527 = vunpack.c.l.b16 %v308
      %v1528 = vunpack.c.h.b16 %v308
      %v1529 = vunpack.c.l.b16 %v309
      %v1530 = vunpack.c.h.b16 %v309
      %v1531 = vunpack.c.l.b16 %v310
      %v1532 = vunpack.c.h.b16 %v310
      %v1533 = vunpack.c.l.b16 %v311
      %v1534 = vunpack.c.h.b16 %v311
      %v1535 = vunpack.c.l.b16 %v312
      %v1536 = vunpack.c.h.b16 %v312
      %v1537 = vunpack.c.l.b16 %v313
      %v1538 = vunpack.c.h.b16 %v313
      %v1539 = vunpack.c.l.b16 %v314
      %v1540 = vunpack.c.h.b16 %v314
      %v1541 = vunpack.c.l.b16 %v315
      %v1542 = vunpack.c.h.b16 %v315
      %v1543 = vunpack.c.l.b16 %v316
      %v1544 = vunpack.c.h.b16 %v316
      %v1545 = vunpack.c.l.b16 %v317
      %v1546 = vunpack.c.h.b16 %v317
      %v1547 = vunpack.c.l.b16 %v318
      %v1548 = vunpack.c.h.b16 %v318
      %v1549 = vunpack.c.l.b16 %v319
      %v1550 = vunpack.c.h.b16 %v319
      %v1551 = vunpack.c.l.b16 %v320
      %v1552 = vunpack.c.h.b16 %v320
      %v1553 = vunpack.c.l.b16 %v321
      %v1554 = vunpack.c.h.b16 %v321
      %v1555 = vunpack.c.l.b16 %v322
      %v1556 = vunpack.c.h.b16 %v322
      %v1557 = vunpack.c.l.b16 %v323
      %v1558 = vunpack.c.h.b16 %v323
      %v1559 = vunpack.c.l.b16 %v324
      %v1560 = vunpack.c.h.b16 %v324
      %v1561 = vunpack.c.l.b16 %v325
      %v1562 = vunpack.c.h.b16 %v325
      %v1563 = vunpack.c.l.b16 %v326
      %v1564 = vunpack.c.h.b16 %v326
      %v1565 = vunpack.c.l.b16 %v327
      %v1566 = vunpack.c.h.b16 %v327
      %v1567 = vunpack.c.l.b16 %v328
      %v1568 = vunpack.c.h.b16 %v328
      %v1569 = vunpack.c.l.b16 %v329
      %v1570 = vunpack.c.h.b16 %v329
      %v1571 = vunpack.c.l.b16 %v330
      %v1572 = vunpack.c.h.b16 %v330
      %v1573 = vunpack.c.l.b16 %v331
      %v1574 = vunpack.c.h.b16 %v331
      %v1575 = vunpack.c.l.b16 %v332
      %v1576 = vunpack.c.h.b16 %v332
      %v1577 = vunpack.c.l.b16 %v333
      %v1578 = vunpack.c.h.b16 %v333
      %v1579 = vunpack.c.l.b16 %v334
      %v1580 = vunpack.c.h.b16 %v334
      %v1581 = vunpack.c.l.b16 %v335
      %v1582 = vunpack.c.h.b16 %v335
      %v1583 = vunpack.c.l.b16 %v336
      %v1584 = vunpack.c.h.b16 %v336
      %v1585 = vunpack.c.l.b16 %v337
      %v1586 = vunpack.c.h.b16 %v337
      %v1587 = vunpack.c.l.b16 %v338
      %v1588 = vunpack.c.h.b16 %v338
      %v1589 = vunpack.c.l.b16 %v339
      %v1590 = vunpack.c.h.b16 %v339
      %v1591 = vunpack.c.l.b16 %v340
      %v1592 = vunpack.c.h.b16 %v340
      %v1593 = vunpack.c.l.b16 %v341
      %v1594 = vunpack.c.h.b16 %v341
      %v1595 = vunpack.c.l.b16 %v342
      %v1596 = vunpack.c.h.b16 %v342
      %v1597 = vunpack.c.l.b16 %v343
      %v1598 = vunpack.c.h.b16 %v343
      %v1599 = vunpack.c.l.b16 %v344
      %v1600 = vunpack.c.h.b16 %v344
      %v1601 = vunpack.c.l.b16 %v345
      %v1602 = vunpack.c.h.b16 %v345
      %v1603 = vunpack.c.l.b16 %v346
      %v1604 = vunpack.c.h.b16 %v346
      %v1605 = vunpack.c.l.b16 %v347
      %v1606 = vunpack.c.h.b16 %v347
      %v1607 = vunpack.c.l.b16 %v348
      %v1608 = vunpack.c.h.b16 %v348
      %v1609 = vunpack.c.l.b16 %v349
      %v1610 = vunpack.c.h.b16 %v349
      %v1611 = vunpack.c.l.b16 %v350
      %v1612 = vunpack.c.h.b16 %v350
      %v1613 = vunpack.c.l.b16 %v351
      %v1614 = vunpack.c.h.b16 %v351
      %v1615 = vunpack.c.l.b16 %v352
      %v1616 = vunpack.c.h.b16 %v352
      %v1617 = vunpack.c.l.b16 %v353
      %v1618 = vunpack.c.h.b16 %v353
      %v1619 = vunpack.c.l.b16 %v354
      %v1620 = vunpack.c.h.b16 %v354
      %v1621 = vunpack.c.l.b16 %v355
      %v1622 = vunpack.c.h.b16 %v355
      %v1623 = vunpack.c.l.b16 %v356
      %v1624 = vunpack.c.h.b16 %v356
      %v1625 = vunpack.c.l.b16 %v357
      %v1626 = vunpack.c.h.b16 %v357
      %v1627 = vunpack.c.l.b16 %v358
      %v1628 = vunpack.c.h.b16 %v358
      %v1629 = vunpack.c.l.b16 %v359
      %v1630 = vunpack.c.h.b16 %v359
      %v1631 = vunpack.c.l.b16 %v360
      %v1632 = vunpack.c.h.b16 %v360
      %v1633 = vunpack.c.l.b16 %v361
      %v1634 = vunpack.c.h.b16 %v361
      %v1635 = vunpack.c.l.b16 %v362
      %v1636 = vunpack.c.h.b16 %v362
      %v1637 = vunpack.c.l.b16 %v363
      %v1638 = vunpack.c.h.b16 %v363
      %v1639 = vunpack.c.l.b16 %v364
      %v1640 = vunpack.c.h.b16 %v364
      %v1641 = vunpack.c.l.b16 %v365
      %v1642 = vunpack.c.h.b16 %v365
      %v1643 = vunpack.c.l.b16 %v366
      %v1644 = vunpack.c.h.b16 %v366
      %v1645 = vunpack.c.l.b16 %v367
      %v1646 = vunpack.c.h.b16 %v367
      %v1647 = vunpack.c.l.b16 %v368
      %v1648 = vunpack.c.h.b16 %v368
      %v1649 = vunpack.c.l.b16 %v369
      %v1650 = vunpack.c.h.b16 %v369
      %v1651 = vunpack.c.l.b16 %v370
      %v1652 = vunpack.c.h.b16 %v370
      %v1653 = vunpack.c.l.b16 %v371
      %v1654 = vunpack.c.h.b16 %v371
      %v1655 = vunpack.c.l.b16 %v372
      %v1656 = vunpack.c.h.b16 %v372
      %v1657 = vunpack.c.l.b16 %v373
      %v1658 = vunpack.c.h.b16 %v373
      %v1659 = vunpack.c.l.b16 %v374
      %v1660 = vunpack.c.h.b16 %v374
      %v1661 = vunpack.c.l.b16 %v375
      %v1662 = vunpack.c.h.b16 %v375
      %v1663 = vunpack.c.l.b16 %v376
      %v1664 = vunpack.c.h.b16 %v376
      %v1665 = vunpack.c.l.b16 %v377
      %v1666 = vunpack.c.h.b16 %v377
      %v1667 = vunpack.c.l.b16 %v378
      %v1668 = vunpack.c.h.b16 %v378
      %v1669 = vunpack.c.l.b16 %v379
      %v1670 = vunpack.c.h.b16 %v379
      %v1671 = vunpack.c.l.b16 %v380
      %v1672 = vunpack.c.h.b16 %v380
      %v1673 = vunpack.c.l.b16 %v381
      %v1674 = vunpack.c.h.b16 %v381
      %v1675 = vunpack.c.l.b16 %v382
      %v1676 = vunpack.c.h.b16 %v382
      %v1677 = vunpack.c.l.b16 %v383
      %v1678 = vunpack.c.h.b16 %v383
      %v1679 = vunpack.c.l.b16 %v384
      %v1680 = vunpack.c.h.b16 %v384
      %v1681 = vunpack.c.l.b16 %v385
      %v1682 = vunpack.c.h.b16 %v385
      %v1683 = vunpack.c.l.b16 %v386
      %v1684 = vunpack.c.h.b16 %v386
      %v1685 = vunpack.c.l.b16 %v387
      %v1686 = vunpack.c.h.b16 %v387
      %v1687 = vunpack.c.l.b16 %v388
      %v1688 = vunpack.c.h.b16 %v388
      %v1689 = vunpack.c.l.b16 %v389
      %v1690 = vunpack.c.h.b16 %v389
      %v1691 = vunpack.c.l.b16 %v390
      %v1692 = vunpack.c.h.b16 %v390
      %v1693 = vunpack.c.l.b16 %v391
      %v1694 = vunpack.c.h.b16 %v391
      %v1695 = vunpack.c.l.b16 %v392
      %v1696 = vunpack.c.h.b16 %v392
      %v1697 = vunpack.c.l.b16 %v393
      %v1698 = vunpack.c.h.b16 %v393
      %v1699 = vunpack.c.l.b16 %v394
      %v1700 = vunpack.c.h.b16 %v394
      %v1701 = vunpack.c.l.b16 %v395
      %v1702 = vunpack.c.h.b16 %v395
      %v1703 = vunpack.c.l.b16 %v396
      %v1704 = vunpack.c.h.b16 %v396
      %v1705 = vunpack.c.l.b16 %v397
      %v1706 = vunpack.c.h.b16 %v397
      %v1707 = vunpack.c.l.b16 %v398
      %v1708 = vunpack.c.h.b16 %v398
      %v1709 = vunpack.c.l.b16 %v399
      %v1710 = vunpack.c.h.b16 %v399
      %v1711 = vunpack.c.l.b16 %v400
      %v1712 = vunpack.c.h.b16 %v400
      %v1713 = vunpack.c.l.b16 %v401
      %v1714 = vunpack.c.h.b16 %v401
      %v1715 = vunpack.c.l.b16 %v402
      %v1716 = vunpack.c.h.b16 %v402
      %v1717 = vunpack.c.l.b16 %v403
      %v1718 = vunpack.c.h.b16 %v403
      %v1719 = vunpack.c.l.b16 %v404
      %v1720 = vunpack.c.h.b16 %v404
      %v1721 = vunpack.c.l.b16 %v405
      %v1722 = vunpack.c.h.b16 %v405
      %v1723 = vunpack.c.l.b16 %v406
      %v1724 = vunpack.c.h.b16 %v406
      %v1725 = vunpack.c.l.b16 %v407
      %v1726 = vunpack.c.h.b16 %v407
      %v1727 = vunpack.c.l.b16 %v408
      %v1728 = vunpack.c.h.b16 %v408
      %v1729 = vunpack.c.l.b16 %v409
      %v1730 = vunpack.c.h.b16 %v409
      %v1731 = vunpack.c.l.b16 %v410
      %v1732 = vunpack.c.h.b16 %v410
      %v1733 = vunpack.c.l.b16 %v411
      %v1734 = vunpack.c.h.b16 %v411
      %v1735 = vunpack.c.l.b16 %v412
      %v1736 = vunpack.c.h.b16 %v412
      %v1737 = vpack.c.b16 %v1489, %v1481
      %v1738 = vpack.c.b16 %v1490, %v1482
      %v1739 = vpack.c.b16 %v1491, %v1483
      %v1740 = vpack.c.b16 %v1492, %v1484
      %v1741 = vpack.c.b16 %v1493, %v1485
      %v1742 = vpack.c.b16 %v1494, %v1486
      %v1743 = vpack.c.b16 %v1495, %v1487
      %v1744 = vpack.c.b16 %v1496, %v1488
      %v1745 = vpack.c.b16 %v1505, %v1497
      %v1746 = vpack.c.b16 %v1506, %v1498
      %v1747 = vpack.c.b16 %v1507, %v1499
      %v1748 = vpack.c.b16 %v1508, %v1500
      %v1749 = vpack.c.b16 %v1509, %v1501
      %v1750 = vpack.c.b16 %v1510, %v1502
      %v1751 = vpack.c.b16 %v1511, %v1503
      %v1752 = vpack.c.b16 %v1512, %v1504
      %v1753 = vpack.c.b16 %v1521, %v1513
      %v1754 = vpack.c.b16 %v1522, %v1514
      %v1755 = vpack.c.b16 %v1523, %v1515
      %v1756 = vpack.c.b16 %v1524, %v1516
      %v1757 = vpack.c.b16 %v1525, %v1517
      %v1758 = vpack.c.b16 %v1526, %v1518
      %v1759 = vpack.c.b16 %v1527, %v1519
      %v1760 = vpack.c.b16 %v1528, %v1520
      %v1761 = vpack.c.b16 %v1537, %v1529
      %v1762 = vpack.c.b16 %v1538, %v1530
      %v1763 = vpack.c.b16 %v1539, %v1531
      %v1764 = vpack.c.b16 %v1540, %v1532
      %v1765 = vpack.c.b16 %v1541, %v1533
      %v1766 = vpack.c.b16 %v1542, %v1534
      %v1767 = vpack.c.b16 %v1543, %v1535
      %v1768 = vpack.c.b16 %v1544, %v1536
      %v1769 = vpack.c.b16 %v1553, %v1545
      %v1770 = vpack.c.b16 %v1554, %v1546
      %v1771 = vpack.c.b16 %v1555, %v1547
      %v1772 = vpack.c.b16 %v1556, %v1548
      %v1773 = vpack.c.b16 %v1557, %v1549
      %v1774 = vpack.c.b16 %v1558, %v1550
      %v1775 = vpack.c.b16 %v1559, %v1551
      %v1776 = vpack.c.b16 %v1560, %v1552
      %v1777 = vpack.c.b16 %v1569, %v1561
      %v1778 = vpack.c.b16 %v1570, %v1562
      %v1779 = vpack.c.b16 %v1571, %v1563
      %v1780 = vpack.c.b16 %v1572, %v1564
      %v1781 = vpack.c.b16 %v1573, %v1565
      %v1782 = vpack.c.b16 %v1574, %v1566
      %v1783 = vpack.c.b16 %v1575, %v1567
      %v1784 = vpack.c.b16 %v1576, %v1568
      %v1785 = vpack.c.b16 %v1585, %v1577
      %v1786 = vpack.c.b16 %v1586, %v1578
      %v1787 = vpack.c.b16 %v1587, %v1579
      %v1788 = vpack.c.b16 %v1588, %v1580
      %v1789 = vpack.c.b16 %v1589, %v1581
      %v1790 = vpack.c.b16 %v1590, %v1582
      %v1791 = vpack.c.b16 %v1591, %v1583
      %v1792 = vpack.c.b16 %v1592, %v1584
      %v1793 = vpack.c.b16 %v1601, %v1593
      %v1794 = vpack.c.b16 %v1602, %v1594
      %v1795 = vpack.c.b16 %v1603, %v1595
      %v1796 = vpack.c.b16 %v1604, %v1596
      %v1797 = vpack.c.b16 %v1605, %v1597
      %v1798 = vpack.c.b16 %v1606, %v1598
      %v1799 = vpack.c.b16 %v1607, %v1599
      %v1800 = vpack.c.b16 %v1608, %v1600
      %v1801 = vpack.c.b16 %v1617, %v1609
      %v1802 = vpack.c.b16 %v1618, %v1610
      %v1803 = vpack.c.b16 %v1619, %v1611
      %v1804 = vpack.c.b16 %v1620, %v1612
      %v1805 = vpack.c.b16 %v1621, %v1613
      %v1806 = vpack.c.b16 %v1622, %v1614
      %v1807 = vpack.c.b16 %v1623, %v1615
      %v1808 = vpack.c.b16 %v1624, %v1616
      %v1809 = vpack.c.b16 %v1633, %v1625
      %v1810 = vpack.c.b16 %v1634, %v1626
      %v1811 = vpack.c.b16 %v1635, %v1627
      %v1812 = vpack.c.b16 %v1636, %v1628
      %v1813 = vpack.c.b16 %v1637, %v1629
      %v1814 = vpack.c.b16 %v1638, %v1630
      %v1815 = vpack.c.b16 %v1639, %v1631
      %v1816 = vpack.c.b16 %v1640, %v1632
      %v1817 = vpack.c.b16 %v1649, %v1641
      %v1818 = vpack.c.b16 %v1650, %v1642
      %v1819 = vpack.c.b16 %v1651, %v1643
      %v1820 = vpack.c.b16 %v1652, %v1644
      %v1821 = vpack.c.b16 %v1653, %v1645
      %v1822 = vpack.c.b16 %v1654, %v1646
      %v1823 = vpack.c.b16 %v1655, %v1647
      %v1824 = vpack.c.b16 %v1656, %v1648
      %v1825 = vpack.c.b16 %v1665, %v1657
      %v1826 = vpack.c.b16 %v1666, %v1658
      %v1827 = vpack.c.b16 %v1667, %v1659
      %v1828 = vpack.c.b16 %v1668, %v1660
      %v1829 = vpack.c.b16 %v1669, %v1661
      %v1830 = vpack.c.b16 %v1670, %v1662
      %v1831 = vpack.c.b16 %v1671, %v1663
      %v1832 = vpack.c.b16 %v1672, %v1664
      %v1833 = vpack.c.b16 %v1681, %v1673
      %v1834 = vpack.c.b16 %v1682, %v1674
      %v1835 = vpack.c.b16 %v1683, %v1675
      %v1836 = vpack.c.b16 %v1684, %v1676
      %v1837 = vpack.c.b16 %v1685, %v1677
      %v1838 = vpack.c.b16 %v1686, %v1678
      %v1839 = vpack.c.b16 %v1687, %v1679
      %v1840 = vpack.c.b16 %v1688, %v1680
      %v1841 = vpack.c.b16 %v1697, %v1689
      %v1842 = vpack.c.b16 %v1698, %v1690
      %v1843 = vpack.c.b16 %v1699, %v1691
      %v1844 = vpack.c.b16 %v1700, %v1692
      %v1845 = vpack.c.b16 %v1701, %v1693
      %v1846 = vpack.c.b16 %v1702, %v1694
      %v1847 = vpack.c.b16 %v1703, %v1695
      %v1848 = vpack.c.b16 %v1704, %v1696
      %v1849 = vpack.c.b16 %v1713, %v1705
      %v1850 = vpack.c.b16 %v1714, %v1706
      %v1851 = vpack.c.b16 %v1715, %v1707
      %v1852 = vpack.c.b16 %v1716, %v1708
      %v1853 = vpack.c.b16 %v1717, %v1709
      %v1854 = vpack.c.b16 %v1718, %v1710
      %v1855 = vpack.c.b16 %v1719, %v1711
      %v1856 = vpack.c.b16 %v1720, %v1712
      %v1857 = vpack.c.b16 %v1729, %v1721
      %v1858 = vpack.c.b16 %v1730, %v1722
      %v1859 = vpack.c.b16 %v1731, %v1723
      %v1860 = vpack.c.b16 %v1732, %v1724
      %v1861 = vpack.c.b16 %v1733, %v1725
      %v1862 = vpack.c.b16 %v1734, %v1726
      %v1863 = vpack.c.b16 %v1735, %v1727
      %v1864 = vpack.c.b16 %v1736, %v1728
      %1993 = vmatprep.subr.bf16.mxu0 %v1738
      %1994 = vmatpush1.bf16.msra.mxu0 %v1737
      %1995 = vmatprep.subr.bf16.mxu0 %v1746
      %1996 = vmatpush1.bf16.msra.mxu0 %v1745
      %1997 = vmatprep.subr.bf16.mxu0 %v1754
      %1998 = vmatpush1.bf16.msra.mxu0 %v1753
      %1999 = vmatprep.subr.bf16.mxu0 %v1762
      %2000 = vmatpush1.bf16.msra.mxu0 %v1761
      %2001 = vmatprep.subr.bf16.mxu0 %v1770
      %2002 = vmatpush1.bf16.msra.mxu0 %v1769
      %2003 = vmatprep.subr.bf16.mxu0 %v1778
      %2004 = vmatpush1.bf16.msra.mxu0 %v1777
      %2005 = vmatprep.subr.bf16.mxu0 %v1786
      %2006 = vmatpush1.bf16.msra.mxu0 %v1785
      %2007 = vmatprep.subr.bf16.mxu0 %v1794
      %2008 = vmatpush1.bf16.msra.mxu0 %v1793
      %2009 = vmatprep.subr.bf16.mxu0 %v1802
      %2010 = vmatpush1.bf16.msra.mxu0 %v1801
      %2011 = vmatprep.subr.bf16.mxu0 %v1810
      %2012 = vmatpush1.bf16.msra.mxu0 %v1809
      %2013 = vmatprep.subr.bf16.mxu0 %v1818
      %2014 = vmatpush1.bf16.msra.mxu0 %v1817
      %2015 = vmatprep.subr.bf16.mxu0 %v1826
      %2016 = vmatpush1.bf16.msra.mxu0 %v1825
      %2017 = vmatprep.subr.bf16.mxu0 %v1834
      %2018 = vmatpush1.bf16.msra.mxu0 %v1833
      %2019 = vmatprep.subr.bf16.mxu0 %v1842
      %2020 = vmatpush1.bf16.msra.mxu0 %v1841
      %2021 = vmatprep.subr.bf16.mxu0 %v1850
      %2022 = vmatpush1.bf16.msra.mxu0 %v1849
      %2023 = vmatprep.subr.bf16.mxu0 %v1858
      %2024 = vmatpush1.bf16.msra.mxu0 %v1857
      %2025 = vmatprep.mubr.bf16.mxu0 %v1350
      %2026 = vmatmul.mubr.bf16.gmra.mrb[0].mxu0 %v1346
      %v2027 = vpop.f32.mrb[0].mxu0
      %v2028 = vadd.f32 0.0, %v2027
      %v2029 = vpop.f32.mrb[0].mxu0
      %v2030 = vadd.f32 0.0, %v2029
      %v2031 = vpop.f32.mrb[0].mxu0
      %v2032 = vpop.f32.mrb[0].mxu0
      %2033 = vdwg.mxu0
      %2034 = vmatprep.subr.bf16.mxu0 %v1740
      %2035 = vmatpush1.bf16.msra.mxu0 %v1739
      %2036 = vmatprep.subr.bf16.mxu0 %v1748
      %2037 = vmatpush1.bf16.msra.mxu0 %v1747
      %2038 = vmatprep.subr.bf16.mxu0 %v1756
      %2039 = vmatpush1.bf16.msra.mxu0 %v1755
      %2040 = vmatprep.subr.bf16.mxu0 %v1764
      %2041 = vmatpush1.bf16.msra.mxu0 %v1763
      %2042 = vmatprep.subr.bf16.mxu0 %v1772
      %2043 = vmatpush1.bf16.msra.mxu0 %v1771
      %2044 = vmatprep.subr.bf16.mxu0 %v1780
      %2045 = vmatpush1.bf16.msra.mxu0 %v1779
      %2046 = vmatprep.subr.bf16.mxu0 %v1788
      %2047 = vmatpush1.bf16.msra.mxu0 %v1787
      %2048 = vmatprep.subr.bf16.mxu0 %v1796
      %2049 = vmatpush1.bf16.msra.mxu0 %v1795
      %2050 = vmatprep.subr.bf16.mxu0 %v1804
      %2051 = vmatpush1.bf16.msra.mxu0 %v1803
      %2052 = vmatprep.subr.bf16.mxu0 %v1812
      %2053 = vmatpush1.bf16.msra.mxu0 %v1811
      %2054 = vmatprep.subr.bf16.mxu0 %v1820
      %2055 = vmatpush1.bf16.msra.mxu0 %v1819
      %2056 = vmatprep.subr.bf16.mxu0 %v1828
      %2057 = vmatpush1.bf16.msra.mxu0 %v1827
      %2058 = vmatprep.subr.bf16.mxu0 %v1836
      %2059 = vmatpush1.bf16.msra.mxu0 %v1835
      %2060 = vmatprep.subr.bf16.mxu0 %v1844
      %2061 = vmatpush1.bf16.msra.mxu0 %v1843
      %2062 = vmatprep.subr.bf16.mxu0 %v1852
      %2063 = vmatpush1.bf16.msra.mxu0 %v1851
      %2064 = vmatprep.subr.bf16.mxu0 %v1860
      %2065 = vmatpush1.bf16.msra.mxu0 %v1859
      %2066 = vmatprep.mubr.bf16.mxu0 %v1350
      %2067 = vmatmul.mubr.bf16.gmra.mrb[0].mxu0 %v1346
      %v2068 = vpop.f32.mrb[0].mxu0
      %v2069 = vadd.f32 0.0, %v2068
      %v2070 = vpop.f32.mrb[0].mxu0
      %v2071 = vadd.f32 0.0, %v2070
      %v2072 = vpop.f32.mrb[0].mxu0
      %v2073 = vpop.f32.mrb[0].mxu0
      %2074 = vdwg.mxu0
      %2075 = vmatprep.subr.bf16.mxu0 %v1742
      %2076 = vmatpush1.bf16.msra.mxu0 %v1741
      %2077 = vmatprep.subr.bf16.mxu0 %v1750
      %2078 = vmatpush1.bf16.msra.mxu0 %v1749
      %2079 = vmatprep.subr.bf16.mxu0 %v1758
      %2080 = vmatpush1.bf16.msra.mxu0 %v1757
      %2081 = vmatprep.subr.bf16.mxu0 %v1766
      %2082 = vmatpush1.bf16.msra.mxu0 %v1765
      %2083 = vmatprep.subr.bf16.mxu0 %v1774
      %2084 = vmatpush1.bf16.msra.mxu0 %v1773
      %2085 = vmatprep.subr.bf16.mxu0 %v1782
      %2086 = vmatpush1.bf16.msra.mxu0 %v1781
      %2087 = vmatprep.subr.bf16.mxu0 %v1790
      %2088 = vmatpush1.bf16.msra.mxu0 %v1789
      %2089 = vmatprep.subr.bf16.mxu0 %v1798
      %2090 = vmatpush1.bf16.msra.mxu0 %v1797
      %2091 = vmatprep.subr.bf16.mxu0 %v1806
      %2092 = vmatpush1.bf16.msra.mxu0 %v1805
      %2093 = vmatprep.subr.bf16.mxu0 %v1814
      %2094 = vmatpush1.bf16.msra.mxu0 %v1813
      %2095 = vmatprep.subr.bf16.mxu0 %v1822
      %2096 = vmatpush1.bf16.msra.mxu0 %v1821
      %2097 = vmatprep.subr.bf16.mxu0 %v1830
      %2098 = vmatpush1.bf16.msra.mxu0 %v1829
      %2099 = vmatprep.subr.bf16.mxu0 %v1838
      %2100 = vmatpush1.bf16.msra.mxu0 %v1837
      %2101 = vmatprep.subr.bf16.mxu0 %v1846
      %2102 = vmatpush1.bf16.msra.mxu0 %v1845
      %2103 = vmatprep.subr.bf16.mxu0 %v1854
      %2104 = vmatpush1.bf16.msra.mxu0 %v1853
      %2105 = vmatprep.subr.bf16.mxu0 %v1862
      %2106 = vmatpush1.bf16.msra.mxu0 %v1861
      %2107 = vmatprep.mubr.bf16.mxu0 %v1350
      %2108 = vmatmul.mubr.bf16.gmra.mrb[0].mxu0 %v1346
      %v2109 = vpop.f32.mrb[0].mxu0
      %v2110 = vadd.f32 0.0, %v2109
      %v2111 = vpop.f32.mrb[0].mxu0
      %v2112 = vadd.f32 0.0, %v2111
      %v2113 = vpop.f32.mrb[0].mxu0
      %v2114 = vpop.f32.mrb[0].mxu0
      %2115 = vdwg.mxu0
      %2116 = vmatprep.subr.bf16.mxu0 %v1744
      %2117 = vmatpush1.bf16.msra.mxu0 %v1743
      %2118 = vmatprep.subr.bf16.mxu0 %v1752
      %2119 = vmatpush1.bf16.msra.mxu0 %v1751
      %2120 = vmatprep.subr.bf16.mxu0 %v1760
      %2121 = vmatpush1.bf16.msra.mxu0 %v1759
      %2122 = vmatprep.subr.bf16.mxu0 %v1768
      %2123 = vmatpush1.bf16.msra.mxu0 %v1767
      %2124 = vmatprep.subr.bf16.mxu0 %v1776
      %2125 = vmatpush1.bf16.msra.mxu0 %v1775
      %2126 = vmatprep.subr.bf16.mxu0 %v1784
      %2127 = vmatpush1.bf16.msra.mxu0 %v1783
      %2128 = vmatprep.subr.bf16.mxu0 %v1792
      %2129 = vmatpush1.bf16.msra.mxu0 %v1791
      %2130 = vmatprep.subr.bf16.mxu0 %v1800
      %2131 = vmatpush1.bf16.msra.mxu0 %v1799
      %2132 = vmatprep.subr.bf16.mxu0 %v1808
      %2133 = vmatpush1.bf16.msra.mxu0 %v1807
      %2134 = vmatprep.subr.bf16.mxu0 %v1816
      %2135 = vmatpush1.bf16.msra.mxu0 %v1815
      %2136 = vmatprep.subr.bf16.mxu0 %v1824
      %2137 = vmatpush1.bf16.msra.mxu0 %v1823
      %2138 = vmatprep.subr.bf16.mxu0 %v1832
      %2139 = vmatpush1.bf16.msra.mxu0 %v1831
      %2140 = vmatprep.subr.bf16.mxu0 %v1840
      %2141 = vmatpush1.bf16.msra.mxu0 %v1839
      %2142 = vmatprep.subr.bf16.mxu0 %v1848
      %2143 = vmatpush1.bf16.msra.mxu0 %v1847
      %2144 = vmatprep.subr.bf16.mxu0 %v1856
      %2145 = vmatpush1.bf16.msra.mxu0 %v1855
      %2146 = vmatprep.subr.bf16.mxu0 %v1864
      %2147 = vmatpush1.bf16.msra.mxu0 %v1863
      %2148 = vmatprep.mubr.bf16.mxu0 %v1350
      %2149 = vmatmul.mubr.bf16.gmra.mrb[0].mxu0 %v1346
      %v2150 = vpop.f32.mrb[0].mxu0
      %v2151 = vadd.f32 0.0, %v2150
      %v2152 = vpop.f32.mrb[0].mxu0
      %v2153 = vadd.f32 0.0, %v2152
      %v2154 = vpop.f32.mrb[0].mxu0
      %v2155 = vpop.f32.mrb[0].mxu0
      %2156 = vdwg.mxu0
      %v2157 = vpack.i.b16 %v1335, %v1335
      %v2158 = vlaneseq
      %v2159 = vshrl.u32 %v2158, 7
      %v2160 = vsub.s32 0, %v2159
      %v2161 = vrot.slane %v2157, %v2160
      %v2162 = vlaneseq
      %v2163 = vshrl.u32 %v2162, 7
      %v2164 = vsub.s32 1, %v2163
      %v2165 = vrot.slane %v2157, %v2164
      %v2296 = vunpack.c.l.b16 %v413
      %v2297 = vunpack.c.h.b16 %v413
      %v2298 = vunpack.c.l.b16 %v414
      %v2299 = vunpack.c.h.b16 %v414
      %v2300 = vunpack.c.l.b16 %v415
      %v2301 = vunpack.c.h.b16 %v415
      %v2302 = vunpack.c.l.b16 %v416
      %v2303 = vunpack.c.h.b16 %v416
      %v2304 = vunpack.c.l.b16 %v417
      %v2305 = vunpack.c.h.b16 %v417
      %v2306 = vunpack.c.l.b16 %v418
      %v2307 = vunpack.c.h.b16 %v418
      %v2308 = vunpack.c.l.b16 %v419
      %v2309 = vunpack.c.h.b16 %v419
      %v2310 = vunpack.c.l.b16 %v420
      %v2311 = vunpack.c.h.b16 %v420
      %v2312 = vunpack.c.l.b16 %v421
      %v2313 = vunpack.c.h.b16 %v421
      %v2314 = vunpack.c.l.b16 %v422
      %v2315 = vunpack.c.h.b16 %v422
      %v2316 = vunpack.c.l.b16 %v423
      %v2317 = vunpack.c.h.b16 %v423
      %v2318 = vunpack.c.l.b16 %v424
      %v2319 = vunpack.c.h.b16 %v424
      %v2320 = vunpack.c.l.b16 %v425
      %v2321 = vunpack.c.h.b16 %v425
      %v2322 = vunpack.c.l.b16 %v426
      %v2323 = vunpack.c.h.b16 %v426
      %v2324 = vunpack.c.l.b16 %v427
      %v2325 = vunpack.c.h.b16 %v427
      %v2326 = vunpack.c.l.b16 %v428
      %v2327 = vunpack.c.h.b16 %v428
      %v2328 = vunpack.c.l.b16 %v429
      %v2329 = vunpack.c.h.b16 %v429
      %v2330 = vunpack.c.l.b16 %v430
      %v2331 = vunpack.c.h.b16 %v430
      %v2332 = vunpack.c.l.b16 %v431
      %v2333 = vunpack.c.h.b16 %v431
      %v2334 = vunpack.c.l.b16 %v432
      %v2335 = vunpack.c.h.b16 %v432
      %v2336 = vunpack.c.l.b16 %v433
      %v2337 = vunpack.c.h.b16 %v433
      %v2338 = vunpack.c.l.b16 %v434
      %v2339 = vunpack.c.h.b16 %v434
      %v2340 = vunpack.c.l.b16 %v435
      %v2341 = vunpack.c.h.b16 %v435
      %v2342 = vunpack.c.l.b16 %v436
      %v2343 = vunpack.c.h.b16 %v436
      %v2344 = vunpack.c.l.b16 %v437
      %v2345 = vunpack.c.h.b16 %v437
      %v2346 = vunpack.c.l.b16 %v438
      %v2347 = vunpack.c.h.b16 %v438
      %v2348 = vunpack.c.l.b16 %v439
      %v2349 = vunpack.c.h.b16 %v439
      %v2350 = vunpack.c.l.b16 %v440
      %v2351 = vunpack.c.h.b16 %v440
      %v2352 = vunpack.c.l.b16 %v441
      %v2353 = vunpack.c.h.b16 %v441
      %v2354 = vunpack.c.l.b16 %v442
      %v2355 = vunpack.c.h.b16 %v442
      %v2356 = vunpack.c.l.b16 %v443
      %v2357 = vunpack.c.h.b16 %v443
      %v2358 = vunpack.c.l.b16 %v444
      %v2359 = vunpack.c.h.b16 %v444
      %v2360 = vunpack.c.l.b16 %v445
      %v2361 = vunpack.c.h.b16 %v445
      %v2362 = vunpack.c.l.b16 %v446
      %v2363 = vunpack.c.h.b16 %v446
      %v2364 = vunpack.c.l.b16 %v447
      %v2365 = vunpack.c.h.b16 %v447
      %v2366 = vunpack.c.l.b16 %v448
      %v2367 = vunpack.c.h.b16 %v448
      %v2368 = vunpack.c.l.b16 %v449
      %v2369 = vunpack.c.h.b16 %v449
      %v2370 = vunpack.c.l.b16 %v450
      %v2371 = vunpack.c.h.b16 %v450
      %v2372 = vunpack.c.l.b16 %v451
      %v2373 = vunpack.c.h.b16 %v451
      %v2374 = vunpack.c.l.b16 %v452
      %v2375 = vunpack.c.h.b16 %v452
      %v2376 = vunpack.c.l.b16 %v453
      %v2377 = vunpack.c.h.b16 %v453
      %v2378 = vunpack.c.l.b16 %v454
      %v2379 = vunpack.c.h.b16 %v454
      %v2380 = vunpack.c.l.b16 %v455
      %v2381 = vunpack.c.h.b16 %v455
      %v2382 = vunpack.c.l.b16 %v456
      %v2383 = vunpack.c.h.b16 %v456
      %v2384 = vunpack.c.l.b16 %v457
      %v2385 = vunpack.c.h.b16 %v457
      %v2386 = vunpack.c.l.b16 %v458
      %v2387 = vunpack.c.h.b16 %v458
      %v2388 = vunpack.c.l.b16 %v459
      %v2389 = vunpack.c.h.b16 %v459
      %v2390 = vunpack.c.l.b16 %v460
      %v2391 = vunpack.c.h.b16 %v460
      %v2392 = vunpack.c.l.b16 %v461
      %v2393 = vunpack.c.h.b16 %v461
      %v2394 = vunpack.c.l.b16 %v462
      %v2395 = vunpack.c.h.b16 %v462
      %v2396 = vunpack.c.l.b16 %v463
      %v2397 = vunpack.c.h.b16 %v463
      %v2398 = vunpack.c.l.b16 %v464
      %v2399 = vunpack.c.h.b16 %v464
      %v2400 = vunpack.c.l.b16 %v465
      %v2401 = vunpack.c.h.b16 %v465
      %v2402 = vunpack.c.l.b16 %v466
      %v2403 = vunpack.c.h.b16 %v466
      %v2404 = vunpack.c.l.b16 %v467
      %v2405 = vunpack.c.h.b16 %v467
      %v2406 = vunpack.c.l.b16 %v468
      %v2407 = vunpack.c.h.b16 %v468
      %v2408 = vunpack.c.l.b16 %v469
      %v2409 = vunpack.c.h.b16 %v469
      %v2410 = vunpack.c.l.b16 %v470
      %v2411 = vunpack.c.h.b16 %v470
      %v2412 = vunpack.c.l.b16 %v471
      %v2413 = vunpack.c.h.b16 %v471
      %v2414 = vunpack.c.l.b16 %v472
      %v2415 = vunpack.c.h.b16 %v472
      %v2416 = vunpack.c.l.b16 %v473
      %v2417 = vunpack.c.h.b16 %v473
      %v2418 = vunpack.c.l.b16 %v474
      %v2419 = vunpack.c.h.b16 %v474
      %v2420 = vunpack.c.l.b16 %v475
      %v2421 = vunpack.c.h.b16 %v475
      %v2422 = vunpack.c.l.b16 %v476
      %v2423 = vunpack.c.h.b16 %v476
      %v2424 = vunpack.c.l.b16 %v477
      %v2425 = vunpack.c.h.b16 %v477
      %v2426 = vunpack.c.l.b16 %v478
      %v2427 = vunpack.c.h.b16 %v478
      %v2428 = vunpack.c.l.b16 %v479
      %v2429 = vunpack.c.h.b16 %v479
      %v2430 = vunpack.c.l.b16 %v480
      %v2431 = vunpack.c.h.b16 %v480
      %v2432 = vunpack.c.l.b16 %v481
      %v2433 = vunpack.c.h.b16 %v481
      %v2434 = vunpack.c.l.b16 %v482
      %v2435 = vunpack.c.h.b16 %v482
      %v2436 = vunpack.c.l.b16 %v483
      %v2437 = vunpack.c.h.b16 %v483
      %v2438 = vunpack.c.l.b16 %v484
      %v2439 = vunpack.c.h.b16 %v484
      %v2440 = vunpack.c.l.b16 %v485
      %v2441 = vunpack.c.h.b16 %v485
      %v2442 = vunpack.c.l.b16 %v486
      %v2443 = vunpack.c.h.b16 %v486
      %v2444 = vunpack.c.l.b16 %v487
      %v2445 = vunpack.c.h.b16 %v487
      %v2446 = vunpack.c.l.b16 %v488
      %v2447 = vunpack.c.h.b16 %v488
      %v2448 = vunpack.c.l.b16 %v489
      %v2449 = vunpack.c.h.b16 %v489
      %v2450 = vunpack.c.l.b16 %v490
      %v2451 = vunpack.c.h.b16 %v490
      %v2452 = vunpack.c.l.b16 %v491
      %v2453 = vunpack.c.h.b16 %v491
      %v2454 = vunpack.c.l.b16 %v492
      %v2455 = vunpack.c.h.b16 %v492
      %v2456 = vunpack.c.l.b16 %v493
      %v2457 = vunpack.c.h.b16 %v493
      %v2458 = vunpack.c.l.b16 %v494
      %v2459 = vunpack.c.h.b16 %v494
      %v2460 = vunpack.c.l.b16 %v495
      %v2461 = vunpack.c.h.b16 %v495
      %v2462 = vunpack.c.l.b16 %v496
      %v2463 = vunpack.c.h.b16 %v496
      %v2464 = vunpack.c.l.b16 %v497
      %v2465 = vunpack.c.h.b16 %v497
      %v2466 = vunpack.c.l.b16 %v498
      %v2467 = vunpack.c.h.b16 %v498
      %v2468 = vunpack.c.l.b16 %v499
      %v2469 = vunpack.c.h.b16 %v499
      %v2470 = vunpack.c.l.b16 %v500
      %v2471 = vunpack.c.h.b16 %v500
      %v2472 = vunpack.c.l.b16 %v501
      %v2473 = vunpack.c.h.b16 %v501
      %v2474 = vunpack.c.l.b16 %v502
      %v2475 = vunpack.c.h.b16 %v502
      %v2476 = vunpack.c.l.b16 %v503
      %v2477 = vunpack.c.h.b16 %v503
      %v2478 = vunpack.c.l.b16 %v504
      %v2479 = vunpack.c.h.b16 %v504
      %v2480 = vunpack.c.l.b16 %v505
      %v2481 = vunpack.c.h.b16 %v505
      %v2482 = vunpack.c.l.b16 %v506
      %v2483 = vunpack.c.h.b16 %v506
      %v2484 = vunpack.c.l.b16 %v507
      %v2485 = vunpack.c.h.b16 %v507
      %v2486 = vunpack.c.l.b16 %v508
      %v2487 = vunpack.c.h.b16 %v508
      %v2488 = vunpack.c.l.b16 %v509
      %v2489 = vunpack.c.h.b16 %v509
      %v2490 = vunpack.c.l.b16 %v510
      %v2491 = vunpack.c.h.b16 %v510
      %v2492 = vunpack.c.l.b16 %v511
      %v2493 = vunpack.c.h.b16 %v511
      %v2494 = vunpack.c.l.b16 %v512
      %v2495 = vunpack.c.h.b16 %v512
      %v2496 = vunpack.c.l.b16 %v513
      %v2497 = vunpack.c.h.b16 %v513
      %v2498 = vunpack.c.l.b16 %v514
      %v2499 = vunpack.c.h.b16 %v514
      %v2500 = vunpack.c.l.b16 %v515
      %v2501 = vunpack.c.h.b16 %v515
      %v2502 = vunpack.c.l.b16 %v516
      %v2503 = vunpack.c.h.b16 %v516
      %v2504 = vunpack.c.l.b16 %v517
      %v2505 = vunpack.c.h.b16 %v517
      %v2506 = vunpack.c.l.b16 %v518
      %v2507 = vunpack.c.h.b16 %v518
      %v2508 = vunpack.c.l.b16 %v519
      %v2509 = vunpack.c.h.b16 %v519
      %v2510 = vunpack.c.l.b16 %v520
      %v2511 = vunpack.c.h.b16 %v520
      %v2512 = vunpack.c.l.b16 %v521
      %v2513 = vunpack.c.h.b16 %v521
      %v2514 = vunpack.c.l.b16 %v522
      %v2515 = vunpack.c.h.b16 %v522
      %v2516 = vunpack.c.l.b16 %v523
      %v2517 = vunpack.c.h.b16 %v523
      %v2518 = vunpack.c.l.b16 %v524
      %v2519 = vunpack.c.h.b16 %v524
      %v2520 = vunpack.c.l.b16 %v525
      %v2521 = vunpack.c.h.b16 %v525
      %v2522 = vunpack.c.l.b16 %v526
      %v2523 = vunpack.c.h.b16 %v526
      %v2524 = vunpack.c.l.b16 %v527
      %v2525 = vunpack.c.h.b16 %v527
      %v2526 = vunpack.c.l.b16 %v528
      %v2527 = vunpack.c.h.b16 %v528
      %v2528 = vunpack.c.l.b16 %v529
      %v2529 = vunpack.c.h.b16 %v529
      %v2530 = vunpack.c.l.b16 %v530
      %v2531 = vunpack.c.h.b16 %v530
      %v2532 = vunpack.c.l.b16 %v531
      %v2533 = vunpack.c.h.b16 %v531
      %v2534 = vunpack.c.l.b16 %v532
      %v2535 = vunpack.c.h.b16 %v532
      %v2536 = vunpack.c.l.b16 %v533
      %v2537 = vunpack.c.h.b16 %v533
      %v2538 = vunpack.c.l.b16 %v534
      %v2539 = vunpack.c.h.b16 %v534
      %v2540 = vunpack.c.l.b16 %v535
      %v2541 = vunpack.c.h.b16 %v535
      %v2542 = vunpack.c.l.b16 %v536
      %v2543 = vunpack.c.h.b16 %v536
      %v2544 = vunpack.c.l.b16 %v537
      %v2545 = vunpack.c.h.b16 %v537
      %v2546 = vunpack.c.l.b16 %v538
      %v2547 = vunpack.c.h.b16 %v538
      %v2548 = vunpack.c.l.b16 %v539
      %v2549 = vunpack.c.h.b16 %v539
      %v2550 = vunpack.c.l.b16 %v540
      %v2551 = vunpack.c.h.b16 %v540
      %v2552 = vpack.c.b16 %v2304, %v2296
      %v2553 = vpack.c.b16 %v2305, %v2297
      %v2554 = vpack.c.b16 %v2306, %v2298
      %v2555 = vpack.c.b16 %v2307, %v2299
      %v2556 = vpack.c.b16 %v2308, %v2300
      %v2557 = vpack.c.b16 %v2309, %v2301
      %v2558 = vpack.c.b16 %v2310, %v2302
      %v2559 = vpack.c.b16 %v2311, %v2303
      %v2560 = vpack.c.b16 %v2320, %v2312
      %v2561 = vpack.c.b16 %v2321, %v2313
      %v2562 = vpack.c.b16 %v2322, %v2314
      %v2563 = vpack.c.b16 %v2323, %v2315
      %v2564 = vpack.c.b16 %v2324, %v2316
      %v2565 = vpack.c.b16 %v2325, %v2317
      %v2566 = vpack.c.b16 %v2326, %v2318
      %v2567 = vpack.c.b16 %v2327, %v2319
      %v2568 = vpack.c.b16 %v2336, %v2328
      %v2569 = vpack.c.b16 %v2337, %v2329
      %v2570 = vpack.c.b16 %v2338, %v2330
      %v2571 = vpack.c.b16 %v2339, %v2331
      %v2572 = vpack.c.b16 %v2340, %v2332
      %v2573 = vpack.c.b16 %v2341, %v2333
      %v2574 = vpack.c.b16 %v2342, %v2334
      %v2575 = vpack.c.b16 %v2343, %v2335
      %v2576 = vpack.c.b16 %v2352, %v2344
      %v2577 = vpack.c.b16 %v2353, %v2345
      %v2578 = vpack.c.b16 %v2354, %v2346
      %v2579 = vpack.c.b16 %v2355, %v2347
      %v2580 = vpack.c.b16 %v2356, %v2348
      %v2581 = vpack.c.b16 %v2357, %v2349
      %v2582 = vpack.c.b16 %v2358, %v2350
      %v2583 = vpack.c.b16 %v2359, %v2351
      %v2584 = vpack.c.b16 %v2368, %v2360
      %v2585 = vpack.c.b16 %v2369, %v2361
      %v2586 = vpack.c.b16 %v2370, %v2362
      %v2587 = vpack.c.b16 %v2371, %v2363
      %v2588 = vpack.c.b16 %v2372, %v2364
      %v2589 = vpack.c.b16 %v2373, %v2365
      %v2590 = vpack.c.b16 %v2374, %v2366
      %v2591 = vpack.c.b16 %v2375, %v2367
      %v2592 = vpack.c.b16 %v2384, %v2376
      %v2593 = vpack.c.b16 %v2385, %v2377
      %v2594 = vpack.c.b16 %v2386, %v2378
      %v2595 = vpack.c.b16 %v2387, %v2379
      %v2596 = vpack.c.b16 %v2388, %v2380
      %v2597 = vpack.c.b16 %v2389, %v2381
      %v2598 = vpack.c.b16 %v2390, %v2382
      %v2599 = vpack.c.b16 %v2391, %v2383
      %v2600 = vpack.c.b16 %v2400, %v2392
      %v2601 = vpack.c.b16 %v2401, %v2393
      %v2602 = vpack.c.b16 %v2402, %v2394
      %v2603 = vpack.c.b16 %v2403, %v2395
      %v2604 = vpack.c.b16 %v2404, %v2396
      %v2605 = vpack.c.b16 %v2405, %v2397
      %v2606 = vpack.c.b16 %v2406, %v2398
      %v2607 = vpack.c.b16 %v2407, %v2399
      %v2608 = vpack.c.b16 %v2416, %v2408
      %v2609 = vpack.c.b16 %v2417, %v2409
      %v2610 = vpack.c.b16 %v2418, %v2410
      %v2611 = vpack.c.b16 %v2419, %v2411
      %v2612 = vpack.c.b16 %v2420, %v2412
      %v2613 = vpack.c.b16 %v2421, %v2413
      %v2614 = vpack.c.b16 %v2422, %v2414
      %v2615 = vpack.c.b16 %v2423, %v2415
      %v2616 = vpack.c.b16 %v2432, %v2424
      %v2617 = vpack.c.b16 %v2433, %v2425
      %v2618 = vpack.c.b16 %v2434, %v2426
      %v2619 = vpack.c.b16 %v2435, %v2427
      %v2620 = vpack.c.b16 %v2436, %v2428
      %v2621 = vpack.c.b16 %v2437, %v2429
      %v2622 = vpack.c.b16 %v2438, %v2430
      %v2623 = vpack.c.b16 %v2439, %v2431
      %v2624 = vpack.c.b16 %v2448, %v2440
      %v2625 = vpack.c.b16 %v2449, %v2441
      %v2626 = vpack.c.b16 %v2450, %v2442
      %v2627 = vpack.c.b16 %v2451, %v2443
      %v2628 = vpack.c.b16 %v2452, %v2444
      %v2629 = vpack.c.b16 %v2453, %v2445
      %v2630 = vpack.c.b16 %v2454, %v2446
      %v2631 = vpack.c.b16 %v2455, %v2447
      %v2632 = vpack.c.b16 %v2464, %v2456
      %v2633 = vpack.c.b16 %v2465, %v2457
      %v2634 = vpack.c.b16 %v2466, %v2458
      %v2635 = vpack.c.b16 %v2467, %v2459
      %v2636 = vpack.c.b16 %v2468, %v2460
      %v2637 = vpack.c.b16 %v2469, %v2461
      %v2638 = vpack.c.b16 %v2470, %v2462
      %v2639 = vpack.c.b16 %v2471, %v2463
      %v2640 = vpack.c.b16 %v2480, %v2472
      %v2641 = vpack.c.b16 %v2481, %v2473
      %v2642 = vpack.c.b16 %v2482, %v2474
      %v2643 = vpack.c.b16 %v2483, %v2475
      %v2644 = vpack.c.b16 %v2484, %v2476
      %v2645 = vpack.c.b16 %v2485, %v2477
      %v2646 = vpack.c.b16 %v2486, %v2478
      %v2647 = vpack.c.b16 %v2487, %v2479
      %v2648 = vpack.c.b16 %v2496, %v2488
      %v2649 = vpack.c.b16 %v2497, %v2489
      %v2650 = vpack.c.b16 %v2498, %v2490
      %v2651 = vpack.c.b16 %v2499, %v2491
      %v2652 = vpack.c.b16 %v2500, %v2492
      %v2653 = vpack.c.b16 %v2501, %v2493
      %v2654 = vpack.c.b16 %v2502, %v2494
      %v2655 = vpack.c.b16 %v2503, %v2495
      %v2656 = vpack.c.b16 %v2512, %v2504
      %v2657 = vpack.c.b16 %v2513, %v2505
      %v2658 = vpack.c.b16 %v2514, %v2506
      %v2659 = vpack.c.b16 %v2515, %v2507
      %v2660 = vpack.c.b16 %v2516, %v2508
      %v2661 = vpack.c.b16 %v2517, %v2509
      %v2662 = vpack.c.b16 %v2518, %v2510
      %v2663 = vpack.c.b16 %v2519, %v2511
      %v2664 = vpack.c.b16 %v2528, %v2520
      %v2665 = vpack.c.b16 %v2529, %v2521
      %v2666 = vpack.c.b16 %v2530, %v2522
      %v2667 = vpack.c.b16 %v2531, %v2523
      %v2668 = vpack.c.b16 %v2532, %v2524
      %v2669 = vpack.c.b16 %v2533, %v2525
      %v2670 = vpack.c.b16 %v2534, %v2526
      %v2671 = vpack.c.b16 %v2535, %v2527
      %v2672 = vpack.c.b16 %v2544, %v2536
      %v2673 = vpack.c.b16 %v2545, %v2537
      %v2674 = vpack.c.b16 %v2546, %v2538
      %v2675 = vpack.c.b16 %v2547, %v2539
      %v2676 = vpack.c.b16 %v2548, %v2540
      %v2677 = vpack.c.b16 %v2549, %v2541
      %v2678 = vpack.c.b16 %v2550, %v2542
      %v2679 = vpack.c.b16 %v2551, %v2543
      %2808 = vmatprep.subr.bf16.mxu0 %v2553
      %2809 = vmatpush1.bf16.msra.mxu0 %v2552
      %2810 = vmatprep.subr.bf16.mxu0 %v2561
      %2811 = vmatpush1.bf16.msra.mxu0 %v2560
      %2812 = vmatprep.subr.bf16.mxu0 %v2569
      %2813 = vmatpush1.bf16.msra.mxu0 %v2568
      %2814 = vmatprep.subr.bf16.mxu0 %v2577
      %2815 = vmatpush1.bf16.msra.mxu0 %v2576
      %2816 = vmatprep.subr.bf16.mxu0 %v2585
      %2817 = vmatpush1.bf16.msra.mxu0 %v2584
      %2818 = vmatprep.subr.bf16.mxu0 %v2593
      %2819 = vmatpush1.bf16.msra.mxu0 %v2592
      %2820 = vmatprep.subr.bf16.mxu0 %v2601
      %2821 = vmatpush1.bf16.msra.mxu0 %v2600
      %2822 = vmatprep.subr.bf16.mxu0 %v2609
      %2823 = vmatpush1.bf16.msra.mxu0 %v2608
      %2824 = vmatprep.subr.bf16.mxu0 %v2617
      %2825 = vmatpush1.bf16.msra.mxu0 %v2616
      %2826 = vmatprep.subr.bf16.mxu0 %v2625
      %2827 = vmatpush1.bf16.msra.mxu0 %v2624
      %2828 = vmatprep.subr.bf16.mxu0 %v2633
      %2829 = vmatpush1.bf16.msra.mxu0 %v2632
      %2830 = vmatprep.subr.bf16.mxu0 %v2641
      %2831 = vmatpush1.bf16.msra.mxu0 %v2640
      %2832 = vmatprep.subr.bf16.mxu0 %v2649
      %2833 = vmatpush1.bf16.msra.mxu0 %v2648
      %2834 = vmatprep.subr.bf16.mxu0 %v2657
      %2835 = vmatpush1.bf16.msra.mxu0 %v2656
      %2836 = vmatprep.subr.bf16.mxu0 %v2665
      %2837 = vmatpush1.bf16.msra.mxu0 %v2664
      %2838 = vmatprep.subr.bf16.mxu0 %v2673
      %2839 = vmatpush1.bf16.msra.mxu0 %v2672
      %2840 = vmatprep.mubr.bf16.mxu0 %v2165
      %2841 = vmatmul.mubr.bf16.gmra.mrb[0].mxu0 %v2161
      %v2842 = vpop.f32.mrb[0].mxu0
      %v2843 = vadd.f32 0.0, %v2842
      %v2844 = vpop.f32.mrb[0].mxu0
      %v2845 = vadd.f32 0.0, %v2844
      %v2846 = vpop.f32.mrb[0].mxu0
      %v2847 = vpop.f32.mrb[0].mxu0
      %2848 = vdwg.mxu0
      %2849 = vmatprep.subr.bf16.mxu0 %v2555
      %2850 = vmatpush1.bf16.msra.mxu0 %v2554
      %2851 = vmatprep.subr.bf16.mxu0 %v2563
      %2852 = vmatpush1.bf16.msra.mxu0 %v2562
      %2853 = vmatprep.subr.bf16.mxu0 %v2571
      %2854 = vmatpush1.bf16.msra.mxu0 %v2570
      %2855 = vmatprep.subr.bf16.mxu0 %v2579
      %2856 = vmatpush1.bf16.msra.mxu0 %v2578
      %2857 = vmatprep.subr.bf16.mxu0 %v2587
      %2858 = vmatpush1.bf16.msra.mxu0 %v2586
      %2859 = vmatprep.subr.bf16.mxu0 %v2595
      %2860 = vmatpush1.bf16.msra.mxu0 %v2594
      %2861 = vmatprep.subr.bf16.mxu0 %v2603
      %2862 = vmatpush1.bf16.msra.mxu0 %v2602
      %2863 = vmatprep.subr.bf16.mxu0 %v2611
      %2864 = vmatpush1.bf16.msra.mxu0 %v2610
      %2865 = vmatprep.subr.bf16.mxu0 %v2619
      %2866 = vmatpush1.bf16.msra.mxu0 %v2618
      %2867 = vmatprep.subr.bf16.mxu0 %v2627
      %2868 = vmatpush1.bf16.msra.mxu0 %v2626
      %2869 = vmatprep.subr.bf16.mxu0 %v2635
      %2870 = vmatpush1.bf16.msra.mxu0 %v2634
      %2871 = vmatprep.subr.bf16.mxu0 %v2643
      %2872 = vmatpush1.bf16.msra.mxu0 %v2642
      %2873 = vmatprep.subr.bf16.mxu0 %v2651
      %2874 = vmatpush1.bf16.msra.mxu0 %v2650
      %2875 = vmatprep.subr.bf16.mxu0 %v2659
      %2876 = vmatpush1.bf16.msra.mxu0 %v2658
      %2877 = vmatprep.subr.bf16.mxu0 %v2667
      %2878 = vmatpush1.bf16.msra.mxu0 %v2666
      %2879 = vmatprep.subr.bf16.mxu0 %v2675
      %2880 = vmatpush1.bf16.msra.mxu0 %v2674
      %2881 = vmatprep.mubr.bf16.mxu0 %v2165
      %2882 = vmatmul.mubr.bf16.gmra.mrb[0].mxu0 %v2161
      %v2883 = vpop.f32.mrb[0].mxu0
      %v2884 = vadd.f32 0.0, %v2883
      %v2885 = vpop.f32.mrb[0].mxu0
      %v2886 = vadd.f32 0.0, %v2885
      %v2887 = vpop.f32.mrb[0].mxu0
      %v2888 = vpop.f32.mrb[0].mxu0
      %2889 = vdwg.mxu0
      %2890 = vmatprep.subr.bf16.mxu0 %v2557
      %2891 = vmatpush1.bf16.msra.mxu0 %v2556
      %2892 = vmatprep.subr.bf16.mxu0 %v2565
      %2893 = vmatpush1.bf16.msra.mxu0 %v2564
      %2894 = vmatprep.subr.bf16.mxu0 %v2573
      %2895 = vmatpush1.bf16.msra.mxu0 %v2572
      %2896 = vmatprep.subr.bf16.mxu0 %v2581
      %2897 = vmatpush1.bf16.msra.mxu0 %v2580
      %2898 = vmatprep.subr.bf16.mxu0 %v2589
      %2899 = vmatpush1.bf16.msra.mxu0 %v2588
      %2900 = vmatprep.subr.bf16.mxu0 %v2597
      %2901 = vmatpush1.bf16.msra.mxu0 %v2596
      %2902 = vmatprep.subr.bf16.mxu0 %v2605
      %2903 = vmatpush1.bf16.msra.mxu0 %v2604
      %2904 = vmatprep.subr.bf16.mxu0 %v2613
      %2905 = vmatpush1.bf16.msra.mxu0 %v2612
      %2906 = vmatprep.subr.bf16.mxu0 %v2621
      %2907 = vmatpush1.bf16.msra.mxu0 %v2620
      %2908 = vmatprep.subr.bf16.mxu0 %v2629
      %2909 = vmatpush1.bf16.msra.mxu0 %v2628
      %2910 = vmatprep.subr.bf16.mxu0 %v2637
      %2911 = vmatpush1.bf16.msra.mxu0 %v2636
      %2912 = vmatprep.subr.bf16.mxu0 %v2645
      %2913 = vmatpush1.bf16.msra.mxu0 %v2644
      %2914 = vmatprep.subr.bf16.mxu0 %v2653
      %2915 = vmatpush1.bf16.msra.mxu0 %v2652
      %2916 = vmatprep.subr.bf16.mxu0 %v2661
      %2917 = vmatpush1.bf16.msra.mxu0 %v2660
      %2918 = vmatprep.subr.bf16.mxu0 %v2669
      %2919 = vmatpush1.bf16.msra.mxu0 %v2668
      %2920 = vmatprep.subr.bf16.mxu0 %v2677
      %2921 = vmatpush1.bf16.msra.mxu0 %v2676
      %2922 = vmatprep.mubr.bf16.mxu0 %v2165
      %2923 = vmatmul.mubr.bf16.gmra.mrb[0].mxu0 %v2161
      %v2924 = vpop.f32.mrb[0].mxu0
      %v2925 = vadd.f32 0.0, %v2924
      %v2926 = vpop.f32.mrb[0].mxu0
      %v2927 = vadd.f32 0.0, %v2926
      %v2928 = vpop.f32.mrb[0].mxu0
      %v2929 = vpop.f32.mrb[0].mxu0
      %2930 = vdwg.mxu0
      %2931 = vmatprep.subr.bf16.mxu0 %v2559
      %2932 = vmatpush1.bf16.msra.mxu0 %v2558
      %2933 = vmatprep.subr.bf16.mxu0 %v2567
      %2934 = vmatpush1.bf16.msra.mxu0 %v2566
      %2935 = vmatprep.subr.bf16.mxu0 %v2575
      %2936 = vmatpush1.bf16.msra.mxu0 %v2574
      %2937 = vmatprep.subr.bf16.mxu0 %v2583
      %2938 = vmatpush1.bf16.msra.mxu0 %v2582
      %2939 = vmatprep.subr.bf16.mxu0 %v2591
      %2940 = vmatpush1.bf16.msra.mxu0 %v2590
      %2941 = vmatprep.subr.bf16.mxu0 %v2599
      %2942 = vmatpush1.bf16.msra.mxu0 %v2598
      %2943 = vmatprep.subr.bf16.mxu0 %v2607
      %2944 = vmatpush1.bf16.msra.mxu0 %v2606
      %2945 = vmatprep.subr.bf16.mxu0 %v2615
      %2946 = vmatpush1.bf16.msra.mxu0 %v2614
      %2947 = vmatprep.subr.bf16.mxu0 %v2623
      %2948 = vmatpush1.bf16.msra.mxu0 %v2622
      %2949 = vmatprep.subr.bf16.mxu0 %v2631
      %2950 = vmatpush1.bf16.msra.mxu0 %v2630
      %2951 = vmatprep.subr.bf16.mxu0 %v2639
      %2952 = vmatpush1.bf16.msra.mxu0 %v2638
      %2953 = vmatprep.subr.bf16.mxu0 %v2647
      %2954 = vmatpush1.bf16.msra.mxu0 %v2646
      %2955 = vmatprep.subr.bf16.mxu0 %v2655
      %2956 = vmatpush1.bf16.msra.mxu0 %v2654
      %2957 = vmatprep.subr.bf16.mxu0 %v2663
      %2958 = vmatpush1.bf16.msra.mxu0 %v2662
      %2959 = vmatprep.subr.bf16.mxu0 %v2671
      %2960 = vmatpush1.bf16.msra.mxu0 %v2670
      %2961 = vmatprep.subr.bf16.mxu0 %v2679
      %2962 = vmatpush1.bf16.msra.mxu0 %v2678
      %2963 = vmatprep.mubr.bf16.mxu0 %v2165
      %2964 = vmatmul.mubr.bf16.gmra.mrb[0].mxu0 %v2161
      %v2965 = vpop.f32.mrb[0].mxu0
      %v2966 = vadd.f32 0.0, %v2965
      %v2967 = vpop.f32.mrb[0].mxu0
      %v2968 = vadd.f32 0.0, %v2967
      %v2969 = vpop.f32.mrb[0].mxu0
      %v2970 = vpop.f32.mrb[0].mxu0
      %2971 = vdwg.mxu0
      %v2972 = vpack.i.b16 %v1336, %v1336
      %v2973 = vlaneseq
      %v2974 = vshrl.u32 %v2973, 7
      %v2975 = vsub.s32 0, %v2974
      %v2976 = vrot.slane %v2972, %v2975
      %v2977 = vlaneseq
      %v2978 = vshrl.u32 %v2977, 7
      %v2979 = vsub.s32 1, %v2978
      %v2980 = vrot.slane %v2972, %v2979
      %v3111 = vunpack.c.l.b16 %v541
      %v3112 = vunpack.c.h.b16 %v541
      %v3113 = vunpack.c.l.b16 %v542
      %v3114 = vunpack.c.h.b16 %v542
      %v3115 = vunpack.c.l.b16 %v543
      %v3116 = vunpack.c.h.b16 %v543
      %v3117 = vunpack.c.l.b16 %v544
      %v3118 = vunpack.c.h.b16 %v544
      %v3119 = vunpack.c.l.b16 %v545
      %v3120 = vunpack.c.h.b16 %v545
      %v3121 = vunpack.c.l.b16 %v546
      %v3122 = vunpack.c.h.b16 %v546
      %v3123 = vunpack.c.l.b16 %v547
      %v3124 = vunpack.c.h.b16 %v547
      %v3125 = vunpack.c.l.b16 %v548
      %v3126 = vunpack.c.h.b16 %v548
      %v3127 = vunpack.c.l.b16 %v549
      %v3128 = vunpack.c.h.b16 %v549
      %v3129 = vunpack.c.l.b16 %v550
      %v3130 = vunpack.c.h.b16 %v550
      %v3131 = vunpack.c.l.b16 %v551
      %v3132 = vunpack.c.h.b16 %v551
      %v3133 = vunpack.c.l.b16 %v552
      %v3134 = vunpack.c.h.b16 %v552
      %v3135 = vunpack.c.l.b16 %v553
      %v3136 = vunpack.c.h.b16 %v553
      %v3137 = vunpack.c.l.b16 %v554
      %v3138 = vunpack.c.h.b16 %v554
      %v3139 = vunpack.c.l.b16 %v555
      %v3140 = vunpack.c.h.b16 %v555
      %v3141 = vunpack.c.l.b16 %v556
      %v3142 = vunpack.c.h.b16 %v556
      %v3143 = vunpack.c.l.b16 %v557
      %v3144 = vunpack.c.h.b16 %v557
      %v3145 = vunpack.c.l.b16 %v558
      %v3146 = vunpack.c.h.b16 %v558
      %v3147 = vunpack.c.l.b16 %v559
      %v3148 = vunpack.c.h.b16 %v559
      %v3149 = vunpack.c.l.b16 %v560
      %v3150 = vunpack.c.h.b16 %v560
      %v3151 = vunpack.c.l.b16 %v561
      %v3152 = vunpack.c.h.b16 %v561
      %v3153 = vunpack.c.l.b16 %v562
      %v3154 = vunpack.c.h.b16 %v562
      %v3155 = vunpack.c.l.b16 %v563
      %v3156 = vunpack.c.h.b16 %v563
      %v3157 = vunpack.c.l.b16 %v564
      %v3158 = vunpack.c.h.b16 %v564
      %v3159 = vunpack.c.l.b16 %v565
      %v3160 = vunpack.c.h.b16 %v565
      %v3161 = vunpack.c.l.b16 %v566
      %v3162 = vunpack.c.h.b16 %v566
      %v3163 = vunpack.c.l.b16 %v567
      %v3164 = vunpack.c.h.b16 %v567
      %v3165 = vunpack.c.l.b16 %v568
      %v3166 = vunpack.c.h.b16 %v568
      %v3167 = vunpack.c.l.b16 %v569
      %v3168 = vunpack.c.h.b16 %v569
      %v3169 = vunpack.c.l.b16 %v570
      %v3170 = vunpack.c.h.b16 %v570
      %v3171 = vunpack.c.l.b16 %v571
      %v3172 = vunpack.c.h.b16 %v571
      %v3173 = vunpack.c.l.b16 %v572
      %v3174 = vunpack.c.h.b16 %v572
      %v3175 = vunpack.c.l.b16 %v573
      %v3176 = vunpack.c.h.b16 %v573
      %v3177 = vunpack.c.l.b16 %v574
      %v3178 = vunpack.c.h.b16 %v574
      %v3179 = vunpack.c.l.b16 %v575
      %v3180 = vunpack.c.h.b16 %v575
      %v3181 = vunpack.c.l.b16 %v576
      %v3182 = vunpack.c.h.b16 %v576
      %v3183 = vunpack.c.l.b16 %v577
      %v3184 = vunpack.c.h.b16 %v577
      %v3185 = vunpack.c.l.b16 %v578
      %v3186 = vunpack.c.h.b16 %v578
      %v3187 = vunpack.c.l.b16 %v579
      %v3188 = vunpack.c.h.b16 %v579
      %v3189 = vunpack.c.l.b16 %v580
      %v3190 = vunpack.c.h.b16 %v580
      %v3191 = vunpack.c.l.b16 %v581
      %v3192 = vunpack.c.h.b16 %v581
      %v3193 = vunpack.c.l.b16 %v582
      %v3194 = vunpack.c.h.b16 %v582
      %v3195 = vunpack.c.l.b16 %v583
      %v3196 = vunpack.c.h.b16 %v583
      %v3197 = vunpack.c.l.b16 %v584
      %v3198 = vunpack.c.h.b16 %v584
      %v3199 = vunpack.c.l.b16 %v585
      %v3200 = vunpack.c.h.b16 %v585
      %v3201 = vunpack.c.l.b16 %v586
      %v3202 = vunpack.c.h.b16 %v586
      %v3203 = vunpack.c.l.b16 %v587
      %v3204 = vunpack.c.h.b16 %v587
      %v3205 = vunpack.c.l.b16 %v588
      %v3206 = vunpack.c.h.b16 %v588
      %v3207 = vunpack.c.l.b16 %v589
      %v3208 = vunpack.c.h.b16 %v589
      %v3209 = vunpack.c.l.b16 %v590
      %v3210 = vunpack.c.h.b16 %v590
      %v3211 = vunpack.c.l.b16 %v591
      %v3212 = vunpack.c.h.b16 %v591
      %v3213 = vunpack.c.l.b16 %v592
      %v3214 = vunpack.c.h.b16 %v592
      %v3215 = vunpack.c.l.b16 %v593
      %v3216 = vunpack.c.h.b16 %v593
      %v3217 = vunpack.c.l.b16 %v594
      %v3218 = vunpack.c.h.b16 %v594
      %v3219 = vunpack.c.l.b16 %v595
      %v3220 = vunpack.c.h.b16 %v595
      %v3221 = vunpack.c.l.b16 %v596
      %v3222 = vunpack.c.h.b16 %v596
      %v3223 = vunpack.c.l.b16 %v597
      %v3224 = vunpack.c.h.b16 %v597
      %v3225 = vunpack.c.l.b16 %v598
      %v3226 = vunpack.c.h.b16 %v598
      %v3227 = vunpack.c.l.b16 %v599
      %v3228 = vunpack.c.h.b16 %v599
      %v3229 = vunpack.c.l.b16 %v600
      %v3230 = vunpack.c.h.b16 %v600
      %v3231 = vunpack.c.l.b16 %v601
      %v3232 = vunpack.c.h.b16 %v601
      %v3233 = vunpack.c.l.b16 %v602
      %v3234 = vunpack.c.h.b16 %v602
      %v3235 = vunpack.c.l.b16 %v603
      %v3236 = vunpack.c.h.b16 %v603
      %v3237 = vunpack.c.l.b16 %v604
      %v3238 = vunpack.c.h.b16 %v604
      %v3239 = vunpack.c.l.b16 %v605
      %v3240 = vunpack.c.h.b16 %v605
      %v3241 = vunpack.c.l.b16 %v606
      %v3242 = vunpack.c.h.b16 %v606
      %v3243 = vunpack.c.l.b16 %v607
      %v3244 = vunpack.c.h.b16 %v607
      %v3245 = vunpack.c.l.b16 %v608
      %v3246 = vunpack.c.h.b16 %v608
      %v3247 = vunpack.c.l.b16 %v609
      %v3248 = vunpack.c.h.b16 %v609
      %v3249 = vunpack.c.l.b16 %v610
      %v3250 = vunpack.c.h.b16 %v610
      %v3251 = vunpack.c.l.b16 %v611
      %v3252 = vunpack.c.h.b16 %v611
      %v3253 = vunpack.c.l.b16 %v612
      %v3254 = vunpack.c.h.b16 %v612
      %v3255 = vunpack.c.l.b16 %v613
      %v3256 = vunpack.c.h.b16 %v613
      %v3257 = vunpack.c.l.b16 %v614
      %v3258 = vunpack.c.h.b16 %v614
      %v3259 = vunpack.c.l.b16 %v615
      %v3260 = vunpack.c.h.b16 %v615
      %v3261 = vunpack.c.l.b16 %v616
      %v3262 = vunpack.c.h.b16 %v616
      %v3263 = vunpack.c.l.b16 %v617
      %v3264 = vunpack.c.h.b16 %v617
      %v3265 = vunpack.c.l.b16 %v618
      %v3266 = vunpack.c.h.b16 %v618
      %v3267 = vunpack.c.l.b16 %v619
      %v3268 = vunpack.c.h.b16 %v619
      %v3269 = vunpack.c.l.b16 %v620
      %v3270 = vunpack.c.h.b16 %v620
      %v3271 = vunpack.c.l.b16 %v621
      %v3272 = vunpack.c.h.b16 %v621
      %v3273 = vunpack.c.l.b16 %v622
      %v3274 = vunpack.c.h.b16 %v622
      %v3275 = vunpack.c.l.b16 %v623
      %v3276 = vunpack.c.h.b16 %v623
      %v3277 = vunpack.c.l.b16 %v624
      %v3278 = vunpack.c.h.b16 %v624
      %v3279 = vunpack.c.l.b16 %v625
      %v3280 = vunpack.c.h.b16 %v625
      %v3281 = vunpack.c.l.b16 %v626
      %v3282 = vunpack.c.h.b16 %v626
      %v3283 = vunpack.c.l.b16 %v627
      %v3284 = vunpack.c.h.b16 %v627
      %v3285 = vunpack.c.l.b16 %v628
      %v3286 = vunpack.c.h.b16 %v628
      %v3287 = vunpack.c.l.b16 %v629
      %v3288 = vunpack.c.h.b16 %v629
      %v3289 = vunpack.c.l.b16 %v630
      %v3290 = vunpack.c.h.b16 %v630
      %v3291 = vunpack.c.l.b16 %v631
      %v3292 = vunpack.c.h.b16 %v631
      %v3293 = vunpack.c.l.b16 %v632
      %v3294 = vunpack.c.h.b16 %v632
      %v3295 = vunpack.c.l.b16 %v633
      %v3296 = vunpack.c.h.b16 %v633
      %v3297 = vunpack.c.l.b16 %v634
      %v3298 = vunpack.c.h.b16 %v634
      %v3299 = vunpack.c.l.b16 %v635
      %v3300 = vunpack.c.h.b16 %v635
      %v3301 = vunpack.c.l.b16 %v636
      %v3302 = vunpack.c.h.b16 %v636
      %v3303 = vunpack.c.l.b16 %v637
      %v3304 = vunpack.c.h.b16 %v637
      %v3305 = vunpack.c.l.b16 %v638
      %v3306 = vunpack.c.h.b16 %v638
      %v3307 = vunpack.c.l.b16 %v639
      %v3308 = vunpack.c.h.b16 %v639
      %v3309 = vunpack.c.l.b16 %v640
      %v3310 = vunpack.c.h.b16 %v640
      %v3311 = vunpack.c.l.b16 %v641
      %v3312 = vunpack.c.h.b16 %v641
      %v3313 = vunpack.c.l.b16 %v642
      %v3314 = vunpack.c.h.b16 %v642
      %v3315 = vunpack.c.l.b16 %v643
      %v3316 = vunpack.c.h.b16 %v643
      %v3317 = vunpack.c.l.b16 %v644
      %v3318 = vunpack.c.h.b16 %v644
      %v3319 = vunpack.c.l.b16 %v645
      %v3320 = vunpack.c.h.b16 %v645
      %v3321 = vunpack.c.l.b16 %v646
      %v3322 = vunpack.c.h.b16 %v646
      %v3323 = vunpack.c.l.b16 %v647
      %v3324 = vunpack.c.h.b16 %v647
      %v3325 = vunpack.c.l.b16 %v648
      %v3326 = vunpack.c.h.b16 %v648
      %v3327 = vunpack.c.l.b16 %v649
      %v3328 = vunpack.c.h.b16 %v649
      %v3329 = vunpack.c.l.b16 %v650
      %v3330 = vunpack.c.h.b16 %v650
      %v3331 = vunpack.c.l.b16 %v651
      %v3332 = vunpack.c.h.b16 %v651
      %v3333 = vunpack.c.l.b16 %v652
      %v3334 = vunpack.c.h.b16 %v652
      %v3335 = vunpack.c.l.b16 %v653
      %v3336 = vunpack.c.h.b16 %v653
      %v3337 = vunpack.c.l.b16 %v654
      %v3338 = vunpack.c.h.b16 %v654
      %v3339 = vunpack.c.l.b16 %v655
      %v3340 = vunpack.c.h.b16 %v655
      %v3341 = vunpack.c.l.b16 %v656
      %v3342 = vunpack.c.h.b16 %v656
      %v3343 = vunpack.c.l.b16 %v657
      %v3344 = vunpack.c.h.b16 %v657
      %v3345 = vunpack.c.l.b16 %v658
      %v3346 = vunpack.c.h.b16 %v658
      %v3347 = vunpack.c.l.b16 %v659
      %v3348 = vunpack.c.h.b16 %v659
      %v3349 = vunpack.c.l.b16 %v660
      %v3350 = vunpack.c.h.b16 %v660
      %v3351 = vunpack.c.l.b16 %v661
      %v3352 = vunpack.c.h.b16 %v661
      %v3353 = vunpack.c.l.b16 %v662
      %v3354 = vunpack.c.h.b16 %v662
      %v3355 = vunpack.c.l.b16 %v663
      %v3356 = vunpack.c.h.b16 %v663
      %v3357 = vunpack.c.l.b16 %v664
      %v3358 = vunpack.c.h.b16 %v664
      %v3359 = vunpack.c.l.b16 %v665
      %v3360 = vunpack.c.h.b16 %v665
      %v3361 = vunpack.c.l.b16 %v666
      %v3362 = vunpack.c.h.b16 %v666
      %v3363 = vunpack.c.l.b16 %v667
      %v3364 = vunpack.c.h.b16 %v667
      %v3365 = vunpack.c.l.b16 %v668
      %v3366 = vunpack.c.h.b16 %v668
      %v3367 = vpack.c.b16 %v3119, %v3111
      %v3368 = vpack.c.b16 %v3120, %v3112
      %v3369 = vpack.c.b16 %v3121, %v3113
      %v3370 = vpack.c.b16 %v3122, %v3114
      %v3371 = vpack.c.b16 %v3123, %v3115
      %v3372 = vpack.c.b16 %v3124, %v3116
      %v3373 = vpack.c.b16 %v3125, %v3117
      %v3374 = vpack.c.b16 %v3126, %v3118
      %v3375 = vpack.c.b16 %v3135, %v3127
      %v3376 = vpack.c.b16 %v3136, %v3128
      %v3377 = vpack.c.b16 %v3137, %v3129
      %v3378 = vpack.c.b16 %v3138, %v3130
      %v3379 = vpack.c.b16 %v3139, %v3131
      %v3380 = vpack.c.b16 %v3140, %v3132
      %v3381 = vpack.c.b16 %v3141, %v3133
      %v3382 = vpack.c.b16 %v3142, %v3134
      %v3383 = vpack.c.b16 %v3151, %v3143
      %v3384 = vpack.c.b16 %v3152, %v3144
      %v3385 = vpack.c.b16 %v3153, %v3145
      %v3386 = vpack.c.b16 %v3154, %v3146
      %v3387 = vpack.c.b16 %v3155, %v3147
      %v3388 = vpack.c.b16 %v3156, %v3148
      %v3389 = vpack.c.b16 %v3157, %v3149
      %v3390 = vpack.c.b16 %v3158, %v3150
      %v3391 = vpack.c.b16 %v3167, %v3159
      %v3392 = vpack.c.b16 %v3168, %v3160
      %v3393 = vpack.c.b16 %v3169, %v3161
      %v3394 = vpack.c.b16 %v3170, %v3162
      %v3395 = vpack.c.b16 %v3171, %v3163
      %v3396 = vpack.c.b16 %v3172, %v3164
      %v3397 = vpack.c.b16 %v3173, %v3165
      %v3398 = vpack.c.b16 %v3174, %v3166
      %v3399 = vpack.c.b16 %v3183, %v3175
      %v3400 = vpack.c.b16 %v3184, %v3176
      %v3401 = vpack.c.b16 %v3185, %v3177
      %v3402 = vpack.c.b16 %v3186, %v3178
      %v3403 = vpack.c.b16 %v3187, %v3179
      %v3404 = vpack.c.b16 %v3188, %v3180
      %v3405 = vpack.c.b16 %v3189, %v3181
      %v3406 = vpack.c.b16 %v3190, %v3182
      %v3407 = vpack.c.b16 %v3199, %v3191
      %v3408 = vpack.c.b16 %v3200, %v3192
      %v3409 = vpack.c.b16 %v3201, %v3193
      %v3410 = vpack.c.b16 %v3202, %v3194
      %v3411 = vpack.c.b16 %v3203, %v3195
      %v3412 = vpack.c.b16 %v3204, %v3196
      %v3413 = vpack.c.b16 %v3205, %v3197
      %v3414 = vpack.c.b16 %v3206, %v3198
      %v3415 = vpack.c.b16 %v3215, %v3207
      %v3416 = vpack.c.b16 %v3216, %v3208
      %v3417 = vpack.c.b16 %v3217, %v3209
      %v3418 = vpack.c.b16 %v3218, %v3210
      %v3419 = vpack.c.b16 %v3219, %v3211
      %v3420 = vpack.c.b16 %v3220, %v3212
      %v3421 = vpack.c.b16 %v3221, %v3213
      %v3422 = vpack.c.b16 %v3222, %v3214
      %v3423 = vpack.c.b16 %v3231, %v3223
      %v3424 = vpack.c.b16 %v3232, %v3224
      %v3425 = vpack.c.b16 %v3233, %v3225
      %v3426 = vpack.c.b16 %v3234, %v3226
      %v3427 = vpack.c.b16 %v3235, %v3227
      %v3428 = vpack.c.b16 %v3236, %v3228
      %v3429 = vpack.c.b16 %v3237, %v3229
      %v3430 = vpack.c.b16 %v3238, %v3230
      %v3431 = vpack.c.b16 %v3247, %v3239
      %v3432 = vpack.c.b16 %v3248, %v3240
      %v3433 = vpack.c.b16 %v3249, %v3241
      %v3434 = vpack.c.b16 %v3250, %v3242
      %v3435 = vpack.c.b16 %v3251, %v3243
      %v3436 = vpack.c.b16 %v3252, %v3244
      %v3437 = vpack.c.b16 %v3253, %v3245
      %v3438 = vpack.c.b16 %v3254, %v3246
      %v3439 = vpack.c.b16 %v3263, %v3255
      %v3440 = vpack.c.b16 %v3264, %v3256
      %v3441 = vpack.c.b16 %v3265, %v3257
      %v3442 = vpack.c.b16 %v3266, %v3258
      %v3443 = vpack.c.b16 %v3267, %v3259
      %v3444 = vpack.c.b16 %v3268, %v3260
      %v3445 = vpack.c.b16 %v3269, %v3261
      %v3446 = vpack.c.b16 %v3270, %v3262
      %v3447 = vpack.c.b16 %v3279, %v3271
      %v3448 = vpack.c.b16 %v3280, %v3272
      %v3449 = vpack.c.b16 %v3281, %v3273
      %v3450 = vpack.c.b16 %v3282, %v3274
      %v3451 = vpack.c.b16 %v3283, %v3275
      %v3452 = vpack.c.b16 %v3284, %v3276
      %v3453 = vpack.c.b16 %v3285, %v3277
      %v3454 = vpack.c.b16 %v3286, %v3278
      %v3455 = vpack.c.b16 %v3295, %v3287
      %v3456 = vpack.c.b16 %v3296, %v3288
      %v3457 = vpack.c.b16 %v3297, %v3289
      %v3458 = vpack.c.b16 %v3298, %v3290
      %v3459 = vpack.c.b16 %v3299, %v3291
      %v3460 = vpack.c.b16 %v3300, %v3292
      %v3461 = vpack.c.b16 %v3301, %v3293
      %v3462 = vpack.c.b16 %v3302, %v3294
      %v3463 = vpack.c.b16 %v3311, %v3303
      %v3464 = vpack.c.b16 %v3312, %v3304
      %v3465 = vpack.c.b16 %v3313, %v3305
      %v3466 = vpack.c.b16 %v3314, %v3306
      %v3467 = vpack.c.b16 %v3315, %v3307
      %v3468 = vpack.c.b16 %v3316, %v3308
      %v3469 = vpack.c.b16 %v3317, %v3309
      %v3470 = vpack.c.b16 %v3318, %v3310
      %v3471 = vpack.c.b16 %v3327, %v3319
      %v3472 = vpack.c.b16 %v3328, %v3320
      %v3473 = vpack.c.b16 %v3329, %v3321
      %v3474 = vpack.c.b16 %v3330, %v3322
      %v3475 = vpack.c.b16 %v3331, %v3323
      %v3476 = vpack.c.b16 %v3332, %v3324
      %v3477 = vpack.c.b16 %v3333, %v3325
      %v3478 = vpack.c.b16 %v3334, %v3326
      %v3479 = vpack.c.b16 %v3343, %v3335
      %v3480 = vpack.c.b16 %v3344, %v3336
      %v3481 = vpack.c.b16 %v3345, %v3337
      %v3482 = vpack.c.b16 %v3346, %v3338
      %v3483 = vpack.c.b16 %v3347, %v3339
      %v3484 = vpack.c.b16 %v3348, %v3340
      %v3485 = vpack.c.b16 %v3349, %v3341
      %v3486 = vpack.c.b16 %v3350, %v3342
      %v3487 = vpack.c.b16 %v3359, %v3351
      %v3488 = vpack.c.b16 %v3360, %v3352
      %v3489 = vpack.c.b16 %v3361, %v3353
      %v3490 = vpack.c.b16 %v3362, %v3354
      %v3491 = vpack.c.b16 %v3363, %v3355
      %v3492 = vpack.c.b16 %v3364, %v3356
      %v3493 = vpack.c.b16 %v3365, %v3357
      %v3494 = vpack.c.b16 %v3366, %v3358
      %3623 = vmatprep.subr.bf16.mxu0 %v3368
      %3624 = vmatpush1.bf16.msra.mxu0 %v3367
      %3625 = vmatprep.subr.bf16.mxu0 %v3376
      %3626 = vmatpush1.bf16.msra.mxu0 %v3375
      %3627 = vmatprep.subr.bf16.mxu0 %v3384
      %3628 = vmatpush1.bf16.msra.mxu0 %v3383
      %3629 = vmatprep.subr.bf16.mxu0 %v3392
      %3630 = vmatpush1.bf16.msra.mxu0 %v3391
      %3631 = vmatprep.subr.bf16.mxu0 %v3400
      %3632 = vmatpush1.bf16.msra.mxu0 %v3399
      %3633 = vmatprep.subr.bf16.mxu0 %v3408
      %3634 = vmatpush1.bf16.msra.mxu0 %v3407
      %3635 = vmatprep.subr.bf16.mxu0 %v3416
      %3636 = vmatpush1.bf16.msra.mxu0 %v3415
      %3637 = vmatprep.subr.bf16.mxu0 %v3424
      %3638 = vmatpush1.bf16.msra.mxu0 %v3423
      %3639 = vmatprep.subr.bf16.mxu0 %v3432
      %3640 = vmatpush1.bf16.msra.mxu0 %v3431
      %3641 = vmatprep.subr.bf16.mxu0 %v3440
      %3642 = vmatpush1.bf16.msra.mxu0 %v3439
      %3643 = vmatprep.subr.bf16.mxu0 %v3448
      %3644 = vmatpush1.bf16.msra.mxu0 %v3447
      %3645 = vmatprep.subr.bf16.mxu0 %v3456
      %3646 = vmatpush1.bf16.msra.mxu0 %v3455
      %3647 = vmatprep.subr.bf16.mxu0 %v3464
      %3648 = vmatpush1.bf16.msra.mxu0 %v3463
      %3649 = vmatprep.subr.bf16.mxu0 %v3472
      %3650 = vmatpush1.bf16.msra.mxu0 %v3471
      %3651 = vmatprep.subr.bf16.mxu0 %v3480
      %3652 = vmatpush1.bf16.msra.mxu0 %v3479
      %3653 = vmatprep.subr.bf16.mxu0 %v3488
      %3654 = vmatpush1.bf16.msra.mxu0 %v3487
      %3655 = vmatprep.mubr.bf16.mxu0 %v2980
      %3656 = vmatmul.mubr.bf16.gmra.mrb[0].mxu0 %v2976
      %v3657 = vpop.f32.mrb[0].mxu0
      %v3658 = vadd.f32 0.0, %v3657
      %v3659 = vpop.f32.mrb[0].mxu0
      %v3660 = vadd.f32 0.0, %v3659
      %v3661 = vpop.f32.mrb[0].mxu0
      %v3662 = vpop.f32.mrb[0].mxu0
      %3663 = vdwg.mxu0
      %3664 = vmatprep.subr.bf16.mxu0 %v3370
      %3665 = vmatpush1.bf16.msra.mxu0 %v3369
      %3666 = vmatprep.subr.bf16.mxu0 %v3378
      %3667 = vmatpush1.bf16.msra.mxu0 %v3377
      %3668 = vmatprep.subr.bf16.mxu0 %v3386
      %3669 = vmatpush1.bf16.msra.mxu0 %v3385
      %3670 = vmatprep.subr.bf16.mxu0 %v3394
      %3671 = vmatpush1.bf16.msra.mxu0 %v3393
      %3672 = vmatprep.subr.bf16.mxu0 %v3402
      %3673 = vmatpush1.bf16.msra.mxu0 %v3401
      %3674 = vmatprep.subr.bf16.mxu0 %v3410
      %3675 = vmatpush1.bf16.msra.mxu0 %v3409
      %3676 = vmatprep.subr.bf16.mxu0 %v3418
      %3677 = vmatpush1.bf16.msra.mxu0 %v3417
      %3678 = vmatprep.subr.bf16.mxu0 %v3426
      %3679 = vmatpush1.bf16.msra.mxu0 %v3425
      %3680 = vmatprep.subr.bf16.mxu0 %v3434
      %3681 = vmatpush1.bf16.msra.mxu0 %v3433
      %3682 = vmatprep.subr.bf16.mxu0 %v3442
      %3683 = vmatpush1.bf16.msra.mxu0 %v3441
      %3684 = vmatprep.subr.bf16.mxu0 %v3450
      %3685 = vmatpush1.bf16.msra.mxu0 %v3449
      %3686 = vmatprep.subr.bf16.mxu0 %v3458
      %3687 = vmatpush1.bf16.msra.mxu0 %v3457
      %3688 = vmatprep.subr.bf16.mxu0 %v3466
      %3689 = vmatpush1.bf16.msra.mxu0 %v3465
      %3690 = vmatprep.subr.bf16.mxu0 %v3474
      %3691 = vmatpush1.bf16.msra.mxu0 %v3473
      %3692 = vmatprep.subr.bf16.mxu0 %v3482
      %3693 = vmatpush1.bf16.msra.mxu0 %v3481
      %3694 = vmatprep.subr.bf16.mxu0 %v3490
      %3695 = vmatpush1.bf16.msra.mxu0 %v3489
      %3696 = vmatprep.mubr.bf16.mxu0 %v2980
      %3697 = vmatmul.mubr.bf16.gmra.mrb[0].mxu0 %v2976
      %v3698 = vpop.f32.mrb[0].mxu0
      %v3699 = vadd.f32 0.0, %v3698
      %v3700 = vpop.f32.mrb[0].mxu0
      %v3701 = vadd.f32 0.0, %v3700
      %v3702 = vpop.f32.mrb[0].mxu0
      %v3703 = vpop.f32.mrb[0].mxu0
      %3704 = vdwg.mxu0
      %3705 = vmatprep.subr.bf16.mxu0 %v3372
      %3706 = vmatpush1.bf16.msra.mxu0 %v3371
      %3707 = vmatprep.subr.bf16.mxu0 %v3380
      %3708 = vmatpush1.bf16.msra.mxu0 %v3379
      %3709 = vmatprep.subr.bf16.mxu0 %v3388
      %3710 = vmatpush1.bf16.msra.mxu0 %v3387
      %3711 = vmatprep.subr.bf16.mxu0 %v3396
      %3712 = vmatpush1.bf16.msra.mxu0 %v3395
      %3713 = vmatprep.subr.bf16.mxu0 %v3404
      %3714 = vmatpush1.bf16.msra.mxu0 %v3403
      %3715 = vmatprep.subr.bf16.mxu0 %v3412
      %3716 = vmatpush1.bf16.msra.mxu0 %v3411
      %3717 = vmatprep.subr.bf16.mxu0 %v3420
      %3718 = vmatpush1.bf16.msra.mxu0 %v3419
      %3719 = vmatprep.subr.bf16.mxu0 %v3428
      %3720 = vmatpush1.bf16.msra.mxu0 %v3427
      %3721 = vmatprep.subr.bf16.mxu0 %v3436
      %3722 = vmatpush1.bf16.msra.mxu0 %v3435
      %3723 = vmatprep.subr.bf16.mxu0 %v3444
      %3724 = vmatpush1.bf16.msra.mxu0 %v3443
      %3725 = vmatprep.subr.bf16.mxu0 %v3452
      %3726 = vmatpush1.bf16.msra.mxu0 %v3451
      %3727 = vmatprep.subr.bf16.mxu0 %v3460
      %3728 = vmatpush1.bf16.msra.mxu0 %v3459
      %3729 = vmatprep.subr.bf16.mxu0 %v3468
      %3730 = vmatpush1.bf16.msra.mxu0 %v3467
      %3731 = vmatprep.subr.bf16.mxu0 %v3476
      %3732 = vmatpush1.bf16.msra.mxu0 %v3475
      %3733 = vmatprep.subr.bf16.mxu0 %v3484
      %3734 = vmatpush1.bf16.msra.mxu0 %v3483
      %3735 = vmatprep.subr.bf16.mxu0 %v3492
      %3736 = vmatpush1.bf16.msra.mxu0 %v3491
      %3737 = vmatprep.mubr.bf16.mxu0 %v2980
      %3738 = vmatmul.mubr.bf16.gmra.mrb[0].mxu0 %v2976
      %v3739 = vpop.f32.mrb[0].mxu0
      %v3740 = vadd.f32 0.0, %v3739
      %v3741 = vpop.f32.mrb[0].mxu0
      %v3742 = vadd.f32 0.0, %v3741
      %v3743 = vpop.f32.mrb[0].mxu0
      %v3744 = vpop.f32.mrb[0].mxu0
      %3745 = vdwg.mxu0
      %3746 = vmatprep.subr.bf16.mxu0 %v3374
      %3747 = vmatpush1.bf16.msra.mxu0 %v3373
      %3748 = vmatprep.subr.bf16.mxu0 %v3382
      %3749 = vmatpush1.bf16.msra.mxu0 %v3381
      %3750 = vmatprep.subr.bf16.mxu0 %v3390
      %3751 = vmatpush1.bf16.msra.mxu0 %v3389
      %3752 = vmatprep.subr.bf16.mxu0 %v3398
      %3753 = vmatpush1.bf16.msra.mxu0 %v3397
      %3754 = vmatprep.subr.bf16.mxu0 %v3406
      %3755 = vmatpush1.bf16.msra.mxu0 %v3405
      %3756 = vmatprep.subr.bf16.mxu0 %v3414
      %3757 = vmatpush1.bf16.msra.mxu0 %v3413
      %3758 = vmatprep.subr.bf16.mxu0 %v3422
      %3759 = vmatpush1.bf16.msra.mxu0 %v3421
      %3760 = vmatprep.subr.bf16.mxu0 %v3430
      %3761 = vmatpush1.bf16.msra.mxu0 %v3429
      %3762 = vmatprep.subr.bf16.mxu0 %v3438
      %3763 = vmatpush1.bf16.msra.mxu0 %v3437
      %3764 = vmatprep.subr.bf16.mxu0 %v3446
      %3765 = vmatpush1.bf16.msra.mxu0 %v3445
      %3766 = vmatprep.subr.bf16.mxu0 %v3454
      %3767 = vmatpush1.bf16.msra.mxu0 %v3453
      %3768 = vmatprep.subr.bf16.mxu0 %v3462
      %3769 = vmatpush1.bf16.msra.mxu0 %v3461
      %3770 = vmatprep.subr.bf16.mxu0 %v3470
      %3771 = vmatpush1.bf16.msra.mxu0 %v3469
      %3772 = vmatprep.subr.bf16.mxu0 %v3478
      %3773 = vmatpush1.bf16.msra.mxu0 %v3477
      %3774 = vmatprep.subr.bf16.mxu0 %v3486
      %3775 = vmatpush1.bf16.msra.mxu0 %v3485
      %3776 = vmatprep.subr.bf16.mxu0 %v3494
      %3777 = vmatpush1.bf16.msra.mxu0 %v3493
      %3778 = vmatprep.mubr.bf16.mxu0 %v2980
      %3779 = vmatmul.mubr.bf16.gmra.mrb[0].mxu0 %v2976
      %v3780 = vpop.f32.mrb[0].mxu0
      %v3781 = vadd.f32 0.0, %v3780
      %v3782 = vpop.f32.mrb[0].mxu0
      %v3783 = vadd.f32 0.0, %v3782
      %v3784 = vpop.f32.mrb[0].mxu0
      %v3785 = vpop.f32.mrb[0].mxu0
      %3786 = vdwg.mxu0
      %v3787 = vpack.i.b16 %v1337, %v1337
      %v3788 = vlaneseq
      %v3789 = vshrl.u32 %v3788, 7
      %v3790 = vsub.s32 0, %v3789
      %v3791 = vrot.slane %v3787, %v3790
      %v3792 = vlaneseq
      %v3793 = vshrl.u32 %v3792, 7
      %v3794 = vsub.s32 1, %v3793
      %v3795 = vrot.slane %v3787, %v3794
      %v3926 = vunpack.c.l.b16 %v669
      %v3927 = vunpack.c.h.b16 %v669
      %v3928 = vunpack.c.l.b16 %v670
      %v3929 = vunpack.c.h.b16 %v670
      %v3930 = vunpack.c.l.b16 %v671
      %v3931 = vunpack.c.h.b16 %v671
      %v3932 = vunpack.c.l.b16 %v672
      %v3933 = vunpack.c.h.b16 %v672
      %v3934 = vunpack.c.l.b16 %v673
      %v3935 = vunpack.c.h.b16 %v673
      %v3936 = vunpack.c.l.b16 %v674
      %v3937 = vunpack.c.h.b16 %v674
      %v3938 = vunpack.c.l.b16 %v675
      %v3939 = vunpack.c.h.b16 %v675
      %v3940 = vunpack.c.l.b16 %v676
      %v3941 = vunpack.c.h.b16 %v676
      %v3942 = vunpack.c.l.b16 %v677
      %v3943 = vunpack.c.h.b16 %v677
      %v3944 = vunpack.c.l.b16 %v678
      %v3945 = vunpack.c.h.b16 %v678
      %v3946 = vunpack.c.l.b16 %v679
      %v3947 = vunpack.c.h.b16 %v679
      %v3948 = vunpack.c.l.b16 %v680
      %v3949 = vunpack.c.h.b16 %v680
      %v3950 = vunpack.c.l.b16 %v681
      %v3951 = vunpack.c.h.b16 %v681
      %v3952 = vunpack.c.l.b16 %v682
      %v3953 = vunpack.c.h.b16 %v682
      %v3954 = vunpack.c.l.b16 %v683
      %v3955 = vunpack.c.h.b16 %v683
      %v3956 = vunpack.c.l.b16 %v684
      %v3957 = vunpack.c.h.b16 %v684
      %v3958 = vunpack.c.l.b16 %v685
      %v3959 = vunpack.c.h.b16 %v685
      %v3960 = vunpack.c.l.b16 %v686
      %v3961 = vunpack.c.h.b16 %v686
      %v3962 = vunpack.c.l.b16 %v687
      %v3963 = vunpack.c.h.b16 %v687
      %v3964 = vunpack.c.l.b16 %v688
      %v3965 = vunpack.c.h.b16 %v688
      %v3966 = vunpack.c.l.b16 %v689
      %v3967 = vunpack.c.h.b16 %v689
      %v3968 = vunpack.c.l.b16 %v690
      %v3969 = vunpack.c.h.b16 %v690
      %v3970 = vunpack.c.l.b16 %v691
      %v3971 = vunpack.c.h.b16 %v691
      %v3972 = vunpack.c.l.b16 %v692
      %v3973 = vunpack.c.h.b16 %v692
      %v3974 = vunpack.c.l.b16 %v693
      %v3975 = vunpack.c.h.b16 %v693
      %v3976 = vunpack.c.l.b16 %v694
      %v3977 = vunpack.c.h.b16 %v694
      %v3978 = vunpack.c.l.b16 %v695
      %v3979 = vunpack.c.h.b16 %v695
      %v3980 = vunpack.c.l.b16 %v696
      %v3981 = vunpack.c.h.b16 %v696
      %v3982 = vunpack.c.l.b16 %v697
      %v3983 = vunpack.c.h.b16 %v697
      %v3984 = vunpack.c.l.b16 %v698
      %v3985 = vunpack.c.h.b16 %v698
      %v3986 = vunpack.c.l.b16 %v699
      %v3987 = vunpack.c.h.b16 %v699
      %v3988 = vunpack.c.l.b16 %v700
      %v3989 = vunpack.c.h.b16 %v700
      %v3990 = vunpack.c.l.b16 %v701
      %v3991 = vunpack.c.h.b16 %v701
      %v3992 = vunpack.c.l.b16 %v702
      %v3993 = vunpack.c.h.b16 %v702
      %v3994 = vunpack.c.l.b16 %v703
      %v3995 = vunpack.c.h.b16 %v703
      %v3996 = vunpack.c.l.b16 %v704
      %v3997 = vunpack.c.h.b16 %v704
      %v3998 = vunpack.c.l.b16 %v705
      %v3999 = vunpack.c.h.b16 %v705
      %v4000 = vunpack.c.l.b16 %v706
      %v4001 = vunpack.c.h.b16 %v706
      %v4002 = vunpack.c.l.b16 %v707
      %v4003 = vunpack.c.h.b16 %v707
      %v4004 = vunpack.c.l.b16 %v708
      %v4005 = vunpack.c.h.b16 %v708
      %v4006 = vunpack.c.l.b16 %v709
      %v4007 = vunpack.c.h.b16 %v709
      %v4008 = vunpack.c.l.b16 %v710
      %v4009 = vunpack.c.h.b16 %v710
      %v4010 = vunpack.c.l.b16 %v711
      %v4011 = vunpack.c.h.b16 %v711
      %v4012 = vunpack.c.l.b16 %v712
      %v4013 = vunpack.c.h.b16 %v712
      %v4014 = vunpack.c.l.b16 %v713
      %v4015 = vunpack.c.h.b16 %v713
      %v4016 = vunpack.c.l.b16 %v714
      %v4017 = vunpack.c.h.b16 %v714
      %v4018 = vunpack.c.l.b16 %v715
      %v4019 = vunpack.c.h.b16 %v715
      %v4020 = vunpack.c.l.b16 %v716
      %v4021 = vunpack.c.h.b16 %v716
      %v4022 = vunpack.c.l.b16 %v717
      %v4023 = vunpack.c.h.b16 %v717
      %v4024 = vunpack.c.l.b16 %v718
      %v4025 = vunpack.c.h.b16 %v718
      %v4026 = vunpack.c.l.b16 %v719
      %v4027 = vunpack.c.h.b16 %v719
      %v4028 = vunpack.c.l.b16 %v720
      %v4029 = vunpack.c.h.b16 %v720
      %v4030 = vunpack.c.l.b16 %v721
      %v4031 = vunpack.c.h.b16 %v721
      %v4032 = vunpack.c.l.b16 %v722
      %v4033 = vunpack.c.h.b16 %v722
      %v4034 = vunpack.c.l.b16 %v723
      %v4035 = vunpack.c.h.b16 %v723
      %v4036 = vunpack.c.l.b16 %v724
      %v4037 = vunpack.c.h.b16 %v724
      %v4038 = vunpack.c.l.b16 %v725
      %v4039 = vunpack.c.h.b16 %v725
      %v4040 = vunpack.c.l.b16 %v726
      %v4041 = vunpack.c.h.b16 %v726
      %v4042 = vunpack.c.l.b16 %v727
      %v4043 = vunpack.c.h.b16 %v727
      %v4044 = vunpack.c.l.b16 %v728
      %v4045 = vunpack.c.h.b16 %v728
      %v4046 = vunpack.c.l.b16 %v729
      %v4047 = vunpack.c.h.b16 %v729
      %v4048 = vunpack.c.l.b16 %v730
      %v4049 = vunpack.c.h.b16 %v730
      %v4050 = vunpack.c.l.b16 %v731
      %v4051 = vunpack.c.h.b16 %v731
      %v4052 = vunpack.c.l.b16 %v732
      %v4053 = vunpack.c.h.b16 %v732
      %v4054 = vunpack.c.l.b16 %v733
      %v4055 = vunpack.c.h.b16 %v733
      %v4056 = vunpack.c.l.b16 %v734
      %v4057 = vunpack.c.h.b16 %v734
      %v4058 = vunpack.c.l.b16 %v735
      %v4059 = vunpack.c.h.b16 %v735
      %v4060 = vunpack.c.l.b16 %v736
      %v4061 = vunpack.c.h.b16 %v736
      %v4062 = vunpack.c.l.b16 %v737
      %v4063 = vunpack.c.h.b16 %v737
      %v4064 = vunpack.c.l.b16 %v738
      %v4065 = vunpack.c.h.b16 %v738
      %v4066 = vunpack.c.l.b16 %v739
      %v4067 = vunpack.c.h.b16 %v739
      %v4068 = vunpack.c.l.b16 %v740
      %v4069 = vunpack.c.h.b16 %v740
      %v4070 = vunpack.c.l.b16 %v741
      %v4071 = vunpack.c.h.b16 %v741
      %v4072 = vunpack.c.l.b16 %v742
      %v4073 = vunpack.c.h.b16 %v742
      %v4074 = vunpack.c.l.b16 %v743
      %v4075 = vunpack.c.h.b16 %v743
      %v4076 = vunpack.c.l.b16 %v744
      %v4077 = vunpack.c.h.b16 %v744
      %v4078 = vunpack.c.l.b16 %v745
      %v4079 = vunpack.c.h.b16 %v745
      %v4080 = vunpack.c.l.b16 %v746
      %v4081 = vunpack.c.h.b16 %v746
      %v4082 = vunpack.c.l.b16 %v747
      %v4083 = vunpack.c.h.b16 %v747
      %v4084 = vunpack.c.l.b16 %v748
      %v4085 = vunpack.c.h.b16 %v748
      %v4086 = vunpack.c.l.b16 %v749
      %v4087 = vunpack.c.h.b16 %v749
      %v4088 = vunpack.c.l.b16 %v750
      %v4089 = vunpack.c.h.b16 %v750
      %v4090 = vunpack.c.l.b16 %v751
      %v4091 = vunpack.c.h.b16 %v751
      %v4092 = vunpack.c.l.b16 %v752
      %v4093 = vunpack.c.h.b16 %v752
      %v4094 = vunpack.c.l.b16 %v753
      %v4095 = vunpack.c.h.b16 %v753
      %v4096 = vunpack.c.l.b16 %v754
      %v4097 = vunpack.c.h.b16 %v754
      %v4098 = vunpack.c.l.b16 %v755
      %v4099 = vunpack.c.h.b16 %v755
      %v4100 = vunpack.c.l.b16 %v756
      %v4101 = vunpack.c.h.b16 %v756
      %v4102 = vunpack.c.l.b16 %v757
      %v4103 = vunpack.c.h.b16 %v757
      %v4104 = vunpack.c.l.b16 %v758
      %v4105 = vunpack.c.h.b16 %v758
      %v4106 = vunpack.c.l.b16 %v759
      %v4107 = vunpack.c.h.b16 %v759
      %v4108 = vunpack.c.l.b16 %v760
      %v4109 = vunpack.c.h.b16 %v760
      %v4110 = vunpack.c.l.b16 %v761
      %v4111 = vunpack.c.h.b16 %v761
      %v4112 = vunpack.c.l.b16 %v762
      %v4113 = vunpack.c.h.b16 %v762
      %v4114 = vunpack.c.l.b16 %v763
      %v4115 = vunpack.c.h.b16 %v763
      %v4116 = vunpack.c.l.b16 %v764
      %v4117 = vunpack.c.h.b16 %v764
      %v4118 = vunpack.c.l.b16 %v765
      %v4119 = vunpack.c.h.b16 %v765
      %v4120 = vunpack.c.l.b16 %v766
      %v4121 = vunpack.c.h.b16 %v766
      %v4122 = vunpack.c.l.b16 %v767
      %v4123 = vunpack.c.h.b16 %v767
      %v4124 = vunpack.c.l.b16 %v768
      %v4125 = vunpack.c.h.b16 %v768
      %v4126 = vunpack.c.l.b16 %v769
      %v4127 = vunpack.c.h.b16 %v769
      %v4128 = vunpack.c.l.b16 %v770
      %v4129 = vunpack.c.h.b16 %v770
      %v4130 = vunpack.c.l.b16 %v771
      %v4131 = vunpack.c.h.b16 %v771
      %v4132 = vunpack.c.l.b16 %v772
      %v4133 = vunpack.c.h.b16 %v772
      %v4134 = vunpack.c.l.b16 %v773
      %v4135 = vunpack.c.h.b16 %v773
      %v4136 = vunpack.c.l.b16 %v774
      %v4137 = vunpack.c.h.b16 %v774
      %v4138 = vunpack.c.l.b16 %v775
      %v4139 = vunpack.c.h.b16 %v775
      %v4140 = vunpack.c.l.b16 %v776
      %v4141 = vunpack.c.h.b16 %v776
      %v4142 = vunpack.c.l.b16 %v777
      %v4143 = vunpack.c.h.b16 %v777
      %v4144 = vunpack.c.l.b16 %v778
      %v4145 = vunpack.c.h.b16 %v778
      %v4146 = vunpack.c.l.b16 %v779
      %v4147 = vunpack.c.h.b16 %v779
      %v4148 = vunpack.c.l.b16 %v780
      %v4149 = vunpack.c.h.b16 %v780
      %v4150 = vunpack.c.l.b16 %v781
      %v4151 = vunpack.c.h.b16 %v781
      %v4152 = vunpack.c.l.b16 %v782
      %v4153 = vunpack.c.h.b16 %v782
      %v4154 = vunpack.c.l.b16 %v783
      %v4155 = vunpack.c.h.b16 %v783
      %v4156 = vunpack.c.l.b16 %v784
      %v4157 = vunpack.c.h.b16 %v784
      %v4158 = vunpack.c.l.b16 %v785
      %v4159 = vunpack.c.h.b16 %v785
      %v4160 = vunpack.c.l.b16 %v786
      %v4161 = vunpack.c.h.b16 %v786
      %v4162 = vunpack.c.l.b16 %v787
      %v4163 = vunpack.c.h.b16 %v787
      %v4164 = vunpack.c.l.b16 %v788
      %v4165 = vunpack.c.h.b16 %v788
      %v4166 = vunpack.c.l.b16 %v789
      %v4167 = vunpack.c.h.b16 %v789
      %v4168 = vunpack.c.l.b16 %v790
      %v4169 = vunpack.c.h.b16 %v790
      %v4170 = vunpack.c.l.b16 %v791
      %v4171 = vunpack.c.h.b16 %v791
      %v4172 = vunpack.c.l.b16 %v792
      %v4173 = vunpack.c.h.b16 %v792
      %v4174 = vunpack.c.l.b16 %v793
      %v4175 = vunpack.c.h.b16 %v793
      %v4176 = vunpack.c.l.b16 %v794
      %v4177 = vunpack.c.h.b16 %v794
      %v4178 = vunpack.c.l.b16 %v795
      %v4179 = vunpack.c.h.b16 %v795
      %v4180 = vunpack.c.l.b16 %v796
      %v4181 = vunpack.c.h.b16 %v796
      %v4182 = vpack.c.b16 %v3934, %v3926
      %v4183 = vpack.c.b16 %v3935, %v3927
      %v4184 = vpack.c.b16 %v3936, %v3928
      %v4185 = vpack.c.b16 %v3937, %v3929
      %v4186 = vpack.c.b16 %v3938, %v3930
      %v4187 = vpack.c.b16 %v3939, %v3931
      %v4188 = vpack.c.b16 %v3940, %v3932
      %v4189 = vpack.c.b16 %v3941, %v3933
      %v4190 = vpack.c.b16 %v3950, %v3942
      %v4191 = vpack.c.b16 %v3951, %v3943
      %v4192 = vpack.c.b16 %v3952, %v3944
      %v4193 = vpack.c.b16 %v3953, %v3945
      %v4194 = vpack.c.b16 %v3954, %v3946
      %v4195 = vpack.c.b16 %v3955, %v3947
      %v4196 = vpack.c.b16 %v3956, %v3948
      %v4197 = vpack.c.b16 %v3957, %v3949
      %v4198 = vpack.c.b16 %v3966, %v3958
      %v4199 = vpack.c.b16 %v3967, %v3959
      %v4200 = vpack.c.b16 %v3968, %v3960
      %v4201 = vpack.c.b16 %v3969, %v3961
      %v4202 = vpack.c.b16 %v3970, %v3962
      %v4203 = vpack.c.b16 %v3971, %v3963
      %v4204 = vpack.c.b16 %v3972, %v3964
      %v4205 = vpack.c.b16 %v3973, %v3965
      %v4206 = vpack.c.b16 %v3982, %v3974
      %v4207 = vpack.c.b16 %v3983, %v3975
      %v4208 = vpack.c.b16 %v3984, %v3976
      %v4209 = vpack.c.b16 %v3985, %v3977
      %v4210 = vpack.c.b16 %v3986, %v3978
      %v4211 = vpack.c.b16 %v3987, %v3979
      %v4212 = vpack.c.b16 %v3988, %v3980
      %v4213 = vpack.c.b16 %v3989, %v3981
      %v4214 = vpack.c.b16 %v3998, %v3990
      %v4215 = vpack.c.b16 %v3999, %v3991
      %v4216 = vpack.c.b16 %v4000, %v3992
      %v4217 = vpack.c.b16 %v4001, %v3993
      %v4218 = vpack.c.b16 %v4002, %v3994
      %v4219 = vpack.c.b16 %v4003, %v3995
      %v4220 = vpack.c.b16 %v4004, %v3996
      %v4221 = vpack.c.b16 %v4005, %v3997
      %v4222 = vpack.c.b16 %v4014, %v4006
      %v4223 = vpack.c.b16 %v4015, %v4007
      %v4224 = vpack.c.b16 %v4016, %v4008
      %v4225 = vpack.c.b16 %v4017, %v4009
      %v4226 = vpack.c.b16 %v4018, %v4010
      %v4227 = vpack.c.b16 %v4019, %v4011
      %v4228 = vpack.c.b16 %v4020, %v4012
      %v4229 = vpack.c.b16 %v4021, %v4013
      %v4230 = vpack.c.b16 %v4030, %v4022
      %v4231 = vpack.c.b16 %v4031, %v4023
      %v4232 = vpack.c.b16 %v4032, %v4024
      %v4233 = vpack.c.b16 %v4033, %v4025
      %v4234 = vpack.c.b16 %v4034, %v4026
      %v4235 = vpack.c.b16 %v4035, %v4027
      %v4236 = vpack.c.b16 %v4036, %v4028
      %v4237 = vpack.c.b16 %v4037, %v4029
      %v4238 = vpack.c.b16 %v4046, %v4038
      %v4239 = vpack.c.b16 %v4047, %v4039
      %v4240 = vpack.c.b16 %v4048, %v4040
      %v4241 = vpack.c.b16 %v4049, %v4041
      %v4242 = vpack.c.b16 %v4050, %v4042
      %v4243 = vpack.c.b16 %v4051, %v4043
      %v4244 = vpack.c.b16 %v4052, %v4044
      %v4245 = vpack.c.b16 %v4053, %v4045
      %v4246 = vpack.c.b16 %v4062, %v4054
      %v4247 = vpack.c.b16 %v4063, %v4055
      %v4248 = vpack.c.b16 %v4064, %v4056
      %v4249 = vpack.c.b16 %v4065, %v4057
      %v4250 = vpack.c.b16 %v4066, %v4058
      %v4251 = vpack.c.b16 %v4067, %v4059
      %v4252 = vpack.c.b16 %v4068, %v4060
      %v4253 = vpack.c.b16 %v4069, %v4061
      %v4254 = vpack.c.b16 %v4078, %v4070
      %v4255 = vpack.c.b16 %v4079, %v4071
      %v4256 = vpack.c.b16 %v4080, %v4072
      %v4257 = vpack.c.b16 %v4081, %v4073
      %v4258 = vpack.c.b16 %v4082, %v4074
      %v4259 = vpack.c.b16 %v4083, %v4075
      %v4260 = vpack.c.b16 %v4084, %v4076
      %v4261 = vpack.c.b16 %v4085, %v4077
      %v4262 = vpack.c.b16 %v4094, %v4086
      %v4263 = vpack.c.b16 %v4095, %v4087
      %v4264 = vpack.c.b16 %v4096, %v4088
      %v4265 = vpack.c.b16 %v4097, %v4089
      %v4266 = vpack.c.b16 %v4098, %v4090
      %v4267 = vpack.c.b16 %v4099, %v4091
      %v4268 = vpack.c.b16 %v4100, %v4092
      %v4269 = vpack.c.b16 %v4101, %v4093
      %v4270 = vpack.c.b16 %v4110, %v4102
      %v4271 = vpack.c.b16 %v4111, %v4103
      %v4272 = vpack.c.b16 %v4112, %v4104
      %v4273 = vpack.c.b16 %v4113, %v4105
      %v4274 = vpack.c.b16 %v4114, %v4106
      %v4275 = vpack.c.b16 %v4115, %v4107
      %v4276 = vpack.c.b16 %v4116, %v4108
      %v4277 = vpack.c.b16 %v4117, %v4109
      %v4278 = vpack.c.b16 %v4126, %v4118
      %v4279 = vpack.c.b16 %v4127, %v4119
      %v4280 = vpack.c.b16 %v4128, %v4120
      %v4281 = vpack.c.b16 %v4129, %v4121
      %v4282 = vpack.c.b16 %v4130, %v4122
      %v4283 = vpack.c.b16 %v4131, %v4123
      %v4284 = vpack.c.b16 %v4132, %v4124
      %v4285 = vpack.c.b16 %v4133, %v4125
      %v4286 = vpack.c.b16 %v4142, %v4134
      %v4287 = vpack.c.b16 %v4143, %v4135
      %v4288 = vpack.c.b16 %v4144, %v4136
      %v4289 = vpack.c.b16 %v4145, %v4137
      %v4290 = vpack.c.b16 %v4146, %v4138
      %v4291 = vpack.c.b16 %v4147, %v4139
      %v4292 = vpack.c.b16 %v4148, %v4140
      %v4293 = vpack.c.b16 %v4149, %v4141
      %v4294 = vpack.c.b16 %v4158, %v4150
      %v4295 = vpack.c.b16 %v4159, %v4151
      %v4296 = vpack.c.b16 %v4160, %v4152
      %v4297 = vpack.c.b16 %v4161, %v4153
      %v4298 = vpack.c.b16 %v4162, %v4154
      %v4299 = vpack.c.b16 %v4163, %v4155
      %v4300 = vpack.c.b16 %v4164, %v4156
      %v4301 = vpack.c.b16 %v4165, %v4157
      %v4302 = vpack.c.b16 %v4174, %v4166
      %v4303 = vpack.c.b16 %v4175, %v4167
      %v4304 = vpack.c.b16 %v4176, %v4168
      %v4305 = vpack.c.b16 %v4177, %v4169
      %v4306 = vpack.c.b16 %v4178, %v4170
      %v4307 = vpack.c.b16 %v4179, %v4171
      %v4308 = vpack.c.b16 %v4180, %v4172
      %v4309 = vpack.c.b16 %v4181, %v4173
      %4438 = vmatprep.subr.bf16.mxu0 %v4183
      %4439 = vmatpush1.bf16.msra.mxu0 %v4182
      %4440 = vmatprep.subr.bf16.mxu0 %v4191
      %4441 = vmatpush1.bf16.msra.mxu0 %v4190
      %4442 = vmatprep.subr.bf16.mxu0 %v4199
      %4443 = vmatpush1.bf16.msra.mxu0 %v4198
      %4444 = vmatprep.subr.bf16.mxu0 %v4207
      %4445 = vmatpush1.bf16.msra.mxu0 %v4206
      %4446 = vmatprep.subr.bf16.mxu0 %v4215
      %4447 = vmatpush1.bf16.msra.mxu0 %v4214
      %4448 = vmatprep.subr.bf16.mxu0 %v4223
      %4449 = vmatpush1.bf16.msra.mxu0 %v4222
      %4450 = vmatprep.subr.bf16.mxu0 %v4231
      %4451 = vmatpush1.bf16.msra.mxu0 %v4230
      %4452 = vmatprep.subr.bf16.mxu0 %v4239
      %4453 = vmatpush1.bf16.msra.mxu0 %v4238
      %4454 = vmatprep.subr.bf16.mxu0 %v4247
      %4455 = vmatpush1.bf16.msra.mxu0 %v4246
      %4456 = vmatprep.subr.bf16.mxu0 %v4255
      %4457 = vmatpush1.bf16.msra.mxu0 %v4254
      %4458 = vmatprep.subr.bf16.mxu0 %v4263
      %4459 = vmatpush1.bf16.msra.mxu0 %v4262
      %4460 = vmatprep.subr.bf16.mxu0 %v4271
      %4461 = vmatpush1.bf16.msra.mxu0 %v4270
      %4462 = vmatprep.subr.bf16.mxu0 %v4279
      %4463 = vmatpush1.bf16.msra.mxu0 %v4278
      %4464 = vmatprep.subr.bf16.mxu0 %v4287
      %4465 = vmatpush1.bf16.msra.mxu0 %v4286
      %4466 = vmatprep.subr.bf16.mxu0 %v4295
      %4467 = vmatpush1.bf16.msra.mxu0 %v4294
      %4468 = vmatprep.subr.bf16.mxu0 %v4303
      %4469 = vmatpush1.bf16.msra.mxu0 %v4302
      %4470 = vmatprep.mubr.bf16.mxu0 %v3795
      %4471 = vmatmul.mubr.bf16.gmra.mrb[0].mxu0 %v3791
      %v4472 = vpop.f32.mrb[0].mxu0
      %v4473 = vadd.f32 0.0, %v4472
      %v4474 = vpop.f32.mrb[0].mxu0
      %v4475 = vadd.f32 0.0, %v4474
      %v4476 = vpop.f32.mrb[0].mxu0
      %v4477 = vpop.f32.mrb[0].mxu0
      %4478 = vdwg.mxu0
      %4479 = vmatprep.subr.bf16.mxu0 %v4185
      %4480 = vmatpush1.bf16.msra.mxu0 %v4184
      %4481 = vmatprep.subr.bf16.mxu0 %v4193
      %4482 = vmatpush1.bf16.msra.mxu0 %v4192
      %4483 = vmatprep.subr.bf16.mxu0 %v4201
      %4484 = vmatpush1.bf16.msra.mxu0 %v4200
      %4485 = vmatprep.subr.bf16.mxu0 %v4209
      %4486 = vmatpush1.bf16.msra.mxu0 %v4208
      %4487 = vmatprep.subr.bf16.mxu0 %v4217
      %4488 = vmatpush1.bf16.msra.mxu0 %v4216
      %4489 = vmatprep.subr.bf16.mxu0 %v4225
      %4490 = vmatpush1.bf16.msra.mxu0 %v4224
      %4491 = vmatprep.subr.bf16.mxu0 %v4233
      %4492 = vmatpush1.bf16.msra.mxu0 %v4232
      %4493 = vmatprep.subr.bf16.mxu0 %v4241
      %4494 = vmatpush1.bf16.msra.mxu0 %v4240
      %4495 = vmatprep.subr.bf16.mxu0 %v4249
      %4496 = vmatpush1.bf16.msra.mxu0 %v4248
      %4497 = vmatprep.subr.bf16.mxu0 %v4257
      %4498 = vmatpush1.bf16.msra.mxu0 %v4256
      %4499 = vmatprep.subr.bf16.mxu0 %v4265
      %4500 = vmatpush1.bf16.msra.mxu0 %v4264
      %4501 = vmatprep.subr.bf16.mxu0 %v4273
      %4502 = vmatpush1.bf16.msra.mxu0 %v4272
      %4503 = vmatprep.subr.bf16.mxu0 %v4281
      %4504 = vmatpush1.bf16.msra.mxu0 %v4280
      %4505 = vmatprep.subr.bf16.mxu0 %v4289
      %4506 = vmatpush1.bf16.msra.mxu0 %v4288
      %4507 = vmatprep.subr.bf16.mxu0 %v4297
      %4508 = vmatpush1.bf16.msra.mxu0 %v4296
      %4509 = vmatprep.subr.bf16.mxu0 %v4305
      %4510 = vmatpush1.bf16.msra.mxu0 %v4304
      %4511 = vmatprep.mubr.bf16.mxu0 %v3795
      %4512 = vmatmul.mubr.bf16.gmra.mrb[0].mxu0 %v3791
      %v4513 = vpop.f32.mrb[0].mxu0
      %v4514 = vadd.f32 0.0, %v4513
      %v4515 = vpop.f32.mrb[0].mxu0
      %v4516 = vadd.f32 0.0, %v4515
      %v4517 = vpop.f32.mrb[0].mxu0
      %v4518 = vpop.f32.mrb[0].mxu0
      %4519 = vdwg.mxu0
      %4520 = vmatprep.subr.bf16.mxu0 %v4187
      %4521 = vmatpush1.bf16.msra.mxu0 %v4186
      %4522 = vmatprep.subr.bf16.mxu0 %v4195
      %4523 = vmatpush1.bf16.msra.mxu0 %v4194
      %4524 = vmatprep.subr.bf16.mxu0 %v4203
      %4525 = vmatpush1.bf16.msra.mxu0 %v4202
      %4526 = vmatprep.subr.bf16.mxu0 %v4211
      %4527 = vmatpush1.bf16.msra.mxu0 %v4210
      %4528 = vmatprep.subr.bf16.mxu0 %v4219
      %4529 = vmatpush1.bf16.msra.mxu0 %v4218
      %4530 = vmatprep.subr.bf16.mxu0 %v4227
      %4531 = vmatpush1.bf16.msra.mxu0 %v4226
      %4532 = vmatprep.subr.bf16.mxu0 %v4235
      %4533 = vmatpush1.bf16.msra.mxu0 %v4234
      %4534 = vmatprep.subr.bf16.mxu0 %v4243
      %4535 = vmatpush1.bf16.msra.mxu0 %v4242
      %4536 = vmatprep.subr.bf16.mxu0 %v4251
      %4537 = vmatpush1.bf16.msra.mxu0 %v4250
      %4538 = vmatprep.subr.bf16.mxu0 %v4259
      %4539 = vmatpush1.bf16.msra.mxu0 %v4258
      %4540 = vmatprep.subr.bf16.mxu0 %v4267
      %4541 = vmatpush1.bf16.msra.mxu0 %v4266
      %4542 = vmatprep.subr.bf16.mxu0 %v4275
      %4543 = vmatpush1.bf16.msra.mxu0 %v4274
      %4544 = vmatprep.subr.bf16.mxu0 %v4283
      %4545 = vmatpush1.bf16.msra.mxu0 %v4282
      %4546 = vmatprep.subr.bf16.mxu0 %v4291
      %4547 = vmatpush1.bf16.msra.mxu0 %v4290
      %4548 = vmatprep.subr.bf16.mxu0 %v4299
      %4549 = vmatpush1.bf16.msra.mxu0 %v4298
      %4550 = vmatprep.subr.bf16.mxu0 %v4307
      %4551 = vmatpush1.bf16.msra.mxu0 %v4306
      %4552 = vmatprep.mubr.bf16.mxu0 %v3795
      %4553 = vmatmul.mubr.bf16.gmra.mrb[0].mxu0 %v3791
      %v4554 = vpop.f32.mrb[0].mxu0
      %v4555 = vadd.f32 0.0, %v4554
      %v4556 = vpop.f32.mrb[0].mxu0
      %v4557 = vadd.f32 0.0, %v4556
      %v4558 = vpop.f32.mrb[0].mxu0
      %v4559 = vpop.f32.mrb[0].mxu0
      %4560 = vdwg.mxu0
      %4561 = vmatprep.subr.bf16.mxu0 %v4189
      %4562 = vmatpush1.bf16.msra.mxu0 %v4188
      %4563 = vmatprep.subr.bf16.mxu0 %v4197
      %4564 = vmatpush1.bf16.msra.mxu0 %v4196
      %4565 = vmatprep.subr.bf16.mxu0 %v4205
      %4566 = vmatpush1.bf16.msra.mxu0 %v4204
      %4567 = vmatprep.subr.bf16.mxu0 %v4213
      %4568 = vmatpush1.bf16.msra.mxu0 %v4212
      %4569 = vmatprep.subr.bf16.mxu0 %v4221
      %4570 = vmatpush1.bf16.msra.mxu0 %v4220
      %4571 = vmatprep.subr.bf16.mxu0 %v4229
      %4572 = vmatpush1.bf16.msra.mxu0 %v4228
      %4573 = vmatprep.subr.bf16.mxu0 %v4237
      %4574 = vmatpush1.bf16.msra.mxu0 %v4236
      %4575 = vmatprep.subr.bf16.mxu0 %v4245
      %4576 = vmatpush1.bf16.msra.mxu0 %v4244
      %4577 = vmatprep.subr.bf16.mxu0 %v4253
      %4578 = vmatpush1.bf16.msra.mxu0 %v4252
      %4579 = vmatprep.subr.bf16.mxu0 %v4261
      %4580 = vmatpush1.bf16.msra.mxu0 %v4260
      %4581 = vmatprep.subr.bf16.mxu0 %v4269
      %4582 = vmatpush1.bf16.msra.mxu0 %v4268
      %4583 = vmatprep.subr.bf16.mxu0 %v4277
      %4584 = vmatpush1.bf16.msra.mxu0 %v4276
      %4585 = vmatprep.subr.bf16.mxu0 %v4285
      %4586 = vmatpush1.bf16.msra.mxu0 %v4284
      %4587 = vmatprep.subr.bf16.mxu0 %v4293
      %4588 = vmatpush1.bf16.msra.mxu0 %v4292
      %4589 = vmatprep.subr.bf16.mxu0 %v4301
      %4590 = vmatpush1.bf16.msra.mxu0 %v4300
      %4591 = vmatprep.subr.bf16.mxu0 %v4309
      %4592 = vmatpush1.bf16.msra.mxu0 %v4308
      %4593 = vmatprep.mubr.bf16.mxu0 %v3795
      %4594 = vmatmul.mubr.bf16.gmra.mrb[0].mxu0 %v3791
      %v4595 = vpop.f32.mrb[0].mxu0
      %v4596 = vadd.f32 0.0, %v4595
      %v4597 = vpop.f32.mrb[0].mxu0
      %v4598 = vadd.f32 0.0, %v4597
      %v4599 = vpop.f32.mrb[0].mxu0
      %v4600 = vpop.f32.mrb[0].mxu0
      %4601 = vdwg.mxu0
      %v4602 = vpack.i.b16 %v1338, %v1338
      %v4603 = vlaneseq
      %v4604 = vshrl.u32 %v4603, 7
      %v4605 = vsub.s32 0, %v4604
      %v4606 = vrot.slane %v4602, %v4605
      %v4607 = vlaneseq
      %v4608 = vshrl.u32 %v4607, 7
      %v4609 = vsub.s32 1, %v4608
      %v4610 = vrot.slane %v4602, %v4609
      %v4741 = vunpack.c.l.b16 %v797
      %v4742 = vunpack.c.h.b16 %v797
      %v4743 = vunpack.c.l.b16 %v798
      %v4744 = vunpack.c.h.b16 %v798
      %v4745 = vunpack.c.l.b16 %v799
      %v4746 = vunpack.c.h.b16 %v799
      %v4747 = vunpack.c.l.b16 %v800
      %v4748 = vunpack.c.h.b16 %v800
      %v4749 = vunpack.c.l.b16 %v801
      %v4750 = vunpack.c.h.b16 %v801
      %v4751 = vunpack.c.l.b16 %v802
      %v4752 = vunpack.c.h.b16 %v802
      %v4753 = vunpack.c.l.b16 %v803
      %v4754 = vunpack.c.h.b16 %v803
      %v4755 = vunpack.c.l.b16 %v804
      %v4756 = vunpack.c.h.b16 %v804
      %v4757 = vunpack.c.l.b16 %v805
      %v4758 = vunpack.c.h.b16 %v805
      %v4759 = vunpack.c.l.b16 %v806
      %v4760 = vunpack.c.h.b16 %v806
      %v4761 = vunpack.c.l.b16 %v807
      %v4762 = vunpack.c.h.b16 %v807
      %v4763 = vunpack.c.l.b16 %v808
      %v4764 = vunpack.c.h.b16 %v808
      %v4765 = vunpack.c.l.b16 %v809
      %v4766 = vunpack.c.h.b16 %v809
      %v4767 = vunpack.c.l.b16 %v810
      %v4768 = vunpack.c.h.b16 %v810
      %v4769 = vunpack.c.l.b16 %v811
      %v4770 = vunpack.c.h.b16 %v811
      %v4771 = vunpack.c.l.b16 %v812
      %v4772 = vunpack.c.h.b16 %v812
      %v4773 = vunpack.c.l.b16 %v813
      %v4774 = vunpack.c.h.b16 %v813
      %v4775 = vunpack.c.l.b16 %v814
      %v4776 = vunpack.c.h.b16 %v814
      %v4777 = vunpack.c.l.b16 %v815
      %v4778 = vunpack.c.h.b16 %v815
      %v4779 = vunpack.c.l.b16 %v816
      %v4780 = vunpack.c.h.b16 %v816
      %v4781 = vunpack.c.l.b16 %v817
      %v4782 = vunpack.c.h.b16 %v817
      %v4783 = vunpack.c.l.b16 %v818
      %v4784 = vunpack.c.h.b16 %v818
      %v4785 = vunpack.c.l.b16 %v819
      %v4786 = vunpack.c.h.b16 %v819
      %v4787 = vunpack.c.l.b16 %v820
      %v4788 = vunpack.c.h.b16 %v820
      %v4789 = vunpack.c.l.b16 %v821
      %v4790 = vunpack.c.h.b16 %v821
      %v4791 = vunpack.c.l.b16 %v822
      %v4792 = vunpack.c.h.b16 %v822
      %v4793 = vunpack.c.l.b16 %v823
      %v4794 = vunpack.c.h.b16 %v823
      %v4795 = vunpack.c.l.b16 %v824
      %v4796 = vunpack.c.h.b16 %v824
      %v4797 = vunpack.c.l.b16 %v825
      %v4798 = vunpack.c.h.b16 %v825
      %v4799 = vunpack.c.l.b16 %v826
      %v4800 = vunpack.c.h.b16 %v826
      %v4801 = vunpack.c.l.b16 %v827
      %v4802 = vunpack.c.h.b16 %v827
      %v4803 = vunpack.c.l.b16 %v828
      %v4804 = vunpack.c.h.b16 %v828
      %v4805 = vunpack.c.l.b16 %v829
      %v4806 = vunpack.c.h.b16 %v829
      %v4807 = vunpack.c.l.b16 %v830
      %v4808 = vunpack.c.h.b16 %v830
      %v4809 = vunpack.c.l.b16 %v831
      %v4810 = vunpack.c.h.b16 %v831
      %v4811 = vunpack.c.l.b16 %v832
      %v4812 = vunpack.c.h.b16 %v832
      %v4813 = vunpack.c.l.b16 %v833
      %v4814 = vunpack.c.h.b16 %v833
      %v4815 = vunpack.c.l.b16 %v834
      %v4816 = vunpack.c.h.b16 %v834
      %v4817 = vunpack.c.l.b16 %v835
      %v4818 = vunpack.c.h.b16 %v835
      %v4819 = vunpack.c.l.b16 %v836
      %v4820 = vunpack.c.h.b16 %v836
      %v4821 = vunpack.c.l.b16 %v837
      %v4822 = vunpack.c.h.b16 %v837
      %v4823 = vunpack.c.l.b16 %v838
      %v4824 = vunpack.c.h.b16 %v838
      %v4825 = vunpack.c.l.b16 %v839
      %v4826 = vunpack.c.h.b16 %v839
      %v4827 = vunpack.c.l.b16 %v840
      %v4828 = vunpack.c.h.b16 %v840
      %v4829 = vunpack.c.l.b16 %v841
      %v4830 = vunpack.c.h.b16 %v841
      %v4831 = vunpack.c.l.b16 %v842
      %v4832 = vunpack.c.h.b16 %v842
      %v4833 = vunpack.c.l.b16 %v843
      %v4834 = vunpack.c.h.b16 %v843
      %v4835 = vunpack.c.l.b16 %v844
      %v4836 = vunpack.c.h.b16 %v844
      %v4837 = vunpack.c.l.b16 %v845
      %v4838 = vunpack.c.h.b16 %v845
      %v4839 = vunpack.c.l.b16 %v846
      %v4840 = vunpack.c.h.b16 %v846
      %v4841 = vunpack.c.l.b16 %v847
      %v4842 = vunpack.c.h.b16 %v847
      %v4843 = vunpack.c.l.b16 %v848
      %v4844 = vunpack.c.h.b16 %v848
      %v4845 = vunpack.c.l.b16 %v849
      %v4846 = vunpack.c.h.b16 %v849
      %v4847 = vunpack.c.l.b16 %v850
      %v4848 = vunpack.c.h.b16 %v850
      %v4849 = vunpack.c.l.b16 %v851
      %v4850 = vunpack.c.h.b16 %v851
      %v4851 = vunpack.c.l.b16 %v852
      %v4852 = vunpack.c.h.b16 %v852
      %v4853 = vunpack.c.l.b16 %v853
      %v4854 = vunpack.c.h.b16 %v853
      %v4855 = vunpack.c.l.b16 %v854
      %v4856 = vunpack.c.h.b16 %v854
      %v4857 = vunpack.c.l.b16 %v855
      %v4858 = vunpack.c.h.b16 %v855
      %v4859 = vunpack.c.l.b16 %v856
      %v4860 = vunpack.c.h.b16 %v856
      %v4861 = vunpack.c.l.b16 %v857
      %v4862 = vunpack.c.h.b16 %v857
      %v4863 = vunpack.c.l.b16 %v858
      %v4864 = vunpack.c.h.b16 %v858
      %v4865 = vunpack.c.l.b16 %v859
      %v4866 = vunpack.c.h.b16 %v859
      %v4867 = vunpack.c.l.b16 %v860
      %v4868 = vunpack.c.h.b16 %v860
      %v4869 = vunpack.c.l.b16 %v861
      %v4870 = vunpack.c.h.b16 %v861
      %v4871 = vunpack.c.l.b16 %v862
      %v4872 = vunpack.c.h.b16 %v862
      %v4873 = vunpack.c.l.b16 %v863
      %v4874 = vunpack.c.h.b16 %v863
      %v4875 = vunpack.c.l.b16 %v864
      %v4876 = vunpack.c.h.b16 %v864
      %v4877 = vunpack.c.l.b16 %v865
      %v4878 = vunpack.c.h.b16 %v865
      %v4879 = vunpack.c.l.b16 %v866
      %v4880 = vunpack.c.h.b16 %v866
      %v4881 = vunpack.c.l.b16 %v867
      %v4882 = vunpack.c.h.b16 %v867
      %v4883 = vunpack.c.l.b16 %v868
      %v4884 = vunpack.c.h.b16 %v868
      %v4885 = vunpack.c.l.b16 %v869
      %v4886 = vunpack.c.h.b16 %v869
      %v4887 = vunpack.c.l.b16 %v870
      %v4888 = vunpack.c.h.b16 %v870
      %v4889 = vunpack.c.l.b16 %v871
      %v4890 = vunpack.c.h.b16 %v871
      %v4891 = vunpack.c.l.b16 %v872
      %v4892 = vunpack.c.h.b16 %v872
      %v4893 = vunpack.c.l.b16 %v873
      %v4894 = vunpack.c.h.b16 %v873
      %v4895 = vunpack.c.l.b16 %v874
      %v4896 = vunpack.c.h.b16 %v874
      %v4897 = vunpack.c.l.b16 %v875
      %v4898 = vunpack.c.h.b16 %v875
      %v4899 = vunpack.c.l.b16 %v876
      %v4900 = vunpack.c.h.b16 %v876
      %v4901 = vunpack.c.l.b16 %v877
      %v4902 = vunpack.c.h.b16 %v877
      %v4903 = vunpack.c.l.b16 %v878
      %v4904 = vunpack.c.h.b16 %v878
      %v4905 = vunpack.c.l.b16 %v879
      %v4906 = vunpack.c.h.b16 %v879
      %v4907 = vunpack.c.l.b16 %v880
      %v4908 = vunpack.c.h.b16 %v880
      %v4909 = vunpack.c.l.b16 %v881
      %v4910 = vunpack.c.h.b16 %v881
      %v4911 = vunpack.c.l.b16 %v882
      %v4912 = vunpack.c.h.b16 %v882
      %v4913 = vunpack.c.l.b16 %v883
      %v4914 = vunpack.c.h.b16 %v883
      %v4915 = vunpack.c.l.b16 %v884
      %v4916 = vunpack.c.h.b16 %v884
      %v4917 = vunpack.c.l.b16 %v885
      %v4918 = vunpack.c.h.b16 %v885
      %v4919 = vunpack.c.l.b16 %v886
      %v4920 = vunpack.c.h.b16 %v886
      %v4921 = vunpack.c.l.b16 %v887
      %v4922 = vunpack.c.h.b16 %v887
      %v4923 = vunpack.c.l.b16 %v888
      %v4924 = vunpack.c.h.b16 %v888
      %v4925 = vunpack.c.l.b16 %v889
      %v4926 = vunpack.c.h.b16 %v889
      %v4927 = vunpack.c.l.b16 %v890
      %v4928 = vunpack.c.h.b16 %v890
      %v4929 = vunpack.c.l.b16 %v891
      %v4930 = vunpack.c.h.b16 %v891
      %v4931 = vunpack.c.l.b16 %v892
      %v4932 = vunpack.c.h.b16 %v892
      %v4933 = vunpack.c.l.b16 %v893
      %v4934 = vunpack.c.h.b16 %v893
      %v4935 = vunpack.c.l.b16 %v894
      %v4936 = vunpack.c.h.b16 %v894
      %v4937 = vunpack.c.l.b16 %v895
      %v4938 = vunpack.c.h.b16 %v895
      %v4939 = vunpack.c.l.b16 %v896
      %v4940 = vunpack.c.h.b16 %v896
      %v4941 = vunpack.c.l.b16 %v897
      %v4942 = vunpack.c.h.b16 %v897
      %v4943 = vunpack.c.l.b16 %v898
      %v4944 = vunpack.c.h.b16 %v898
      %v4945 = vunpack.c.l.b16 %v899
      %v4946 = vunpack.c.h.b16 %v899
      %v4947 = vunpack.c.l.b16 %v900
      %v4948 = vunpack.c.h.b16 %v900
      %v4949 = vunpack.c.l.b16 %v901
      %v4950 = vunpack.c.h.b16 %v901
      %v4951 = vunpack.c.l.b16 %v902
      %v4952 = vunpack.c.h.b16 %v902
      %v4953 = vunpack.c.l.b16 %v903
      %v4954 = vunpack.c.h.b16 %v903
      %v4955 = vunpack.c.l.b16 %v904
      %v4956 = vunpack.c.h.b16 %v904
      %v4957 = vunpack.c.l.b16 %v905
      %v4958 = vunpack.c.h.b16 %v905
      %v4959 = vunpack.c.l.b16 %v906
      %v4960 = vunpack.c.h.b16 %v906
      %v4961 = vunpack.c.l.b16 %v907
      %v4962 = vunpack.c.h.b16 %v907
      %v4963 = vunpack.c.l.b16 %v908
      %v4964 = vunpack.c.h.b16 %v908
      %v4965 = vunpack.c.l.b16 %v909
      %v4966 = vunpack.c.h.b16 %v909
      %v4967 = vunpack.c.l.b16 %v910
      %v4968 = vunpack.c.h.b16 %v910
      %v4969 = vunpack.c.l.b16 %v911
      %v4970 = vunpack.c.h.b16 %v911
      %v4971 = vunpack.c.l.b16 %v912
      %v4972 = vunpack.c.h.b16 %v912
      %v4973 = vunpack.c.l.b16 %v913
      %v4974 = vunpack.c.h.b16 %v913
      %v4975 = vunpack.c.l.b16 %v914
      %v4976 = vunpack.c.h.b16 %v914
      %v4977 = vunpack.c.l.b16 %v915
      %v4978 = vunpack.c.h.b16 %v915
      %v4979 = vunpack.c.l.b16 %v916
      %v4980 = vunpack.c.h.b16 %v916
      %v4981 = vunpack.c.l.b16 %v917
      %v4982 = vunpack.c.h.b16 %v917
      %v4983 = vunpack.c.l.b16 %v918
      %v4984 = vunpack.c.h.b16 %v918
      %v4985 = vunpack.c.l.b16 %v919
      %v4986 = vunpack.c.h.b16 %v919
      %v4987 = vunpack.c.l.b16 %v920
      %v4988 = vunpack.c.h.b16 %v920
      %v4989 = vunpack.c.l.b16 %v921
      %v4990 = vunpack.c.h.b16 %v921
      %v4991 = vunpack.c.l.b16 %v922
      %v4992 = vunpack.c.h.b16 %v922
      %v4993 = vunpack.c.l.b16 %v923
      %v4994 = vunpack.c.h.b16 %v923
      %v4995 = vunpack.c.l.b16 %v924
      %v4996 = vunpack.c.h.b16 %v924
      %v4997 = vpack.c.b16 %v4749, %v4741
      %v4998 = vpack.c.b16 %v4750, %v4742
      %v4999 = vpack.c.b16 %v4751, %v4743
      %v5000 = vpack.c.b16 %v4752, %v4744
      %v5001 = vpack.c.b16 %v4753, %v4745
      %v5002 = vpack.c.b16 %v4754, %v4746
      %v5003 = vpack.c.b16 %v4755, %v4747
      %v5004 = vpack.c.b16 %v4756, %v4748
      %v5005 = vpack.c.b16 %v4765, %v4757
      %v5006 = vpack.c.b16 %v4766, %v4758
      %v5007 = vpack.c.b16 %v4767, %v4759
      %v5008 = vpack.c.b16 %v4768, %v4760
      %v5009 = vpack.c.b16 %v4769, %v4761
      %v5010 = vpack.c.b16 %v4770, %v4762
      %v5011 = vpack.c.b16 %v4771, %v4763
      %v5012 = vpack.c.b16 %v4772, %v4764
      %v5013 = vpack.c.b16 %v4781, %v4773
      %v5014 = vpack.c.b16 %v4782, %v4774
      %v5015 = vpack.c.b16 %v4783, %v4775
      %v5016 = vpack.c.b16 %v4784, %v4776
      %v5017 = vpack.c.b16 %v4785, %v4777
      %v5018 = vpack.c.b16 %v4786, %v4778
      %v5019 = vpack.c.b16 %v4787, %v4779
      %v5020 = vpack.c.b16 %v4788, %v4780
      %v5021 = vpack.c.b16 %v4797, %v4789
      %v5022 = vpack.c.b16 %v4798, %v4790
      %v5023 = vpack.c.b16 %v4799, %v4791
      %v5024 = vpack.c.b16 %v4800, %v4792
      %v5025 = vpack.c.b16 %v4801, %v4793
      %v5026 = vpack.c.b16 %v4802, %v4794
      %v5027 = vpack.c.b16 %v4803, %v4795
      %v5028 = vpack.c.b16 %v4804, %v4796
      %v5029 = vpack.c.b16 %v4813, %v4805
      %v5030 = vpack.c.b16 %v4814, %v4806
      %v5031 = vpack.c.b16 %v4815, %v4807
      %v5032 = vpack.c.b16 %v4816, %v4808
      %v5033 = vpack.c.b16 %v4817, %v4809
      %v5034 = vpack.c.b16 %v4818, %v4810
      %v5035 = vpack.c.b16 %v4819, %v4811
      %v5036 = vpack.c.b16 %v4820, %v4812
      %v5037 = vpack.c.b16 %v4829, %v4821
      %v5038 = vpack.c.b16 %v4830, %v4822
      %v5039 = vpack.c.b16 %v4831, %v4823
      %v5040 = vpack.c.b16 %v4832, %v4824
      %v5041 = vpack.c.b16 %v4833, %v4825
      %v5042 = vpack.c.b16 %v4834, %v4826
      %v5043 = vpack.c.b16 %v4835, %v4827
      %v5044 = vpack.c.b16 %v4836, %v4828
      %v5045 = vpack.c.b16 %v4845, %v4837
      %v5046 = vpack.c.b16 %v4846, %v4838
      %v5047 = vpack.c.b16 %v4847, %v4839
      %v5048 = vpack.c.b16 %v4848, %v4840
      %v5049 = vpack.c.b16 %v4849, %v4841
      %v5050 = vpack.c.b16 %v4850, %v4842
      %v5051 = vpack.c.b16 %v4851, %v4843
      %v5052 = vpack.c.b16 %v4852, %v4844
      %v5053 = vpack.c.b16 %v4861, %v4853
      %v5054 = vpack.c.b16 %v4862, %v4854
      %v5055 = vpack.c.b16 %v4863, %v4855
      %v5056 = vpack.c.b16 %v4864, %v4856
      %v5057 = vpack.c.b16 %v4865, %v4857
      %v5058 = vpack.c.b16 %v4866, %v4858
      %v5059 = vpack.c.b16 %v4867, %v4859
      %v5060 = vpack.c.b16 %v4868, %v4860
      %v5061 = vpack.c.b16 %v4877, %v4869
      %v5062 = vpack.c.b16 %v4878, %v4870
      %v5063 = vpack.c.b16 %v4879, %v4871
      %v5064 = vpack.c.b16 %v4880, %v4872
      %v5065 = vpack.c.b16 %v4881, %v4873
      %v5066 = vpack.c.b16 %v4882, %v4874
      %v5067 = vpack.c.b16 %v4883, %v4875
      %v5068 = vpack.c.b16 %v4884, %v4876
      %v5069 = vpack.c.b16 %v4893, %v4885
      %v5070 = vpack.c.b16 %v4894, %v4886
      %v5071 = vpack.c.b16 %v4895, %v4887
      %v5072 = vpack.c.b16 %v4896, %v4888
      %v5073 = vpack.c.b16 %v4897, %v4889
      %v5074 = vpack.c.b16 %v4898, %v4890
      %v5075 = vpack.c.b16 %v4899, %v4891
      %v5076 = vpack.c.b16 %v4900, %v4892
      %v5077 = vpack.c.b16 %v4909, %v4901
      %v5078 = vpack.c.b16 %v4910, %v4902
      %v5079 = vpack.c.b16 %v4911, %v4903
      %v5080 = vpack.c.b16 %v4912, %v4904
      %v5081 = vpack.c.b16 %v4913, %v4905
      %v5082 = vpack.c.b16 %v4914, %v4906
      %v5083 = vpack.c.b16 %v4915, %v4907
      %v5084 = vpack.c.b16 %v4916, %v4908
      %v5085 = vpack.c.b16 %v4925, %v4917
      %v5086 = vpack.c.b16 %v4926, %v4918
      %v5087 = vpack.c.b16 %v4927, %v4919
      %v5088 = vpack.c.b16 %v4928, %v4920
      %v5089 = vpack.c.b16 %v4929, %v4921
      %v5090 = vpack.c.b16 %v4930, %v4922
      %v5091 = vpack.c.b16 %v4931, %v4923
      %v5092 = vpack.c.b16 %v4932, %v4924
      %v5093 = vpack.c.b16 %v4941, %v4933
      %v5094 = vpack.c.b16 %v4942, %v4934
      %v5095 = vpack.c.b16 %v4943, %v4935
      %v5096 = vpack.c.b16 %v4944, %v4936
      %v5097 = vpack.c.b16 %v4945, %v4937
      %v5098 = vpack.c.b16 %v4946, %v4938
      %v5099 = vpack.c.b16 %v4947, %v4939
      %v5100 = vpack.c.b16 %v4948, %v4940
      %v5101 = vpack.c.b16 %v4957, %v4949
      %v5102 = vpack.c.b16 %v4958, %v4950
      %v5103 = vpack.c.b16 %v4959, %v4951
      %v5104 = vpack.c.b16 %v4960, %v4952
      %v5105 = vpack.c.b16 %v4961, %v4953
      %v5106 = vpack.c.b16 %v4962, %v4954
      %v5107 = vpack.c.b16 %v4963, %v4955
      %v5108 = vpack.c.b16 %v4964, %v4956
      %v5109 = vpack.c.b16 %v4973, %v4965
      %v5110 = vpack.c.b16 %v4974, %v4966
      %v5111 = vpack.c.b16 %v4975, %v4967
      %v5112 = vpack.c.b16 %v4976, %v4968
      %v5113 = vpack.c.b16 %v4977, %v4969
      %v5114 = vpack.c.b16 %v4978, %v4970
      %v5115 = vpack.c.b16 %v4979, %v4971
      %v5116 = vpack.c.b16 %v4980, %v4972
      %v5117 = vpack.c.b16 %v4989, %v4981
      %v5118 = vpack.c.b16 %v4990, %v4982
      %v5119 = vpack.c.b16 %v4991, %v4983
      %v5120 = vpack.c.b16 %v4992, %v4984
      %v5121 = vpack.c.b16 %v4993, %v4985
      %v5122 = vpack.c.b16 %v4994, %v4986
      %v5123 = vpack.c.b16 %v4995, %v4987
      %v5124 = vpack.c.b16 %v4996, %v4988
      %5253 = vmatprep.subr.bf16.mxu0 %v4998
      %5254 = vmatpush1.bf16.msra.mxu0 %v4997
      %5255 = vmatprep.subr.bf16.mxu0 %v5006
      %5256 = vmatpush1.bf16.msra.mxu0 %v5005
      %5257 = vmatprep.subr.bf16.mxu0 %v5014
      %5258 = vmatpush1.bf16.msra.mxu0 %v5013
      %5259 = vmatprep.subr.bf16.mxu0 %v5022
      %5260 = vmatpush1.bf16.msra.mxu0 %v5021
      %5261 = vmatprep.subr.bf16.mxu0 %v5030
      %5262 = vmatpush1.bf16.msra.mxu0 %v5029
      %5263 = vmatprep.subr.bf16.mxu0 %v5038
      %5264 = vmatpush1.bf16.msra.mxu0 %v5037
      %5265 = vmatprep.subr.bf16.mxu0 %v5046
      %5266 = vmatpush1.bf16.msra.mxu0 %v5045
      %5267 = vmatprep.subr.bf16.mxu0 %v5054
      %5268 = vmatpush1.bf16.msra.mxu0 %v5053
      %5269 = vmatprep.subr.bf16.mxu0 %v5062
      %5270 = vmatpush1.bf16.msra.mxu0 %v5061
      %5271 = vmatprep.subr.bf16.mxu0 %v5070
      %5272 = vmatpush1.bf16.msra.mxu0 %v5069
      %5273 = vmatprep.subr.bf16.mxu0 %v5078
      %5274 = vmatpush1.bf16.msra.mxu0 %v5077
      %5275 = vmatprep.subr.bf16.mxu0 %v5086
      %5276 = vmatpush1.bf16.msra.mxu0 %v5085
      %5277 = vmatprep.subr.bf16.mxu0 %v5094
      %5278 = vmatpush1.bf16.msra.mxu0 %v5093
      %5279 = vmatprep.subr.bf16.mxu0 %v5102
      %5280 = vmatpush1.bf16.msra.mxu0 %v5101
      %5281 = vmatprep.subr.bf16.mxu0 %v5110
      %5282 = vmatpush1.bf16.msra.mxu0 %v5109
      %5283 = vmatprep.subr.bf16.mxu0 %v5118
      %5284 = vmatpush1.bf16.msra.mxu0 %v5117
      %5285 = vmatprep.mubr.bf16.mxu0 %v4610
      %5286 = vmatmul.mubr.bf16.gmra.mrb[0].mxu0 %v4606
      %v5287 = vpop.f32.mrb[0].mxu0
      %v5288 = vadd.f32 0.0, %v5287
      %v5289 = vpop.f32.mrb[0].mxu0
      %v5290 = vadd.f32 0.0, %v5289
      %v5291 = vpop.f32.mrb[0].mxu0
      %v5292 = vpop.f32.mrb[0].mxu0
      %5293 = vdwg.mxu0
      %5294 = vmatprep.subr.bf16.mxu0 %v5000
      %5295 = vmatpush1.bf16.msra.mxu0 %v4999
      %5296 = vmatprep.subr.bf16.mxu0 %v5008
      %5297 = vmatpush1.bf16.msra.mxu0 %v5007
      %5298 = vmatprep.subr.bf16.mxu0 %v5016
      %5299 = vmatpush1.bf16.msra.mxu0 %v5015
      %5300 = vmatprep.subr.bf16.mxu0 %v5024
      %5301 = vmatpush1.bf16.msra.mxu0 %v5023
      %5302 = vmatprep.subr.bf16.mxu0 %v5032
      %5303 = vmatpush1.bf16.msra.mxu0 %v5031
      %5304 = vmatprep.subr.bf16.mxu0 %v5040
      %5305 = vmatpush1.bf16.msra.mxu0 %v5039
      %5306 = vmatprep.subr.bf16.mxu0 %v5048
      %5307 = vmatpush1.bf16.msra.mxu0 %v5047
      %5308 = vmatprep.subr.bf16.mxu0 %v5056
      %5309 = vmatpush1.bf16.msra.mxu0 %v5055
      %5310 = vmatprep.subr.bf16.mxu0 %v5064
      %5311 = vmatpush1.bf16.msra.mxu0 %v5063
      %5312 = vmatprep.subr.bf16.mxu0 %v5072
      %5313 = vmatpush1.bf16.msra.mxu0 %v5071
      %5314 = vmatprep.subr.bf16.mxu0 %v5080
      %5315 = vmatpush1.bf16.msra.mxu0 %v5079
      %5316 = vmatprep.subr.bf16.mxu0 %v5088
      %5317 = vmatpush1.bf16.msra.mxu0 %v5087
      %5318 = vmatprep.subr.bf16.mxu0 %v5096
      %5319 = vmatpush1.bf16.msra.mxu0 %v5095
      %5320 = vmatprep.subr.bf16.mxu0 %v5104
      %5321 = vmatpush1.bf16.msra.mxu0 %v5103
      %5322 = vmatprep.subr.bf16.mxu0 %v5112
      %5323 = vmatpush1.bf16.msra.mxu0 %v5111
      %5324 = vmatprep.subr.bf16.mxu0 %v5120
      %5325 = vmatpush1.bf16.msra.mxu0 %v5119
      %5326 = vmatprep.mubr.bf16.mxu0 %v4610
      %5327 = vmatmul.mubr.bf16.gmra.mrb[0].mxu0 %v4606
      %v5328 = vpop.f32.mrb[0].mxu0
      %v5329 = vadd.f32 0.0, %v5328
      %v5330 = vpop.f32.mrb[0].mxu0
      %v5331 = vadd.f32 0.0, %v5330
      %v5332 = vpop.f32.mrb[0].mxu0
      %v5333 = vpop.f32.mrb[0].mxu0
      %5334 = vdwg.mxu0
      %5335 = vmatprep.subr.bf16.mxu0 %v5002
      %5336 = vmatpush1.bf16.msra.mxu0 %v5001
      %5337 = vmatprep.subr.bf16.mxu0 %v5010
      %5338 = vmatpush1.bf16.msra.mxu0 %v5009
      %5339 = vmatprep.subr.bf16.mxu0 %v5018
      %5340 = vmatpush1.bf16.msra.mxu0 %v5017
      %5341 = vmatprep.subr.bf16.mxu0 %v5026
      %5342 = vmatpush1.bf16.msra.mxu0 %v5025
      %5343 = vmatprep.subr.bf16.mxu0 %v5034
      %5344 = vmatpush1.bf16.msra.mxu0 %v5033
      %5345 = vmatprep.subr.bf16.mxu0 %v5042
      %5346 = vmatpush1.bf16.msra.mxu0 %v5041
      %5347 = vmatprep.subr.bf16.mxu0 %v5050
      %5348 = vmatpush1.bf16.msra.mxu0 %v5049
      %5349 = vmatprep.subr.bf16.mxu0 %v5058
      %5350 = vmatpush1.bf16.msra.mxu0 %v5057
      %5351 = vmatprep.subr.bf16.mxu0 %v5066
      %5352 = vmatpush1.bf16.msra.mxu0 %v5065
      %5353 = vmatprep.subr.bf16.mxu0 %v5074
      %5354 = vmatpush1.bf16.msra.mxu0 %v5073
      %5355 = vmatprep.subr.bf16.mxu0 %v5082
      %5356 = vmatpush1.bf16.msra.mxu0 %v5081
      %5357 = vmatprep.subr.bf16.mxu0 %v5090
      %5358 = vmatpush1.bf16.msra.mxu0 %v5089
      %5359 = vmatprep.subr.bf16.mxu0 %v5098
      %5360 = vmatpush1.bf16.msra.mxu0 %v5097
      %5361 = vmatprep.subr.bf16.mxu0 %v5106
      %5362 = vmatpush1.bf16.msra.mxu0 %v5105
      %5363 = vmatprep.subr.bf16.mxu0 %v5114
      %5364 = vmatpush1.bf16.msra.mxu0 %v5113
      %5365 = vmatprep.subr.bf16.mxu0 %v5122
      %5366 = vmatpush1.bf16.msra.mxu0 %v5121
      %5367 = vmatprep.mubr.bf16.mxu0 %v4610
      %5368 = vmatmul.mubr.bf16.gmra.mrb[0].mxu0 %v4606
      %v5369 = vpop.f32.mrb[0].mxu0
      %v5370 = vadd.f32 0.0, %v5369
      %v5371 = vpop.f32.mrb[0].mxu0
      %v5372 = vadd.f32 0.0, %v5371
      %v5373 = vpop.f32.mrb[0].mxu0
      %v5374 = vpop.f32.mrb[0].mxu0
      %5375 = vdwg.mxu0
      %5376 = vmatprep.subr.bf16.mxu0 %v5004
      %5377 = vmatpush1.bf16.msra.mxu0 %v5003
      %5378 = vmatprep.subr.bf16.mxu0 %v5012
      %5379 = vmatpush1.bf16.msra.mxu0 %v5011
      %5380 = vmatprep.subr.bf16.mxu0 %v5020
      %5381 = vmatpush1.bf16.msra.mxu0 %v5019
      %5382 = vmatprep.subr.bf16.mxu0 %v5028
      %5383 = vmatpush1.bf16.msra.mxu0 %v5027
      %5384 = vmatprep.subr.bf16.mxu0 %v5036
      %5385 = vmatpush1.bf16.msra.mxu0 %v5035
      %5386 = vmatprep.subr.bf16.mxu0 %v5044
      %5387 = vmatpush1.bf16.msra.mxu0 %v5043
      %5388 = vmatprep.subr.bf16.mxu0 %v5052
      %5389 = vmatpush1.bf16.msra.mxu0 %v5051
      %5390 = vmatprep.subr.bf16.mxu0 %v5060
      %5391 = vmatpush1.bf16.msra.mxu0 %v5059
      %5392 = vmatprep.subr.bf16.mxu0 %v5068
      %5393 = vmatpush1.bf16.msra.mxu0 %v5067
      %5394 = vmatprep.subr.bf16.mxu0 %v5076
      %5395 = vmatpush1.bf16.msra.mxu0 %v5075
      %5396 = vmatprep.subr.bf16.mxu0 %v5084
      %5397 = vmatpush1.bf16.msra.mxu0 %v5083
      %5398 = vmatprep.subr.bf16.mxu0 %v5092
      %5399 = vmatpush1.bf16.msra.mxu0 %v5091
      %5400 = vmatprep.subr.bf16.mxu0 %v5100
      %5401 = vmatpush1.bf16.msra.mxu0 %v5099
      %5402 = vmatprep.subr.bf16.mxu0 %v5108
      %5403 = vmatpush1.bf16.msra.mxu0 %v5107
      %5404 = vmatprep.subr.bf16.mxu0 %v5116
      %5405 = vmatpush1.bf16.msra.mxu0 %v5115
      %5406 = vmatprep.subr.bf16.mxu0 %v5124
      %5407 = vmatpush1.bf16.msra.mxu0 %v5123
      %5408 = vmatprep.mubr.bf16.mxu0 %v4610
      %5409 = vmatmul.mubr.bf16.gmra.mrb[0].mxu0 %v4606
      %v5410 = vpop.f32.mrb[0].mxu0
      %v5411 = vadd.f32 0.0, %v5410
      %v5412 = vpop.f32.mrb[0].mxu0
      %v5413 = vadd.f32 0.0, %v5412
      %v5414 = vpop.f32.mrb[0].mxu0
      %v5415 = vpop.f32.mrb[0].mxu0
      %5416 = vdwg.mxu0
      %v5417 = vpack.i.b16 %v1339, %v1339
      %v5418 = vlaneseq
      %v5419 = vshrl.u32 %v5418, 7
      %v5420 = vsub.s32 0, %v5419
      %v5421 = vrot.slane %v5417, %v5420
      %v5422 = vlaneseq
      %v5423 = vshrl.u32 %v5422, 7
      %v5424 = vsub.s32 1, %v5423
      %v5425 = vrot.slane %v5417, %v5424
      %v5556 = vunpack.c.l.b16 %v925
      %v5557 = vunpack.c.h.b16 %v925
      %v5558 = vunpack.c.l.b16 %v926
      %v5559 = vunpack.c.h.b16 %v926
      %v5560 = vunpack.c.l.b16 %v927
      %v5561 = vunpack.c.h.b16 %v927
      %v5562 = vunpack.c.l.b16 %v928
      %v5563 = vunpack.c.h.b16 %v928
      %v5564 = vunpack.c.l.b16 %v929
      %v5565 = vunpack.c.h.b16 %v929
      %v5566 = vunpack.c.l.b16 %v930
      %v5567 = vunpack.c.h.b16 %v930
      %v5568 = vunpack.c.l.b16 %v931
      %v5569 = vunpack.c.h.b16 %v931
      %v5570 = vunpack.c.l.b16 %v932
      %v5571 = vunpack.c.h.b16 %v932
      %v5572 = vunpack.c.l.b16 %v933
      %v5573 = vunpack.c.h.b16 %v933
      %v5574 = vunpack.c.l.b16 %v934
      %v5575 = vunpack.c.h.b16 %v934
      %v5576 = vunpack.c.l.b16 %v935
      %v5577 = vunpack.c.h.b16 %v935
      %v5578 = vunpack.c.l.b16 %v936
      %v5579 = vunpack.c.h.b16 %v936
      %v5580 = vunpack.c.l.b16 %v937
      %v5581 = vunpack.c.h.b16 %v937
      %v5582 = vunpack.c.l.b16 %v938
      %v5583 = vunpack.c.h.b16 %v938
      %v5584 = vunpack.c.l.b16 %v939
      %v5585 = vunpack.c.h.b16 %v939
      %v5586 = vunpack.c.l.b16 %v940
      %v5587 = vunpack.c.h.b16 %v940
      %v5588 = vunpack.c.l.b16 %v941
      %v5589 = vunpack.c.h.b16 %v941
      %v5590 = vunpack.c.l.b16 %v942
      %v5591 = vunpack.c.h.b16 %v942
      %v5592 = vunpack.c.l.b16 %v943
      %v5593 = vunpack.c.h.b16 %v943
      %v5594 = vunpack.c.l.b16 %v944
      %v5595 = vunpack.c.h.b16 %v944
      %v5596 = vunpack.c.l.b16 %v945
      %v5597 = vunpack.c.h.b16 %v945
      %v5598 = vunpack.c.l.b16 %v946
      %v5599 = vunpack.c.h.b16 %v946
      %v5600 = vunpack.c.l.b16 %v947
      %v5601 = vunpack.c.h.b16 %v947
      %v5602 = vunpack.c.l.b16 %v948
      %v5603 = vunpack.c.h.b16 %v948
      %v5604 = vunpack.c.l.b16 %v949
      %v5605 = vunpack.c.h.b16 %v949
      %v5606 = vunpack.c.l.b16 %v950
      %v5607 = vunpack.c.h.b16 %v950
      %v5608 = vunpack.c.l.b16 %v951
      %v5609 = vunpack.c.h.b16 %v951
      %v5610 = vunpack.c.l.b16 %v952
      %v5611 = vunpack.c.h.b16 %v952
      %v5612 = vunpack.c.l.b16 %v953
      %v5613 = vunpack.c.h.b16 %v953
      %v5614 = vunpack.c.l.b16 %v954
      %v5615 = vunpack.c.h.b16 %v954
      %v5616 = vunpack.c.l.b16 %v955
      %v5617 = vunpack.c.h.b16 %v955
      %v5618 = vunpack.c.l.b16 %v956
      %v5619 = vunpack.c.h.b16 %v956
      %v5620 = vunpack.c.l.b16 %v957
      %v5621 = vunpack.c.h.b16 %v957
      %v5622 = vunpack.c.l.b16 %v958
      %v5623 = vunpack.c.h.b16 %v958
      %v5624 = vunpack.c.l.b16 %v959
      %v5625 = vunpack.c.h.b16 %v959
      %v5626 = vunpack.c.l.b16 %v960
      %v5627 = vunpack.c.h.b16 %v960
      %v5628 = vunpack.c.l.b16 %v961
      %v5629 = vunpack.c.h.b16 %v961
      %v5630 = vunpack.c.l.b16 %v962
      %v5631 = vunpack.c.h.b16 %v962
      %v5632 = vunpack.c.l.b16 %v963
      %v5633 = vunpack.c.h.b16 %v963
      %v5634 = vunpack.c.l.b16 %v964
      %v5635 = vunpack.c.h.b16 %v964
      %v5636 = vunpack.c.l.b16 %v965
      %v5637 = vunpack.c.h.b16 %v965
      %v5638 = vunpack.c.l.b16 %v966
      %v5639 = vunpack.c.h.b16 %v966
      %v5640 = vunpack.c.l.b16 %v967
      %v5641 = vunpack.c.h.b16 %v967
      %v5642 = vunpack.c.l.b16 %v968
      %v5643 = vunpack.c.h.b16 %v968
      %v5644 = vunpack.c.l.b16 %v969
      %v5645 = vunpack.c.h.b16 %v969
      %v5646 = vunpack.c.l.b16 %v970
      %v5647 = vunpack.c.h.b16 %v970
      %v5648 = vunpack.c.l.b16 %v971
      %v5649 = vunpack.c.h.b16 %v971
      %v5650 = vunpack.c.l.b16 %v972
      %v5651 = vunpack.c.h.b16 %v972
      %v5652 = vunpack.c.l.b16 %v973
      %v5653 = vunpack.c.h.b16 %v973
      %v5654 = vunpack.c.l.b16 %v974
      %v5655 = vunpack.c.h.b16 %v974
      %v5656 = vunpack.c.l.b16 %v975
      %v5657 = vunpack.c.h.b16 %v975
      %v5658 = vunpack.c.l.b16 %v976
      %v5659 = vunpack.c.h.b16 %v976
      %v5660 = vunpack.c.l.b16 %v977
      %v5661 = vunpack.c.h.b16 %v977
      %v5662 = vunpack.c.l.b16 %v978
      %v5663 = vunpack.c.h.b16 %v978
      %v5664 = vunpack.c.l.b16 %v979
      %v5665 = vunpack.c.h.b16 %v979
      %v5666 = vunpack.c.l.b16 %v980
      %v5667 = vunpack.c.h.b16 %v980
      %v5668 = vunpack.c.l.b16 %v981
      %v5669 = vunpack.c.h.b16 %v981
      %v5670 = vunpack.c.l.b16 %v982
      %v5671 = vunpack.c.h.b16 %v982
      %v5672 = vunpack.c.l.b16 %v983
      %v5673 = vunpack.c.h.b16 %v983
      %v5674 = vunpack.c.l.b16 %v984
      %v5675 = vunpack.c.h.b16 %v984
      %v5676 = vunpack.c.l.b16 %v985
      %v5677 = vunpack.c.h.b16 %v985
      %v5678 = vunpack.c.l.b16 %v986
      %v5679 = vunpack.c.h.b16 %v986
      %v5680 = vunpack.c.l.b16 %v987
      %v5681 = vunpack.c.h.b16 %v987
      %v5682 = vunpack.c.l.b16 %v988
      %v5683 = vunpack.c.h.b16 %v988
      %v5684 = vunpack.c.l.b16 %v989
      %v5685 = vunpack.c.h.b16 %v989
      %v5686 = vunpack.c.l.b16 %v990
      %v5687 = vunpack.c.h.b16 %v990
      %v5688 = vunpack.c.l.b16 %v991
      %v5689 = vunpack.c.h.b16 %v991
      %v5690 = vunpack.c.l.b16 %v992
      %v5691 = vunpack.c.h.b16 %v992
      %v5692 = vunpack.c.l.b16 %v993
      %v5693 = vunpack.c.h.b16 %v993
      %v5694 = vunpack.c.l.b16 %v994
      %v5695 = vunpack.c.h.b16 %v994
      %v5696 = vunpack.c.l.b16 %v995
      %v5697 = vunpack.c.h.b16 %v995
      %v5698 = vunpack.c.l.b16 %v996
      %v5699 = vunpack.c.h.b16 %v996
      %v5700 = vunpack.c.l.b16 %v997
      %v5701 = vunpack.c.h.b16 %v997
      %v5702 = vunpack.c.l.b16 %v998
      %v5703 = vunpack.c.h.b16 %v998
      %v5704 = vunpack.c.l.b16 %v999
      %v5705 = vunpack.c.h.b16 %v999
      %v5706 = vunpack.c.l.b16 %v1000
      %v5707 = vunpack.c.h.b16 %v1000
      %v5708 = vunpack.c.l.b16 %v1001
      %v5709 = vunpack.c.h.b16 %v1001
      %v5710 = vunpack.c.l.b16 %v1002
      %v5711 = vunpack.c.h.b16 %v1002
      %v5712 = vunpack.c.l.b16 %v1003
      %v5713 = vunpack.c.h.b16 %v1003
      %v5714 = vunpack.c.l.b16 %v1004
      %v5715 = vunpack.c.h.b16 %v1004
      %v5716 = vunpack.c.l.b16 %v1005
      %v5717 = vunpack.c.h.b16 %v1005
      %v5718 = vunpack.c.l.b16 %v1006
      %v5719 = vunpack.c.h.b16 %v1006
      %v5720 = vunpack.c.l.b16 %v1007
      %v5721 = vunpack.c.h.b16 %v1007
      %v5722 = vunpack.c.l.b16 %v1008
      %v5723 = vunpack.c.h.b16 %v1008
      %v5724 = vunpack.c.l.b16 %v1009
      %v5725 = vunpack.c.h.b16 %v1009
      %v5726 = vunpack.c.l.b16 %v1010
      %v5727 = vunpack.c.h.b16 %v1010
      %v5728 = vunpack.c.l.b16 %v1011
      %v5729 = vunpack.c.h.b16 %v1011
      %v5730 = vunpack.c.l.b16 %v1012
      %v5731 = vunpack.c.h.b16 %v1012
      %v5732 = vunpack.c.l.b16 %v1013
      %v5733 = vunpack.c.h.b16 %v1013
      %v5734 = vunpack.c.l.b16 %v1014
      %v5735 = vunpack.c.h.b16 %v1014
      %v5736 = vunpack.c.l.b16 %v1015
      %v5737 = vunpack.c.h.b16 %v1015
      %v5738 = vunpack.c.l.b16 %v1016
      %v5739 = vunpack.c.h.b16 %v1016
      %v5740 = vunpack.c.l.b16 %v1017
      %v5741 = vunpack.c.h.b16 %v1017
      %v5742 = vunpack.c.l.b16 %v1018
      %v5743 = vunpack.c.h.b16 %v1018
      %v5744 = vunpack.c.l.b16 %v1019
      %v5745 = vunpack.c.h.b16 %v1019
      %v5746 = vunpack.c.l.b16 %v1020
      %v5747 = vunpack.c.h.b16 %v1020
      %v5748 = vunpack.c.l.b16 %v1021
      %v5749 = vunpack.c.h.b16 %v1021
      %v5750 = vunpack.c.l.b16 %v1022
      %v5751 = vunpack.c.h.b16 %v1022
      %v5752 = vunpack.c.l.b16 %v1023
      %v5753 = vunpack.c.h.b16 %v1023
      %v5754 = vunpack.c.l.b16 %v1024
      %v5755 = vunpack.c.h.b16 %v1024
      %v5756 = vunpack.c.l.b16 %v1025
      %v5757 = vunpack.c.h.b16 %v1025
      %v5758 = vunpack.c.l.b16 %v1026
      %v5759 = vunpack.c.h.b16 %v1026
      %v5760 = vunpack.c.l.b16 %v1027
      %v5761 = vunpack.c.h.b16 %v1027
      %v5762 = vunpack.c.l.b16 %v1028
      %v5763 = vunpack.c.h.b16 %v1028
      %v5764 = vunpack.c.l.b16 %v1029
      %v5765 = vunpack.c.h.b16 %v1029
      %v5766 = vunpack.c.l.b16 %v1030
      %v5767 = vunpack.c.h.b16 %v1030
      %v5768 = vunpack.c.l.b16 %v1031
      %v5769 = vunpack.c.h.b16 %v1031
      %v5770 = vunpack.c.l.b16 %v1032
      %v5771 = vunpack.c.h.b16 %v1032
      %v5772 = vunpack.c.l.b16 %v1033
      %v5773 = vunpack.c.h.b16 %v1033
      %v5774 = vunpack.c.l.b16 %v1034
      %v5775 = vunpack.c.h.b16 %v1034
      %v5776 = vunpack.c.l.b16 %v1035
      %v5777 = vunpack.c.h.b16 %v1035
      %v5778 = vunpack.c.l.b16 %v1036
      %v5779 = vunpack.c.h.b16 %v1036
      %v5780 = vunpack.c.l.b16 %v1037
      %v5781 = vunpack.c.h.b16 %v1037
      %v5782 = vunpack.c.l.b16 %v1038
      %v5783 = vunpack.c.h.b16 %v1038
      %v5784 = vunpack.c.l.b16 %v1039
      %v5785 = vunpack.c.h.b16 %v1039
      %v5786 = vunpack.c.l.b16 %v1040
      %v5787 = vunpack.c.h.b16 %v1040
      %v5788 = vunpack.c.l.b16 %v1041
      %v5789 = vunpack.c.h.b16 %v1041
      %v5790 = vunpack.c.l.b16 %v1042
      %v5791 = vunpack.c.h.b16 %v1042
      %v5792 = vunpack.c.l.b16 %v1043
      %v5793 = vunpack.c.h.b16 %v1043
      %v5794 = vunpack.c.l.b16 %v1044
      %v5795 = vunpack.c.h.b16 %v1044
      %v5796 = vunpack.c.l.b16 %v1045
      %v5797 = vunpack.c.h.b16 %v1045
      %v5798 = vunpack.c.l.b16 %v1046
      %v5799 = vunpack.c.h.b16 %v1046
      %v5800 = vunpack.c.l.b16 %v1047
      %v5801 = vunpack.c.h.b16 %v1047
      %v5802 = vunpack.c.l.b16 %v1048
      %v5803 = vunpack.c.h.b16 %v1048
      %v5804 = vunpack.c.l.b16 %v1049
      %v5805 = vunpack.c.h.b16 %v1049
      %v5806 = vunpack.c.l.b16 %v1050
      %v5807 = vunpack.c.h.b16 %v1050
      %v5808 = vunpack.c.l.b16 %v1051
      %v5809 = vunpack.c.h.b16 %v1051
      %v5810 = vunpack.c.l.b16 %v1052
      %v5811 = vunpack.c.h.b16 %v1052
      %v5812 = vpack.c.b16 %v5564, %v5556
      %v5813 = vpack.c.b16 %v5565, %v5557
      %v5814 = vpack.c.b16 %v5566, %v5558
      %v5815 = vpack.c.b16 %v5567, %v5559
      %v5816 = vpack.c.b16 %v5568, %v5560
      %v5817 = vpack.c.b16 %v5569, %v5561
      %v5818 = vpack.c.b16 %v5570, %v5562
      %v5819 = vpack.c.b16 %v5571, %v5563
      %v5820 = vpack.c.b16 %v5580, %v5572
      %v5821 = vpack.c.b16 %v5581, %v5573
      %v5822 = vpack.c.b16 %v5582, %v5574
      %v5823 = vpack.c.b16 %v5583, %v5575
      %v5824 = vpack.c.b16 %v5584, %v5576
      %v5825 = vpack.c.b16 %v5585, %v5577
      %v5826 = vpack.c.b16 %v5586, %v5578
      %v5827 = vpack.c.b16 %v5587, %v5579
      %v5828 = vpack.c.b16 %v5596, %v5588
      %v5829 = vpack.c.b16 %v5597, %v5589
      %v5830 = vpack.c.b16 %v5598, %v5590
      %v5831 = vpack.c.b16 %v5599, %v5591
      %v5832 = vpack.c.b16 %v5600, %v5592
      %v5833 = vpack.c.b16 %v5601, %v5593
      %v5834 = vpack.c.b16 %v5602, %v5594
      %v5835 = vpack.c.b16 %v5603, %v5595
      %v5836 = vpack.c.b16 %v5612, %v5604
      %v5837 = vpack.c.b16 %v5613, %v5605
      %v5838 = vpack.c.b16 %v5614, %v5606
      %v5839 = vpack.c.b16 %v5615, %v5607
      %v5840 = vpack.c.b16 %v5616, %v5608
      %v5841 = vpack.c.b16 %v5617, %v5609
      %v5842 = vpack.c.b16 %v5618, %v5610
      %v5843 = vpack.c.b16 %v5619, %v5611
      %v5844 = vpack.c.b16 %v5628, %v5620
      %v5845 = vpack.c.b16 %v5629, %v5621
      %v5846 = vpack.c.b16 %v5630, %v5622
      %v5847 = vpack.c.b16 %v5631, %v5623
      %v5848 = vpack.c.b16 %v5632, %v5624
      %v5849 = vpack.c.b16 %v5633, %v5625
      %v5850 = vpack.c.b16 %v5634, %v5626
      %v5851 = vpack.c.b16 %v5635, %v5627
      %v5852 = vpack.c.b16 %v5644, %v5636
      %v5853 = vpack.c.b16 %v5645, %v5637
      %v5854 = vpack.c.b16 %v5646, %v5638
      %v5855 = vpack.c.b16 %v5647, %v5639
      %v5856 = vpack.c.b16 %v5648, %v5640
      %v5857 = vpack.c.b16 %v5649, %v5641
      %v5858 = vpack.c.b16 %v5650, %v5642
      %v5859 = vpack.c.b16 %v5651, %v5643
      %v5860 = vpack.c.b16 %v5660, %v5652
      %v5861 = vpack.c.b16 %v5661, %v5653
      %v5862 = vpack.c.b16 %v5662, %v5654
      %v5863 = vpack.c.b16 %v5663, %v5655
      %v5864 = vpack.c.b16 %v5664, %v5656
      %v5865 = vpack.c.b16 %v5665, %v5657
      %v5866 = vpack.c.b16 %v5666, %v5658
      %v5867 = vpack.c.b16 %v5667, %v5659
      %v5868 = vpack.c.b16 %v5676, %v5668
      %v5869 = vpack.c.b16 %v5677, %v5669
      %v5870 = vpack.c.b16 %v5678, %v5670
      %v5871 = vpack.c.b16 %v5679, %v5671
      %v5872 = vpack.c.b16 %v5680, %v5672
      %v5873 = vpack.c.b16 %v5681, %v5673
      %v5874 = vpack.c.b16 %v5682, %v5674
      %v5875 = vpack.c.b16 %v5683, %v5675
      %v5876 = vpack.c.b16 %v5692, %v5684
      %v5877 = vpack.c.b16 %v5693, %v5685
      %v5878 = vpack.c.b16 %v5694, %v5686
      %v5879 = vpack.c.b16 %v5695, %v5687
      %v5880 = vpack.c.b16 %v5696, %v5688
      %v5881 = vpack.c.b16 %v5697, %v5689
      %v5882 = vpack.c.b16 %v5698, %v5690
      %v5883 = vpack.c.b16 %v5699, %v5691
      %v5884 = vpack.c.b16 %v5708, %v5700
      %v5885 = vpack.c.b16 %v5709, %v5701
      %v5886 = vpack.c.b16 %v5710, %v5702
      %v5887 = vpack.c.b16 %v5711, %v5703
      %v5888 = vpack.c.b16 %v5712, %v5704
      %v5889 = vpack.c.b16 %v5713, %v5705
      %v5890 = vpack.c.b16 %v5714, %v5706
      %v5891 = vpack.c.b16 %v5715, %v5707
      %v5892 = vpack.c.b16 %v5724, %v5716
      %v5893 = vpack.c.b16 %v5725, %v5717
      %v5894 = vpack.c.b16 %v5726, %v5718
      %v5895 = vpack.c.b16 %v5727, %v5719
      %v5896 = vpack.c.b16 %v5728, %v5720
      %v5897 = vpack.c.b16 %v5729, %v5721
      %v5898 = vpack.c.b16 %v5730, %v5722
      %v5899 = vpack.c.b16 %v5731, %v5723
      %v5900 = vpack.c.b16 %v5740, %v5732
      %v5901 = vpack.c.b16 %v5741, %v5733
      %v5902 = vpack.c.b16 %v5742, %v5734
      %v5903 = vpack.c.b16 %v5743, %v5735
      %v5904 = vpack.c.b16 %v5744, %v5736
      %v5905 = vpack.c.b16 %v5745, %v5737
      %v5906 = vpack.c.b16 %v5746, %v5738
      %v5907 = vpack.c.b16 %v5747, %v5739
      %v5908 = vpack.c.b16 %v5756, %v5748
      %v5909 = vpack.c.b16 %v5757, %v5749
      %v5910 = vpack.c.b16 %v5758, %v5750
      %v5911 = vpack.c.b16 %v5759, %v5751
      %v5912 = vpack.c.b16 %v5760, %v5752
      %v5913 = vpack.c.b16 %v5761, %v5753
      %v5914 = vpack.c.b16 %v5762, %v5754
      %v5915 = vpack.c.b16 %v5763, %v5755
      %v5916 = vpack.c.b16 %v5772, %v5764
      %v5917 = vpack.c.b16 %v5773, %v5765
      %v5918 = vpack.c.b16 %v5774, %v5766
      %v5919 = vpack.c.b16 %v5775, %v5767
      %v5920 = vpack.c.b16 %v5776, %v5768
      %v5921 = vpack.c.b16 %v5777, %v5769
      %v5922 = vpack.c.b16 %v5778, %v5770
      %v5923 = vpack.c.b16 %v5779, %v5771
      %v5924 = vpack.c.b16 %v5788, %v5780
      %v5925 = vpack.c.b16 %v5789, %v5781
      %v5926 = vpack.c.b16 %v5790, %v5782
      %v5927 = vpack.c.b16 %v5791, %v5783
      %v5928 = vpack.c.b16 %v5792, %v5784
      %v5929 = vpack.c.b16 %v5793, %v5785
      %v5930 = vpack.c.b16 %v5794, %v5786
      %v5931 = vpack.c.b16 %v5795, %v5787
      %v5932 = vpack.c.b16 %v5804, %v5796
      %v5933 = vpack.c.b16 %v5805, %v5797
      %v5934 = vpack.c.b16 %v5806, %v5798
      %v5935 = vpack.c.b16 %v5807, %v5799
      %v5936 = vpack.c.b16 %v5808, %v5800
      %v5937 = vpack.c.b16 %v5809, %v5801
      %v5938 = vpack.c.b16 %v5810, %v5802
      %v5939 = vpack.c.b16 %v5811, %v5803
      %6068 = vmatprep.subr.bf16.mxu0 %v5813
      %6069 = vmatpush1.bf16.msra.mxu0 %v5812
      %6070 = vmatprep.subr.bf16.mxu0 %v5821
      %6071 = vmatpush1.bf16.msra.mxu0 %v5820
      %6072 = vmatprep.subr.bf16.mxu0 %v5829
      %6073 = vmatpush1.bf16.msra.mxu0 %v5828
      %6074 = vmatprep.subr.bf16.mxu0 %v5837
      %6075 = vmatpush1.bf16.msra.mxu0 %v5836
      %6076 = vmatprep.subr.bf16.mxu0 %v5845
      %6077 = vmatpush1.bf16.msra.mxu0 %v5844
      %6078 = vmatprep.subr.bf16.mxu0 %v5853
      %6079 = vmatpush1.bf16.msra.mxu0 %v5852
      %6080 = vmatprep.subr.bf16.mxu0 %v5861
      %6081 = vmatpush1.bf16.msra.mxu0 %v5860
      %6082 = vmatprep.subr.bf16.mxu0 %v5869
      %6083 = vmatpush1.bf16.msra.mxu0 %v5868
      %6084 = vmatprep.subr.bf16.mxu0 %v5877
      %6085 = vmatpush1.bf16.msra.mxu0 %v5876
      %6086 = vmatprep.subr.bf16.mxu0 %v5885
      %6087 = vmatpush1.bf16.msra.mxu0 %v5884
      %6088 = vmatprep.subr.bf16.mxu0 %v5893
      %6089 = vmatpush1.bf16.msra.mxu0 %v5892
      %6090 = vmatprep.subr.bf16.mxu0 %v5901
      %6091 = vmatpush1.bf16.msra.mxu0 %v5900
      %6092 = vmatprep.subr.bf16.mxu0 %v5909
      %6093 = vmatpush1.bf16.msra.mxu0 %v5908
      %6094 = vmatprep.subr.bf16.mxu0 %v5917
      %6095 = vmatpush1.bf16.msra.mxu0 %v5916
      %6096 = vmatprep.subr.bf16.mxu0 %v5925
      %6097 = vmatpush1.bf16.msra.mxu0 %v5924
      %6098 = vmatprep.subr.bf16.mxu0 %v5933
      %6099 = vmatpush1.bf16.msra.mxu0 %v5932
      %6100 = vmatprep.mubr.bf16.mxu0 %v5425
      %6101 = vmatmul.mubr.bf16.gmra.mrb[0].mxu0 %v5421
      %v6102 = vpop.f32.mrb[0].mxu0
      %v6103 = vadd.f32 0.0, %v6102
      %v6104 = vpop.f32.mrb[0].mxu0
      %v6105 = vadd.f32 0.0, %v6104
      %v6106 = vpop.f32.mrb[0].mxu0
      %v6107 = vpop.f32.mrb[0].mxu0
      %6108 = vdwg.mxu0
      %6109 = vmatprep.subr.bf16.mxu0 %v5815
      %6110 = vmatpush1.bf16.msra.mxu0 %v5814
      %6111 = vmatprep.subr.bf16.mxu0 %v5823
      %6112 = vmatpush1.bf16.msra.mxu0 %v5822
      %6113 = vmatprep.subr.bf16.mxu0 %v5831
      %6114 = vmatpush1.bf16.msra.mxu0 %v5830
      %6115 = vmatprep.subr.bf16.mxu0 %v5839
      %6116 = vmatpush1.bf16.msra.mxu0 %v5838
      %6117 = vmatprep.subr.bf16.mxu0 %v5847
      %6118 = vmatpush1.bf16.msra.mxu0 %v5846
      %6119 = vmatprep.subr.bf16.mxu0 %v5855
      %6120 = vmatpush1.bf16.msra.mxu0 %v5854
      %6121 = vmatprep.subr.bf16.mxu0 %v5863
      %6122 = vmatpush1.bf16.msra.mxu0 %v5862
      %6123 = vmatprep.subr.bf16.mxu0 %v5871
      %6124 = vmatpush1.bf16.msra.mxu0 %v5870
      %6125 = vmatprep.subr.bf16.mxu0 %v5879
      %6126 = vmatpush1.bf16.msra.mxu0 %v5878
      %6127 = vmatprep.subr.bf16.mxu0 %v5887
      %6128 = vmatpush1.bf16.msra.mxu0 %v5886
      %6129 = vmatprep.subr.bf16.mxu0 %v5895
      %6130 = vmatpush1.bf16.msra.mxu0 %v5894
      %6131 = vmatprep.subr.bf16.mxu0 %v5903
      %6132 = vmatpush1.bf16.msra.mxu0 %v5902
      %6133 = vmatprep.subr.bf16.mxu0 %v5911
      %6134 = vmatpush1.bf16.msra.mxu0 %v5910
      %6135 = vmatprep.subr.bf16.mxu0 %v5919
      %6136 = vmatpush1.bf16.msra.mxu0 %v5918
      %6137 = vmatprep.subr.bf16.mxu0 %v5927
      %6138 = vmatpush1.bf16.msra.mxu0 %v5926
      %6139 = vmatprep.subr.bf16.mxu0 %v5935
      %6140 = vmatpush1.bf16.msra.mxu0 %v5934
      %6141 = vmatprep.mubr.bf16.mxu0 %v5425
      %6142 = vmatmul.mubr.bf16.gmra.mrb[0].mxu0 %v5421
      %v6143 = vpop.f32.mrb[0].mxu0
      %v6144 = vadd.f32 0.0, %v6143
      %v6145 = vpop.f32.mrb[0].mxu0
      %v6146 = vadd.f32 0.0, %v6145
      %v6147 = vpop.f32.mrb[0].mxu0
      %v6148 = vpop.f32.mrb[0].mxu0
      %6149 = vdwg.mxu0
      %6150 = vmatprep.subr.bf16.mxu0 %v5817
      %6151 = vmatpush1.bf16.msra.mxu0 %v5816
      %6152 = vmatprep.subr.bf16.mxu0 %v5825
      %6153 = vmatpush1.bf16.msra.mxu0 %v5824
      %6154 = vmatprep.subr.bf16.mxu0 %v5833
      %6155 = vmatpush1.bf16.msra.mxu0 %v5832
      %6156 = vmatprep.subr.bf16.mxu0 %v5841
      %6157 = vmatpush1.bf16.msra.mxu0 %v5840
      %6158 = vmatprep.subr.bf16.mxu0 %v5849
      %6159 = vmatpush1.bf16.msra.mxu0 %v5848
      %6160 = vmatprep.subr.bf16.mxu0 %v5857
      %6161 = vmatpush1.bf16.msra.mxu0 %v5856
      %6162 = vmatprep.subr.bf16.mxu0 %v5865
      %6163 = vmatpush1.bf16.msra.mxu0 %v5864
      %6164 = vmatprep.subr.bf16.mxu0 %v5873
      %6165 = vmatpush1.bf16.msra.mxu0 %v5872
      %6166 = vmatprep.subr.bf16.mxu0 %v5881
      %6167 = vmatpush1.bf16.msra.mxu0 %v5880
      %6168 = vmatprep.subr.bf16.mxu0 %v5889
      %6169 = vmatpush1.bf16.msra.mxu0 %v5888
      %6170 = vmatprep.subr.bf16.mxu0 %v5897
      %6171 = vmatpush1.bf16.msra.mxu0 %v5896
      %6172 = vmatprep.subr.bf16.mxu0 %v5905
      %6173 = vmatpush1.bf16.msra.mxu0 %v5904
      %6174 = vmatprep.subr.bf16.mxu0 %v5913
      %6175 = vmatpush1.bf16.msra.mxu0 %v5912
      %6176 = vmatprep.subr.bf16.mxu0 %v5921
      %6177 = vmatpush1.bf16.msra.mxu0 %v5920
      %6178 = vmatprep.subr.bf16.mxu0 %v5929
      %6179 = vmatpush1.bf16.msra.mxu0 %v5928
      %6180 = vmatprep.subr.bf16.mxu0 %v5937
      %6181 = vmatpush1.bf16.msra.mxu0 %v5936
      %6182 = vmatprep.mubr.bf16.mxu0 %v5425
      %6183 = vmatmul.mubr.bf16.gmra.mrb[0].mxu0 %v5421
      %v6184 = vpop.f32.mrb[0].mxu0
      %v6185 = vadd.f32 0.0, %v6184
      %v6186 = vpop.f32.mrb[0].mxu0
      %v6187 = vadd.f32 0.0, %v6186
      %v6188 = vpop.f32.mrb[0].mxu0
      %v6189 = vpop.f32.mrb[0].mxu0
      %6190 = vdwg.mxu0
      %6191 = vmatprep.subr.bf16.mxu0 %v5819
      %6192 = vmatpush1.bf16.msra.mxu0 %v5818
      %6193 = vmatprep.subr.bf16.mxu0 %v5827
      %6194 = vmatpush1.bf16.msra.mxu0 %v5826
      %6195 = vmatprep.subr.bf16.mxu0 %v5835
      %6196 = vmatpush1.bf16.msra.mxu0 %v5834
      %6197 = vmatprep.subr.bf16.mxu0 %v5843
      %6198 = vmatpush1.bf16.msra.mxu0 %v5842
      %6199 = vmatprep.subr.bf16.mxu0 %v5851
      %6200 = vmatpush1.bf16.msra.mxu0 %v5850
      %6201 = vmatprep.subr.bf16.mxu0 %v5859
      %6202 = vmatpush1.bf16.msra.mxu0 %v5858
      %6203 = vmatprep.subr.bf16.mxu0 %v5867
      %6204 = vmatpush1.bf16.msra.mxu0 %v5866
      %6205 = vmatprep.subr.bf16.mxu0 %v5875
      %6206 = vmatpush1.bf16.msra.mxu0 %v5874
      %6207 = vmatprep.subr.bf16.mxu0 %v5883
      %6208 = vmatpush1.bf16.msra.mxu0 %v5882
      %6209 = vmatprep.subr.bf16.mxu0 %v5891
      %6210 = vmatpush1.bf16.msra.mxu0 %v5890
      %6211 = vmatprep.subr.bf16.mxu0 %v5899
      %6212 = vmatpush1.bf16.msra.mxu0 %v5898
      %6213 = vmatprep.subr.bf16.mxu0 %v5907
      %6214 = vmatpush1.bf16.msra.mxu0 %v5906
      %6215 = vmatprep.subr.bf16.mxu0 %v5915
      %6216 = vmatpush1.bf16.msra.mxu0 %v5914
      %6217 = vmatprep.subr.bf16.mxu0 %v5923
      %6218 = vmatpush1.bf16.msra.mxu0 %v5922
      %6219 = vmatprep.subr.bf16.mxu0 %v5931
      %6220 = vmatpush1.bf16.msra.mxu0 %v5930
      %6221 = vmatprep.subr.bf16.mxu0 %v5939
      %6222 = vmatpush1.bf16.msra.mxu0 %v5938
      %6223 = vmatprep.mubr.bf16.mxu0 %v5425
      %6224 = vmatmul.mubr.bf16.gmra.mrb[0].mxu0 %v5421
      %v6225 = vpop.f32.mrb[0].mxu0
      %v6226 = vadd.f32 0.0, %v6225
      %v6227 = vpop.f32.mrb[0].mxu0
      %v6228 = vadd.f32 0.0, %v6227
      %v6229 = vpop.f32.mrb[0].mxu0
      %v6230 = vpop.f32.mrb[0].mxu0
      %6231 = vdwg.mxu0
      %v6232 = vpack.i.b16 %v1340, %v1340
      %v6233 = vlaneseq
      %v6234 = vshrl.u32 %v6233, 7
      %v6235 = vsub.s32 0, %v6234
      %v6236 = vrot.slane %v6232, %v6235
      %v6237 = vlaneseq
      %v6238 = vshrl.u32 %v6237, 7
      %v6239 = vsub.s32 1, %v6238
      %v6240 = vrot.slane %v6232, %v6239
      %v6371 = vunpack.c.l.b16 %v1053
      %v6372 = vunpack.c.h.b16 %v1053
      %v6373 = vunpack.c.l.b16 %v1054
      %v6374 = vunpack.c.h.b16 %v1054
      %v6375 = vunpack.c.l.b16 %v1055
      %v6376 = vunpack.c.h.b16 %v1055
      %v6377 = vunpack.c.l.b16 %v1056
      %v6378 = vunpack.c.h.b16 %v1056
      %v6379 = vunpack.c.l.b16 %v1057
      %v6380 = vunpack.c.h.b16 %v1057
      %v6381 = vunpack.c.l.b16 %v1058
      %v6382 = vunpack.c.h.b16 %v1058
      %v6383 = vunpack.c.l.b16 %v1059
      %v6384 = vunpack.c.h.b16 %v1059
      %v6385 = vunpack.c.l.b16 %v1060
      %v6386 = vunpack.c.h.b16 %v1060
      %v6387 = vunpack.c.l.b16 %v1061
      %v6388 = vunpack.c.h.b16 %v1061
      %v6389 = vunpack.c.l.b16 %v1062
      %v6390 = vunpack.c.h.b16 %v1062
      %v6391 = vunpack.c.l.b16 %v1063
      %v6392 = vunpack.c.h.b16 %v1063
      %v6393 = vunpack.c.l.b16 %v1064
      %v6394 = vunpack.c.h.b16 %v1064
      %v6395 = vunpack.c.l.b16 %v1065
      %v6396 = vunpack.c.h.b16 %v1065
      %v6397 = vunpack.c.l.b16 %v1066
      %v6398 = vunpack.c.h.b16 %v1066
      %v6399 = vunpack.c.l.b16 %v1067
      %v6400 = vunpack.c.h.b16 %v1067
      %v6401 = vunpack.c.l.b16 %v1068
      %v6402 = vunpack.c.h.b16 %v1068
      %v6403 = vunpack.c.l.b16 %v1069
      %v6404 = vunpack.c.h.b16 %v1069
      %v6405 = vunpack.c.l.b16 %v1070
      %v6406 = vunpack.c.h.b16 %v1070
      %v6407 = vunpack.c.l.b16 %v1071
      %v6408 = vunpack.c.h.b16 %v1071
      %v6409 = vunpack.c.l.b16 %v1072
      %v6410 = vunpack.c.h.b16 %v1072
      %v6411 = vunpack.c.l.b16 %v1073
      %v6412 = vunpack.c.h.b16 %v1073
      %v6413 = vunpack.c.l.b16 %v1074
      %v6414 = vunpack.c.h.b16 %v1074
      %v6415 = vunpack.c.l.b16 %v1075
      %v6416 = vunpack.c.h.b16 %v1075
      %v6417 = vunpack.c.l.b16 %v1076
      %v6418 = vunpack.c.h.b16 %v1076
      %v6419 = vunpack.c.l.b16 %v1077
      %v6420 = vunpack.c.h.b16 %v1077
      %v6421 = vunpack.c.l.b16 %v1078
      %v6422 = vunpack.c.h.b16 %v1078
      %v6423 = vunpack.c.l.b16 %v1079
      %v6424 = vunpack.c.h.b16 %v1079
      %v6425 = vunpack.c.l.b16 %v1080
      %v6426 = vunpack.c.h.b16 %v1080
      %v6427 = vunpack.c.l.b16 %v1081
      %v6428 = vunpack.c.h.b16 %v1081
      %v6429 = vunpack.c.l.b16 %v1082
      %v6430 = vunpack.c.h.b16 %v1082
      %v6431 = vunpack.c.l.b16 %v1083
      %v6432 = vunpack.c.h.b16 %v1083
      %v6433 = vunpack.c.l.b16 %v1084
      %v6434 = vunpack.c.h.b16 %v1084
      %v6435 = vunpack.c.l.b16 %v1085
      %v6436 = vunpack.c.h.b16 %v1085
      %v6437 = vunpack.c.l.b16 %v1086
      %v6438 = vunpack.c.h.b16 %v1086
      %v6439 = vunpack.c.l.b16 %v1087
      %v6440 = vunpack.c.h.b16 %v1087
      %v6441 = vunpack.c.l.b16 %v1088
      %v6442 = vunpack.c.h.b16 %v1088
      %v6443 = vunpack.c.l.b16 %v1089
      %v6444 = vunpack.c.h.b16 %v1089
      %v6445 = vunpack.c.l.b16 %v1090
      %v6446 = vunpack.c.h.b16 %v1090
      %v6447 = vunpack.c.l.b16 %v1091
      %v6448 = vunpack.c.h.b16 %v1091
      %v6449 = vunpack.c.l.b16 %v1092
      %v6450 = vunpack.c.h.b16 %v1092
      %v6451 = vunpack.c.l.b16 %v1093
      %v6452 = vunpack.c.h.b16 %v1093
      %v6453 = vunpack.c.l.b16 %v1094
      %v6454 = vunpack.c.h.b16 %v1094
      %v6455 = vunpack.c.l.b16 %v1095
      %v6456 = vunpack.c.h.b16 %v1095
      %v6457 = vunpack.c.l.b16 %v1096
      %v6458 = vunpack.c.h.b16 %v1096
      %v6459 = vunpack.c.l.b16 %v1097
      %v6460 = vunpack.c.h.b16 %v1097
      %v6461 = vunpack.c.l.b16 %v1098
      %v6462 = vunpack.c.h.b16 %v1098
      %v6463 = vunpack.c.l.b16 %v1099
      %v6464 = vunpack.c.h.b16 %v1099
      %v6465 = vunpack.c.l.b16 %v1100
      %v6466 = vunpack.c.h.b16 %v1100
      %v6467 = vunpack.c.l.b16 %v1101
      %v6468 = vunpack.c.h.b16 %v1101
      %v6469 = vunpack.c.l.b16 %v1102
      %v6470 = vunpack.c.h.b16 %v1102
      %v6471 = vunpack.c.l.b16 %v1103
      %v6472 = vunpack.c.h.b16 %v1103
      %v6473 = vunpack.c.l.b16 %v1104
      %v6474 = vunpack.c.h.b16 %v1104
      %v6475 = vunpack.c.l.b16 %v1105
      %v6476 = vunpack.c.h.b16 %v1105
      %v6477 = vunpack.c.l.b16 %v1106
      %v6478 = vunpack.c.h.b16 %v1106
      %v6479 = vunpack.c.l.b16 %v1107
      %v6480 = vunpack.c.h.b16 %v1107
      %v6481 = vunpack.c.l.b16 %v1108
      %v6482 = vunpack.c.h.b16 %v1108
      %v6483 = vunpack.c.l.b16 %v1109
      %v6484 = vunpack.c.h.b16 %v1109
      %v6485 = vunpack.c.l.b16 %v1110
      %v6486 = vunpack.c.h.b16 %v1110
      %v6487 = vunpack.c.l.b16 %v1111
      %v6488 = vunpack.c.h.b16 %v1111
      %v6489 = vunpack.c.l.b16 %v1112
      %v6490 = vunpack.c.h.b16 %v1112
      %v6491 = vunpack.c.l.b16 %v1113
      %v6492 = vunpack.c.h.b16 %v1113
      %v6493 = vunpack.c.l.b16 %v1114
      %v6494 = vunpack.c.h.b16 %v1114
      %v6495 = vunpack.c.l.b16 %v1115
      %v6496 = vunpack.c.h.b16 %v1115
      %v6497 = vunpack.c.l.b16 %v1116
      %v6498 = vunpack.c.h.b16 %v1116
      %v6499 = vunpack.c.l.b16 %v1117
      %v6500 = vunpack.c.h.b16 %v1117
      %v6501 = vunpack.c.l.b16 %v1118
      %v6502 = vunpack.c.h.b16 %v1118
      %v6503 = vunpack.c.l.b16 %v1119
      %v6504 = vunpack.c.h.b16 %v1119
      %v6505 = vunpack.c.l.b16 %v1120
      %v6506 = vunpack.c.h.b16 %v1120
      %v6507 = vunpack.c.l.b16 %v1121
      %v6508 = vunpack.c.h.b16 %v1121
      %v6509 = vunpack.c.l.b16 %v1122
      %v6510 = vunpack.c.h.b16 %v1122
      %v6511 = vunpack.c.l.b16 %v1123
      %v6512 = vunpack.c.h.b16 %v1123
      %v6513 = vunpack.c.l.b16 %v1124
      %v6514 = vunpack.c.h.b16 %v1124
      %v6515 = vunpack.c.l.b16 %v1125
      %v6516 = vunpack.c.h.b16 %v1125
      %v6517 = vunpack.c.l.b16 %v1126
      %v6518 = vunpack.c.h.b16 %v1126
      %v6519 = vunpack.c.l.b16 %v1127
      %v6520 = vunpack.c.h.b16 %v1127
      %v6521 = vunpack.c.l.b16 %v1128
      %v6522 = vunpack.c.h.b16 %v1128
      %v6523 = vunpack.c.l.b16 %v1129
      %v6524 = vunpack.c.h.b16 %v1129
      %v6525 = vunpack.c.l.b16 %v1130
      %v6526 = vunpack.c.h.b16 %v1130
      %v6527 = vunpack.c.l.b16 %v1131
      %v6528 = vunpack.c.h.b16 %v1131
      %v6529 = vunpack.c.l.b16 %v1132
      %v6530 = vunpack.c.h.b16 %v1132
      %v6531 = vunpack.c.l.b16 %v1133
      %v6532 = vunpack.c.h.b16 %v1133
      %v6533 = vunpack.c.l.b16 %v1134
      %v6534 = vunpack.c.h.b16 %v1134
      %v6535 = vunpack.c.l.b16 %v1135
      %v6536 = vunpack.c.h.b16 %v1135
      %v6537 = vunpack.c.l.b16 %v1136
      %v6538 = vunpack.c.h.b16 %v1136
      %v6539 = vunpack.c.l.b16 %v1137
      %v6540 = vunpack.c.h.b16 %v1137
      %v6541 = vunpack.c.l.b16 %v1138
      %v6542 = vunpack.c.h.b16 %v1138
      %v6543 = vunpack.c.l.b16 %v1139
      %v6544 = vunpack.c.h.b16 %v1139
      %v6545 = vunpack.c.l.b16 %v1140
      %v6546 = vunpack.c.h.b16 %v1140
      %v6547 = vunpack.c.l.b16 %v1141
      %v6548 = vunpack.c.h.b16 %v1141
      %v6549 = vunpack.c.l.b16 %v1142
      %v6550 = vunpack.c.h.b16 %v1142
      %v6551 = vunpack.c.l.b16 %v1143
      %v6552 = vunpack.c.h.b16 %v1143
      %v6553 = vunpack.c.l.b16 %v1144
      %v6554 = vunpack.c.h.b16 %v1144
      %v6555 = vunpack.c.l.b16 %v1145
      %v6556 = vunpack.c.h.b16 %v1145
      %v6557 = vunpack.c.l.b16 %v1146
      %v6558 = vunpack.c.h.b16 %v1146
      %v6559 = vunpack.c.l.b16 %v1147
      %v6560 = vunpack.c.h.b16 %v1147
      %v6561 = vunpack.c.l.b16 %v1148
      %v6562 = vunpack.c.h.b16 %v1148
      %v6563 = vunpack.c.l.b16 %v1149
      %v6564 = vunpack.c.h.b16 %v1149
      %v6565 = vunpack.c.l.b16 %v1150
      %v6566 = vunpack.c.h.b16 %v1150
      %v6567 = vunpack.c.l.b16 %v1151
      %v6568 = vunpack.c.h.b16 %v1151
      %v6569 = vunpack.c.l.b16 %v1152
      %v6570 = vunpack.c.h.b16 %v1152
      %v6571 = vunpack.c.l.b16 %v1153
      %v6572 = vunpack.c.h.b16 %v1153
      %v6573 = vunpack.c.l.b16 %v1154
      %v6574 = vunpack.c.h.b16 %v1154
      %v6575 = vunpack.c.l.b16 %v1155
      %v6576 = vunpack.c.h.b16 %v1155
      %v6577 = vunpack.c.l.b16 %v1156
      %v6578 = vunpack.c.h.b16 %v1156
      %v6579 = vunpack.c.l.b16 %v1157
      %v6580 = vunpack.c.h.b16 %v1157
      %v6581 = vunpack.c.l.b16 %v1158
      %v6582 = vunpack.c.h.b16 %v1158
      %v6583 = vunpack.c.l.b16 %v1159
      %v6584 = vunpack.c.h.b16 %v1159
      %v6585 = vunpack.c.l.b16 %v1160
      %v6586 = vunpack.c.h.b16 %v1160
      %v6587 = vunpack.c.l.b16 %v1161
      %v6588 = vunpack.c.h.b16 %v1161
      %v6589 = vunpack.c.l.b16 %v1162
      %v6590 = vunpack.c.h.b16 %v1162
      %v6591 = vunpack.c.l.b16 %v1163
      %v6592 = vunpack.c.h.b16 %v1163
      %v6593 = vunpack.c.l.b16 %v1164
      %v6594 = vunpack.c.h.b16 %v1164
      %v6595 = vunpack.c.l.b16 %v1165
      %v6596 = vunpack.c.h.b16 %v1165
      %v6597 = vunpack.c.l.b16 %v1166
      %v6598 = vunpack.c.h.b16 %v1166
      %v6599 = vunpack.c.l.b16 %v1167
      %v6600 = vunpack.c.h.b16 %v1167
      %v6601 = vunpack.c.l.b16 %v1168
      %v6602 = vunpack.c.h.b16 %v1168
      %v6603 = vunpack.c.l.b16 %v1169
      %v6604 = vunpack.c.h.b16 %v1169
      %v6605 = vunpack.c.l.b16 %v1170
      %v6606 = vunpack.c.h.b16 %v1170
      %v6607 = vunpack.c.l.b16 %v1171
      %v6608 = vunpack.c.h.b16 %v1171
      %v6609 = vunpack.c.l.b16 %v1172
      %v6610 = vunpack.c.h.b16 %v1172
      %v6611 = vunpack.c.l.b16 %v1173
      %v6612 = vunpack.c.h.b16 %v1173
      %v6613 = vunpack.c.l.b16 %v1174
      %v6614 = vunpack.c.h.b16 %v1174
      %v6615 = vunpack.c.l.b16 %v1175
      %v6616 = vunpack.c.h.b16 %v1175
      %v6617 = vunpack.c.l.b16 %v1176
      %v6618 = vunpack.c.h.b16 %v1176
      %v6619 = vunpack.c.l.b16 %v1177
      %v6620 = vunpack.c.h.b16 %v1177
      %v6621 = vunpack.c.l.b16 %v1178
      %v6622 = vunpack.c.h.b16 %v1178
      %v6623 = vunpack.c.l.b16 %v1179
      %v6624 = vunpack.c.h.b16 %v1179
      %v6625 = vunpack.c.l.b16 %v1180
      %v6626 = vunpack.c.h.b16 %v1180
      %v6627 = vpack.c.b16 %v6379, %v6371
      %v6628 = vpack.c.b16 %v6380, %v6372
      %v6629 = vpack.c.b16 %v6381, %v6373
      %v6630 = vpack.c.b16 %v6382, %v6374
      %v6631 = vpack.c.b16 %v6383, %v6375
      %v6632 = vpack.c.b16 %v6384, %v6376
      %v6633 = vpack.c.b16 %v6385, %v6377
      %v6634 = vpack.c.b16 %v6386, %v6378
      %v6635 = vpack.c.b16 %v6395, %v6387
      %v6636 = vpack.c.b16 %v6396, %v6388
      %v6637 = vpack.c.b16 %v6397, %v6389
      %v6638 = vpack.c.b16 %v6398, %v6390
      %v6639 = vpack.c.b16 %v6399, %v6391
      %v6640 = vpack.c.b16 %v6400, %v6392
      %v6641 = vpack.c.b16 %v6401, %v6393
      %v6642 = vpack.c.b16 %v6402, %v6394
      %v6643 = vpack.c.b16 %v6411, %v6403
      %v6644 = vpack.c.b16 %v6412, %v6404
      %v6645 = vpack.c.b16 %v6413, %v6405
      %v6646 = vpack.c.b16 %v6414, %v6406
      %v6647 = vpack.c.b16 %v6415, %v6407
      %v6648 = vpack.c.b16 %v6416, %v6408
      %v6649 = vpack.c.b16 %v6417, %v6409
      %v6650 = vpack.c.b16 %v6418, %v6410
      %v6651 = vpack.c.b16 %v6427, %v6419
      %v6652 = vpack.c.b16 %v6428, %v6420
      %v6653 = vpack.c.b16 %v6429, %v6421
      %v6654 = vpack.c.b16 %v6430, %v6422
      %v6655 = vpack.c.b16 %v6431, %v6423
      %v6656 = vpack.c.b16 %v6432, %v6424
      %v6657 = vpack.c.b16 %v6433, %v6425
      %v6658 = vpack.c.b16 %v6434, %v6426
      %v6659 = vpack.c.b16 %v6443, %v6435
      %v6660 = vpack.c.b16 %v6444, %v6436
      %v6661 = vpack.c.b16 %v6445, %v6437
      %v6662 = vpack.c.b16 %v6446, %v6438
      %v6663 = vpack.c.b16 %v6447, %v6439
      %v6664 = vpack.c.b16 %v6448, %v6440
      %v6665 = vpack.c.b16 %v6449, %v6441
      %v6666 = vpack.c.b16 %v6450, %v6442
      %v6667 = vpack.c.b16 %v6459, %v6451
      %v6668 = vpack.c.b16 %v6460, %v6452
      %v6669 = vpack.c.b16 %v6461, %v6453
      %v6670 = vpack.c.b16 %v6462, %v6454
      %v6671 = vpack.c.b16 %v6463, %v6455
      %v6672 = vpack.c.b16 %v6464, %v6456
      %v6673 = vpack.c.b16 %v6465, %v6457
      %v6674 = vpack.c.b16 %v6466, %v6458
      %v6675 = vpack.c.b16 %v6475, %v6467
      %v6676 = vpack.c.b16 %v6476, %v6468
      %v6677 = vpack.c.b16 %v6477, %v6469
      %v6678 = vpack.c.b16 %v6478, %v6470
      %v6679 = vpack.c.b16 %v6479, %v6471
      %v6680 = vpack.c.b16 %v6480, %v6472
      %v6681 = vpack.c.b16 %v6481, %v6473
      %v6682 = vpack.c.b16 %v6482, %v6474
      %v6683 = vpack.c.b16 %v6491, %v6483
      %v6684 = vpack.c.b16 %v6492, %v6484
      %v6685 = vpack.c.b16 %v6493, %v6485
      %v6686 = vpack.c.b16 %v6494, %v6486
      %v6687 = vpack.c.b16 %v6495, %v6487
      %v6688 = vpack.c.b16 %v6496, %v6488
      %v6689 = vpack.c.b16 %v6497, %v6489
      %v6690 = vpack.c.b16 %v6498, %v6490
      %v6691 = vpack.c.b16 %v6507, %v6499
      %v6692 = vpack.c.b16 %v6508, %v6500
      %v6693 = vpack.c.b16 %v6509, %v6501
      %v6694 = vpack.c.b16 %v6510, %v6502
      %v6695 = vpack.c.b16 %v6511, %v6503
      %v6696 = vpack.c.b16 %v6512, %v6504
      %v6697 = vpack.c.b16 %v6513, %v6505
      %v6698 = vpack.c.b16 %v6514, %v6506
      %v6699 = vpack.c.b16 %v6523, %v6515
      %v6700 = vpack.c.b16 %v6524, %v6516
      %v6701 = vpack.c.b16 %v6525, %v6517
      %v6702 = vpack.c.b16 %v6526, %v6518
      %v6703 = vpack.c.b16 %v6527, %v6519
      %v6704 = vpack.c.b16 %v6528, %v6520
      %v6705 = vpack.c.b16 %v6529, %v6521
      %v6706 = vpack.c.b16 %v6530, %v6522
      %v6707 = vpack.c.b16 %v6539, %v6531
      %v6708 = vpack.c.b16 %v6540, %v6532
      %v6709 = vpack.c.b16 %v6541, %v6533
      %v6710 = vpack.c.b16 %v6542, %v6534
      %v6711 = vpack.c.b16 %v6543, %v6535
      %v6712 = vpack.c.b16 %v6544, %v6536
      %v6713 = vpack.c.b16 %v6545, %v6537
      %v6714 = vpack.c.b16 %v6546, %v6538
      %v6715 = vpack.c.b16 %v6555, %v6547
      %v6716 = vpack.c.b16 %v6556, %v6548
      %v6717 = vpack.c.b16 %v6557, %v6549
      %v6718 = vpack.c.b16 %v6558, %v6550
      %v6719 = vpack.c.b16 %v6559, %v6551
      %v6720 = vpack.c.b16 %v6560, %v6552
      %v6721 = vpack.c.b16 %v6561, %v6553
      %v6722 = vpack.c.b16 %v6562, %v6554
      %v6723 = vpack.c.b16 %v6571, %v6563
      %v6724 = vpack.c.b16 %v6572, %v6564
      %v6725 = vpack.c.b16 %v6573, %v6565
      %v6726 = vpack.c.b16 %v6574, %v6566
      %v6727 = vpack.c.b16 %v6575, %v6567
      %v6728 = vpack.c.b16 %v6576, %v6568
      %v6729 = vpack.c.b16 %v6577, %v6569
      %v6730 = vpack.c.b16 %v6578, %v6570
      %v6731 = vpack.c.b16 %v6587, %v6579
      %v6732 = vpack.c.b16 %v6588, %v6580
      %v6733 = vpack.c.b16 %v6589, %v6581
      %v6734 = vpack.c.b16 %v6590, %v6582
      %v6735 = vpack.c.b16 %v6591, %v6583
      %v6736 = vpack.c.b16 %v6592, %v6584
      %v6737 = vpack.c.b16 %v6593, %v6585
      %v6738 = vpack.c.b16 %v6594, %v6586
      %v6739 = vpack.c.b16 %v6603, %v6595
      %v6740 = vpack.c.b16 %v6604, %v6596
      %v6741 = vpack.c.b16 %v6605, %v6597
      %v6742 = vpack.c.b16 %v6606, %v6598
      %v6743 = vpack.c.b16 %v6607, %v6599
      %v6744 = vpack.c.b16 %v6608, %v6600
      %v6745 = vpack.c.b16 %v6609, %v6601
      %v6746 = vpack.c.b16 %v6610, %v6602
      %v6747 = vpack.c.b16 %v6619, %v6611
      %v6748 = vpack.c.b16 %v6620, %v6612
      %v6749 = vpack.c.b16 %v6621, %v6613
      %v6750 = vpack.c.b16 %v6622, %v6614
      %v6751 = vpack.c.b16 %v6623, %v6615
      %v6752 = vpack.c.b16 %v6624, %v6616
      %v6753 = vpack.c.b16 %v6625, %v6617
      %v6754 = vpack.c.b16 %v6626, %v6618
      %6883 = vmatprep.subr.bf16.mxu0 %v6628
      %6884 = vmatpush1.bf16.msra.mxu0 %v6627
      %6885 = vmatprep.subr.bf16.mxu0 %v6636
      %6886 = vmatpush1.bf16.msra.mxu0 %v6635
      %6887 = vmatprep.subr.bf16.mxu0 %v6644
      %6888 = vmatpush1.bf16.msra.mxu0 %v6643
      %6889 = vmatprep.subr.bf16.mxu0 %v6652
      %6890 = vmatpush1.bf16.msra.mxu0 %v6651
      %6891 = vmatprep.subr.bf16.mxu0 %v6660
      %6892 = vmatpush1.bf16.msra.mxu0 %v6659
      %6893 = vmatprep.subr.bf16.mxu0 %v6668
      %6894 = vmatpush1.bf16.msra.mxu0 %v6667
      %6895 = vmatprep.subr.bf16.mxu0 %v6676
      %6896 = vmatpush1.bf16.msra.mxu0 %v6675
      %6897 = vmatprep.subr.bf16.mxu0 %v6684
      %6898 = vmatpush1.bf16.msra.mxu0 %v6683
      %6899 = vmatprep.subr.bf16.mxu0 %v6692
      %6900 = vmatpush1.bf16.msra.mxu0 %v6691
      %6901 = vmatprep.subr.bf16.mxu0 %v6700
      %6902 = vmatpush1.bf16.msra.mxu0 %v6699
      %6903 = vmatprep.subr.bf16.mxu0 %v6708
      %6904 = vmatpush1.bf16.msra.mxu0 %v6707
      %6905 = vmatprep.subr.bf16.mxu0 %v6716
      %6906 = vmatpush1.bf16.msra.mxu0 %v6715
      %6907 = vmatprep.subr.bf16.mxu0 %v6724
      %6908 = vmatpush1.bf16.msra.mxu0 %v6723
      %6909 = vmatprep.subr.bf16.mxu0 %v6732
      %6910 = vmatpush1.bf16.msra.mxu0 %v6731
      %6911 = vmatprep.subr.bf16.mxu0 %v6740
      %6912 = vmatpush1.bf16.msra.mxu0 %v6739
      %6913 = vmatprep.subr.bf16.mxu0 %v6748
      %6914 = vmatpush1.bf16.msra.mxu0 %v6747
      %6915 = vmatprep.mubr.bf16.mxu0 %v6240
      %6916 = vmatmul.mubr.bf16.gmra.mrb[0].mxu0 %v6236
      %v6917 = vpop.f32.mrb[0].mxu0
      %v6918 = vadd.f32 0.0, %v6917
      %v6919 = vpop.f32.mrb[0].mxu0
      %v6920 = vadd.f32 0.0, %v6919
      %v6921 = vpop.f32.mrb[0].mxu0
      %v6922 = vpop.f32.mrb[0].mxu0
      %6923 = vdwg.mxu0
      %6924 = vmatprep.subr.bf16.mxu0 %v6630
      %6925 = vmatpush1.bf16.msra.mxu0 %v6629
      %6926 = vmatprep.subr.bf16.mxu0 %v6638
      %6927 = vmatpush1.bf16.msra.mxu0 %v6637
      %6928 = vmatprep.subr.bf16.mxu0 %v6646
      %6929 = vmatpush1.bf16.msra.mxu0 %v6645
      %6930 = vmatprep.subr.bf16.mxu0 %v6654
      %6931 = vmatpush1.bf16.msra.mxu0 %v6653
      %6932 = vmatprep.subr.bf16.mxu0 %v6662
      %6933 = vmatpush1.bf16.msra.mxu0 %v6661
      %6934 = vmatprep.subr.bf16.mxu0 %v6670
      %6935 = vmatpush1.bf16.msra.mxu0 %v6669
      %6936 = vmatprep.subr.bf16.mxu0 %v6678
      %6937 = vmatpush1.bf16.msra.mxu0 %v6677
      %6938 = vmatprep.subr.bf16.mxu0 %v6686
      %6939 = vmatpush1.bf16.msra.mxu0 %v6685
      %6940 = vmatprep.subr.bf16.mxu0 %v6694
      %6941 = vmatpush1.bf16.msra.mxu0 %v6693
      %6942 = vmatprep.subr.bf16.mxu0 %v6702
      %6943 = vmatpush1.bf16.msra.mxu0 %v6701
      %6944 = vmatprep.subr.bf16.mxu0 %v6710
      %6945 = vmatpush1.bf16.msra.mxu0 %v6709
      %6946 = vmatprep.subr.bf16.mxu0 %v6718
      %6947 = vmatpush1.bf16.msra.mxu0 %v6717
      %6948 = vmatprep.subr.bf16.mxu0 %v6726
      %6949 = vmatpush1.bf16.msra.mxu0 %v6725
      %6950 = vmatprep.subr.bf16.mxu0 %v6734
      %6951 = vmatpush1.bf16.msra.mxu0 %v6733
      %6952 = vmatprep.subr.bf16.mxu0 %v6742
      %6953 = vmatpush1.bf16.msra.mxu0 %v6741
      %6954 = vmatprep.subr.bf16.mxu0 %v6750
      %6955 = vmatpush1.bf16.msra.mxu0 %v6749
      %6956 = vmatprep.mubr.bf16.mxu0 %v6240
      %6957 = vmatmul.mubr.bf16.gmra.mrb[0].mxu0 %v6236
      %v6958 = vpop.f32.mrb[0].mxu0
      %v6959 = vadd.f32 0.0, %v6958
      %v6960 = vpop.f32.mrb[0].mxu0
      %v6961 = vadd.f32 0.0, %v6960
      %v6962 = vpop.f32.mrb[0].mxu0
      %v6963 = vpop.f32.mrb[0].mxu0
      %6964 = vdwg.mxu0
      %6965 = vmatprep.subr.bf16.mxu0 %v6632
      %6966 = vmatpush1.bf16.msra.mxu0 %v6631
      %6967 = vmatprep.subr.bf16.mxu0 %v6640
      %6968 = vmatpush1.bf16.msra.mxu0 %v6639
      %6969 = vmatprep.subr.bf16.mxu0 %v6648
      %6970 = vmatpush1.bf16.msra.mxu0 %v6647
      %6971 = vmatprep.subr.bf16.mxu0 %v6656
      %6972 = vmatpush1.bf16.msra.mxu0 %v6655
      %6973 = vmatprep.subr.bf16.mxu0 %v6664
      %6974 = vmatpush1.bf16.msra.mxu0 %v6663
      %6975 = vmatprep.subr.bf16.mxu0 %v6672
      %6976 = vmatpush1.bf16.msra.mxu0 %v6671
      %6977 = vmatprep.subr.bf16.mxu0 %v6680
      %6978 = vmatpush1.bf16.msra.mxu0 %v6679
      %6979 = vmatprep.subr.bf16.mxu0 %v6688
      %6980 = vmatpush1.bf16.msra.mxu0 %v6687
      %6981 = vmatprep.subr.bf16.mxu0 %v6696
      %6982 = vmatpush1.bf16.msra.mxu0 %v6695
      %6983 = vmatprep.subr.bf16.mxu0 %v6704
      %6984 = vmatpush1.bf16.msra.mxu0 %v6703
      %6985 = vmatprep.subr.bf16.mxu0 %v6712
      %6986 = vmatpush1.bf16.msra.mxu0 %v6711
      %6987 = vmatprep.subr.bf16.mxu0 %v6720
      %6988 = vmatpush1.bf16.msra.mxu0 %v6719
      %6989 = vmatprep.subr.bf16.mxu0 %v6728
      %6990 = vmatpush1.bf16.msra.mxu0 %v6727
      %6991 = vmatprep.subr.bf16.mxu0 %v6736
      %6992 = vmatpush1.bf16.msra.mxu0 %v6735
      %6993 = vmatprep.subr.bf16.mxu0 %v6744
      %6994 = vmatpush1.bf16.msra.mxu0 %v6743
      %6995 = vmatprep.subr.bf16.mxu0 %v6752
      %6996 = vmatpush1.bf16.msra.mxu0 %v6751
      %6997 = vmatprep.mubr.bf16.mxu0 %v6240
      %6998 = vmatmul.mubr.bf16.gmra.mrb[0].mxu0 %v6236
      %v6999 = vpop.f32.mrb[0].mxu0
      %v7000 = vadd.f32 0.0, %v6999
      %v7001 = vpop.f32.mrb[0].mxu0
      %v7002 = vadd.f32 0.0, %v7001
      %v7003 = vpop.f32.mrb[0].mxu0
      %v7004 = vpop.f32.mrb[0].mxu0
      %7005 = vdwg.mxu0
      %7006 = vmatprep.subr.bf16.mxu0 %v6634
      %7007 = vmatpush1.bf16.msra.mxu0 %v6633
      %7008 = vmatprep.subr.bf16.mxu0 %v6642
      %7009 = vmatpush1.bf16.msra.mxu0 %v6641
      %7010 = vmatprep.subr.bf16.mxu0 %v6650
      %7011 = vmatpush1.bf16.msra.mxu0 %v6649
      %7012 = vmatprep.subr.bf16.mxu0 %v6658
      %7013 = vmatpush1.bf16.msra.mxu0 %v6657
      %7014 = vmatprep.subr.bf16.mxu0 %v6666
      %7015 = vmatpush1.bf16.msra.mxu0 %v6665
      %7016 = vmatprep.subr.bf16.mxu0 %v6674
      %7017 = vmatpush1.bf16.msra.mxu0 %v6673
      %7018 = vmatprep.subr.bf16.mxu0 %v6682
      %7019 = vmatpush1.bf16.msra.mxu0 %v6681
      %7020 = vmatprep.subr.bf16.mxu0 %v6690
      %7021 = vmatpush1.bf16.msra.mxu0 %v6689
      %7022 = vmatprep.subr.bf16.mxu0 %v6698
      %7023 = vmatpush1.bf16.msra.mxu0 %v6697
      %7024 = vmatprep.subr.bf16.mxu0 %v6706
      %7025 = vmatpush1.bf16.msra.mxu0 %v6705
      %7026 = vmatprep.subr.bf16.mxu0 %v6714
      %7027 = vmatpush1.bf16.msra.mxu0 %v6713
      %7028 = vmatprep.subr.bf16.mxu0 %v6722
      %7029 = vmatpush1.bf16.msra.mxu0 %v6721
      %7030 = vmatprep.subr.bf16.mxu0 %v6730
      %7031 = vmatpush1.bf16.msra.mxu0 %v6729
      %7032 = vmatprep.subr.bf16.mxu0 %v6738
      %7033 = vmatpush1.bf16.msra.mxu0 %v6737
      %7034 = vmatprep.subr.bf16.mxu0 %v6746
      %7035 = vmatpush1.bf16.msra.mxu0 %v6745
      %7036 = vmatprep.subr.bf16.mxu0 %v6754
      %7037 = vmatpush1.bf16.msra.mxu0 %v6753
      %7038 = vmatprep.mubr.bf16.mxu0 %v6240
      %7039 = vmatmul.mubr.bf16.gmra.mrb[0].mxu0 %v6236
      %v7040 = vpop.f32.mrb[0].mxu0
      %v7041 = vadd.f32 0.0, %v7040
      %v7042 = vpop.f32.mrb[0].mxu0
      %v7043 = vadd.f32 0.0, %v7042
      %v7044 = vpop.f32.mrb[0].mxu0
      %v7045 = vpop.f32.mrb[0].mxu0
      %7046 = vdwg.mxu0
      %v7047 = vpack.i.b16 %v1341, %v1341
      %v7048 = vlaneseq
      %v7049 = vshrl.u32 %v7048, 7
      %v7050 = vsub.s32 0, %v7049
      %v7051 = vrot.slane %v7047, %v7050
      %v7052 = vlaneseq
      %v7053 = vshrl.u32 %v7052, 7
      %v7054 = vsub.s32 1, %v7053
      %v7055 = vrot.slane %v7047, %v7054
      %v7186 = vunpack.c.l.b16 %v1181
      %v7187 = vunpack.c.h.b16 %v1181
      %v7188 = vunpack.c.l.b16 %v1182
      %v7189 = vunpack.c.h.b16 %v1182
      %v7190 = vunpack.c.l.b16 %v1183
      %v7191 = vunpack.c.h.b16 %v1183
      %v7192 = vunpack.c.l.b16 %v1184
      %v7193 = vunpack.c.h.b16 %v1184
      %v7194 = vunpack.c.l.b16 %v1185
      %v7195 = vunpack.c.h.b16 %v1185
      %v7196 = vunpack.c.l.b16 %v1186
      %v7197 = vunpack.c.h.b16 %v1186
      %v7198 = vunpack.c.l.b16 %v1187
      %v7199 = vunpack.c.h.b16 %v1187
      %v7200 = vunpack.c.l.b16 %v1188
      %v7201 = vunpack.c.h.b16 %v1188
      %v7202 = vunpack.c.l.b16 %v1189
      %v7203 = vunpack.c.h.b16 %v1189
      %v7204 = vunpack.c.l.b16 %v1190
      %v7205 = vunpack.c.h.b16 %v1190
      %v7206 = vunpack.c.l.b16 %v1191
      %v7207 = vunpack.c.h.b16 %v1191
      %v7208 = vunpack.c.l.b16 %v1192
      %v7209 = vunpack.c.h.b16 %v1192
      %v7210 = vunpack.c.l.b16 %v1193
      %v7211 = vunpack.c.h.b16 %v1193
      %v7212 = vunpack.c.l.b16 %v1194
      %v7213 = vunpack.c.h.b16 %v1194
      %v7214 = vunpack.c.l.b16 %v1195
      %v7215 = vunpack.c.h.b16 %v1195
      %v7216 = vunpack.c.l.b16 %v1196
      %v7217 = vunpack.c.h.b16 %v1196
      %v7218 = vunpack.c.l.b16 %v1197
      %v7219 = vunpack.c.h.b16 %v1197
      %v7220 = vunpack.c.l.b16 %v1198
      %v7221 = vunpack.c.h.b16 %v1198
      %v7222 = vunpack.c.l.b16 %v1199
      %v7223 = vunpack.c.h.b16 %v1199
      %v7224 = vunpack.c.l.b16 %v1200
      %v7225 = vunpack.c.h.b16 %v1200
      %v7226 = vunpack.c.l.b16 %v1201
      %v7227 = vunpack.c.h.b16 %v1201
      %v7228 = vunpack.c.l.b16 %v1202
      %v7229 = vunpack.c.h.b16 %v1202
      %v7230 = vunpack.c.l.b16 %v1203
      %v7231 = vunpack.c.h.b16 %v1203
      %v7232 = vunpack.c.l.b16 %v1204
      %v7233 = vunpack.c.h.b16 %v1204
      %v7234 = vunpack.c.l.b16 %v1205
      %v7235 = vunpack.c.h.b16 %v1205
      %v7236 = vunpack.c.l.b16 %v1206
      %v7237 = vunpack.c.h.b16 %v1206
      %v7238 = vunpack.c.l.b16 %v1207
      %v7239 = vunpack.c.h.b16 %v1207
      %v7240 = vunpack.c.l.b16 %v1208
      %v7241 = vunpack.c.h.b16 %v1208
      %v7242 = vunpack.c.l.b16 %v1209
      %v7243 = vunpack.c.h.b16 %v1209
      %v7244 = vunpack.c.l.b16 %v1210
      %v7245 = vunpack.c.h.b16 %v1210
      %v7246 = vunpack.c.l.b16 %v1211
      %v7247 = vunpack.c.h.b16 %v1211
      %v7248 = vunpack.c.l.b16 %v1212
      %v7249 = vunpack.c.h.b16 %v1212
      %v7250 = vunpack.c.l.b16 %v1213
      %v7251 = vunpack.c.h.b16 %v1213
      %v7252 = vunpack.c.l.b16 %v1214
      %v7253 = vunpack.c.h.b16 %v1214
      %v7254 = vunpack.c.l.b16 %v1215
      %v7255 = vunpack.c.h.b16 %v1215
      %v7256 = vunpack.c.l.b16 %v1216
      %v7257 = vunpack.c.h.b16 %v1216
      %v7258 = vunpack.c.l.b16 %v1217
      %v7259 = vunpack.c.h.b16 %v1217
      %v7260 = vunpack.c.l.b16 %v1218
      %v7261 = vunpack.c.h.b16 %v1218
      %v7262 = vunpack.c.l.b16 %v1219
      %v7263 = vunpack.c.h.b16 %v1219
      %v7264 = vunpack.c.l.b16 %v1220
      %v7265 = vunpack.c.h.b16 %v1220
      %v7266 = vunpack.c.l.b16 %v1221
      %v7267 = vunpack.c.h.b16 %v1221
      %v7268 = vunpack.c.l.b16 %v1222
      %v7269 = vunpack.c.h.b16 %v1222
      %v7270 = vunpack.c.l.b16 %v1223
      %v7271 = vunpack.c.h.b16 %v1223
      %v7272 = vunpack.c.l.b16 %v1224
      %v7273 = vunpack.c.h.b16 %v1224
      %v7274 = vunpack.c.l.b16 %v1225
      %v7275 = vunpack.c.h.b16 %v1225
      %v7276 = vunpack.c.l.b16 %v1226
      %v7277 = vunpack.c.h.b16 %v1226
      %v7278 = vunpack.c.l.b16 %v1227
      %v7279 = vunpack.c.h.b16 %v1227
      %v7280 = vunpack.c.l.b16 %v1228
      %v7281 = vunpack.c.h.b16 %v1228
      %v7282 = vunpack.c.l.b16 %v1229
      %v7283 = vunpack.c.h.b16 %v1229
      %v7284 = vunpack.c.l.b16 %v1230
      %v7285 = vunpack.c.h.b16 %v1230
      %v7286 = vunpack.c.l.b16 %v1231
      %v7287 = vunpack.c.h.b16 %v1231
      %v7288 = vunpack.c.l.b16 %v1232
      %v7289 = vunpack.c.h.b16 %v1232
      %v7290 = vunpack.c.l.b16 %v1233
      %v7291 = vunpack.c.h.b16 %v1233
      %v7292 = vunpack.c.l.b16 %v1234
      %v7293 = vunpack.c.h.b16 %v1234
      %v7294 = vunpack.c.l.b16 %v1235
      %v7295 = vunpack.c.h.b16 %v1235
      %v7296 = vunpack.c.l.b16 %v1236
      %v7297 = vunpack.c.h.b16 %v1236
      %v7298 = vunpack.c.l.b16 %v1237
      %v7299 = vunpack.c.h.b16 %v1237
      %v7300 = vunpack.c.l.b16 %v1238
      %v7301 = vunpack.c.h.b16 %v1238
      %v7302 = vunpack.c.l.b16 %v1239
      %v7303 = vunpack.c.h.b16 %v1239
      %v7304 = vunpack.c.l.b16 %v1240
      %v7305 = vunpack.c.h.b16 %v1240
      %v7306 = vunpack.c.l.b16 %v1241
      %v7307 = vunpack.c.h.b16 %v1241
      %v7308 = vunpack.c.l.b16 %v1242
      %v7309 = vunpack.c.h.b16 %v1242
      %v7310 = vunpack.c.l.b16 %v1243
      %v7311 = vunpack.c.h.b16 %v1243
      %v7312 = vunpack.c.l.b16 %v1244
      %v7313 = vunpack.c.h.b16 %v1244
      %v7314 = vunpack.c.l.b16 %v1245
      %v7315 = vunpack.c.h.b16 %v1245
      %v7316 = vunpack.c.l.b16 %v1246
      %v7317 = vunpack.c.h.b16 %v1246
      %v7318 = vunpack.c.l.b16 %v1247
      %v7319 = vunpack.c.h.b16 %v1247
      %v7320 = vunpack.c.l.b16 %v1248
      %v7321 = vunpack.c.h.b16 %v1248
      %v7322 = vunpack.c.l.b16 %v1249
      %v7323 = vunpack.c.h.b16 %v1249
      %v7324 = vunpack.c.l.b16 %v1250
      %v7325 = vunpack.c.h.b16 %v1250
      %v7326 = vunpack.c.l.b16 %v1251
      %v7327 = vunpack.c.h.b16 %v1251
      %v7328 = vunpack.c.l.b16 %v1252
      %v7329 = vunpack.c.h.b16 %v1252
      %v7330 = vunpack.c.l.b16 %v1253
      %v7331 = vunpack.c.h.b16 %v1253
      %v7332 = vunpack.c.l.b16 %v1254
      %v7333 = vunpack.c.h.b16 %v1254
      %v7334 = vunpack.c.l.b16 %v1255
      %v7335 = vunpack.c.h.b16 %v1255
      %v7336 = vunpack.c.l.b16 %v1256
      %v7337 = vunpack.c.h.b16 %v1256
      %v7338 = vunpack.c.l.b16 %v1257
      %v7339 = vunpack.c.h.b16 %v1257
      %v7340 = vunpack.c.l.b16 %v1258
      %v7341 = vunpack.c.h.b16 %v1258
      %v7342 = vunpack.c.l.b16 %v1259
      %v7343 = vunpack.c.h.b16 %v1259
      %v7344 = vunpack.c.l.b16 %v1260
      %v7345 = vunpack.c.h.b16 %v1260
      %v7346 = vunpack.c.l.b16 %v1261
      %v7347 = vunpack.c.h.b16 %v1261
      %v7348 = vunpack.c.l.b16 %v1262
      %v7349 = vunpack.c.h.b16 %v1262
      %v7350 = vunpack.c.l.b16 %v1263
      %v7351 = vunpack.c.h.b16 %v1263
      %v7352 = vunpack.c.l.b16 %v1264
      %v7353 = vunpack.c.h.b16 %v1264
      %v7354 = vunpack.c.l.b16 %v1265
      %v7355 = vunpack.c.h.b16 %v1265
      %v7356 = vunpack.c.l.b16 %v1266
      %v7357 = vunpack.c.h.b16 %v1266
      %v7358 = vunpack.c.l.b16 %v1267
      %v7359 = vunpack.c.h.b16 %v1267
      %v7360 = vunpack.c.l.b16 %v1268
      %v7361 = vunpack.c.h.b16 %v1268
      %v7362 = vunpack.c.l.b16 %v1269
      %v7363 = vunpack.c.h.b16 %v1269
      %v7364 = vunpack.c.l.b16 %v1270
      %v7365 = vunpack.c.h.b16 %v1270
      %v7366 = vunpack.c.l.b16 %v1271
      %v7367 = vunpack.c.h.b16 %v1271
      %v7368 = vunpack.c.l.b16 %v1272
      %v7369 = vunpack.c.h.b16 %v1272
      %v7370 = vunpack.c.l.b16 %v1273
      %v7371 = vunpack.c.h.b16 %v1273
      %v7372 = vunpack.c.l.b16 %v1274
      %v7373 = vunpack.c.h.b16 %v1274
      %v7374 = vunpack.c.l.b16 %v1275
      %v7375 = vunpack.c.h.b16 %v1275
      %v7376 = vunpack.c.l.b16 %v1276
      %v7377 = vunpack.c.h.b16 %v1276
      %v7378 = vunpack.c.l.b16 %v1277
      %v7379 = vunpack.c.h.b16 %v1277
      %v7380 = vunpack.c.l.b16 %v1278
      %v7381 = vunpack.c.h.b16 %v1278
      %v7382 = vunpack.c.l.b16 %v1279
      %v7383 = vunpack.c.h.b16 %v1279
      %v7384 = vunpack.c.l.b16 %v1280
      %v7385 = vunpack.c.h.b16 %v1280
      %v7386 = vunpack.c.l.b16 %v1281
      %v7387 = vunpack.c.h.b16 %v1281
      %v7388 = vunpack.c.l.b16 %v1282
      %v7389 = vunpack.c.h.b16 %v1282
      %v7390 = vunpack.c.l.b16 %v1283
      %v7391 = vunpack.c.h.b16 %v1283
      %v7392 = vunpack.c.l.b16 %v1284
      %v7393 = vunpack.c.h.b16 %v1284
      %v7394 = vunpack.c.l.b16 %v1285
      %v7395 = vunpack.c.h.b16 %v1285
      %v7396 = vunpack.c.l.b16 %v1286
      %v7397 = vunpack.c.h.b16 %v1286
      %v7398 = vunpack.c.l.b16 %v1287
      %v7399 = vunpack.c.h.b16 %v1287
      %v7400 = vunpack.c.l.b16 %v1288
      %v7401 = vunpack.c.h.b16 %v1288
      %v7402 = vunpack.c.l.b16 %v1289
      %v7403 = vunpack.c.h.b16 %v1289
      %v7404 = vunpack.c.l.b16 %v1290
      %v7405 = vunpack.c.h.b16 %v1290
      %v7406 = vunpack.c.l.b16 %v1291
      %v7407 = vunpack.c.h.b16 %v1291
      %v7408 = vunpack.c.l.b16 %v1292
      %v7409 = vunpack.c.h.b16 %v1292
      %v7410 = vunpack.c.l.b16 %v1293
      %v7411 = vunpack.c.h.b16 %v1293
      %v7412 = vunpack.c.l.b16 %v1294
      %v7413 = vunpack.c.h.b16 %v1294
      %v7414 = vunpack.c.l.b16 %v1295
      %v7415 = vunpack.c.h.b16 %v1295
      %v7416 = vunpack.c.l.b16 %v1296
      %v7417 = vunpack.c.h.b16 %v1296
      %v7418 = vunpack.c.l.b16 %v1297
      %v7419 = vunpack.c.h.b16 %v1297
      %v7420 = vunpack.c.l.b16 %v1298
      %v7421 = vunpack.c.h.b16 %v1298
      %v7422 = vunpack.c.l.b16 %v1299
      %v7423 = vunpack.c.h.b16 %v1299
      %v7424 = vunpack.c.l.b16 %v1300
      %v7425 = vunpack.c.h.b16 %v1300
      %v7426 = vunpack.c.l.b16 %v1301
      %v7427 = vunpack.c.h.b16 %v1301
      %v7428 = vunpack.c.l.b16 %v1302
      %v7429 = vunpack.c.h.b16 %v1302
      %v7430 = vunpack.c.l.b16 %v1303
      %v7431 = vunpack.c.h.b16 %v1303
      %v7432 = vunpack.c.l.b16 %v1304
      %v7433 = vunpack.c.h.b16 %v1304
      %v7434 = vunpack.c.l.b16 %v1305
      %v7435 = vunpack.c.h.b16 %v1305
      %v7436 = vunpack.c.l.b16 %v1306
      %v7437 = vunpack.c.h.b16 %v1306
      %v7438 = vunpack.c.l.b16 %v1307
      %v7439 = vunpack.c.h.b16 %v1307
      %v7440 = vunpack.c.l.b16 %v1308
      %v7441 = vunpack.c.h.b16 %v1308
      %v7442 = vpack.c.b16 %v7194, %v7186
      %v7443 = vpack.c.b16 %v7195, %v7187
      %v7444 = vpack.c.b16 %v7196, %v7188
      %v7445 = vpack.c.b16 %v7197, %v7189
      %v7446 = vpack.c.b16 %v7198, %v7190
      %v7447 = vpack.c.b16 %v7199, %v7191
      %v7448 = vpack.c.b16 %v7200, %v7192
      %v7449 = vpack.c.b16 %v7201, %v7193
      %v7450 = vpack.c.b16 %v7210, %v7202
      %v7451 = vpack.c.b16 %v7211, %v7203
      %v7452 = vpack.c.b16 %v7212, %v7204
      %v7453 = vpack.c.b16 %v7213, %v7205
      %v7454 = vpack.c.b16 %v7214, %v7206
      %v7455 = vpack.c.b16 %v7215, %v7207
      %v7456 = vpack.c.b16 %v7216, %v7208
      %v7457 = vpack.c.b16 %v7217, %v7209
      %v7458 = vpack.c.b16 %v7226, %v7218
      %v7459 = vpack.c.b16 %v7227, %v7219
      %v7460 = vpack.c.b16 %v7228, %v7220
      %v7461 = vpack.c.b16 %v7229, %v7221
      %v7462 = vpack.c.b16 %v7230, %v7222
      %v7463 = vpack.c.b16 %v7231, %v7223
      %v7464 = vpack.c.b16 %v7232, %v7224
      %v7465 = vpack.c.b16 %v7233, %v7225
      %v7466 = vpack.c.b16 %v7242, %v7234
      %v7467 = vpack.c.b16 %v7243, %v7235
      %v7468 = vpack.c.b16 %v7244, %v7236
      %v7469 = vpack.c.b16 %v7245, %v7237
      %v7470 = vpack.c.b16 %v7246, %v7238
      %v7471 = vpack.c.b16 %v7247, %v7239
      %v7472 = vpack.c.b16 %v7248, %v7240
      %v7473 = vpack.c.b16 %v7249, %v7241
      %v7474 = vpack.c.b16 %v7258, %v7250
      %v7475 = vpack.c.b16 %v7259, %v7251
      %v7476 = vpack.c.b16 %v7260, %v7252
      %v7477 = vpack.c.b16 %v7261, %v7253
      %v7478 = vpack.c.b16 %v7262, %v7254
      %v7479 = vpack.c.b16 %v7263, %v7255
      %v7480 = vpack.c.b16 %v7264, %v7256
      %v7481 = vpack.c.b16 %v7265, %v7257
      %v7482 = vpack.c.b16 %v7274, %v7266
      %v7483 = vpack.c.b16 %v7275, %v7267
      %v7484 = vpack.c.b16 %v7276, %v7268
      %v7485 = vpack.c.b16 %v7277, %v7269
      %v7486 = vpack.c.b16 %v7278, %v7270
      %v7487 = vpack.c.b16 %v7279, %v7271
      %v7488 = vpack.c.b16 %v7280, %v7272
      %v7489 = vpack.c.b16 %v7281, %v7273
      %v7490 = vpack.c.b16 %v7290, %v7282
      %v7491 = vpack.c.b16 %v7291, %v7283
      %v7492 = vpack.c.b16 %v7292, %v7284
      %v7493 = vpack.c.b16 %v7293, %v7285
      %v7494 = vpack.c.b16 %v7294, %v7286
      %v7495 = vpack.c.b16 %v7295, %v7287
      %v7496 = vpack.c.b16 %v7296, %v7288
      %v7497 = vpack.c.b16 %v7297, %v7289
      %v7498 = vpack.c.b16 %v7306, %v7298
      %v7499 = vpack.c.b16 %v7307, %v7299
      %v7500 = vpack.c.b16 %v7308, %v7300
      %v7501 = vpack.c.b16 %v7309, %v7301
      %v7502 = vpack.c.b16 %v7310, %v7302
      %v7503 = vpack.c.b16 %v7311, %v7303
      %v7504 = vpack.c.b16 %v7312, %v7304
      %v7505 = vpack.c.b16 %v7313, %v7305
      %v7506 = vpack.c.b16 %v7322, %v7314
      %v7507 = vpack.c.b16 %v7323, %v7315
      %v7508 = vpack.c.b16 %v7324, %v7316
      %v7509 = vpack.c.b16 %v7325, %v7317
      %v7510 = vpack.c.b16 %v7326, %v7318
      %v7511 = vpack.c.b16 %v7327, %v7319
      %v7512 = vpack.c.b16 %v7328, %v7320
      %v7513 = vpack.c.b16 %v7329, %v7321
      %v7514 = vpack.c.b16 %v7338, %v7330
      %v7515 = vpack.c.b16 %v7339, %v7331
      %v7516 = vpack.c.b16 %v7340, %v7332
      %v7517 = vpack.c.b16 %v7341, %v7333
      %v7518 = vpack.c.b16 %v7342, %v7334
      %v7519 = vpack.c.b16 %v7343, %v7335
      %v7520 = vpack.c.b16 %v7344, %v7336
      %v7521 = vpack.c.b16 %v7345, %v7337
      %v7522 = vpack.c.b16 %v7354, %v7346
      %v7523 = vpack.c.b16 %v7355, %v7347
      %v7524 = vpack.c.b16 %v7356, %v7348
      %v7525 = vpack.c.b16 %v7357, %v7349
      %v7526 = vpack.c.b16 %v7358, %v7350
      %v7527 = vpack.c.b16 %v7359, %v7351
      %v7528 = vpack.c.b16 %v7360, %v7352
      %v7529 = vpack.c.b16 %v7361, %v7353
      %v7530 = vpack.c.b16 %v7370, %v7362
      %v7531 = vpack.c.b16 %v7371, %v7363
      %v7532 = vpack.c.b16 %v7372, %v7364
      %v7533 = vpack.c.b16 %v7373, %v7365
      %v7534 = vpack.c.b16 %v7374, %v7366
      %v7535 = vpack.c.b16 %v7375, %v7367
      %v7536 = vpack.c.b16 %v7376, %v7368
      %v7537 = vpack.c.b16 %v7377, %v7369
      %v7538 = vpack.c.b16 %v7386, %v7378
      %v7539 = vpack.c.b16 %v7387, %v7379
      %v7540 = vpack.c.b16 %v7388, %v7380
      %v7541 = vpack.c.b16 %v7389, %v7381
      %v7542 = vpack.c.b16 %v7390, %v7382
      %v7543 = vpack.c.b16 %v7391, %v7383
      %v7544 = vpack.c.b16 %v7392, %v7384
      %v7545 = vpack.c.b16 %v7393, %v7385
      %v7546 = vpack.c.b16 %v7402, %v7394
      %v7547 = vpack.c.b16 %v7403, %v7395
      %v7548 = vpack.c.b16 %v7404, %v7396
      %v7549 = vpack.c.b16 %v7405, %v7397
      %v7550 = vpack.c.b16 %v7406, %v7398
      %v7551 = vpack.c.b16 %v7407, %v7399
      %v7552 = vpack.c.b16 %v7408, %v7400
      %v7553 = vpack.c.b16 %v7409, %v7401
      %v7554 = vpack.c.b16 %v7418, %v7410
      %v7555 = vpack.c.b16 %v7419, %v7411
      %v7556 = vpack.c.b16 %v7420, %v7412
      %v7557 = vpack.c.b16 %v7421, %v7413
      %v7558 = vpack.c.b16 %v7422, %v7414
      %v7559 = vpack.c.b16 %v7423, %v7415
      %v7560 = vpack.c.b16 %v7424, %v7416
      %v7561 = vpack.c.b16 %v7425, %v7417
      %v7562 = vpack.c.b16 %v7434, %v7426
      %v7563 = vpack.c.b16 %v7435, %v7427
      %v7564 = vpack.c.b16 %v7436, %v7428
      %v7565 = vpack.c.b16 %v7437, %v7429
      %v7566 = vpack.c.b16 %v7438, %v7430
      %v7567 = vpack.c.b16 %v7439, %v7431
      %v7568 = vpack.c.b16 %v7440, %v7432
      %v7569 = vpack.c.b16 %v7441, %v7433
      %7698 = vmatprep.subr.bf16.mxu0 %v7443
      %7699 = vmatpush1.bf16.msra.mxu0 %v7442
      %7700 = vmatprep.subr.bf16.mxu0 %v7451
      %7701 = vmatpush1.bf16.msra.mxu0 %v7450
      %7702 = vmatprep.subr.bf16.mxu0 %v7459
      %7703 = vmatpush1.bf16.msra.mxu0 %v7458
      %7704 = vmatprep.subr.bf16.mxu0 %v7467
      %7705 = vmatpush1.bf16.msra.mxu0 %v7466
      %7706 = vmatprep.subr.bf16.mxu0 %v7475
      %7707 = vmatpush1.bf16.msra.mxu0 %v7474
      %7708 = vmatprep.subr.bf16.mxu0 %v7483
      %7709 = vmatpush1.bf16.msra.mxu0 %v7482
      %7710 = vmatprep.subr.bf16.mxu0 %v7491
      %7711 = vmatpush1.bf16.msra.mxu0 %v7490
      %7712 = vmatprep.subr.bf16.mxu0 %v7499
      %7713 = vmatpush1.bf16.msra.mxu0 %v7498
      %7714 = vmatprep.subr.bf16.mxu0 %v7507
      %7715 = vmatpush1.bf16.msra.mxu0 %v7506
      %7716 = vmatprep.subr.bf16.mxu0 %v7515
      %7717 = vmatpush1.bf16.msra.mxu0 %v7514
      %7718 = vmatprep.subr.bf16.mxu0 %v7523
      %7719 = vmatpush1.bf16.msra.mxu0 %v7522
      %7720 = vmatprep.subr.bf16.mxu0 %v7531
      %7721 = vmatpush1.bf16.msra.mxu0 %v7530
      %7722 = vmatprep.subr.bf16.mxu0 %v7539
      %7723 = vmatpush1.bf16.msra.mxu0 %v7538
      %7724 = vmatprep.subr.bf16.mxu0 %v7547
      %7725 = vmatpush1.bf16.msra.mxu0 %v7546
      %7726 = vmatprep.subr.bf16.mxu0 %v7555
      %7727 = vmatpush1.bf16.msra.mxu0 %v7554
      %7728 = vmatprep.subr.bf16.mxu0 %v7563
      %7729 = vmatpush1.bf16.msra.mxu0 %v7562
      %7730 = vmatprep.mubr.bf16.mxu0 %v7055
      %7731 = vmatmul.mubr.bf16.gmra.mrb[0].mxu0 %v7051
      %v7732 = vpop.f32.mrb[0].mxu0
      %v7733 = vadd.f32 0.0, %v7732
      %v7734 = vpop.f32.mrb[0].mxu0
      %v7735 = vadd.f32 0.0, %v7734
      %v7736 = vpop.f32.mrb[0].mxu0
      %v7737 = vpop.f32.mrb[0].mxu0
      %7738 = vdwg.mxu0
      %7739 = vmatprep.subr.bf16.mxu0 %v7445
      %7740 = vmatpush1.bf16.msra.mxu0 %v7444
      %7741 = vmatprep.subr.bf16.mxu0 %v7453
      %7742 = vmatpush1.bf16.msra.mxu0 %v7452
      %7743 = vmatprep.subr.bf16.mxu0 %v7461
      %7744 = vmatpush1.bf16.msra.mxu0 %v7460
      %7745 = vmatprep.subr.bf16.mxu0 %v7469
      %7746 = vmatpush1.bf16.msra.mxu0 %v7468
      %7747 = vmatprep.subr.bf16.mxu0 %v7477
      %7748 = vmatpush1.bf16.msra.mxu0 %v7476
      %7749 = vmatprep.subr.bf16.mxu0 %v7485
      %7750 = vmatpush1.bf16.msra.mxu0 %v7484
      %7751 = vmatprep.subr.bf16.mxu0 %v7493
      %7752 = vmatpush1.bf16.msra.mxu0 %v7492
      %7753 = vmatprep.subr.bf16.mxu0 %v7501
      %7754 = vmatpush1.bf16.msra.mxu0 %v7500
      %7755 = vmatprep.subr.bf16.mxu0 %v7509
      %7756 = vmatpush1.bf16.msra.mxu0 %v7508
      %7757 = vmatprep.subr.bf16.mxu0 %v7517
      %7758 = vmatpush1.bf16.msra.mxu0 %v7516
      %7759 = vmatprep.subr.bf16.mxu0 %v7525
      %7760 = vmatpush1.bf16.msra.mxu0 %v7524
      %7761 = vmatprep.subr.bf16.mxu0 %v7533
      %7762 = vmatpush1.bf16.msra.mxu0 %v7532
      %7763 = vmatprep.subr.bf16.mxu0 %v7541
      %7764 = vmatpush1.bf16.msra.mxu0 %v7540
      %7765 = vmatprep.subr.bf16.mxu0 %v7549
      %7766 = vmatpush1.bf16.msra.mxu0 %v7548
      %7767 = vmatprep.subr.bf16.mxu0 %v7557
      %7768 = vmatpush1.bf16.msra.mxu0 %v7556
      %7769 = vmatprep.subr.bf16.mxu0 %v7565
      %7770 = vmatpush1.bf16.msra.mxu0 %v7564
      %7771 = vmatprep.mubr.bf16.mxu0 %v7055
      %7772 = vmatmul.mubr.bf16.gmra.mrb[0].mxu0 %v7051
      %v7773 = vpop.f32.mrb[0].mxu0
      %v7774 = vadd.f32 0.0, %v7773
      %v7775 = vpop.f32.mrb[0].mxu0
      %v7776 = vadd.f32 0.0, %v7775
      %v7777 = vpop.f32.mrb[0].mxu0
      %v7778 = vpop.f32.mrb[0].mxu0
      %7779 = vdwg.mxu0
      %7780 = vmatprep.subr.bf16.mxu0 %v7447
      %7781 = vmatpush1.bf16.msra.mxu0 %v7446
      %7782 = vmatprep.subr.bf16.mxu0 %v7455
      %7783 = vmatpush1.bf16.msra.mxu0 %v7454
      %7784 = vmatprep.subr.bf16.mxu0 %v7463
      %7785 = vmatpush1.bf16.msra.mxu0 %v7462
      %7786 = vmatprep.subr.bf16.mxu0 %v7471
      %7787 = vmatpush1.bf16.msra.mxu0 %v7470
      %7788 = vmatprep.subr.bf16.mxu0 %v7479
      %7789 = vmatpush1.bf16.msra.mxu0 %v7478
      %7790 = vmatprep.subr.bf16.mxu0 %v7487
      %7791 = vmatpush1.bf16.msra.mxu0 %v7486
      %7792 = vmatprep.subr.bf16.mxu0 %v7495
      %7793 = vmatpush1.bf16.msra.mxu0 %v7494
      %7794 = vmatprep.subr.bf16.mxu0 %v7503
      %7795 = vmatpush1.bf16.msra.mxu0 %v7502
      %7796 = vmatprep.subr.bf16.mxu0 %v7511
      %7797 = vmatpush1.bf16.msra.mxu0 %v7510
      %7798 = vmatprep.subr.bf16.mxu0 %v7519
      %7799 = vmatpush1.bf16.msra.mxu0 %v7518
      %7800 = vmatprep.subr.bf16.mxu0 %v7527
      %7801 = vmatpush1.bf16.msra.mxu0 %v7526
      %7802 = vmatprep.subr.bf16.mxu0 %v7535
      %7803 = vmatpush1.bf16.msra.mxu0 %v7534
      %7804 = vmatprep.subr.bf16.mxu0 %v7543
      %7805 = vmatpush1.bf16.msra.mxu0 %v7542
      %7806 = vmatprep.subr.bf16.mxu0 %v7551
      %7807 = vmatpush1.bf16.msra.mxu0 %v7550
      %7808 = vmatprep.subr.bf16.mxu0 %v7559
      %7809 = vmatpush1.bf16.msra.mxu0 %v7558
      %7810 = vmatprep.subr.bf16.mxu0 %v7567
      %7811 = vmatpush1.bf16.msra.mxu0 %v7566
      %7812 = vmatprep.mubr.bf16.mxu0 %v7055
      %7813 = vmatmul.mubr.bf16.gmra.mrb[0].mxu0 %v7051
      %v7814 = vpop.f32.mrb[0].mxu0
      %v7815 = vadd.f32 0.0, %v7814
      %v7816 = vpop.f32.mrb[0].mxu0
      %v7817 = vadd.f32 0.0, %v7816
      %v7818 = vpop.f32.mrb[0].mxu0
      %v7819 = vpop.f32.mrb[0].mxu0
      %7820 = vdwg.mxu0
      %7821 = vmatprep.subr.bf16.mxu0 %v7449
      %7822 = vmatpush1.bf16.msra.mxu0 %v7448
      %7823 = vmatprep.subr.bf16.mxu0 %v7457
      %7824 = vmatpush1.bf16.msra.mxu0 %v7456
      %7825 = vmatprep.subr.bf16.mxu0 %v7465
      %7826 = vmatpush1.bf16.msra.mxu0 %v7464
      %7827 = vmatprep.subr.bf16.mxu0 %v7473
      %7828 = vmatpush1.bf16.msra.mxu0 %v7472
      %7829 = vmatprep.subr.bf16.mxu0 %v7481
      %7830 = vmatpush1.bf16.msra.mxu0 %v7480
      %7831 = vmatprep.subr.bf16.mxu0 %v7489
      %7832 = vmatpush1.bf16.msra.mxu0 %v7488
      %7833 = vmatprep.subr.bf16.mxu0 %v7497
      %7834 = vmatpush1.bf16.msra.mxu0 %v7496
      %7835 = vmatprep.subr.bf16.mxu0 %v7505
      %7836 = vmatpush1.bf16.msra.mxu0 %v7504
      %7837 = vmatprep.subr.bf16.mxu0 %v7513
      %7838 = vmatpush1.bf16.msra.mxu0 %v7512
      %7839 = vmatprep.subr.bf16.mxu0 %v7521
      %7840 = vmatpush1.bf16.msra.mxu0 %v7520
      %7841 = vmatprep.subr.bf16.mxu0 %v7529
      %7842 = vmatpush1.bf16.msra.mxu0 %v7528
      %7843 = vmatprep.subr.bf16.mxu0 %v7537
      %7844 = vmatpush1.bf16.msra.mxu0 %v7536
      %7845 = vmatprep.subr.bf16.mxu0 %v7545
      %7846 = vmatpush1.bf16.msra.mxu0 %v7544
      %7847 = vmatprep.subr.bf16.mxu0 %v7553
      %7848 = vmatpush1.bf16.msra.mxu0 %v7552
      %7849 = vmatprep.subr.bf16.mxu0 %v7561
      %7850 = vmatpush1.bf16.msra.mxu0 %v7560
      %7851 = vmatprep.subr.bf16.mxu0 %v7569
      %7852 = vmatpush1.bf16.msra.mxu0 %v7568
      %7853 = vmatprep.mubr.bf16.mxu0 %v7055
      %7854 = vmatmul.mubr.bf16.gmra.mrb[0].mxu0 %v7051
      %v7855 = vpop.f32.mrb[0].mxu0
      %v7856 = vadd.f32 0.0, %v7855
      %v7857 = vpop.f32.mrb[0].mxu0
      %v7858 = vadd.f32 0.0, %v7857
      %v7859 = vpop.f32.mrb[0].mxu0
      %v7860 = vpop.f32.mrb[0].mxu0
      %7861 = vdwg.mxu0
      %v7862 = vld [vmem:[#allocation2] sm:$0xff]
      %v7863 = vld [vmem:[#allocation2 + $0x8] sm:$0xff]
      %v7864 = vld [vmem:[#allocation2 + $0x10] sm:$0xff]
      %v7865 = vld [vmem:[#allocation2 + $0x18] sm:$0xff]
      %v7866 = vld [vmem:[#allocation2 + $0x20] sm:$0xff]
      %v7867 = vld [vmem:[#allocation2 + $0x28] sm:$0xff]
      %v7868 = vld [vmem:[#allocation2 + $0x30] sm:$0xff]
      %v7869 = vld [vmem:[#allocation2 + $0x38] sm:$0xff]
      %v7934 = vrot.slane %v2843, 7
      %vm7935 = vcmask 1041409
      %v7936 = vsel %vm7935, %v7934, %v2028
      %v7937 = vrot.slane %v3658, 6
      %vm7938 = vcmask 1042434
      %v7939 = vsel %vm7938, %v7937, %v7936
      %v7940 = vrot.slane %v4473, 5
      %vm7941 = vcmask 1043459
      %v7942 = vsel %vm7941, %v7940, %v7939
      %v7943 = vrot.slane %v5288, 4
      %vm7944 = vcmask 1044484
      %v7945 = vsel %vm7944, %v7943, %v7942
      %v7946 = vrot.slane %v6103, 3
      %vm7947 = vcmask 1045509
      %v7948 = vsel %vm7947, %v7946, %v7945
      %v7949 = vrot.slane %v6918, 2
      %vm7950 = vcmask 1046534
      %v7951 = vsel %vm7950, %v7949, %v7948
      %v7952 = vrot.slane %v7733, 1
      %vm7953 = vcmask 1047559
      %v7954 = vsel %vm7953, %v7952, %v7951
      %v7955 = vrot.slane %v2845, 7
      %v7956 = vsel %vm7935, %v7955, %v2030
      %v7957 = vrot.slane %v3660, 6
      %v7958 = vsel %vm7938, %v7957, %v7956
      %v7959 = vrot.slane %v4475, 5
      %v7960 = vsel %vm7941, %v7959, %v7958
      %v7961 = vrot.slane %v5290, 4
      %v7962 = vsel %vm7944, %v7961, %v7960
      %v7963 = vrot.slane %v6105, 3
      %v7964 = vsel %vm7947, %v7963, %v7962
      %v7965 = vrot.slane %v6920, 2
      %v7966 = vsel %vm7950, %v7965, %v7964
      %v7967 = vrot.slane %v7735, 1
      %v7968 = vsel %vm7953, %v7967, %v7966
      %v7969 = vrot.slane %v2884, 7
      %v7970 = vsel %vm7935, %v7969, %v2069
      %v7971 = vrot.slane %v3699, 6
      %v7972 = vsel %vm7938, %v7971, %v7970
      %v7973 = vrot.slane %v4514, 5
      %v7974 = vsel %vm7941, %v7973, %v7972
      %v7975 = vrot.slane %v5329, 4
      %v7976 = vsel %vm7944, %v7975, %v7974
      %v7977 = vrot.slane %v6144, 3
      %v7978 = vsel %vm7947, %v7977, %v7976
      %v7979 = vrot.slane %v6959, 2
      %v7980 = vsel %vm7950, %v7979, %v7978
      %v7981 = vrot.slane %v7774, 1
      %v7982 = vsel %vm7953, %v7981, %v7980
      %v7983 = vrot.slane %v2886, 7
      %v7984 = vsel %vm7935, %v7983, %v2071
      %v7985 = vrot.slane %v3701, 6
      %v7986 = vsel %vm7938, %v7985, %v7984
      %v7987 = vrot.slane %v4516, 5
      %v7988 = vsel %vm7941, %v7987, %v7986
      %v7989 = vrot.slane %v5331, 4
      %v7990 = vsel %vm7944, %v7989, %v7988
      %v7991 = vrot.slane %v6146, 3
      %v7992 = vsel %vm7947, %v7991, %v7990
      %v7993 = vrot.slane %v6961, 2
      %v7994 = vsel %vm7950, %v7993, %v7992
      %v7995 = vrot.slane %v7776, 1
      %v7996 = vsel %vm7953, %v7995, %v7994
      %v7997 = vrot.slane %v2925, 7
      %v7998 = vsel %vm7935, %v7997, %v2110
      %v7999 = vrot.slane %v3740, 6
      %v8000 = vsel %vm7938, %v7999, %v7998
      %v8001 = vrot.slane %v4555, 5
      %v8002 = vsel %vm7941, %v8001, %v8000
      %v8003 = vrot.slane %v5370, 4
      %v8004 = vsel %vm7944, %v8003, %v8002
      %v8005 = vrot.slane %v6185, 3
      %v8006 = vsel %vm7947, %v8005, %v8004
      %v8007 = vrot.slane %v7000, 2
      %v8008 = vsel %vm7950, %v8007, %v8006
      %v8009 = vrot.slane %v7815, 1
      %v8010 = vsel %vm7953, %v8009, %v8008
      %v8011 = vrot.slane %v2927, 7
      %v8012 = vsel %vm7935, %v8011, %v2112
      %v8013 = vrot.slane %v3742, 6
      %v8014 = vsel %vm7938, %v8013, %v8012
      %v8015 = vrot.slane %v4557, 5
      %v8016 = vsel %vm7941, %v8015, %v8014
      %v8017 = vrot.slane %v5372, 4
      %v8018 = vsel %vm7944, %v8017, %v8016
      %v8019 = vrot.slane %v6187, 3
      %v8020 = vsel %vm7947, %v8019, %v8018
      %v8021 = vrot.slane %v7002, 2
      %v8022 = vsel %vm7950, %v8021, %v8020
      %v8023 = vrot.slane %v7817, 1
      %v8024 = vsel %vm7953, %v8023, %v8022
      %v8025 = vrot.slane %v2966, 7
      %v8026 = vsel %vm7935, %v8025, %v2151
      %v8027 = vrot.slane %v3781, 6
      %v8028 = vsel %vm7938, %v8027, %v8026
      %v8029 = vrot.slane %v4596, 5
      %v8030 = vsel %vm7941, %v8029, %v8028
      %v8031 = vrot.slane %v5411, 4
      %v8032 = vsel %vm7944, %v8031, %v8030
      %v8033 = vrot.slane %v6226, 3
      %v8034 = vsel %vm7947, %v8033, %v8032
      %v8035 = vrot.slane %v7041, 2
      %v8036 = vsel %vm7950, %v8035, %v8034
      %v8037 = vrot.slane %v7856, 1
      %v8038 = vsel %vm7953, %v8037, %v8036
      %v8039 = vrot.slane %v2968, 7
      %v8040 = vsel %vm7935, %v8039, %v2153
      %v8041 = vrot.slane %v3783, 6
      %v8042 = vsel %vm7938, %v8041, %v8040
      %v8043 = vrot.slane %v4598, 5
      %v8044 = vsel %vm7941, %v8043, %v8042
      %v8045 = vrot.slane %v5413, 4
      %v8046 = vsel %vm7944, %v8045, %v8044
      %v8047 = vrot.slane %v6228, 3
      %v8048 = vsel %vm7947, %v8047, %v8046
      %v8049 = vrot.slane %v7043, 2
      %v8050 = vsel %vm7950, %v8049, %v8048
      %v8051 = vrot.slane %v7858, 1
      %v8052 = vsel %vm7953, %v8051, %v8050
      %v8061 = vadd.f32 %v7862, %v7954
      %v8062 = vadd.f32 %v7863, %v7968
      %v8063 = vadd.f32 %v7864, %v7982
      %v8064 = vadd.f32 %v7865, %v7996
      %v8065 = vadd.f32 %v7866, %v8010
      %v8066 = vadd.f32 %v7867, %v8024
      %v8067 = vadd.f32 %v7868, %v8038
      %v8068 = vadd.f32 %v7869, %v8052
      %8069 = vst [vmem:[#allocation2] sm:$0xff] %v8061
      %8070 = vst [vmem:[#allocation2 + $0x8] sm:$0xff] %v8062
      %8071 = vst [vmem:[#allocation2 + $0x10] sm:$0xff] %v8063
      %8072 = vst [vmem:[#allocation2 + $0x18] sm:$0xff] %v8064
      %8073 = vst [vmem:[#allocation2 + $0x20] sm:$0xff] %v8065
      %8074 = vst [vmem:[#allocation2 + $0x28] sm:$0xff] %v8066
      %8075 = vst [vmem:[#allocation2 + $0x30] sm:$0xff] %v8067
      %vm8076 = vcmask 523264
      %8077 = vst.msk [vmem:[#allocation2 + $0x38] sm:$0xff] %vm8076, %v8068
      %v8078 = vld [vmem:[#allocation3] sm:$0xff]
      %v8079 = vunpack.c.l.bf16 %v284
      %v8080 = vunpack.c.h.bf16 %v284
      %v8081 = vadd.f32 %v8079, %v8080
      %8082 = vadd.xlane.f32.xlu0 %v8081
      %v8083 = vpop.xlane.xlu0 %8082
      %v8084 = vadd.f32 %v8078, %v8083
      %vm8085 = vcmask 7168
      %8086 = vst.msk [vmem:[#allocation3] sm:$0xff] %vm8085, %v8084
      // Predicated region
      $region41: #{tpu_custom_call.1} parent=35 // pred_check
        %p8087 = pneg %p269
      $region42: #{tpu_custom_call.1} parent=35 // pred_check_branch
        %8089 = sbr.rel (%p8087) target = $region44
      $region43: #{tpu_custom_call.1} parent=35 // pred_region
        %v8090 = vld [vmem:[#allocation3] sm:$0xff]
        %v8091 = vadd.f32 %v8090, 1e-08
        %v8092 = vrcp.pop %v8091
        %v8093 = vld [vmem:[#allocation2] sm:$0xff]
        %v8094 = vld [vmem:[#allocation2 + $0x8] sm:$0xff]
        %v8095 = vld [vmem:[#allocation2 + $0x10] sm:$0xff]
        %v8096 = vld [vmem:[#allocation2 + $0x18] sm:$0xff]
        %v8097 = vld [vmem:[#allocation2 + $0x20] sm:$0xff]
        %v8098 = vld [vmem:[#allocation2 + $0x28] sm:$0xff]
        %v8099 = vld [vmem:[#allocation2 + $0x30] sm:$0xff]
        %v8100 = vld [vmem:[#allocation2 + $0x38] sm:$0xff]
        %8102 = vset.pattern.permute.xlu0 0
        %8103 = vperm.xlu0 %8102, %v8092
        %v8104 = vpop.permute.xlu0 %8103
        %v8106 = vmul.f32 %v8093, %v8104
        %v8107 = vmul.f32 %v8094, %v8104
        %v8108 = vmul.f32 %v8095, %v8104
        %v8109 = vmul.f32 %v8096, %v8104
        %v8110 = vmul.f32 %v8097, %v8104
        %v8111 = vmul.f32 %v8098, %v8104
        %v8112 = vmul.f32 %v8099, %v8104
        %v8113 = vmul.f32 %v8100, %v8104
        %v8114 = vld [vmem:[%s2] sm:$0xff]
        %v8116 = vlaneseq
        %v8117 = vshrl.u32 %v8116, 7
        %v8118 = vsub.s32 0, %v8117
        %v8119 = vrot.slane %v8114, %v8118
        %v8120 = vlaneseq
        %v8121 = vshrl.u32 %v8120, 7
        %v8122 = vsub.s32 1, %v8121
        %v8123 = vrot.slane %v8114, %v8122
        %v8124 = vlaneseq
        %v8125 = vshrl.u32 %v8124, 7
        %v8126 = vsub.s32 2, %v8125
        %v8127 = vrot.slane %v8114, %v8126
        %v8128 = vlaneseq
        %v8129 = vshrl.u32 %v8128, 7
        %v8130 = vsub.s32 3, %v8129
        %v8131 = vrot.slane %v8114, %v8130
        %v8132 = vlaneseq
        %v8133 = vshrl.u32 %v8132, 7
        %v8134 = vsub.s32 4, %v8133
        %v8135 = vrot.slane %v8114, %v8134
        %v8136 = vlaneseq
        %v8137 = vshrl.u32 %v8136, 7
        %v8138 = vsub.s32 5, %v8137
        %v8139 = vrot.slane %v8114, %v8138
        %v8140 = vlaneseq
        %v8141 = vshrl.u32 %v8140, 7
        %v8142 = vsub.s32 6, %v8141
        %v8143 = vrot.slane %v8114, %v8142
        %v8144 = vlaneseq
        %v8145 = vshrl.u32 %v8144, 7
        %v8146 = vsub.s32 7, %v8145
        %v8147 = vrot.slane %v8114, %v8146
        %v8156 = vmul.f32 %v8106, %v8119
        %v8157 = vmul.f32 %v8107, %v8123
        %v8158 = vmul.f32 %v8108, %v8127
        %v8159 = vmul.f32 %v8109, %v8131
        %v8160 = vmul.f32 %v8110, %v8135
        %v8161 = vmul.f32 %v8111, %v8139
        %v8162 = vmul.f32 %v8112, %v8143
        %v8163 = vmul.f32 %v8113, %v8147
        %v8164 = vadd.f32 %v8156, %v8157
        %v8165 = vadd.f32 %v8164, %v8158
        %v8166 = vadd.f32 %v8165, %v8159
        %v8167 = vadd.f32 %v8166, %v8160
        %v8168 = vadd.f32 %v8167, %v8161
        %v8169 = vadd.f32 %v8168, %v8162
        %v8170 = vsel %vm8076, %v8163, 0.0
        %v8171 = vadd.f32 %v8169, %v8170
        %8172 = vadd.xlane.f32.xlu0 %v8171
        %v8173 = vpop.xlane.xlu0 %8172
        %s8174 = sld [smem:[#allocation4]]
        %v8175 = vstv %s8174
        %v8176 = vadd.f32 %v8173, %v8175
        %8177 = vst.msk [vmem:[%s268] sm:$0xff] %vm8085, %v8176
      $region44: #{tpu_custom_call.1} parent=35 // pred_fallthru
        _
      %p8178 = scmp.lt.s32.totalorder %s20, 1
      %s8179 = scalar_select %p8178, %s20, 1
      %s8180 = smul.addr %s8179, 8
      %s8181 = scalar_lea.vmem %s4, %s8180
      // Predicated region
      $region45: #{tpu_custom_call.1} parent=35 // pred_check
        %p8182 = pneg %p144
      $region46: #{tpu_custom_call.1} parent=35 // pred_check_branch
        %8184 = sbr.rel (%p8182) target = $region48
      $region47: #{tpu_custom_call.1} parent=35 // pred_region
        _
      $region48: #{tpu_custom_call.1} parent=35 // pred_fallthru
        _
    $region36: #{tpu_custom_call.1} parent=5 // pred_fallthru
      _
    %p8185 = scmp.le.s32.totalorder 2, %s11
    // Predicated region
    $region49: #{tpu_custom_call.1} parent=5 // pred_check
      %p8186 = pneg %p8185
    $region50: #{tpu_custom_call.1} parent=5 // pred_check_branch
      %8188 = sbr.rel (%p8186) target = $region52
    $region51: #{tpu_custom_call.1} parent=5 // pred_region
      %s8189 = ssub.s32 %s11, 2
      // Predicated region
      $region53: #{tpu_custom_call.1} parent=51 // pred_check
        %p8190 = pneg %p150
      $region54: #{tpu_custom_call.1} parent=51 // pred_check_branch
        %8192 = sbr.rel (%p8190) target = $region56
      $region55: #{tpu_custom_call.1} parent=51 // pred_region
        %p8193 = scmp.lt.s32.totalorder %s22, 1
        %s8194 = scalar_select %p8193, %s22, 1
        %s8195 = smul.addr %s8194, 8
        %s8196 = scalar_lea.vmem %s4, %s8195
      $region56: #{tpu_custom_call.1} parent=51 // pred_fallthru
        _
    $region52: #{tpu_custom_call.1} parent=5 // pred_fallthru
      _
  $region6: #{tpu_custom_call.1} parent=0 // loop_footer
    %s15 = sadd.s32 1, %s11
  $region7: #{tpu_custom_call.1} parent=0 // loop_footer_branch
    %10 = sbr.rel target = $region3
  $region8: #{tpu_custom_call.1} parent=0 // loop_exit
    _

</llo_original>
